<compile_context>
chip_gen: v7x
topology: tpu7x:2x2x1
jax: 0.10.0
libtpu: 0.0.40
codegen_flags: <defaults>
</compile_context>

<pallas_src>
from functools import partial

import numpy as np

import jax
import jax.numpy as jnp
from jax.experimental import pallas as pl
from jax.experimental.pallas import tpu as pltpu


def _pick_vmem_limit():
    # ~half of physical VMEM: 64 MiB on 128-MiB parts (v5e/v6e), 32 MiB on
    # 64-MiB parts (v7x).  Conservative fallback if the query fails.
    try:
        cap = int(pltpu.get_tpu_info().vmem_capacity_bytes)
        return max(16 * 1024 * 1024, min(cap // 2, 96 * 1024 * 1024))
    except Exception:
        return 32 * 1024 * 1024


_VMEM_LIMIT = _pick_vmem_limit()
_TILE_M = 1024 if _VMEM_LIMIT >= 64 * 1024 * 1024 else 512   # row tile


def _cparams(*sems):
    return pltpu.CompilerParams(dimension_semantics=sems,
                                vmem_limit_bytes=_VMEM_LIMIT)


# ----------------------------- in-kernel helpers ----------------------------

def _ln(x, g, b, eps=1e-5):
    mu = jnp.mean(x, axis=-1, keepdims=True)
    var = jnp.mean(jnp.square(x - mu), axis=-1, keepdims=True)
    return (x - mu) * jax.lax.rsqrt(var + eps) * g + b


def _act(y, activation):
    if activation == "relu":
        return jnp.maximum(y, 0.0)
    if activation == "sigmoid":
        return jax.nn.sigmoid(y)
    return y


def _mm(x, w, b):
    return jnp.dot(x, w, preferred_element_type=jnp.float32) + b


# ----------------------------- Pallas kernels ------------------------------

def _linear_kernel(x_ref, w_ref, b_ref, o_ref, *, activation=None):
    y = _mm(x_ref[...].astype(jnp.float32), w_ref[...], b_ref[...])
    o_ref[...] = _act(y, activation).astype(o_ref.dtype)


def _linear_rowscale_kernel(x_ref, s_ref, w_ref, b_ref, o_ref):
    # (x @ w + b) * per-row scale   (used for OPM mask-norm division)
    y = _mm(x_ref[...].astype(jnp.float32), w_ref[...], b_ref[...])
    o_ref[...] = (y * s_ref[...].astype(jnp.float32)).astype(o_ref.dtype)


def _ln_linear_kernel(x_ref, gln_ref, bln_ref, w_ref, b_ref, o_ref, *,
                      activation=None):
    xn = _ln(x_ref[...].astype(jnp.float32), gln_ref[...], bln_ref[...])
    y = _mm(xn, w_ref[...], b_ref[...])
    o_ref[...] = _act(y, activation).astype(o_ref.dtype)


def _ln_linear_gate_kernel(x_ref, g_ref, gln_ref, bln_ref, w_ref, b_ref, o_ref):
    # LN(x) @ w + b, multiplied by a precomputed gate (triangle-mul finalize)
    xn = _ln(x_ref[...].astype(jnp.float32), gln_ref[...], bln_ref[...])
    y = _mm(xn, w_ref[...], b_ref[...])
    o_ref[...] = (y * g_ref[...].astype(jnp.float32)).astype(o_ref.dtype)


def _transition_kernel(x_ref, m_ref, gln_ref, bln_ref,
                       w1_ref, b1_ref, w2_ref, b2_ref, o_ref):
    # LN -> lin1 -> relu -> lin2 -> mask, fused; 4x intermediate never in HBM.
    xn = _ln(x_ref[...].astype(jnp.float32), gln_ref[...], bln_ref[...])
    h = jnp.maximum(_mm(xn, w1_ref[...], b1_ref[...]), 0.0)
    y = _mm(h, w2_ref[...], b2_ref[...])
    o_ref[...] = (y * m_ref[...].astype(jnp.float32)).astype(o_ref.dtype)


def _opm_proj_kernel(x_ref, m_ref, gln_ref, bln_ref,
                     w1_ref, b1_ref, w2_ref, b2_ref, a_ref, b_ref):
    xn = _ln(x_ref[...].astype(jnp.float32), gln_ref[...], bln_ref[...])
    mask = m_ref[...].astype(jnp.float32)
    a_ref[...] = (_mm(xn, w1_ref[...], b1_ref[...]) * mask).astype(a_ref.dtype)
    b_ref[...] = (_mm(xn, w2_ref[...], b2_ref[...]) * mask).astype(b_ref.dtype)


def _tri_proj_kernel(x_ref, m_ref, gln_ref, bln_ref,
                     wap_ref, bap_ref, wag_ref, bag_ref,
                     wbp_ref, bbp_ref, wbg_ref, bbg_ref,
                     wg_ref, bg_ref, a_ref, b_ref, g_ref):
    # LN(z) shared by 5 projections; gates applied in-kernel.
    xn = _ln(x_ref[...].astype(jnp.float32), gln_ref[...], bln_ref[...])
    mask = m_ref[...].astype(jnp.float32)
    a = jax.nn.sigmoid(_mm(xn, wag_ref[...], bag_ref[...])) \
        * _mm(xn, wap_ref[...], bap_ref[...]) * mask
    b = jax.nn.sigmoid(_mm(xn, wbg_ref[...], bbg_ref[...])) \
        * _mm(xn, wbp_ref[...], bbp_ref[...]) * mask
    g = jax.nn.sigmoid(_mm(xn, wg_ref[...], bg_ref[...]))
    a_ref[...] = a.astype(a_ref.dtype)
    b_ref[...] = b.astype(b_ref.dtype)
    g_ref[...] = g.astype(g_ref.dtype)


def _fused_attention_kernel(*refs, num_heads, c_hidden, inf, has_pair_bias):
    # Fused: LN + single QKVG projection + per-head NT logits + bias/mask add +
    #        softmax (approx reciprocal) + gating + single output projection.
    if has_pair_bias:
        (x_ref, bias_ref, mask_ref, gln_ref, bln_ref,
         wqkvg_ref, bqkvg_ref, wo_ref, bo_ref, o_ref) = refs
    else:
        (x_ref, mask_ref, gln_ref, bln_ref,
         wqkvg_ref, bqkvg_ref, wo_ref, bo_ref, o_ref) = refs
        bias_ref = None

    h, d = num_heads, c_hidden
    hd = h * d
    x = x_ref[0, 0].astype(jnp.float32)                              # [L, C]
    xn = _ln(x, gln_ref[...], bln_ref[...])
    # Single fused QKVG projection: [L, C] @ [C, 4*H*D]; bf16 MXU, f32 acc.
    qkvg = jnp.dot(xn.astype(jnp.bfloat16), wqkvg_ref[...],
                   preferred_element_type=jnp.float32) + bqkvg_ref[...]
    mask_bias = (mask_ref[0, 0].astype(jnp.float32) - 1.0) * inf     # [1, L]
    scale = c_hidden ** -0.5
    dims_nt = (((1,), (1,)), ((), ()))   # contract last dims, no k.T relayout

    ctx_heads = []
    # TODO(synk): flash/KV tiling (or fori_loop) to explicitly bound the per-
    #             head [L, L] logits live range for very large N_res on v7x.
    for head in range(h):
        q_h = (qkvg[:, head * d:(head + 1) * d] * scale).astype(jnp.bfloat16)
        k_h = qkvg[:, hd + head * d: hd + (head + 1) * d].astype(jnp.bfloat16)
        v_h = qkvg[:, 2 * hd + head * d: 2 * hd + (head + 1) * d]
        logits = jax.lax.dot_general(q_h, k_h, dims_nt,
                                     preferred_element_type=jnp.float32)
        if bias_ref is not None:
            logits = logits + bias_ref[0, head].astype(jnp.float32)
        logits = logits + mask_bias
        mx = jnp.max(logits, axis=-1, keepdims=True)
        e = jnp.exp(logits - mx)
        p = e * pl.reciprocal(jnp.sum(e, axis=-1, keepdims=True), approx=True)
        ctx_heads.append(jnp.dot(p.astype(jnp.bfloat16),
                                 v_h.astype(jnp.bfloat16),
                                 preferred_element_type=jnp.float32))
    gate = jax.nn.sigmoid(qkvg[:, 3 * hd:4 * hd])                    # [L, H*D]
    ctx = jnp.concatenate(ctx_heads, axis=-1) * gate                 # [L, H*D]
    # Single output projection: [L, H*D] @ [H*D, C] (bf16 MXU, f32 acc).
    out = jnp.dot(ctx.astype(jnp.bfloat16), wo_ref[...],
                  preferred_element_type=jnp.float32) + bo_ref[...]
    o_ref[0, 0] = out.astype(o_ref.dtype)


def _bmm_kernel(a_ref, b_ref, o_ref, acc_ref):
    @pl.when(pl.program_id(3) == 0)
    def _():
        acc_ref[...] = jnp.zeros_like(acc_ref)
    acc_ref[...] += jnp.dot(a_ref[0].astype(jnp.bfloat16),
                            b_ref[0].astype(jnp.bfloat16),
                            preferred_element_type=jnp.float32)
    # Only store the output tile on the last K step (saves K/tk-1 stores).
    @pl.when(pl.program_id(3) == pl.num_programs(3) - 1)
    def _():
        o_ref[0] = acc_ref[...].astype(o_ref.dtype)


# ----------------------------- kernel wrappers ------------------------------

def _tile_rows(m):
    return m if m <= _TILE_M else _TILE_M


def _row_tiled_call(kernel, row_inputs, const_inputs, out_channels, out_dtypes):
    """Row-tiled pallas_call: row_inputs/outputs are [M, c_i] and tiled over M;
    const_inputs (weights / LN params) stay VMEM-resident across tiles."""
    m = row_inputs[0].shape[0]
    tm = _tile_rows(m)
    grid = (pl.cdiv(m, tm),)

    in_specs = [pl.BlockSpec((tm, r.shape[1]), lambda i: (i, 0))
                for r in row_inputs]
    for c in const_inputs:
        in_specs.append(pl.BlockSpec(c.shape, lambda i, nd=c.ndim: (0,) * nd))
    out_specs = [pl.BlockSpec((tm, c), lambda i: (i, 0)) for c in out_channels]
    out_shape = [jax.ShapeDtypeStruct((m, c), dt)
                 for c, dt in zip(out_channels, out_dtypes)]

    outs = pl.pallas_call(
        kernel,
        grid=grid,
        in_specs=in_specs,
        out_specs=out_specs,
        out_shape=out_shape,
        compiler_params=_cparams("parallel"),
    )(*row_inputs, *const_inputs)
    return tuple(outs)


def pallas_linear(x, p, activation=None):
    shape = x.shape
    cin = shape[-1]
    cout = p["w"].shape[1]
    m = int(np.prod(shape[:-1]))
    (out,) = _row_tiled_call(
        partial(_linear_kernel, activation=activation),
        [x.reshape(m, cin)],
        [p["w"], p["b"].reshape(1, cout)],
        [cout], [x.dtype])
    return out.reshape(shape[:-1] + (cout,))


def pallas_ln_linear(x, ln, p, activation=None):
    shape = x.shape
    cin = shape[-1]
    cout = p["w"].shape[1]
    m = int(np.prod(shape[:-1]))
    (out,) = _row_tiled_call(
        partial(_ln_linear_kernel, activation=activation),
        [x.reshape(m, cin)],
        [ln["g"].reshape(1, cin), ln["b"].reshape(1, cin),
         p["w"], p["b"].reshape(1, cout)],
        [cout], [x.dtype])
    return out.reshape(shape[:-1] + (cout,))


def _tile_mn(d, target=512):
    return d if d <= target else target


def _tile_red(k, target=1024):
    if k <= target:
        return k
    for t in range(target, 0, -128):
        if k % t == 0:
            return t
    return k  # fall back to full reduction dim (no partial K blocks)


def pallas_bmm(a, b):
    """Tiled batched matmul: a [G, M, K] @ b [G, K, N] -> [G, M, N]."""
    g_dim, m_dim, k_dim = a.shape
    n_dim = b.shape[2]
    tm = _tile_mn(m_dim)
    tn = _tile_mn(n_dim)
    tk = _tile_red(k_dim)
    grid = (g_dim, pl.cdiv(m_dim, tm), pl.cdiv(n_dim, tn), pl.cdiv(k_dim, tk))
    return pl.pallas_call(
        _bmm_kernel,
        grid=grid,
        in_specs=[pl.BlockSpec((1, tm, tk), lambda g, i, j, k: (g, i, k)),
                  pl.BlockSpec((1, tk, tn), lambda g, i, j, k: (g, k, j))],
        out_specs=pl.BlockSpec((1, tm, tn), lambda g, i, j, k: (g, i, j)),
        out_shape=jax.ShapeDtypeStruct((g_dim, m_dim, n_dim), a.dtype),
        scratch_shapes=[pltpu.VMEM((tm, tn), jnp.float32)],
        compiler_params=_cparams("parallel", "parallel", "parallel",
                                 "arbitrary"),
    )(a, b)


def fused_gated_attention(x, mask, ln, p, num_heads, c_hidden, inf,
                          pair_bias=None):
    """x: [Bo, So, L, C]; mask: [Bo, So, L]; pair_bias: [Bo, H, L, L] or None.
    pair_bias index_map ignores the So axis -> stays VMEM-resident (bf16)."""
    bo_dim, so_dim, l_dim, c_dim = x.shape
    h, d = num_heads, c_hidden

    # Fused QKVG weight: [C, 4*H*D]; per-head (h, d) ordering matches the
    # PyTorch linear_{q,k,v,g} output layout.
    w_qkvg = jnp.concatenate(
        [p["q"]["w"], p["k"]["w"], p["v"]["w"], p["g"]["w"]],
        axis=1).astype(jnp.bfloat16)
    b_qkvg = jnp.concatenate(
        [p["q"]["b"], p["k"]["b"], p["v"]["b"], p["g"]["b"]],
        axis=0).reshape(1, 4 * h * d)
    wo = p["o"]["w"].astype(jnp.bfloat16)                   # [H*D, C]
    bo = p["o"]["b"].reshape(1, c_dim)
    consts = [ln["g"].reshape(1, c_dim), ln["b"].reshape(1, c_dim),
              w_qkvg, b_qkvg, wo, bo]

    inputs = [x]
    in_specs = [pl.BlockSpec((1, 1, l_dim, c_dim), lambda b, s: (b, s, 0, 0))]
    if pair_bias is not None:
        # bf16 halves the VMEM-resident bias block (v7x) and its HBM traffic.
        inputs.append(pair_bias.astype(jnp.bfloat16))
        in_specs.append(pl.BlockSpec((1, h, l_dim, l_dim),
                                     lambda b, s: (b, 0, 0, 0)))
    inputs.append(mask.reshape(bo_dim, so_dim, 1, l_dim))
    in_specs.append(pl.BlockSpec((1, 1, 1, l_dim), lambda b, s: (b, s, 0, 0)))
    for c in consts:
        inputs.append(c)
        in_specs.append(pl.BlockSpec(c.shape, lambda b, s, nd=c.ndim: (0,) * nd))

    kernel = partial(_fused_attention_kernel, num_heads=h, c_hidden=d,
                     inf=inf, has_pair_bias=pair_bias is not None)
    return pl.pallas_call(
        kernel,
        grid=(bo_dim, so_dim),
        in_specs=in_specs,
        out_specs=pl.BlockSpec((1, 1, l_dim, c_dim), lambda b, s: (b, s, 0, 0)),
        out_shape=jax.ShapeDtypeStruct((bo_dim, so_dim, l_dim, c_dim), x.dtype),
        compiler_params=_cparams("parallel", "parallel"),
    )(*inputs)


# ----------------------------- Evoformer modules ----------------------------

def msa_row_attention_with_pair_bias(m, z, msa_mask, p, cfg):
    pair_bias = pallas_ln_linear(z, p["ln_z"], p["lin_z"])   # [B, R, R, H]
    pair_bias = jnp.transpose(pair_bias, (0, 3, 1, 2))       # [B, H, R, R]
    return fused_gated_attention(m, msa_mask, p["ln_m"], p,
                                 cfg["num_heads_msa"], cfg["c_hidden_msa_att"],
                                 cfg["inf"], pair_bias=pair_bias)


def msa_column_attention(m, msa_mask, p, cfg):
    # TODO(synk): fold this swapaxes into the attention BlockSpec (strided DMA)
    #             to avoid two full-tensor HBM relayouts per call.
    m_t = jnp.swapaxes(m, -2, -3)            # [B, R, S, c_m]
    mask_t = jnp.swapaxes(msa_mask, -1, -2)  # [B, R, S]
    out = fused_gated_attention(m_t, mask_t, p["ln"], p,
                                cfg["num_heads_msa"], cfg["c_hidden_msa_att"],
                                cfg["inf"])
    return jnp.swapaxes(out, -2, -3)


def transition(x, mask, p):
    shape = x.shape
    cin = shape[-1]
    m = int(np.prod(shape[:-1]))
    (out,) = _row_tiled_call(
        _transition_kernel,
        [x.reshape(m, cin), mask.reshape(m, 1)],
        [p["ln"]["g"].reshape(1, cin), p["ln"]["b"].reshape(1, cin),
         p["lin1"]["w"], p["lin1"]["b"].reshape(1, -1),
         p["lin2"]["w"], p["lin2"]["b"].reshape(1, -1)],
        [cin], [x.dtype])
    return out.reshape(shape)


def outer_product_mean(m, msa_mask, p, cfg):
    b_dim, s, r, c_m = m.shape
    c = cfg["c_hidden_opm"]
    c_z = p["lin_out"]["w"].shape[1]
    mm = b_dim * s * r

    # a/b projections emitted in bf16 (halves relayout + bmm HBM traffic).
    a_flat, b_flat = _row_tiled_call(
        _opm_proj_kernel,
        [m.reshape(mm, c_m), msa_mask.reshape(mm, 1)],
        [p["ln"]["g"].reshape(1, c_m), p["ln"]["b"].reshape(1, c_m),
         p["lin1"]["w"], p["lin1"]["b"].reshape(1, c),
         p["lin2"]["w"], p["lin2"]["b"].reshape(1, c)],
        [c, c], [jnp.bfloat16, jnp.bfloat16])
    a = a_flat.reshape(b_dim, s, r, c)
    b = b_flat.reshape(b_dim, s, r, c)

    a2 = jnp.transpose(a, (0, 2, 3, 1)).reshape(b_dim, r * c, s)
    b2 = b.reshape(b_dim, s, r * c)
    outer = pallas_bmm(a2, b2)                                # [B, R*C, R*C]
    outer = outer.reshape(b_dim, r, c, r, c).transpose(0, 1, 3, 2, 4)
    outer = outer.reshape(b_dim, r, r, c * c)

    norm = cfg["eps_opm"] + jnp.einsum("bsi,bsj->bij", msa_mask, msa_mask)
    inv_norm = (1.0 / norm).reshape(b_dim * r * r, 1)

    (out,) = _row_tiled_call(
        _linear_rowscale_kernel,
        [outer.reshape(b_dim * r * r, c * c), inv_norm],
        [p["lin_out"]["w"], p["lin_out"]["b"].reshape(1, c_z)],
        [c_z], [m.dtype])
    return out.reshape(b_dim, r, r, c_z)


def triangle_multiplication(z, pair_mask, p, cfg, outgoing):
    b_dim, r, _, c_z = z.shape
    c = cfg["c_hidden_tri_mul"]
    mm = b_dim * r * r

    a_flat, b_flat, g_flat = _row_tiled_call(
        _tri_proj_kernel,
        [z.reshape(mm, c_z), pair_mask.reshape(mm, 1)],
        [p["ln_in"]["g"].reshape(1, c_z), p["ln_in"]["b"].reshape(1, c_z),
         p["a_p"]["w"], p["a_p"]["b"].reshape(1, c),
         p["a_g"]["w"], p["a_g"]["b"].reshape(1, c),
         p["b_p"]["w"], p["b_p"]["b"].reshape(1, c),
         p["b_g"]["w"], p["b_g"]["b"].reshape(1, c),
         p["lin_g"]["w"], p["lin_g"]["b"].reshape(1, c_z)],
        [c, c, c_z], [jnp.bfloat16, jnp.bfloat16, z.dtype])
    a = a_flat.reshape(b_dim, r, r, c)
    b = b_flat.reshape(b_dim, r, r, c)

    if outgoing:   # x[i,j,c] = sum_k a[i,k,c] * b[j,k,c]
        a2 = jnp.transpose(a, (0, 3, 1, 2))
        b2 = jnp.transpose(b, (0, 3, 2, 1))
    else:          # x[i,j,c] = sum_k a[k,i,c] * b[k,j,c]
        a2 = jnp.transpose(a, (0, 3, 2, 1))
        b2 = jnp.transpose(b, (0, 3, 1, 2))
    x = pallas_bmm(a2.reshape(b_dim * c, r, r), b2.reshape(b_dim * c, r, r))
    x = x.reshape(b_dim, c, r, r).transpose(0, 2, 3, 1)       # [B, R, R, C]

    (out,) = _row_tiled_call(
        _ln_linear_gate_kernel,
        [x.reshape(mm, c), g_flat],
        [p["ln_out"]["g"].reshape(1, c), p["ln_out"]["b"].reshape(1, c),
         p["lin_z"]["w"], p["lin_z"]["b"].reshape(1, c_z)],
        [c_z], [z.dtype])
    return out.reshape(b_dim, r, r, c_z)


def triangle_attention(z, pair_mask, p, cfg, starting):
    if not starting:
        z = jnp.swapaxes(z, -2, -3)
        pair_mask = jnp.swapaxes(pair_mask, -1, -2)
    tri_bias = pallas_ln_linear(z, p["ln"], p["lin_tri"])     # [B, R, R, H]
    tri_bias = jnp.transpose(tri_bias, (0, 3, 1, 2))          # [B, H, R, R]
    out = fused_gated_attention(z, pair_mask, p["ln"], p,
                                cfg["num_heads_tri"], cfg["c_hidden_tri_att"],
                                cfg["inf"], pair_bias=tri_bias)
    if not starting:
        out = jnp.swapaxes(out, -2, -3)
    return out


def evoformer_block(m, z, msa_mask, pair_mask, p, cfg):
    # Dropout layers are identity (inference mode).
    if cfg["opm_first"]:
        z = z + outer_product_mean(m, msa_mask, p["opm"], cfg)
        m = m + msa_row_attention_with_pair_bias(m, z, msa_mask, p["row_att"], cfg)
        m = m + msa_column_attention(m, msa_mask, p["col_att"], cfg)
        m = m + transition(m, msa_mask, p["msa_trans"])
    else:
        m = m + msa_row_attention_with_pair_bias(m, z, msa_mask, p["row_att"], cfg)
        m = m + msa_column_attention(m, msa_mask, p["col_att"], cfg)
        m = m + transition(m, msa_mask, p["msa_trans"])
        z = z + outer_product_mean(m, msa_mask, p["opm"], cfg)
    z = z + triangle_multiplication(z, pair_mask, p["tri_mul_out"], cfg, outgoing=True)
    z = z + triangle_multiplication(z, pair_mask, p["tri_mul_in"], cfg, outgoing=False)
    z = z + triangle_attention(z, pair_mask, p["tri_att_start"], cfg, starting=True)
    z = z + triangle_attention(z, pair_mask, p["tri_att_end"], cfg, starting=False)
    z = z + transition(z, pair_mask, p["pair_trans"])
    return m, z


def evoformer_stack_forward(m, z, msa_mask, pair_mask, params, cfg):
    for bp in params["blocks"]:
        m, z = evoformer_block(m, z, msa_mask, pair_mask, bp, cfg)
    s = pallas_linear(m[..., 0, :, :], params["linear"])  # [B, R, c_s]
    return m, z, s


# ----------------------------- parameter init -------------------------------

class ParamGen:
    def __init__(self, seed=0):
        self._key = jax.random.PRNGKey(seed)

    def _next(self):
        self._key, sub = jax.random.split(self._key)
        return sub

    def linear(self, cin, cout, bias_init=0.0, scale=0.02):
        w = scale * jax.random.normal(self._next(), (cin, cout), jnp.float32)
        b = jnp.full((cout,), bias_init, jnp.float32)
        return {"w": w, "b": b}

    def layer_norm(self, c):
        return {"g": jnp.ones((c,), jnp.float32),
                "b": jnp.zeros((c,), jnp.float32)}


def init_attention_params(pg, c_in, num_heads, c_hidden):
    hd = num_heads * c_hidden
    return {"q": pg.linear(c_in, hd), "k": pg.linear(c_in, hd),
            "v": pg.linear(c_in, hd), "g": pg.linear(c_in, hd, bias_init=1.0),
            "o": pg.linear(hd, c_in)}


def init_block_params(pg, cfg):
    c_m, c_z, n = cfg["c_m"], cfg["c_z"], cfg["transition_n"]

    row_att = {"ln_m": pg.layer_norm(c_m), "ln_z": pg.layer_norm(c_z),
               "lin_z": pg.linear(c_z, cfg["num_heads_msa"])}
    row_att.update(init_attention_params(pg, c_m, cfg["num_heads_msa"],
                                         cfg["c_hidden_msa_att"]))

    col_att = {"ln": pg.layer_norm(c_m)}
    col_att.update(init_attention_params(pg, c_m, cfg["num_heads_msa"],
                                         cfg["c_hidden_msa_att"]))

    def tri_att():
        p = {"ln": pg.layer_norm(c_z), "lin_tri": pg.linear(c_z, cfg["num_heads_tri"])}
        p.update(init_attention_params(pg, c_z, cfg["num_heads_tri"],
                                       cfg["c_hidden_tri_att"]))
        return p

    def tri_mul():
        c = cfg["c_hidden_tri_mul"]
        return {"ln_in": pg.layer_norm(c_z), "ln_out": pg.layer_norm(c),
                "a_p": pg.linear(c_z, c), "a_g": pg.linear(c_z, c, bias_init=1.0),
                "b_p": pg.linear(c_z, c), "b_g": pg.linear(c_z, c, bias_init=1.0),
                "lin_g": pg.linear(c_z, c_z, bias_init=1.0),
                "lin_z": pg.linear(c, c_z)}

    return {"row_att": row_att,
            "col_att": col_att,
            "msa_trans": {"ln": pg.layer_norm(c_m),
                          "lin1": pg.linear(c_m, n * c_m),
                          "lin2": pg.linear(n * c_m, c_m)},
            "opm": {"ln": pg.layer_norm(c_m),
                    "lin1": pg.linear(c_m, cfg["c_hidden_opm"]),
                    "lin2": pg.linear(c_m, cfg["c_hidden_opm"]),
                    "lin_out": pg.linear(cfg["c_hidden_opm"] ** 2, c_z)},
            "tri_mul_out": tri_mul(), "tri_mul_in": tri_mul(),
            "tri_att_start": tri_att(), "tri_att_end": tri_att(),
            "pair_trans": {"ln": pg.layer_norm(c_z),
                           "lin1": pg.linear(c_z, n * c_z),
                           "lin2": pg.linear(n * c_z, c_z)}}


# ------------------------------------ main -----------------------------------

if __name__ == "__main__":
    cfg = dict(c_m=32, c_z=16, c_hidden_msa_att=8, c_hidden_opm=8,
               c_hidden_tri_mul=16, c_hidden_tri_att=8, c_s=32,
               num_heads_msa=4, num_heads_tri=2, num_blocks=2,
               transition_n=2, msa_dropout=0.15, pair_dropout=0.25,
               inf=1e9, eps_opm=1e-3, opm_first=False)
    B, S, R = 1, 4, 8

    pg = ParamGen(seed=0)
    params = {"blocks": [init_block_params(pg, cfg) for _ in range(cfg["num_blocks"])],
              "linear": pg.linear(cfg["c_m"], cfg["c_s"])}

    key = jax.random.PRNGKey(0)
    k1, k2 = jax.random.split(key)
    m = jax.random.normal(k1, (B, S, R, cfg["c_m"]), jnp.float32)
    z = jax.random.normal(k2, (B, R, R, cfg["c_z"]), jnp.float32)
    msa_mask = jnp.ones((B, S, R), jnp.float32)
    pair_mask = jnp.ones((B, R, R), jnp.float32)

    fwd = jax.jit(partial(evoformer_stack_forward, cfg=cfg))
    m_out, z_out, s_out = fwd(m, z, msa_mask, pair_mask, params)
    jax.block_until_ready((m_out, z_out, s_out))

    assert m_out.shape == (B, S, R, cfg["c_m"])
    assert z_out.shape == (B, R, R, cfg["c_z"])
    assert s_out.shape == (B, R, cfg["c_s"])
    assert bool(jnp.all(jnp.isfinite(m_out))) and bool(jnp.all(jnp.isfinite(z_out))) \
        and bool(jnp.all(jnp.isfinite(s_out)))
    print("KERNEL_OK")
</pallas_src>

<mosaic_0001>
module attributes {stable_mosaic.version = 11 : i64} {
  func.func @_ln_linear_kernel(%arg0: i32, %arg1: memref<64x16xf32, #tpu.memory_space<vmem>>, %arg2: memref<1x16xf32, #tpu.memory_space<vmem>>, %arg3: memref<1x16xf32, #tpu.memory_space<vmem>>, %arg4: memref<16x4xf32, #tpu.memory_space<vmem>>, %arg5: memref<1x4xf32, #tpu.memory_space<vmem>>, %arg6: memref<64x4xf32, #tpu.memory_space<vmem>>) attributes {dimension_semantics = [#tpu.dimension_semantics<parallel>], iteration_bounds = array<i64: 1>, scalar_prefetch = 0 : i64, scratch_operands = 0 : i64, tpu.core_type = #tpu.core_type<tc>, window_params = [{transform_indices = @transform_0, window_bounds = array<i64: 64, 16>}, {pipeline_mode = #tpu.pipeline_mode<synchronous>, transform_indices = @transform_1, window_bounds = array<i64: 1, 16>}, {pipeline_mode = #tpu.pipeline_mode<synchronous>, transform_indices = @transform_2, window_bounds = array<i64: 1, 16>}, {pipeline_mode = #tpu.pipeline_mode<synchronous>, transform_indices = @transform_3, window_bounds = array<i64: 16, 4>}, {pipeline_mode = #tpu.pipeline_mode<synchronous>, transform_indices = @transform_4, window_bounds = array<i64: 1, 4>}, {transform_indices = @transform_5, window_bounds = array<i64: 64, 4>}]} {
    %c0 = arith.constant 0 : index
    %c0_0 = arith.constant 0 : index
    %0 = vector.load %arg1[%c0, %c0_0] : memref<64x16xf32, #tpu.memory_space<vmem>>, vector<64x16xf32>
    %c0_1 = arith.constant 0 : index
    %c0_2 = arith.constant 0 : index
    %1 = vector.load %arg2[%c0_1, %c0_2] : memref<1x16xf32, #tpu.memory_space<vmem>>, vector<1x16xf32>
    %c0_3 = arith.constant 0 : index
    %c0_4 = arith.constant 0 : index
    %2 = vector.load %arg3[%c0_3, %c0_4] : memref<1x16xf32, #tpu.memory_space<vmem>>, vector<1x16xf32>
    %cst = arith.constant dense<0.000000e+00> : vector<64xf32>
    %3 = vector.multi_reduction <add>, %0, %cst [1] : vector<64x16xf32> to vector<64xf32>
    %4 = vector.shape_cast %3 : vector<64xf32> to vector<64x1xf32>
    %cst_5 = arith.constant 1.600000e+01 : f32
    %5 = vector.broadcast %cst_5 : f32 to vector<64x1xf32>
    %6 = arith.divf %4, %5 : vector<64x1xf32>
    %7 = vector.broadcast %6 : vector<64x1xf32> to vector<64x16xf32>
    %8 = arith.subf %0, %7 : vector<64x16xf32>
    %9 = arith.mulf %8, %8 : vector<64x16xf32>
    %cst_6 = arith.constant dense<0.000000e+00> : vector<64xf32>
    %10 = vector.multi_reduction <add>, %9, %cst_6 [1] : vector<64x16xf32> to vector<64xf32>
    %11 = vector.shape_cast %10 : vector<64xf32> to vector<64x1xf32>
    %cst_7 = arith.constant 1.600000e+01 : f32
    %12 = vector.broadcast %cst_7 : f32 to vector<64x1xf32>
    %13 = arith.divf %11, %12 : vector<64x1xf32>
    %14 = vector.broadcast %6 : vector<64x1xf32> to vector<64x16xf32>
    %15 = arith.subf %0, %14 : vector<64x16xf32>
    %cst_8 = arith.constant 9.99999974E-6 : f32
    %16 = vector.broadcast %cst_8 : f32 to vector<64x1xf32>
    %17 = arith.addf %13, %16 : vector<64x1xf32>
    %18 = math.rsqrt %17 : vector<64x1xf32>
    %19 = vector.broadcast %18 : vector<64x1xf32> to vector<64x16xf32>
    %20 = arith.mulf %15, %19 : vector<64x16xf32>
    %21 = vector.broadcast %1 : vector<1x16xf32> to vector<64x16xf32>
    %22 = arith.mulf %20, %21 : vector<64x16xf32>
    %23 = vector.broadcast %2 : vector<1x16xf32> to vector<64x16xf32>
    %24 = arith.addf %22, %23 : vector<64x16xf32>
    %c0_9 = arith.constant 0 : index
    %c0_10 = arith.constant 0 : index
    %25 = vector.load %arg4[%c0_9, %c0_10] : memref<16x4xf32, #tpu.memory_space<vmem>>, vector<16x4xf32>
    %c0_11 = arith.constant 0 : index
    %c0_12 = arith.constant 0 : index
    %26 = vector.load %arg5[%c0_11, %c0_12] : memref<1x4xf32, #tpu.memory_space<vmem>>, vector<1x4xf32>
    %cst_13 = arith.constant dense<0.000000e+00> : vector<64x4xf32>
    %27 = tpu.matmul %24, %25, %cst_13 {dimension_numbers = #tpu.dot_dimension_numbers<[1], [0], [0], [1], [0, 0, 1, 1], [], []>} : vector<64x16xf32>, vector<16x4xf32>, vector<64x4xf32> -> vector<64x4xf32>
    %28 = vector.broadcast %26 : vector<1x4xf32> to vector<64x4xf32>
    %29 = arith.addf %27, %28 : vector<64x4xf32>
    %c0_14 = arith.constant 0 : index
    %c0_15 = arith.constant 0 : index
    %30 = vector.load %arg6[%c0_14, %c0_15] : memref<64x4xf32, #tpu.memory_space<vmem>>, vector<64x4xf32>
    tpu.vector_store %arg6[%c0_14, %c0_15], %29 {strides = array<i32>} : memref<64x4xf32, #tpu.memory_space<vmem>>, vector<64x4xf32>,
    return
  }
  func.func @transform_0(%arg0: i32) -> (i32, i32) {
    %c0_i32 = arith.constant 0 : i32
    %c0_i32_0 = arith.constant 0 : i32
    return %arg0, %c0_i32 : i32, i32
  }
  func.func @transform_1(%arg0: i32) -> (i32, i32) {
    %c0_i32 = arith.constant 0 : i32
    %c0_i32_0 = arith.constant 0 : i32
    %c0_i32_1 = arith.constant 0 : i32
    return %c0_i32, %c0_i32_0 : i32, i32
  }
  func.func @transform_2(%arg0: i32) -> (i32, i32) {
    %c0_i32 = arith.constant 0 : i32
    %c0_i32_0 = arith.constant 0 : i32
    %c0_i32_1 = arith.constant 0 : i32
    return %c0_i32, %c0_i32_0 : i32, i32
  }
  func.func @transform_3(%arg0: i32) -> (i32, i32) {
    %c0_i32 = arith.constant 0 : i32
    %c0_i32_0 = arith.constant 0 : i32
    %c0_i32_1 = arith.constant 0 : i32
    return %c0_i32, %c0_i32_0 : i32, i32
  }
  func.func @transform_4(%arg0: i32) -> (i32, i32) {
    %c0_i32 = arith.constant 0 : i32
    %c0_i32_0 = arith.constant 0 : i32
    %c0_i32_1 = arith.constant 0 : i32
    return %c0_i32, %c0_i32_0 : i32, i32
  }
  func.func @transform_5(%arg0: i32) -> (i32, i32) {
    %c0_i32 = arith.constant 0 : i32
    %c0_i32_0 = arith.constant 0 : i32
    return %arg0, %c0_i32 : i32, i32
  }
}

module attributes {stable_mosaic.version = 11 : i64} {
  func.func @_fused_attention_kernel(%arg0: i32, %arg1: i32, %arg2: memref<1x1x8x32xf32, #tpu.memory_space<vmem>>, %arg3: memref<1x4x8x8xbf16, #tpu.memory_space<vmem>>, %arg4: memref<1x1x1x8xf32, #tpu.memory_space<vmem>>, %arg5: memref<1x32xf32, #tpu.memory_space<vmem>>, %arg6: memref<1x32xf32, #tpu.memory_space<vmem>>, %arg7: memref<32x128xbf16, #tpu.memory_space<vmem>>, %arg8: memref<1x128xf32, #tpu.memory_space<vmem>>, %arg9: memref<32x32xbf16, #tpu.memory_space<vmem>>, %arg10: memref<1x32xf32, #tpu.memory_space<vmem>>, %arg11: memref<1x1x8x32xf32, #tpu.memory_space<vmem>>) attributes {dimension_semantics = [#tpu.dimension_semantics<parallel>, #tpu.dimension_semantics<parallel>], iteration_bounds = array<i64: 1, 4>, scalar_prefetch = 0 : i64, scratch_operands = 0 : i64, tpu.core_type = #tpu.core_type<tc>, window_params = [{transform_indices = @transform_0, window_bounds = array<i64: 1, 1, 8, 32>}, {transform_indices = @transform_1, window_bounds = array<i64: 1, 4, 8, 8>}, {transform_indices = @transform_2, window_bounds = array<i64: 1, 1, 1, 8>}, {pipeline_mode = #tpu.pipeline_mode<synchronous>, transform_indices = @transform_3, window_bounds = array<i64: 1, 32>}, {pipeline_mode = #tpu.pipeline_mode<synchronous>, transform_indices = @transform_4, window_bounds = array<i64: 1, 32>}, {pipeline_mode = #tpu.pipeline_mode<synchronous>, transform_indices = @transform_5, window_bounds = array<i64: 32, 128>}, {pipeline_mode = #tpu.pipeline_mode<synchronous>, transform_indices = @transform_6, window_bounds = array<i64: 1, 128>}, {pipeline_mode = #tpu.pipeline_mode<synchronous>, transform_indices = @transform_7, window_bounds = array<i64: 32, 32>}, {pipeline_mode = #tpu.pipeline_mode<synchronous>, transform_indices = @transform_8, window_bounds = array<i64: 1, 32>}, {transform_indices = @transform_9, window_bounds = array<i64: 1, 1, 8, 32>}]} {
    %c0 = arith.constant 0 : index
    %c0_0 = arith.constant 0 : index
    %c0_1 = arith.constant 0 : index
    %c0_2 = arith.constant 0 : index
    %0 = vector.load %arg2[%c0, %c0_0, %c0_1, %c0_2] : memref<1x1x8x32xf32, #tpu.memory_space<vmem>>, vector<1x1x8x32xf32>
    %1 = vector.shape_cast %0 : vector<1x1x8x32xf32> to vector<8x32xf32>
    %c0_3 = arith.constant 0 : index
    %c0_4 = arith.constant 0 : index
    %2 = vector.load %arg5[%c0_3, %c0_4] : memref<1x32xf32, #tpu.memory_space<vmem>>, vector<1x32xf32>
    %c0_5 = arith.constant 0 : index
    %c0_6 = arith.constant 0 : index
    %3 = vector.load %arg6[%c0_5, %c0_6] : memref<1x32xf32, #tpu.memory_space<vmem>>, vector<1x32xf32>
    %cst = arith.constant dense<0.000000e+00> : vector<8xf32>
    %4 = vector.multi_reduction <add>, %1, %cst [1] : vector<8x32xf32> to vector<8xf32>
    %5 = vector.shape_cast %4 : vector<8xf32> to vector<8x1xf32>
    %cst_7 = arith.constant 3.200000e+01 : f32
    %6 = vector.broadcast %cst_7 : f32 to vector<8x1xf32>
    %7 = arith.divf %5, %6 : vector<8x1xf32>
    %8 = vector.broadcast %7 : vector<8x1xf32> to vector<8x32xf32>
    %9 = arith.subf %1, %8 : vector<8x32xf32>
    %10 = arith.mulf %9, %9 : vector<8x32xf32>
    %cst_8 = arith.constant dense<0.000000e+00> : vector<8xf32>
    %11 = vector.multi_reduction <add>, %10, %cst_8 [1] : vector<8x32xf32> to vector<8xf32>
    %12 = vector.shape_cast %11 : vector<8xf32> to vector<8x1xf32>
    %cst_9 = arith.constant 3.200000e+01 : f32
    %13 = vector.broadcast %cst_9 : f32 to vector<8x1xf32>
    %14 = arith.divf %12, %13 : vector<8x1xf32>
    %15 = vector.broadcast %7 : vector<8x1xf32> to vector<8x32xf32>
    %16 = arith.subf %1, %15 : vector<8x32xf32>
    %cst_10 = arith.constant 9.99999974E-6 : f32
    %17 = vector.broadcast %cst_10 : f32 to vector<8x1xf32>
    %18 = arith.addf %14, %17 : vector<8x1xf32>
    %19 = math.rsqrt %18 : vector<8x1xf32>
    %20 = vector.broadcast %19 : vector<8x1xf32> to vector<8x32xf32>
    %21 = arith.mulf %16, %20 : vector<8x32xf32>
    %22 = vector.broadcast %2 : vector<1x32xf32> to vector<8x32xf32>
    %23 = arith.mulf %21, %22 : vector<8x32xf32>
    %24 = vector.broadcast %3 : vector<1x32xf32> to vector<8x32xf32>
    %25 = arith.addf %23, %24 : vector<8x32xf32>
    %26 = arith.truncf %25 : vector<8x32xf32> to vector<8x32xbf16>
    %c0_11 = arith.constant 0 : index
    %c0_12 = arith.constant 0 : index
    %27 = vector.load %arg7[%c0_11, %c0_12] : memref<32x128xbf16, #tpu.memory_space<vmem>>, vector<32x128xbf16>
    %cst_13 = arith.constant dense<0.000000e+00> : vector<8x128xf32>
    %28 = tpu.matmul %26, %27, %cst_13 {dimension_numbers = #tpu.dot_dimension_numbers<[1], [0], [0], [1], [0, 0, 1, 1], [], []>} : vector<8x32xbf16>, vector<32x128xbf16>, vector<8x128xf32> -> vector<8x128xf32>
    %c0_14 = arith.constant 0 : index
    %c0_15 = arith.constant 0 : index
    %29 = vector.load %arg8[%c0_14, %c0_15] : memref<1x128xf32, #tpu.memory_space<vmem>>, vector<1x128xf32>
    %30 = vector.broadcast %29 : vector<1x128xf32> to vector<8x128xf32>
    %31 = arith.addf %28, %30 : vector<8x128xf32>
    %c0_16 = arith.constant 0 : index
    %c0_17 = arith.constant 0 : index
    %c0_18 = arith.constant 0 : index
    %c0_19 = arith.constant 0 : index
    %32 = vector.load %arg4[%c0_16, %c0_17, %c0_18, %c0_19] : memref<1x1x1x8xf32, #tpu.memory_space<vmem>>, vector<1x1x1x8xf32>
    %33 = vector.shape_cast %32 : vector<1x1x1x8xf32> to vector<1x8xf32>
    %cst_20 = arith.constant 1.000000e+00 : f32
    %34 = vector.broadcast %cst_20 : f32 to vector<1x8xf32>
    %35 = arith.subf %33, %34 : vector<1x8xf32>
    %cst_21 = arith.constant 1.000000e+09 : f32
    %36 = vector.broadcast %cst_21 : f32 to vector<1x8xf32>
    %37 = arith.mulf %35, %36 : vector<1x8xf32>
    %38 = vector.extract_strided_slice %31 {offsets = [0, 0], sizes = [8, 8], strides = [1, 1]} : vector<8x128xf32> to vector<8x8xf32>
    %cst_22 = arith.constant 0.353553385 : f32
    %39 = vector.broadcast %cst_22 : f32 to vector<8x8xf32>
    %40 = arith.mulf %38, %39 : vector<8x8xf32>
    %41 = arith.truncf %40 : vector<8x8xf32> to vector<8x8xbf16>
    %42 = vector.extract_strided_slice %31 {offsets = [0, 32], sizes = [8, 8], strides = [1, 1]} : vector<8x128xf32> to vector<8x8xf32>
    %43 = arith.truncf %42 : vector<8x8xf32> to vector<8x8xbf16>
    %44 = vector.extract_strided_slice %31 {offsets = [0, 64], sizes = [8, 8], strides = [1, 1]} : vector<8x128xf32> to vector<8x8xf32>
    %cst_23 = arith.constant dense<0.000000e+00> : vector<8x8xf32>
    %45 = tpu.matmul %41, %43, %cst_23 {dimension_numbers = #tpu.dot_dimension_numbers<[1], [1], [0], [0], [0, 0, 1, 0], [], []>} : vector<8x8xbf16>, vector<8x8xbf16>, vector<8x8xf32> -> vector<8x8xf32>
    %c0_24 = arith.constant 0 : index
    %c0_25 = arith.constant 0 : index
    %c0_26 = arith.constant 0 : index
    %c0_27 = arith.constant 0 : index
    %46 = vector.load %arg3[%c0_24, %c0_25, %c0_26, %c0_27] : memref<1x4x8x8xbf16, #tpu.memory_space<vmem>>, vector<1x1x8x8xbf16>
    %47 = vector.shape_cast %46 : vector<1x1x8x8xbf16> to vector<8x8xbf16>
    %48 = arith.extf %47 : vector<8x8xbf16> to vector<8x8xf32>
    %49 = arith.addf %45, %48 : vector<8x8xf32>
    %50 = vector.broadcast %37 : vector<1x8xf32> to vector<8x8xf32>
    %51 = arith.addf %49, %50 : vector<8x8xf32>
    %cst_28 = arith.constant dense<0xFF800000> : vector<8xf32>
    %52 = vector.multi_reduction <maximumf>, %51, %cst_28 [1] : vector<8x8xf32> to vector<8xf32>
    %53 = vector.shape_cast %52 : vector<8xf32> to vector<8x1xf32>
    %54 = vector.broadcast %53 : vector<8x1xf32> to vector<8x8xf32>
    %55 = arith.subf %51, %54 : vector<8x8xf32>
    %56 = math.exp %55 : vector<8x8xf32>
    %cst_29 = arith.constant dense<0.000000e+00> : vector<8xf32>
    %57 = vector.multi_reduction <add>, %56, %cst_29 [1] : vector<8x8xf32> to vector<8xf32>
    %58 = vector.shape_cast %57 : vector<8xf32> to vector<8x1xf32>
    %59 = tpu.reciprocal %58 {approx = true} : vector<8x1xf32> -> vector<8x1xf32>
    %60 = vector.broadcast %59 : vector<8x1xf32> to vector<8x8xf32>
    %61 = arith.mulf %56, %60 : vector<8x8xf32>
    %62 = arith.truncf %61 : vector<8x8xf32> to vector<8x8xbf16>
    %63 = arith.truncf %44 : vector<8x8xf32> to vector<8x8xbf16>
    %cst_30 = arith.constant dense<0.000000e+00> : vector<8x8xf32>
    %64 = tpu.matmul %62, %63, %cst_30 {dimension_numbers = #tpu.dot_dimension_numbers<[1], [0], [0], [1], [0, 0, 1, 1], [], []>} : vector<8x8xbf16>, vector<8x8xbf16>, vector<8x8xf32> -> vector<8x8xf32>
    %65 = vector.extract_strided_slice %31 {offsets = [0, 8], sizes = [8, 8], strides = [1, 1]} : vector<8x128xf32> to vector<8x8xf32>
    %cst_31 = arith.constant 0.353553385 : f32
    %66 = vector.broadcast %cst_31 : f32 to vector<8x8xf32>
    %67 = arith.mulf %65, %66 : vector<8x8xf32>
    %68 = arith.truncf %67 : vector<8x8xf32> to vector<8x8xbf16>
    %69 = vector.extract_strided_slice %31 {offsets = [0, 40], sizes = [8, 8], strides = [1, 1]} : vector<8x128xf32> to vector<8x8xf32>
    %70 = arith.truncf %69 : vector<8x8xf32> to vector<8x8xbf16>
    %71 = vector.extract_strided_slice %31 {offsets = [0, 72], sizes = [8, 8], strides = [1, 1]} : vector<8x128xf32> to vector<8x8xf32>
    %cst_32 = arith.constant dense<0.000000e+00> : vector<8x8xf32>
    %72 = tpu.matmul %68, %70, %cst_32 {dimension_numbers = #tpu.dot_dimension_numbers<[1], [1], [0], [0], [0, 0, 1, 0], [], []>} : vector<8x8xbf16>, vector<8x8xbf16>, vector<8x8xf32> -> vector<8x8xf32>
    %c0_33 = arith.constant 0 : index
    %c1 = arith.constant 1 : index
    %c0_34 = arith.constant 0 : index
    %c0_35 = arith.constant 0 : index
    %73 = vector.load %arg3[%c0_33, %c1, %c0_34, %c0_35] : memref<1x4x8x8xbf16, #tpu.memory_space<vmem>>, vector<1x1x8x8xbf16>
    %74 = vector.shape_cast %73 : vector<1x1x8x8xbf16> to vector<8x8xbf16>
    %75 = arith.extf %74 : vector<8x8xbf16> to vector<8x8xf32>
    %76 = arith.addf %72, %75 : vector<8x8xf32>
    %77 = vector.broadcast %37 : vector<1x8xf32> to vector<8x8xf32>
    %78 = arith.addf %76, %77 : vector<8x8xf32>
    %cst_36 = arith.constant dense<0xFF800000> : vector<8xf32>
    %79 = vector.multi_reduction <maximumf>, %78, %cst_36 [1] : vector<8x8xf32> to vector<8xf32>
    %80 = vector.shape_cast %79 : vector<8xf32> to vector<8x1xf32>
    %81 = vector.broadcast %80 : vector<8x1xf32> to vector<8x8xf32>
    %82 = arith.subf %78, %81 : vector<8x8xf32>
    %83 = math.exp %82 : vector<8x8xf32>
    %cst_37 = arith.constant dense<0.000000e+00> : vector<8xf32>
    %84 = vector.multi_reduction <add>, %83, %cst_37 [1] : vector<8x8xf32> to vector<8xf32>
    %85 = vector.shape_cast %84 : vector<8xf32> to vector<8x1xf32>
    %86 = tpu.reciprocal %85 {approx = true} : vector<8x1xf32> -> vector<8x1xf32>
    %87 = vector.broadcast %86 : vector<8x1xf32> to vector<8x8xf32>
    %88 = arith.mulf %83, %87 : vector<8x8xf32>
    %89 = arith.truncf %88 : vector<8x8xf32> to vector<8x8xbf16>
    %90 = arith.truncf %71 : vector<8x8xf32> to vector<8x8xbf16>
    %cst_38 = arith.constant dense<0.000000e+00> : vector<8x8xf32>
    %91 = tpu.matmul %89, %90, %cst_38 {dimension_numbers = #tpu.dot_dimension_numbers<[1], [0], [0], [1], [0, 0, 1, 1], [], []>} : vector<8x8xbf16>, vector<8x8xbf16>, vector<8x8xf32> -> vector<8x8xf32>
    %92 = vector.extract_strided_slice %31 {offsets = [0, 16], sizes = [8, 8], strides = [1, 1]} : vector<8x128xf32> to vector<8x8xf32>
    %cst_39 = arith.constant 0.353553385 : f32
    %93 = vector.broadcast %cst_39 : f32 to vector<8x8xf32>
    %94 = arith.mulf %92, %93 : vector<8x8xf32>
    %95 = arith.truncf %94 : vector<8x8xf32> to vector<8x8xbf16>
    %96 = vector.extract_strided_slice %31 {offsets = [0, 48], sizes = [8, 8], strides = [1, 1]} : vector<8x128xf32> to vector<8x8xf32>
    %97 = arith.truncf %96 : vector<8x8xf32> to vector<8x8xbf16>
    %98 = vector.extract_strided_slice %31 {offsets = [0, 80], sizes = [8, 8], strides = [1, 1]} : vector<8x128xf32> to vector<8x8xf32>
    %cst_40 = arith.constant dense<0.000000e+00> : vector<8x8xf32>
    %99 = tpu.matmul %95, %97, %cst_40 {dimension_numbers = #tpu.dot_dimension_numbers<[1], [1], [0], [0], [0, 0, 1, 0], [], []>} : vector<8x8xbf16>, vector<8x8xbf16>, vector<8x8xf32> -> vector<8x8xf32>
    %c0_41 = arith.constant 0 : index
    %c2 = arith.constant 2 : index
    %c0_42 = arith.constant 0 : index
    %c0_43 = arith.constant 0 : index
    %100 = vector.load %arg3[%c0_41, %c2, %c0_42, %c0_43] : memref<1x4x8x8xbf16, #tpu.memory_space<vmem>>, vector<1x1x8x8xbf16>
    %101 = vector.shape_cast %100 : vector<1x1x8x8xbf16> to vector<8x8xbf16>
    %102 = arith.extf %101 : vector<8x8xbf16> to vector<8x8xf32>
    %103 = arith.addf %99, %102 : vector<8x8xf32>
    %104 = vector.broadcast %37 : vector<1x8xf32> to vector<8x8xf32>
    %105 = arith.addf %103, %104 : vector<8x8xf32>
    %cst_44 = arith.constant dense<0xFF800000> : vector<8xf32>
    %106 = vector.multi_reduction <maximumf>, %105, %cst_44 [1] : vector<8x8xf32> to vector<8xf32>
    %107 = vector.shape_cast %106 : vector<8xf32> to vector<8x1xf32>
    %108 = vector.broadcast %107 : vector<8x1xf32> to vector<8x8xf32>
    %109 = arith.subf %105, %108 : vector<8x8xf32>
    %110 = math.exp %109 : vector<8x8xf32>
    %cst_45 = arith.constant dense<0.000000e+00> : vector<8xf32>
    %111 = vector.multi_reduction <add>, %110, %cst_45 [1] : vector<8x8xf32> to vector<8xf32>
    %112 = vector.shape_cast %111 : vector<8xf32> to vector<8x1xf32>
    %113 = tpu.reciprocal %112 {approx = true} : vector<8x1xf32> -> vector<8x1xf32>
    %114 = vector.broadcast %113 : vector<8x1xf32> to vector<8x8xf32>
    %115 = arith.mulf %110, %114 : vector<8x8xf32>
    %116 = arith.truncf %115 : vector<8x8xf32> to vector<8x8xbf16>
    %117 = arith.truncf %98 : vector<8x8xf32> to vector<8x8xbf16>
    %cst_46 = arith.constant dense<0.000000e+00> : vector<8x8xf32>
    %118 = tpu.matmul %116, %117, %cst_46 {dimension_numbers = #tpu.dot_dimension_numbers<[1], [0], [0], [1], [0, 0, 1, 1], [], []>} : vector<8x8xbf16>, vector<8x8xbf16>, vector<8x8xf32> -> vector<8x8xf32>
    %119 = vector.extract_strided_slice %31 {offsets = [0, 24], sizes = [8, 8], strides = [1, 1]} : vector<8x128xf32> to vector<8x8xf32>
    %cst_47 = arith.constant 0.353553385 : f32
    %120 = vector.broadcast %cst_47 : f32 to vector<8x8xf32>
    %121 = arith.mulf %119, %120 : vector<8x8xf32>
    %122 = arith.truncf %121 : vector<8x8xf32> to vector<8x8xbf16>
    %123 = vector.extract_strided_slice %31 {offsets = [0, 56], sizes = [8, 8], strides = [1, 1]} : vector<8x128xf32> to vector<8x8xf32>
    %124 = arith.truncf %123 : vector<8x8xf32> to vector<8x8xbf16>
    %125 = vector.extract_strided_slice %31 {offsets = [0, 88], sizes = [8, 8], strides = [1, 1]} : vector<8x128xf32> to vector<8x8xf32>
    %cst_48 = arith.constant dense<0.000000e+00> : vector<8x8xf32>
    %126 = tpu.matmul %122, %124, %cst_48 {dimension_numbers = #tpu.dot_dimension_numbers<[1], [1], [0], [0], [0, 0, 1, 0], [], []>} : vector<8x8xbf16>, vector<8x8xbf16>, vector<8x8xf32> -> vector<8x8xf32>
    %c0_49 = arith.constant 0 : index
    %c3 = arith.constant 3 : index
    %c0_50 = arith.constant 0 : index
    %c0_51 = arith.constant 0 : index
    %127 = vector.load %arg3[%c0_49, %c3, %c0_50, %c0_51] : memref<1x4x8x8xbf16, #tpu.memory_space<vmem>>, vector<1x1x8x8xbf16>
    %128 = vector.shape_cast %127 : vector<1x1x8x8xbf16> to vector<8x8xbf16>
    %129 = arith.extf %128 : vector<8x8xbf16> to vector<8x8xf32>
    %130 = arith.addf %126, %129 : vector<8x8xf32>
    %131 = vector.broadcast %37 : vector<1x8xf32> to vector<8x8xf32>
    %132 = arith.addf %130, %131 : vector<8x8xf32>
    %cst_52 = arith.constant dense<0xFF800000> : vector<8xf32>
    %133 = vector.multi_reduction <maximumf>, %132, %cst_52 [1] : vector<8x8xf32> to vector<8xf32>
    %134 = vector.shape_cast %133 : vector<8xf32> to vector<8x1xf32>
    %135 = vector.broadcast %134 : vector<8x1xf32> to vector<8x8xf32>
    %136 = arith.subf %132, %135 : vector<8x8xf32>
    %137 = math.exp %136 : vector<8x8xf32>
    %cst_53 = arith.constant dense<0.000000e+00> : vector<8xf32>
    %138 = vector.multi_reduction <add>, %137, %cst_53 [1] : vector<8x8xf32> to vector<8xf32>
    %139 = vector.shape_cast %138 : vector<8xf32> to vector<8x1xf32>
    %140 = tpu.reciprocal %139 {approx = true} : vector<8x1xf32> -> vector<8x1xf32>
    %141 = vector.broadcast %140 : vector<8x1xf32> to vector<8x8xf32>
    %142 = arith.mulf %137, %141 : vector<8x8xf32>
    %143 = arith.truncf %142 : vector<8x8xf32> to vector<8x8xbf16>
    %144 = arith.truncf %125 : vector<8x8xf32> to vector<8x8xbf16>
    %cst_54 = arith.constant dense<0.000000e+00> : vector<8x8xf32>
    %145 = tpu.matmul %143, %144, %cst_54 {dimension_numbers = #tpu.dot_dimension_numbers<[1], [0], [0], [1], [0, 0, 1, 1], [], []>} : vector<8x8xbf16>, vector<8x8xbf16>, vector<8x8xf32> -> vector<8x8xf32>
    %146 = vector.extract_strided_slice %31 {offsets = [0, 96], sizes = [8, 32], strides = [1, 1]} : vector<8x128xf32> to vector<8x32xf32>
    %147 = arith.negf %146 : vector<8x32xf32>
    %148 = math.exp %147 : vector<8x32xf32>
    %cst_55 = arith.constant 1.000000e+00 : f32
    %149 = vector.broadcast %cst_55 : f32 to vector<8x32xf32>
    %150 = arith.addf %149, %148 : vector<8x32xf32>
    %151 = arith.divf %149, %150 : vector<8x32xf32>
    %152 = tpu.concatenate %64, %91, %118, %145 in 1 : vector<8x8xf32>, vector<8x8xf32>, vector<8x8xf32>, vector<8x8xf32> -> vector<8x32xf32>
    %153 = arith.mulf %152, %151 : vector<8x32xf32>
    %154 = arith.truncf %153 : vector<8x32xf32> to vector<8x32xbf16>
    %c0_56 = arith.constant 0 : index
    %c0_57 = arith.constant 0 : index
    %155 = vector.load %arg9[%c0_56, %c0_57] : memref<32x32xbf16, #tpu.memory_space<vmem>>, vector<32x32xbf16>
    %cst_58 = arith.constant dense<0.000000e+00> : vector<8x32xf32>
    %156 = tpu.matmul %154, %155, %cst_58 {dimension_numbers = #tpu.dot_dimension_numbers<[1], [0], [0], [1], [0, 0, 1, 1], [], []>} : vector<8x32xbf16>, vector<32x32xbf16>, vector<8x32xf32> -> vector<8x32xf32>
    %c0_59 = arith.constant 0 : index
    %c0_60 = arith.constant 0 : index
    %157 = vector.load %arg10[%c0_59, %c0_60] : memref<1x32xf32, #tpu.memory_space<vmem>>, vector<1x32xf32>
    %158 = vector.broadcast %157 : vector<1x32xf32> to vector<8x32xf32>
    %159 = arith.addf %156, %158 : vector<8x32xf32>
    %c0_61 = arith.constant 0 : index
    %c0_62 = arith.constant 0 : index
    %c0_63 = arith.constant 0 : index
    %c0_64 = arith.constant 0 : index
    %160 = vector.load %arg11[%c0_61, %c0_62, %c0_63, %c0_64] : memref<1x1x8x32xf32, #tpu.memory_space<vmem>>, vector<1x1x8x32xf32>
    %161 = vector.shape_cast %160 : vector<1x1x8x32xf32> to vector<8x32xf32>
    %162 = vector.shape_cast %159 : vector<8x32xf32> to vector<1x1x8x32xf32>
    tpu.vector_store %arg11[%c0_61, %c0_62, %c0_63, %c0_64], %162 {strides = array<i32>} : memref<1x1x8x32xf32, #tpu.memory_space<vmem>>, vector<1x1x8x32xf32>,
    return
  }
  func.func @transform_0(%arg0: i32, %arg1: i32) -> (i32, i32, i32, i32) {
    %c0_i32 = arith.constant 0 : i32
    %c0_i32_0 = arith.constant 0 : i32
    %c0_i32_1 = arith.constant 0 : i32
    return %arg0, %arg1, %c0_i32, %c0_i32_0 : i32, i32, i32, i32
  }
  func.func @transform_1(%arg0: i32, %arg1: i32) -> (i32, i32, i32, i32) {
    %c0_i32 = arith.constant 0 : i32
    %c0_i32_0 = arith.constant 0 : i32
    %c0_i32_1 = arith.constant 0 : i32
    %c0_i32_2 = arith.constant 0 : i32
    return %arg0, %c0_i32, %c0_i32_0, %c0_i32_1 : i32, i32, i32, i32
  }
  func.func @transform_2(%arg0: i32, %arg1: i32) -> (i32, i32, i32, i32) {
    %c0_i32 = arith.constant 0 : i32
    %c0_i32_0 = arith.constant 0 : i32
    %c0_i32_1 = arith.constant 0 : i32
    return %arg0, %arg1, %c0_i32, %c0_i32_0 : i32, i32, i32, i32
  }
  func.func @transform_3(%arg0: i32, %arg1: i32) -> (i32, i32) {
    %c0_i32 = arith.constant 0 : i32
    %c0_i32_0 = arith.constant 0 : i32
    %c0_i32_1 = arith.constant 0 : i32
    return %c0_i32, %c0_i32_0 : i32, i32
  }
  func.func @transform_4(%arg0: i32, %arg1: i32) -> (i32, i32) {
    %c0_i32 = arith.constant 0 : i32
    %c0_i32_0 = arith.constant 0 : i32
    %c0_i32_1 = arith.constant 0 : i32
    return %c0_i32, %c0_i32_0 : i32, i32
  }
  func.func @transform_5(%arg0: i32, %arg1: i32) -> (i32, i32) {
    %c0_i32 = arith.constant 0 : i32
    %c0_i32_0 = arith.constant 0 : i32
    %c0_i32_1 = arith.constant 0 : i32
    return %c0_i32, %c0_i32_0 : i32, i32
  }
  func.func @transform_6(%arg0: i32, %arg1: i32) -> (i32, i32) {
    %c0_i32 = arith.constant 0 : i32
    %c0_i32_0 = arith.constant 0 : i32
    %c0_i32_1 = arith.constant 0 : i32
    return %c0_i32, %c0_i32_0 : i32, i32
  }
  func.func @transform_7(%arg0: i32, %arg1: i32) -> (i32, i32) {
    %c0_i32 = arith.constant 0 : i32
    %c0_i32_0 = arith.constant 0 : i32
    %c0_i32_1 = arith.constant 0 : i32
    return %c0_i32, %c0_i32_0 : i32, i32
  }
  func.func @transform_8(%arg0: i32, %arg1: i32) -> (i32, i32) {
    %c0_i32 = arith.constant 0 : i32
    %c0_i32_0 = arith.constant 0 : i32
    %c0_i32_1 = arith.constant 0 : i32
    return %c0_i32, %c0_i32_0 : i32, i32
  }
  func.func @transform_9(%arg0: i32, %arg1: i32) -> (i32, i32, i32, i32) {
    %c0_i32 = arith.constant 0 : i32
    %c0_i32_0 = arith.constant 0 : i32
    %c0_i32_1 = arith.constant 0 : i32
    return %arg0, %arg1, %c0_i32, %c0_i32_0 : i32, i32, i32, i32
  }
}

module attributes {stable_mosaic.version = 11 : i64} {
  func.func @_fused_attention_kernel(%arg0: i32, %arg1: i32, %arg2: memref<1x1x4x32xf32, #tpu.memory_space<vmem>>, %arg3: memref<1x1x1x4xf32, #tpu.memory_space<vmem>>, %arg4: memref<1x32xf32, #tpu.memory_space<vmem>>, %arg5: memref<1x32xf32, #tpu.memory_space<vmem>>, %arg6: memref<32x128xbf16, #tpu.memory_space<vmem>>, %arg7: memref<1x128xf32, #tpu.memory_space<vmem>>, %arg8: memref<32x32xbf16, #tpu.memory_space<vmem>>, %arg9: memref<1x32xf32, #tpu.memory_space<vmem>>, %arg10: memref<1x1x4x32xf32, #tpu.memory_space<vmem>>) attributes {dimension_semantics = [#tpu.dimension_semantics<parallel>, #tpu.dimension_semantics<parallel>], iteration_bounds = array<i64: 1, 8>, scalar_prefetch = 0 : i64, scratch_operands = 0 : i64, tpu.core_type = #tpu.core_type<tc>, window_params = [{transform_indices = @transform_0, window_bounds = array<i64: 1, 1, 4, 32>}, {transform_indices = @transform_1, window_bounds = array<i64: 1, 1, 1, 4>}, {pipeline_mode = #tpu.pipeline_mode<synchronous>, transform_indices = @transform_2, window_bounds = array<i64: 1, 32>}, {pipeline_mode = #tpu.pipeline_mode<synchronous>, transform_indices = @transform_3, window_bounds = array<i64: 1, 32>}, {pipeline_mode = #tpu.pipeline_mode<synchronous>, transform_indices = @transform_4, window_bounds = array<i64: 32, 128>}, {pipeline_mode = #tpu.pipeline_mode<synchronous>, transform_indices = @transform_5, window_bounds = array<i64: 1, 128>}, {pipeline_mode = #tpu.pipeline_mode<synchronous>, transform_indices = @transform_6, window_bounds = array<i64: 32, 32>}, {pipeline_mode = #tpu.pipeline_mode<synchronous>, transform_indices = @transform_7, window_bounds = array<i64: 1, 32>}, {transform_indices = @transform_8, window_bounds = array<i64: 1, 1, 4, 32>}]} {
    %c0 = arith.constant 0 : index
    %c0_0 = arith.constant 0 : index
    %c0_1 = arith.constant 0 : index
    %c0_2 = arith.constant 0 : index
    %0 = vector.load %arg2[%c0, %c0_0, %c0_1, %c0_2] : memref<1x1x4x32xf32, #tpu.memory_space<vmem>>, vector<1x1x4x32xf32>
    %1 = vector.shape_cast %0 : vector<1x1x4x32xf32> to vector<4x32xf32>
    %c0_3 = arith.constant 0 : index
    %c0_4 = arith.constant 0 : index
    %2 = vector.load %arg4[%c0_3, %c0_4] : memref<1x32xf32, #tpu.memory_space<vmem>>, vector<1x32xf32>
    %c0_5 = arith.constant 0 : index
    %c0_6 = arith.constant 0 : index
    %3 = vector.load %arg5[%c0_5, %c0_6] : memref<1x32xf32, #tpu.memory_space<vmem>>, vector<1x32xf32>
    %cst = arith.constant dense<0.000000e+00> : vector<4xf32>
    %4 = vector.multi_reduction <add>, %1, %cst [1] : vector<4x32xf32> to vector<4xf32>
    %5 = vector.shape_cast %4 : vector<4xf32> to vector<4x1xf32>
    %cst_7 = arith.constant 3.200000e+01 : f32
    %6 = vector.broadcast %cst_7 : f32 to vector<4x1xf32>
    %7 = arith.divf %5, %6 : vector<4x1xf32>
    %8 = vector.broadcast %7 : vector<4x1xf32> to vector<4x32xf32>
    %9 = arith.subf %1, %8 : vector<4x32xf32>
    %10 = arith.mulf %9, %9 : vector<4x32xf32>
    %cst_8 = arith.constant dense<0.000000e+00> : vector<4xf32>
    %11 = vector.multi_reduction <add>, %10, %cst_8 [1] : vector<4x32xf32> to vector<4xf32>
    %12 = vector.shape_cast %11 : vector<4xf32> to vector<4x1xf32>
    %cst_9 = arith.constant 3.200000e+01 : f32
    %13 = vector.broadcast %cst_9 : f32 to vector<4x1xf32>
    %14 = arith.divf %12, %13 : vector<4x1xf32>
    %15 = vector.broadcast %7 : vector<4x1xf32> to vector<4x32xf32>
    %16 = arith.subf %1, %15 : vector<4x32xf32>
    %cst_10 = arith.constant 9.99999974E-6 : f32
    %17 = vector.broadcast %cst_10 : f32 to vector<4x1xf32>
    %18 = arith.addf %14, %17 : vector<4x1xf32>
    %19 = math.rsqrt %18 : vector<4x1xf32>
    %20 = vector.broadcast %19 : vector<4x1xf32> to vector<4x32xf32>
    %21 = arith.mulf %16, %20 : vector<4x32xf32>
    %22 = vector.broadcast %2 : vector<1x32xf32> to vector<4x32xf32>
    %23 = arith.mulf %21, %22 : vector<4x32xf32>
    %24 = vector.broadcast %3 : vector<1x32xf32> to vector<4x32xf32>
    %25 = arith.addf %23, %24 : vector<4x32xf32>
    %26 = arith.truncf %25 : vector<4x32xf32> to vector<4x32xbf16>
    %c0_11 = arith.constant 0 : index
    %c0_12 = arith.constant 0 : index
    %27 = vector.load %arg6[%c0_11, %c0_12] : memref<32x128xbf16, #tpu.memory_space<vmem>>, vector<32x128xbf16>
    %cst_13 = arith.constant dense<0.000000e+00> : vector<4x128xf32>
    %28 = tpu.matmul %26, %27, %cst_13 {dimension_numbers = #tpu.dot_dimension_numbers<[1], [0], [0], [1], [0, 0, 1, 1], [], []>} : vector<4x32xbf16>, vector<32x128xbf16>, vector<4x128xf32> -> vector<4x128xf32>
    %c0_14 = arith.constant 0 : index
    %c0_15 = arith.constant 0 : index
    %29 = vector.load %arg7[%c0_14, %c0_15] : memref<1x128xf32, #tpu.memory_space<vmem>>, vector<1x128xf32>
    %30 = vector.broadcast %29 : vector<1x128xf32> to vector<4x128xf32>
    %31 = arith.addf %28, %30 : vector<4x128xf32>
    %c0_16 = arith.constant 0 : index
    %c0_17 = arith.constant 0 : index
    %c0_18 = arith.constant 0 : index
    %c0_19 = arith.constant 0 : index
    %32 = vector.load %arg3[%c0_16, %c0_17, %c0_18, %c0_19] : memref<1x1x1x4xf32, #tpu.memory_space<vmem>>, vector<1x1x1x4xf32>
    %33 = vector.shape_cast %32 : vector<1x1x1x4xf32> to vector<1x4xf32>
    %cst_20 = arith.constant 1.000000e+00 : f32
    %34 = vector.broadcast %cst_20 : f32 to vector<1x4xf32>
    %35 = arith.subf %33, %34 : vector<1x4xf32>
    %cst_21 = arith.constant 1.000000e+09 : f32
    %36 = vector.broadcast %cst_21 : f32 to vector<1x4xf32>
    %37 = arith.mulf %35, %36 : vector<1x4xf32>
    %38 = vector.extract_strided_slice %31 {offsets = [0, 0], sizes = [4, 8], strides = [1, 1]} : vector<4x128xf32> to vector<4x8xf32>
    %cst_22 = arith.constant 0.353553385 : f32
    %39 = vector.broadcast %cst_22 : f32 to vector<4x8xf32>
    %40 = arith.mulf %38, %39 : vector<4x8xf32>
    %41 = arith.truncf %40 : vector<4x8xf32> to vector<4x8xbf16>
    %42 = vector.extract_strided_slice %31 {offsets = [0, 32], sizes = [4, 8], strides = [1, 1]} : vector<4x128xf32> to vector<4x8xf32>
    %43 = arith.truncf %42 : vector<4x8xf32> to vector<4x8xbf16>
    %44 = vector.extract_strided_slice %31 {offsets = [0, 64], sizes = [4, 8], strides = [1, 1]} : vector<4x128xf32> to vector<4x8xf32>
    %cst_23 = arith.constant dense<0.000000e+00> : vector<4x4xf32>
    %45 = tpu.matmul %41, %43, %cst_23 {dimension_numbers = #tpu.dot_dimension_numbers<[1], [1], [0], [0], [0, 0, 1, 0], [], []>} : vector<4x8xbf16>, vector<4x8xbf16>, vector<4x4xf32> -> vector<4x4xf32>
    %46 = vector.broadcast %37 : vector<1x4xf32> to vector<4x4xf32>
    %47 = arith.addf %45, %46 : vector<4x4xf32>
    %cst_24 = arith.constant dense<0xFF800000> : vector<4xf32>
    %48 = vector.multi_reduction <maximumf>, %47, %cst_24 [1] : vector<4x4xf32> to vector<4xf32>
    %49 = vector.shape_cast %48 : vector<4xf32> to vector<4x1xf32>
    %50 = vector.broadcast %49 : vector<4x1xf32> to vector<4x4xf32>
    %51 = arith.subf %47, %50 : vector<4x4xf32>
    %52 = math.exp %51 : vector<4x4xf32>
    %cst_25 = arith.constant dense<0.000000e+00> : vector<4xf32>
    %53 = vector.multi_reduction <add>, %52, %cst_25 [1] : vector<4x4xf32> to vector<4xf32>
    %54 = vector.shape_cast %53 : vector<4xf32> to vector<4x1xf32>
    %55 = tpu.reciprocal %54 {approx = true} : vector<4x1xf32> -> vector<4x1xf32>
    %56 = vector.broadcast %55 : vector<4x1xf32> to vector<4x4xf32>
    %57 = arith.mulf %52, %56 : vector<4x4xf32>
    %58 = arith.truncf %57 : vector<4x4xf32> to vector<4x4xbf16>
    %59 = arith.truncf %44 : vector<4x8xf32> to vector<4x8xbf16>
    %cst_26 = arith.constant dense<0.000000e+00> : vector<4x8xf32>
    %60 = tpu.matmul %58, %59, %cst_26 {dimension_numbers = #tpu.dot_dimension_numbers<[1], [0], [0], [1], [0, 0, 1, 1], [], []>} : vector<4x4xbf16>, vector<4x8xbf16>, vector<4x8xf32> -> vector<4x8xf32>
    %61 = vector.extract_strided_slice %31 {offsets = [0, 8], sizes = [4, 8], strides = [1, 1]} : vector<4x128xf32> to vector<4x8xf32>
    %cst_27 = arith.constant 0.353553385 : f32
    %62 = vector.broadcast %cst_27 : f32 to vector<4x8xf32>
    %63 = arith.mulf %61, %62 : vector<4x8xf32>
    %64 = arith.truncf %63 : vector<4x8xf32> to vector<4x8xbf16>
    %65 = vector.extract_strided_slice %31 {offsets = [0, 40], sizes = [4, 8], strides = [1, 1]} : vector<4x128xf32> to vector<4x8xf32>
    %66 = arith.truncf %65 : vector<4x8xf32> to vector<4x8xbf16>
    %67 = vector.extract_strided_slice %31 {offsets = [0, 72], sizes = [4, 8], strides = [1, 1]} : vector<4x128xf32> to vector<4x8xf32>
    %cst_28 = arith.constant dense<0.000000e+00> : vector<4x4xf32>
    %68 = tpu.matmul %64, %66, %cst_28 {dimension_numbers = #tpu.dot_dimension_numbers<[1], [1], [0], [0], [0, 0, 1, 0], [], []>} : vector<4x8xbf16>, vector<4x8xbf16>, vector<4x4xf32> -> vector<4x4xf32>
    %69 = vector.broadcast %37 : vector<1x4xf32> to vector<4x4xf32>
    %70 = arith.addf %68, %69 : vector<4x4xf32>
    %cst_29 = arith.constant dense<0xFF800000> : vector<4xf32>
    %71 = vector.multi_reduction <maximumf>, %70, %cst_29 [1] : vector<4x4xf32> to vector<4xf32>
    %72 = vector.shape_cast %71 : vector<4xf32> to vector<4x1xf32>
    %73 = vector.broadcast %72 : vector<4x1xf32> to vector<4x4xf32>
    %74 = arith.subf %70, %73 : vector<4x4xf32>
    %75 = math.exp %74 : vector<4x4xf32>
    %cst_30 = arith.constant dense<0.000000e+00> : vector<4xf32>
    %76 = vector.multi_reduction <add>, %75, %cst_30 [1] : vector<4x4xf32> to vector<4xf32>
    %77 = vector.shape_cast %76 : vector<4xf32> to vector<4x1xf32>
    %78 = tpu.reciprocal %77 {approx = true} : vector<4x1xf32> -> vector<4x1xf32>
    %79 = vector.broadcast %78 : vector<4x1xf32> to vector<4x4xf32>
    %80 = arith.mulf %75, %79 : vector<4x4xf32>
    %81 = arith.truncf %80 : vector<4x4xf32> to vector<4x4xbf16>
    %82 = arith.truncf %67 : vector<4x8xf32> to vector<4x8xbf16>
    %cst_31 = arith.constant dense<0.000000e+00> : vector<4x8xf32>
    %83 = tpu.matmul %81, %82, %cst_31 {dimension_numbers = #tpu.dot_dimension_numbers<[1], [0], [0], [1], [0, 0, 1, 1], [], []>} : vector<4x4xbf16>, vector<4x8xbf16>, vector<4x8xf32> -> vector<4x8xf32>
    %84 = vector.extract_strided_slice %31 {offsets = [0, 16], sizes = [4, 8], strides = [1, 1]} : vector<4x128xf32> to vector<4x8xf32>
    %cst_32 = arith.constant 0.353553385 : f32
    %85 = vector.broadcast %cst_32 : f32 to vector<4x8xf32>
    %86 = arith.mulf %84, %85 : vector<4x8xf32>
    %87 = arith.truncf %86 : vector<4x8xf32> to vector<4x8xbf16>
    %88 = vector.extract_strided_slice %31 {offsets = [0, 48], sizes = [4, 8], strides = [1, 1]} : vector<4x128xf32> to vector<4x8xf32>
    %89 = arith.truncf %88 : vector<4x8xf32> to vector<4x8xbf16>
    %90 = vector.extract_strided_slice %31 {offsets = [0, 80], sizes = [4, 8], strides = [1, 1]} : vector<4x128xf32> to vector<4x8xf32>
    %cst_33 = arith.constant dense<0.000000e+00> : vector<4x4xf32>
    %91 = tpu.matmul %87, %89, %cst_33 {dimension_numbers = #tpu.dot_dimension_numbers<[1], [1], [0], [0], [0, 0, 1, 0], [], []>} : vector<4x8xbf16>, vector<4x8xbf16>, vector<4x4xf32> -> vector<4x4xf32>
    %92 = vector.broadcast %37 : vector<1x4xf32> to vector<4x4xf32>
    %93 = arith.addf %91, %92 : vector<4x4xf32>
    %cst_34 = arith.constant dense<0xFF800000> : vector<4xf32>
    %94 = vector.multi_reduction <maximumf>, %93, %cst_34 [1] : vector<4x4xf32> to vector<4xf32>
    %95 = vector.shape_cast %94 : vector<4xf32> to vector<4x1xf32>
    %96 = vector.broadcast %95 : vector<4x1xf32> to vector<4x4xf32>
    %97 = arith.subf %93, %96 : vector<4x4xf32>
    %98 = math.exp %97 : vector<4x4xf32>
    %cst_35 = arith.constant dense<0.000000e+00> : vector<4xf32>
    %99 = vector.multi_reduction <add>, %98, %cst_35 [1] : vector<4x4xf32> to vector<4xf32>
    %100 = vector.shape_cast %99 : vector<4xf32> to vector<4x1xf32>
    %101 = tpu.reciprocal %100 {approx = true} : vector<4x1xf32> -> vector<4x1xf32>
    %102 = vector.broadcast %101 : vector<4x1xf32> to vector<4x4xf32>
    %103 = arith.mulf %98, %102 : vector<4x4xf32>
    %104 = arith.truncf %103 : vector<4x4xf32> to vector<4x4xbf16>
    %105 = arith.truncf %90 : vector<4x8xf32> to vector<4x8xbf16>
    %cst_36 = arith.constant dense<0.000000e+00> : vector<4x8xf32>
    %106 = tpu.matmul %104, %105, %cst_36 {dimension_numbers = #tpu.dot_dimension_numbers<[1], [0], [0], [1], [0, 0, 1, 1], [], []>} : vector<4x4xbf16>, vector<4x8xbf16>, vector<4x8xf32> -> vector<4x8xf32>
    %107 = vector.extract_strided_slice %31 {offsets = [0, 24], sizes = [4, 8], strides = [1, 1]} : vector<4x128xf32> to vector<4x8xf32>
    %cst_37 = arith.constant 0.353553385 : f32
    %108 = vector.broadcast %cst_37 : f32 to vector<4x8xf32>
    %109 = arith.mulf %107, %108 : vector<4x8xf32>
    %110 = arith.truncf %109 : vector<4x8xf32> to vector<4x8xbf16>
    %111 = vector.extract_strided_slice %31 {offsets = [0, 56], sizes = [4, 8], strides = [1, 1]} : vector<4x128xf32> to vector<4x8xf32>
    %112 = arith.truncf %111 : vector<4x8xf32> to vector<4x8xbf16>
    %113 = vector.extract_strided_slice %31 {offsets = [0, 88], sizes = [4, 8], strides = [1, 1]} : vector<4x128xf32> to vector<4x8xf32>
    %cst_38 = arith.constant dense<0.000000e+00> : vector<4x4xf32>
    %114 = tpu.matmul %110, %112, %cst_38 {dimension_numbers = #tpu.dot_dimension_numbers<[1], [1], [0], [0], [0, 0, 1, 0], [], []>} : vector<4x8xbf16>, vector<4x8xbf16>, vector<4x4xf32> -> vector<4x4xf32>
    %115 = vector.broadcast %37 : vector<1x4xf32> to vector<4x4xf32>
    %116 = arith.addf %114, %115 : vector<4x4xf32>
    %cst_39 = arith.constant dense<0xFF800000> : vector<4xf32>
    %117 = vector.multi_reduction <maximumf>, %116, %cst_39 [1] : vector<4x4xf32> to vector<4xf32>
    %118 = vector.shape_cast %117 : vector<4xf32> to vector<4x1xf32>
    %119 = vector.broadcast %118 : vector<4x1xf32> to vector<4x4xf32>
    %120 = arith.subf %116, %119 : vector<4x4xf32>
    %121 = math.exp %120 : vector<4x4xf32>
    %cst_40 = arith.constant dense<0.000000e+00> : vector<4xf32>
    %122 = vector.multi_reduction <add>, %121, %cst_40 [1] : vector<4x4xf32> to vector<4xf32>
    %123 = vector.shape_cast %122 : vector<4xf32> to vector<4x1xf32>
    %124 = tpu.reciprocal %123 {approx = true} : vector<4x1xf32> -> vector<4x1xf32>
    %125 = vector.broadcast %124 : vector<4x1xf32> to vector<4x4xf32>
    %126 = arith.mulf %121, %125 : vector<4x4xf32>
    %127 = arith.truncf %126 : vector<4x4xf32> to vector<4x4xbf16>
    %128 = arith.truncf %113 : vector<4x8xf32> to vector<4x8xbf16>
    %cst_41 = arith.constant dense<0.000000e+00> : vector<4x8xf32>
    %129 = tpu.matmul %127, %128, %cst_41 {dimension_numbers = #tpu.dot_dimension_numbers<[1], [0], [0], [1], [0, 0, 1, 1], [], []>} : vector<4x4xbf16>, vector<4x8xbf16>, vector<4x8xf32> -> vector<4x8xf32>
    %130 = vector.extract_strided_slice %31 {offsets = [0, 96], sizes = [4, 32], strides = [1, 1]} : vector<4x128xf32> to vector<4x32xf32>
    %131 = arith.negf %130 : vector<4x32xf32>
    %132 = math.exp %131 : vector<4x32xf32>
    %cst_42 = arith.constant 1.000000e+00 : f32
    %133 = vector.broadcast %cst_42 : f32 to vector<4x32xf32>
    %134 = arith.addf %133, %132 : vector<4x32xf32>
    %135 = arith.divf %133, %134 : vector<4x32xf32>
    %136 = tpu.concatenate %60, %83, %106, %129 in 1 : vector<4x8xf32>, vector<4x8xf32>, vector<4x8xf32>, vector<4x8xf32> -> vector<4x32xf32>
    %137 = arith.mulf %136, %135 : vector<4x32xf32>
    %138 = arith.truncf %137 : vector<4x32xf32> to vector<4x32xbf16>
    %c0_43 = arith.constant 0 : index
    %c0_44 = arith.constant 0 : index
    %139 = vector.load %arg8[%c0_43, %c0_44] : memref<32x32xbf16, #tpu.memory_space<vmem>>, vector<32x32xbf16>
    %cst_45 = arith.constant dense<0.000000e+00> : vector<4x32xf32>
    %140 = tpu.matmul %138, %139, %cst_45 {dimension_numbers = #tpu.dot_dimension_numbers<[1], [0], [0], [1], [0, 0, 1, 1], [], []>} : vector<4x32xbf16>, vector<32x32xbf16>, vector<4x32xf32> -> vector<4x32xf32>
    %c0_46 = arith.constant 0 : index
    %c0_47 = arith.constant 0 : index
    %141 = vector.load %arg9[%c0_46, %c0_47] : memref<1x32xf32, #tpu.memory_space<vmem>>, vector<1x32xf32>
    %142 = vector.broadcast %141 : vector<1x32xf32> to vector<4x32xf32>
    %143 = arith.addf %140, %142 : vector<4x32xf32>
    %c0_48 = arith.constant 0 : index
    %c0_49 = arith.constant 0 : index
    %c0_50 = arith.constant 0 : index
    %c0_51 = arith.constant 0 : index
    %144 = vector.load %arg10[%c0_48, %c0_49, %c0_50, %c0_51] : memref<1x1x4x32xf32, #tpu.memory_space<vmem>>, vector<1x1x4x32xf32>
    %145 = vector.shape_cast %144 : vector<1x1x4x32xf32> to vector<4x32xf32>
    %146 = vector.shape_cast %143 : vector<4x32xf32> to vector<1x1x4x32xf32>
    tpu.vector_store %arg10[%c0_48, %c0_49, %c0_50, %c0_51], %146 {strides = array<i32>} : memref<1x1x4x32xf32, #tpu.memory_space<vmem>>, vector<1x1x4x32xf32>,
    return
  }
  func.func @transform_0(%arg0: i32, %arg1: i32) -> (i32, i32, i32, i32) {
    %c0_i32 = arith.constant 0 : i32
    %c0_i32_0 = arith.constant 0 : i32
    %c0_i32_1 = arith.constant 0 : i32
    return %arg0, %arg1, %c0_i32, %c0_i32_0 : i32, i32, i32, i32
  }
  func.func @transform_1(%arg0: i32, %arg1: i32) -> (i32, i32, i32, i32) {
    %c0_i32 = arith.constant 0 : i32
    %c0_i32_0 = arith.constant 0 : i32
    %c0_i32_1 = arith.constant 0 : i32
    return %arg0, %arg1, %c0_i32, %c0_i32_0 : i32, i32, i32, i32
  }
  func.func @transform_2(%arg0: i32, %arg1: i32) -> (i32, i32) {
    %c0_i32 = arith.constant 0 : i32
    %c0_i32_0 = arith.constant 0 : i32
    %c0_i32_1 = arith.constant 0 : i32
    return %c0_i32, %c0_i32_0 : i32, i32
  }
  func.func @transform_3(%arg0: i32, %arg1: i32) -> (i32, i32) {
    %c0_i32 = arith.constant 0 : i32
    %c0_i32_0 = arith.constant 0 : i32
    %c0_i32_1 = arith.constant 0 : i32
    return %c0_i32, %c0_i32_0 : i32, i32
  }
  func.func @transform_4(%arg0: i32, %arg1: i32) -> (i32, i32) {
    %c0_i32 = arith.constant 0 : i32
    %c0_i32_0 = arith.constant 0 : i32
    %c0_i32_1 = arith.constant 0 : i32
    return %c0_i32, %c0_i32_0 : i32, i32
  }
  func.func @transform_5(%arg0: i32, %arg1: i32) -> (i32, i32) {
    %c0_i32 = arith.constant 0 : i32
    %c0_i32_0 = arith.constant 0 : i32
    %c0_i32_1 = arith.constant 0 : i32
    return %c0_i32, %c0_i32_0 : i32, i32
  }
  func.func @transform_6(%arg0: i32, %arg1: i32) -> (i32, i32) {
    %c0_i32 = arith.constant 0 : i32
    %c0_i32_0 = arith.constant 0 : i32
    %c0_i32_1 = arith.constant 0 : i32
    return %c0_i32, %c0_i32_0 : i32, i32
  }
  func.func @transform_7(%arg0: i32, %arg1: i32) -> (i32, i32) {
    %c0_i32 = arith.constant 0 : i32
    %c0_i32_0 = arith.constant 0 : i32
    %c0_i32_1 = arith.constant 0 : i32
    return %c0_i32, %c0_i32_0 : i32, i32
  }
  func.func @transform_8(%arg0: i32, %arg1: i32) -> (i32, i32, i32, i32) {
    %c0_i32 = arith.constant 0 : i32
    %c0_i32_0 = arith.constant 0 : i32
    %c0_i32_1 = arith.constant 0 : i32
    return %arg0, %arg1, %c0_i32, %c0_i32_0 : i32, i32, i32, i32
  }
}

module attributes {stable_mosaic.version = 11 : i64} {
  func.func @_transition_kernel(%arg0: i32, %arg1: memref<32x32xf32, #tpu.memory_space<vmem>>, %arg2: memref<32x1xf32, #tpu.memory_space<vmem>>, %arg3: memref<1x32xf32, #tpu.memory_space<vmem>>, %arg4: memref<1x32xf32, #tpu.memory_space<vmem>>, %arg5: memref<32x64xf32, #tpu.memory_space<vmem>>, %arg6: memref<1x64xf32, #tpu.memory_space<vmem>>, %arg7: memref<64x32xf32, #tpu.memory_space<vmem>>, %arg8: memref<1x32xf32, #tpu.memory_space<vmem>>, %arg9: memref<32x32xf32, #tpu.memory_space<vmem>>) attributes {dimension_semantics = [#tpu.dimension_semantics<parallel>], iteration_bounds = array<i64: 1>, scalar_prefetch = 0 : i64, scratch_operands = 0 : i64, tpu.core_type = #tpu.core_type<tc>, window_params = [{transform_indices = @transform_0, window_bounds = array<i64: 32, 32>}, {transform_indices = @transform_1, window_bounds = array<i64: 32, 1>}, {pipeline_mode = #tpu.pipeline_mode<synchronous>, transform_indices = @transform_2, window_bounds = array<i64: 1, 32>}, {pipeline_mode = #tpu.pipeline_mode<synchronous>, transform_indices = @transform_3, window_bounds = array<i64: 1, 32>}, {pipeline_mode = #tpu.pipeline_mode<synchronous>, transform_indices = @transform_4, window_bounds = array<i64: 32, 64>}, {pipeline_mode = #tpu.pipeline_mode<synchronous>, transform_indices = @transform_5, window_bounds = array<i64: 1, 64>}, {pipeline_mode = #tpu.pipeline_mode<synchronous>, transform_indices = @transform_6, window_bounds = array<i64: 64, 32>}, {pipeline_mode = #tpu.pipeline_mode<synchronous>, transform_indices = @transform_7, window_bounds = array<i64: 1, 32>}, {transform_indices = @transform_8, window_bounds = array<i64: 32, 32>}]} {
    %c0 = arith.constant 0 : index
    %c0_0 = arith.constant 0 : index
    %0 = vector.load %arg1[%c0, %c0_0] : memref<32x32xf32, #tpu.memory_space<vmem>>, vector<32x32xf32>
    %c0_1 = arith.constant 0 : index
    %c0_2 = arith.constant 0 : index
    %1 = vector.load %arg3[%c0_1, %c0_2] : memref<1x32xf32, #tpu.memory_space<vmem>>, vector<1x32xf32>
    %c0_3 = arith.constant 0 : index
    %c0_4 = arith.constant 0 : index
    %2 = vector.load %arg4[%c0_3, %c0_4] : memref<1x32xf32, #tpu.memory_space<vmem>>, vector<1x32xf32>
    %cst = arith.constant dense<0.000000e+00> : vector<32xf32>
    %3 = vector.multi_reduction <add>, %0, %cst [1] : vector<32x32xf32> to vector<32xf32>
    %4 = vector.shape_cast %3 : vector<32xf32> to vector<32x1xf32>
    %cst_5 = arith.constant 3.200000e+01 : f32
    %5 = vector.broadcast %cst_5 : f32 to vector<32x1xf32>
    %6 = arith.divf %4, %5 : vector<32x1xf32>
    %7 = vector.broadcast %6 : vector<32x1xf32> to vector<32x32xf32>
    %8 = arith.subf %0, %7 : vector<32x32xf32>
    %9 = arith.mulf %8, %8 : vector<32x32xf32>
    %cst_6 = arith.constant dense<0.000000e+00> : vector<32xf32>
    %10 = vector.multi_reduction <add>, %9, %cst_6 [1] : vector<32x32xf32> to vector<32xf32>
    %11 = vector.shape_cast %10 : vector<32xf32> to vector<32x1xf32>
    %cst_7 = arith.constant 3.200000e+01 : f32
    %12 = vector.broadcast %cst_7 : f32 to vector<32x1xf32>
    %13 = arith.divf %11, %12 : vector<32x1xf32>
    %14 = vector.broadcast %6 : vector<32x1xf32> to vector<32x32xf32>
    %15 = arith.subf %0, %14 : vector<32x32xf32>
    %cst_8 = arith.constant 9.99999974E-6 : f32
    %16 = vector.broadcast %cst_8 : f32 to vector<32x1xf32>
    %17 = arith.addf %13, %16 : vector<32x1xf32>
    %18 = math.rsqrt %17 : vector<32x1xf32>
    %19 = vector.broadcast %18 : vector<32x1xf32> to vector<32x32xf32>
    %20 = arith.mulf %15, %19 : vector<32x32xf32>
    %21 = vector.broadcast %1 : vector<1x32xf32> to vector<32x32xf32>
    %22 = arith.mulf %20, %21 : vector<32x32xf32>
    %23 = vector.broadcast %2 : vector<1x32xf32> to vector<32x32xf32>
    %24 = arith.addf %22, %23 : vector<32x32xf32>
    %c0_9 = arith.constant 0 : index
    %c0_10 = arith.constant 0 : index
    %25 = vector.load %arg5[%c0_9, %c0_10] : memref<32x64xf32, #tpu.memory_space<vmem>>, vector<32x64xf32>
    %c0_11 = arith.constant 0 : index
    %c0_12 = arith.constant 0 : index
    %26 = vector.load %arg6[%c0_11, %c0_12] : memref<1x64xf32, #tpu.memory_space<vmem>>, vector<1x64xf32>
    %cst_13 = arith.constant dense<0.000000e+00> : vector<32x64xf32>
    %27 = tpu.matmul %24, %25, %cst_13 {dimension_numbers = #tpu.dot_dimension_numbers<[1], [0], [0], [1], [0, 0, 1, 1], [], []>} : vector<32x32xf32>, vector<32x64xf32>, vector<32x64xf32> -> vector<32x64xf32>
    %28 = vector.broadcast %26 : vector<1x64xf32> to vector<32x64xf32>
    %29 = arith.addf %27, %28 : vector<32x64xf32>
    %cst_14 = arith.constant 0.000000e+00 : f32
    %30 = vector.broadcast %cst_14 : f32 to vector<32x64xf32>
    %31 = arith.maximumf %29, %30 : vector<32x64xf32>
    %c0_15 = arith.constant 0 : index
    %c0_16 = arith.constant 0 : index
    %32 = vector.load %arg7[%c0_15, %c0_16] : memref<64x32xf32, #tpu.memory_space<vmem>>, vector<64x32xf32>
    %c0_17 = arith.constant 0 : index
    %c0_18 = arith.constant 0 : index
    %33 = vector.load %arg8[%c0_17, %c0_18] : memref<1x32xf32, #tpu.memory_space<vmem>>, vector<1x32xf32>
    %cst_19 = arith.constant dense<0.000000e+00> : vector<32x32xf32>
    %34 = tpu.matmul %31, %32, %cst_19 {dimension_numbers = #tpu.dot_dimension_numbers<[1], [0], [0], [1], [0, 0, 1, 1], [], []>} : vector<32x64xf32>, vector<64x32xf32>, vector<32x32xf32> -> vector<32x32xf32>
    %35 = vector.broadcast %33 : vector<1x32xf32> to vector<32x32xf32>
    %36 = arith.addf %34, %35 : vector<32x32xf32>
    %c0_20 = arith.constant 0 : index
    %c0_21 = arith.constant 0 : index
    %37 = vector.load %arg2[%c0_20, %c0_21] : memref<32x1xf32, #tpu.memory_space<vmem>>, vector<32x1xf32>
    %38 = vector.broadcast %37 : vector<32x1xf32> to vector<32x32xf32>
    %39 = arith.mulf %36, %38 : vector<32x32xf32>
    %c0_22 = arith.constant 0 : index
    %c0_23 = arith.constant 0 : index
    %40 = vector.load %arg9[%c0_22, %c0_23] : memref<32x32xf32, #tpu.memory_space<vmem>>, vector<32x32xf32>
    tpu.vector_store %arg9[%c0_22, %c0_23], %39 {strides = array<i32>} : memref<32x32xf32, #tpu.memory_space<vmem>>, vector<32x32xf32>,
    return
  }
  func.func @transform_0(%arg0: i32) -> (i32, i32) {
    %c0_i32 = arith.constant 0 : i32
    %c0_i32_0 = arith.constant 0 : i32
    return %arg0, %c0_i32 : i32, i32
  }
  func.func @transform_1(%arg0: i32) -> (i32, i32) {
    %c0_i32 = arith.constant 0 : i32
    %c0_i32_0 = arith.constant 0 : i32
    return %arg0, %c0_i32 : i32, i32
  }
  func.func @transform_2(%arg0: i32) -> (i32, i32) {
    %c0_i32 = arith.constant 0 : i32
    %c0_i32_0 = arith.constant 0 : i32
    %c0_i32_1 = arith.constant 0 : i32
    return %c0_i32, %c0_i32_0 : i32, i32
  }
  func.func @transform_3(%arg0: i32) -> (i32, i32) {
    %c0_i32 = arith.constant 0 : i32
    %c0_i32_0 = arith.constant 0 : i32
    %c0_i32_1 = arith.constant 0 : i32
    return %c0_i32, %c0_i32_0 : i32, i32
  }
  func.func @transform_4(%arg0: i32) -> (i32, i32) {
    %c0_i32 = arith.constant 0 : i32
    %c0_i32_0 = arith.constant 0 : i32
    %c0_i32_1 = arith.constant 0 : i32
    return %c0_i32, %c0_i32_0 : i32, i32
  }
  func.func @transform_5(%arg0: i32) -> (i32, i32) {
    %c0_i32 = arith.constant 0 : i32
    %c0_i32_0 = arith.constant 0 : i32
    %c0_i32_1 = arith.constant 0 : i32
    return %c0_i32, %c0_i32_0 : i32, i32
  }
  func.func @transform_6(%arg0: i32) -> (i32, i32) {
    %c0_i32 = arith.constant 0 : i32
    %c0_i32_0 = arith.constant 0 : i32
    %c0_i32_1 = arith.constant 0 : i32
    return %c0_i32, %c0_i32_0 : i32, i32
  }
  func.func @transform_7(%arg0: i32) -> (i32, i32) {
    %c0_i32 = arith.constant 0 : i32
    %c0_i32_0 = arith.constant 0 : i32
    %c0_i32_1 = arith.constant 0 : i32
    return %c0_i32, %c0_i32_0 : i32, i32
  }
  func.func @transform_8(%arg0: i32) -> (i32, i32) {
    %c0_i32 = arith.constant 0 : i32
    %c0_i32_0 = arith.constant 0 : i32
    return %arg0, %c0_i32 : i32, i32
  }
}

module attributes {stable_mosaic.version = 11 : i64} {
  func.func @_opm_proj_kernel(%arg0: i32, %arg1: memref<32x32xf32, #tpu.memory_space<vmem>>, %arg2: memref<32x1xf32, #tpu.memory_space<vmem>>, %arg3: memref<1x32xf32, #tpu.memory_space<vmem>>, %arg4: memref<1x32xf32, #tpu.memory_space<vmem>>, %arg5: memref<32x8xf32, #tpu.memory_space<vmem>>, %arg6: memref<1x8xf32, #tpu.memory_space<vmem>>, %arg7: memref<32x8xf32, #tpu.memory_space<vmem>>, %arg8: memref<1x8xf32, #tpu.memory_space<vmem>>, %arg9: memref<32x8xbf16, #tpu.memory_space<vmem>>, %arg10: memref<32x8xbf16, #tpu.memory_space<vmem>>) attributes {dimension_semantics = [#tpu.dimension_semantics<parallel>], iteration_bounds = array<i64: 1>, scalar_prefetch = 0 : i64, scratch_operands = 0 : i64, tpu.core_type = #tpu.core_type<tc>, window_params = [{transform_indices = @transform_0, window_bounds = array<i64: 32, 32>}, {transform_indices = @transform_1, window_bounds = array<i64: 32, 1>}, {pipeline_mode = #tpu.pipeline_mode<synchronous>, transform_indices = @transform_2, window_bounds = array<i64: 1, 32>}, {pipeline_mode = #tpu.pipeline_mode<synchronous>, transform_indices = @transform_3, window_bounds = array<i64: 1, 32>}, {pipeline_mode = #tpu.pipeline_mode<synchronous>, transform_indices = @transform_4, window_bounds = array<i64: 32, 8>}, {pipeline_mode = #tpu.pipeline_mode<synchronous>, transform_indices = @transform_5, window_bounds = array<i64: 1, 8>}, {pipeline_mode = #tpu.pipeline_mode<synchronous>, transform_indices = @transform_6, window_bounds = array<i64: 32, 8>}, {pipeline_mode = #tpu.pipeline_mode<synchronous>, transform_indices = @transform_7, window_bounds = array<i64: 1, 8>}, {transform_indices = @transform_8, window_bounds = array<i64: 32, 8>}, {transform_indices = @transform_9, window_bounds = array<i64: 32, 8>}]} {
    %c0 = arith.constant 0 : index
    %c0_0 = arith.constant 0 : index
    %0 = vector.load %arg1[%c0, %c0_0] : memref<32x32xf32, #tpu.memory_space<vmem>>, vector<32x32xf32>
    %c0_1 = arith.constant 0 : index
    %c0_2 = arith.constant 0 : index
    %1 = vector.load %arg3[%c0_1, %c0_2] : memref<1x32xf32, #tpu.memory_space<vmem>>, vector<1x32xf32>
    %c0_3 = arith.constant 0 : index
    %c0_4 = arith.constant 0 : index
    %2 = vector.load %arg4[%c0_3, %c0_4] : memref<1x32xf32, #tpu.memory_space<vmem>>, vector<1x32xf32>
    %cst = arith.constant dense<0.000000e+00> : vector<32xf32>
    %3 = vector.multi_reduction <add>, %0, %cst [1] : vector<32x32xf32> to vector<32xf32>
    %4 = vector.shape_cast %3 : vector<32xf32> to vector<32x1xf32>
    %cst_5 = arith.constant 3.200000e+01 : f32
    %5 = vector.broadcast %cst_5 : f32 to vector<32x1xf32>
    %6 = arith.divf %4, %5 : vector<32x1xf32>
    %7 = vector.broadcast %6 : vector<32x1xf32> to vector<32x32xf32>
    %8 = arith.subf %0, %7 : vector<32x32xf32>
    %9 = arith.mulf %8, %8 : vector<32x32xf32>
    %cst_6 = arith.constant dense<0.000000e+00> : vector<32xf32>
    %10 = vector.multi_reduction <add>, %9, %cst_6 [1] : vector<32x32xf32> to vector<32xf32>
    %11 = vector.shape_cast %10 : vector<32xf32> to vector<32x1xf32>
    %cst_7 = arith.constant 3.200000e+01 : f32
    %12 = vector.broadcast %cst_7 : f32 to vector<32x1xf32>
    %13 = arith.divf %11, %12 : vector<32x1xf32>
    %14 = vector.broadcast %6 : vector<32x1xf32> to vector<32x32xf32>
    %15 = arith.subf %0, %14 : vector<32x32xf32>
    %cst_8 = arith.constant 9.99999974E-6 : f32
    %16 = vector.broadcast %cst_8 : f32 to vector<32x1xf32>
    %17 = arith.addf %13, %16 : vector<32x1xf32>
    %18 = math.rsqrt %17 : vector<32x1xf32>
    %19 = vector.broadcast %18 : vector<32x1xf32> to vector<32x32xf32>
    %20 = arith.mulf %15, %19 : vector<32x32xf32>
    %21 = vector.broadcast %1 : vector<1x32xf32> to vector<32x32xf32>
    %22 = arith.mulf %20, %21 : vector<32x32xf32>
    %23 = vector.broadcast %2 : vector<1x32xf32> to vector<32x32xf32>
    %24 = arith.addf %22, %23 : vector<32x32xf32>
    %c0_9 = arith.constant 0 : index
    %c0_10 = arith.constant 0 : index
    %25 = vector.load %arg2[%c0_9, %c0_10] : memref<32x1xf32, #tpu.memory_space<vmem>>, vector<32x1xf32>
    %c0_11 = arith.constant 0 : index
    %c0_12 = arith.constant 0 : index
    %26 = vector.load %arg5[%c0_11, %c0_12] : memref<32x8xf32, #tpu.memory_space<vmem>>, vector<32x8xf32>
    %c0_13 = arith.constant 0 : index
    %c0_14 = arith.constant 0 : index
    %27 = vector.load %arg6[%c0_13, %c0_14] : memref<1x8xf32, #tpu.memory_space<vmem>>, vector<1x8xf32>
    %cst_15 = arith.constant dense<0.000000e+00> : vector<32x8xf32>
    %28 = tpu.matmul %24, %26, %cst_15 {dimension_numbers = #tpu.dot_dimension_numbers<[1], [0], [0], [1], [0, 0, 1, 1], [], []>} : vector<32x32xf32>, vector<32x8xf32>, vector<32x8xf32> -> vector<32x8xf32>
    %29 = vector.broadcast %27 : vector<1x8xf32> to vector<32x8xf32>
    %30 = arith.addf %28, %29 : vector<32x8xf32>
    %31 = vector.broadcast %25 : vector<32x1xf32> to vector<32x8xf32>
    %32 = arith.mulf %30, %31 : vector<32x8xf32>
    %33 = arith.truncf %32 : vector<32x8xf32> to vector<32x8xbf16>
    %c0_16 = arith.constant 0 : index
    %c0_17 = arith.constant 0 : index
    %34 = vector.load %arg9[%c0_16, %c0_17] : memref<32x8xbf16, #tpu.memory_space<vmem>>, vector<32x8xbf16>
    tpu.vector_store %arg9[%c0_16, %c0_17], %33 {strides = array<i32>} : memref<32x8xbf16, #tpu.memory_space<vmem>>, vector<32x8xbf16>,
    %c0_18 = arith.constant 0 : index
    %c0_19 = arith.constant 0 : index
    %35 = vector.load %arg7[%c0_18, %c0_19] : memref<32x8xf32, #tpu.memory_space<vmem>>, vector<32x8xf32>
    %c0_20 = arith.constant 0 : index
    %c0_21 = arith.constant 0 : index
    %36 = vector.load %arg8[%c0_20, %c0_21] : memref<1x8xf32, #tpu.memory_space<vmem>>, vector<1x8xf32>
    %cst_22 = arith.constant dense<0.000000e+00> : vector<32x8xf32>
    %37 = tpu.matmul %24, %35, %cst_22 {dimension_numbers = #tpu.dot_dimension_numbers<[1], [0], [0], [1], [0, 0, 1, 1], [], []>} : vector<32x32xf32>, vector<32x8xf32>, vector<32x8xf32> -> vector<32x8xf32>
    %38 = vector.broadcast %36 : vector<1x8xf32> to vector<32x8xf32>
    %39 = arith.addf %37, %38 : vector<32x8xf32>
    %40 = vector.broadcast %25 : vector<32x1xf32> to vector<32x8xf32>
    %41 = arith.mulf %39, %40 : vector<32x8xf32>
    %42 = arith.truncf %41 : vector<32x8xf32> to vector<32x8xbf16>
    %c0_23 = arith.constant 0 : index
    %c0_24 = arith.constant 0 : index
    %43 = vector.load %arg10[%c0_23, %c0_24] : memref<32x8xbf16, #tpu.memory_space<vmem>>, vector<32x8xbf16>
    tpu.vector_store %arg10[%c0_23, %c0_24], %42 {strides = array<i32>} : memref<32x8xbf16, #tpu.memory_space<vmem>>, vector<32x8xbf16>,
    return
  }
  func.func @transform_0(%arg0: i32) -> (i32, i32) {
    %c0_i32 = arith.constant 0 : i32
    %c0_i32_0 = arith.constant 0 : i32
    return %arg0, %c0_i32 : i32, i32
  }
  func.func @transform_1(%arg0: i32) -> (i32, i32) {
    %c0_i32 = arith.constant 0 : i32
    %c0_i32_0 = arith.constant 0 : i32
    return %arg0, %c0_i32 : i32, i32
  }
  func.func @transform_2(%arg0: i32) -> (i32, i32) {
    %c0_i32 = arith.constant 0 : i32
    %c0_i32_0 = arith.constant 0 : i32
    %c0_i32_1 = arith.constant 0 : i32
    return %c0_i32, %c0_i32_0 : i32, i32
  }
  func.func @transform_3(%arg0: i32) -> (i32, i32) {
    %c0_i32 = arith.constant 0 : i32
    %c0_i32_0 = arith.constant 0 : i32
    %c0_i32_1 = arith.constant 0 : i32
    return %c0_i32, %c0_i32_0 : i32, i32
  }
  func.func @transform_4(%arg0: i32) -> (i32, i32) {
    %c0_i32 = arith.constant 0 : i32
    %c0_i32_0 = arith.constant 0 : i32
    %c0_i32_1 = arith.constant 0 : i32
    return %c0_i32, %c0_i32_0 : i32, i32
  }
  func.func @transform_5(%arg0: i32) -> (i32, i32) {
    %c0_i32 = arith.constant 0 : i32
    %c0_i32_0 = arith.constant 0 : i32
    %c0_i32_1 = arith.constant 0 : i32
    return %c0_i32, %c0_i32_0 : i32, i32
  }
  func.func @transform_6(%arg0: i32) -> (i32, i32) {
    %c0_i32 = arith.constant 0 : i32
    %c0_i32_0 = arith.constant 0 : i32
    %c0_i32_1 = arith.constant 0 : i32
    return %c0_i32, %c0_i32_0 : i32, i32
  }
  func.func @transform_7(%arg0: i32) -> (i32, i32) {
    %c0_i32 = arith.constant 0 : i32
    %c0_i32_0 = arith.constant 0 : i32
    %c0_i32_1 = arith.constant 0 : i32
    return %c0_i32, %c0_i32_0 : i32, i32
  }
  func.func @transform_8(%arg0: i32) -> (i32, i32) {
    %c0_i32 = arith.constant 0 : i32
    %c0_i32_0 = arith.constant 0 : i32
    return %arg0, %c0_i32 : i32, i32
  }
  func.func @transform_9(%arg0: i32) -> (i32, i32) {
    %c0_i32 = arith.constant 0 : i32
    %c0_i32_0 = arith.constant 0 : i32
    return %arg0, %c0_i32 : i32, i32
  }
}

module attributes {stable_mosaic.version = 11 : i64} {
  func.func @_bmm_kernel(%arg0: i32, %arg1: i32, %arg2: i32, %arg3: i32, %arg4: memref<1x64x4xbf16, #tpu.memory_space<vmem>>, %arg5: memref<1x4x64xbf16, #tpu.memory_space<vmem>>, %arg6: memref<1x64x64xbf16, #tpu.memory_space<vmem>>, %arg7: memref<64x64xf32, #tpu.memory_space<vmem>>) attributes {dimension_semantics = [#tpu.dimension_semantics<parallel>, #tpu.dimension_semantics<parallel>, #tpu.dimension_semantics<parallel>, #tpu.dimension_semantics<arbitrary>], iteration_bounds = array<i64: 1, 1, 1, 1>, scalar_prefetch = 0 : i64, scratch_operands = 1 : i64, tpu.core_type = #tpu.core_type<tc>, window_params = [{transform_indices = @transform_0, window_bounds = array<i64: 1, 64, 4>}, {transform_indices = @transform_1, window_bounds = array<i64: 1, 4, 64>}, {transform_indices = @transform_2, window_bounds = array<i64: 1, 64, 64>}]} {
    %c0_i32 = arith.constant 0 : i32
    %0 = arith.cmpi eq, %arg3, %c0_i32 : i32
    %1 = arith.extui %0 : i1 to i32
    %c0_i32_0 = arith.constant 0 : i32
    %2 = arith.cmpi ne, %1, %c0_i32_0 : i32
    scf.if %2 {
      %cst_12 = arith.constant 0.000000e+00 : f32
      %14 = vector.broadcast %cst_12 : f32 to vector<64x64xf32>
      %c0_13 = arith.constant 0 : index
      %c0_14 = arith.constant 0 : index
      %15 = vector.load %arg7[%c0_13, %c0_14] : memref<64x64xf32, #tpu.memory_space<vmem>>, vector<64x64xf32>
      tpu.vector_store %arg7[%c0_13, %c0_14], %14 {strides = array<i32>} : memref<64x64xf32, #tpu.memory_space<vmem>>, vector<64x64xf32>,
    } else {
    }
    %c0 = arith.constant 0 : index
    %c0_1 = arith.constant 0 : index
    %3 = vector.load %arg7[%c0, %c0_1] : memref<64x64xf32, #tpu.memory_space<vmem>>, vector<64x64xf32>
    %c0_2 = arith.constant 0 : index
    %c0_3 = arith.constant 0 : index
    %c0_4 = arith.constant 0 : index
    %4 = vector.load %arg4[%c0_2, %c0_3, %c0_4] : memref<1x64x4xbf16, #tpu.memory_space<vmem>>, vector<1x64x4xbf16>
    %5 = vector.shape_cast %4 : vector<1x64x4xbf16> to vector<64x4xbf16>
    %c0_5 = arith.constant 0 : index
    %c0_6 = arith.constant 0 : index
    %c0_7 = arith.constant 0 : index
    %6 = vector.load %arg5[%c0_5, %c0_6, %c0_7] : memref<1x4x64xbf16, #tpu.memory_space<vmem>>, vector<1x4x64xbf16>
    %7 = vector.shape_cast %6 : vector<1x4x64xbf16> to vector<4x64xbf16>
    %cst = arith.constant dense<0.000000e+00> : vector<64x64xf32>
    %8 = tpu.matmul %5, %7, %cst {dimension_numbers = #tpu.dot_dimension_numbers<[1], [0], [0], [1], [0, 0, 1, 1], [], []>} : vector<64x4xbf16>, vector<4x64xbf16>, vector<64x64xf32> -> vector<64x64xf32>
    %9 = arith.addf %3, %8 : vector<64x64xf32>
    %c0_8 = arith.constant 0 : index
    %c0_9 = arith.constant 0 : index
    %10 = vector.load %arg7[%c0_8, %c0_9] : memref<64x64xf32, #tpu.memory_space<vmem>>, vector<64x64xf32>
    tpu.vector_store %arg7[%c0_8, %c0_9], %9 {strides = array<i32>} : memref<64x64xf32, #tpu.memory_space<vmem>>, vector<64x64xf32>,
    %c0_i32_10 = arith.constant 0 : i32
    %11 = arith.cmpi eq, %arg3, %c0_i32_10 : i32
    %12 = arith.extui %11 : i1 to i32
    %c0_i32_11 = arith.constant 0 : i32
    %13 = arith.cmpi ne, %12, %c0_i32_11 : i32
    scf.if %13 {
      %c0_12 = arith.constant 0 : index
      %c0_13 = arith.constant 0 : index
      %14 = vector.load %arg7[%c0_12, %c0_13] : memref<64x64xf32, #tpu.memory_space<vmem>>, vector<64x64xf32>
      %15 = arith.truncf %14 : vector<64x64xf32> to vector<64x64xbf16>
      %c0_14 = arith.constant 0 : index
      %c0_15 = arith.constant 0 : index
      %c0_16 = arith.constant 0 : index
      %16 = vector.load %arg6[%c0_14, %c0_15, %c0_16] : memref<1x64x64xbf16, #tpu.memory_space<vmem>>, vector<1x64x64xbf16>
      %17 = vector.shape_cast %16 : vector<1x64x64xbf16> to vector<64x64xbf16>
      %18 = vector.shape_cast %15 : vector<64x64xbf16> to vector<1x64x64xbf16>
      tpu.vector_store %arg6[%c0_14, %c0_15, %c0_16], %18 {strides = array<i32>} : memref<1x64x64xbf16, #tpu.memory_space<vmem>>, vector<1x64x64xbf16>,
    } else {
    }
    return
  }
  func.func @transform_0(%arg0: i32, %arg1: i32, %arg2: i32, %arg3: i32) -> (i32, i32, i32) {
    %c0_i32 = arith.constant 0 : i32
    return %arg0, %arg1, %arg3 : i32, i32, i32
  }
  func.func @transform_1(%arg0: i32, %arg1: i32, %arg2: i32, %arg3: i32) -> (i32, i32, i32) {
    %c0_i32 = arith.constant 0 : i32
    return %arg0, %arg3, %arg2 : i32, i32, i32
  }
  func.func @transform_2(%arg0: i32, %arg1: i32, %arg2: i32, %arg3: i32) -> (i32, i32, i32) {
    %c0_i32 = arith.constant 0 : i32
    return %arg0, %arg1, %arg2 : i32, i32, i32
  }
}

module attributes {stable_mosaic.version = 11 : i64} {
  func.func @_linear_rowscale_kernel(%arg0: i32, %arg1: memref<64x64xbf16, #tpu.memory_space<vmem>>, %arg2: memref<64x1xf32, #tpu.memory_space<vmem>>, %arg3: memref<64x16xf32, #tpu.memory_space<vmem>>, %arg4: memref<1x16xf32, #tpu.memory_space<vmem>>, %arg5: memref<64x16xf32, #tpu.memory_space<vmem>>) attributes {dimension_semantics = [#tpu.dimension_semantics<parallel>], iteration_bounds = array<i64: 1>, scalar_prefetch = 0 : i64, scratch_operands = 0 : i64, tpu.core_type = #tpu.core_type<tc>, window_params = [{transform_indices = @transform_0, window_bounds = array<i64: 64, 64>}, {transform_indices = @transform_1, window_bounds = array<i64: 64, 1>}, {pipeline_mode = #tpu.pipeline_mode<synchronous>, transform_indices = @transform_2, window_bounds = array<i64: 64, 16>}, {pipeline_mode = #tpu.pipeline_mode<synchronous>, transform_indices = @transform_3, window_bounds = array<i64: 1, 16>}, {transform_indices = @transform_4, window_bounds = array<i64: 64, 16>}]} {
    %c0 = arith.constant 0 : index
    %c0_0 = arith.constant 0 : index
    %0 = vector.load %arg1[%c0, %c0_0] : memref<64x64xbf16, #tpu.memory_space<vmem>>, vector<64x64xbf16>
    %1 = arith.extf %0 : vector<64x64xbf16> to vector<64x64xf32>
    %c0_1 = arith.constant 0 : index
    %c0_2 = arith.constant 0 : index
    %2 = vector.load %arg3[%c0_1, %c0_2] : memref<64x16xf32, #tpu.memory_space<vmem>>, vector<64x16xf32>
    %c0_3 = arith.constant 0 : index
    %c0_4 = arith.constant 0 : index
    %3 = vector.load %arg4[%c0_3, %c0_4] : memref<1x16xf32, #tpu.memory_space<vmem>>, vector<1x16xf32>
    %cst = arith.constant dense<0.000000e+00> : vector<64x16xf32>
    %4 = tpu.matmul %1, %2, %cst {dimension_numbers = #tpu.dot_dimension_numbers<[1], [0], [0], [1], [0, 0, 1, 1], [], []>} : vector<64x64xf32>, vector<64x16xf32>, vector<64x16xf32> -> vector<64x16xf32>
    %5 = vector.broadcast %3 : vector<1x16xf32> to vector<64x16xf32>
    %6 = arith.addf %4, %5 : vector<64x16xf32>
    %c0_5 = arith.constant 0 : index
    %c0_6 = arith.constant 0 : index
    %7 = vector.load %arg2[%c0_5, %c0_6] : memref<64x1xf32, #tpu.memory_space<vmem>>, vector<64x1xf32>
    %8 = vector.broadcast %7 : vector<64x1xf32> to vector<64x16xf32>
    %9 = arith.mulf %6, %8 : vector<64x16xf32>
    %c0_7 = arith.constant 0 : index
    %c0_8 = arith.constant 0 : index
    %10 = vector.load %arg5[%c0_7, %c0_8] : memref<64x16xf32, #tpu.memory_space<vmem>>, vector<64x16xf32>
    tpu.vector_store %arg5[%c0_7, %c0_8], %9 {strides = array<i32>} : memref<64x16xf32, #tpu.memory_space<vmem>>, vector<64x16xf32>,
    return
  }
  func.func @transform_0(%arg0: i32) -> (i32, i32) {
    %c0_i32 = arith.constant 0 : i32
    %c0_i32_0 = arith.constant 0 : i32
    return %arg0, %c0_i32 : i32, i32
  }
  func.func @transform_1(%arg0: i32) -> (i32, i32) {
    %c0_i32 = arith.constant 0 : i32
    %c0_i32_0 = arith.constant 0 : i32
    return %arg0, %c0_i32 : i32, i32
  }
  func.func @transform_2(%arg0: i32) -> (i32, i32) {
    %c0_i32 = arith.constant 0 : i32
    %c0_i32_0 = arith.constant 0 : i32
    %c0_i32_1 = arith.constant 0 : i32
    return %c0_i32, %c0_i32_0 : i32, i32
  }
  func.func @transform_3(%arg0: i32) -> (i32, i32) {
    %c0_i32 = arith.constant 0 : i32
    %c0_i32_0 = arith.constant 0 : i32
    %c0_i32_1 = arith.constant 0 : i32
    return %c0_i32, %c0_i32_0 : i32, i32
  }
  func.func @transform_4(%arg0: i32) -> (i32, i32) {
    %c0_i32 = arith.constant 0 : i32
    %c0_i32_0 = arith.constant 0 : i32
    return %arg0, %c0_i32 : i32, i32
  }
}

module attributes {stable_mosaic.version = 11 : i64} {
  func.func @_tri_proj_kernel(%arg0: i32, %arg1: memref<64x16xf32, #tpu.memory_space<vmem>>, %arg2: memref<64x1xf32, #tpu.memory_space<vmem>>, %arg3: memref<1x16xf32, #tpu.memory_space<vmem>>, %arg4: memref<1x16xf32, #tpu.memory_space<vmem>>, %arg5: memref<16x16xf32, #tpu.memory_space<vmem>>, %arg6: memref<1x16xf32, #tpu.memory_space<vmem>>, %arg7: memref<16x16xf32, #tpu.memory_space<vmem>>, %arg8: memref<1x16xf32, #tpu.memory_space<vmem>>, %arg9: memref<16x16xf32, #tpu.memory_space<vmem>>, %arg10: memref<1x16xf32, #tpu.memory_space<vmem>>, %arg11: memref<16x16xf32, #tpu.memory_space<vmem>>, %arg12: memref<1x16xf32, #tpu.memory_space<vmem>>, %arg13: memref<16x16xf32, #tpu.memory_space<vmem>>, %arg14: memref<1x16xf32, #tpu.memory_space<vmem>>, %arg15: memref<64x16xbf16, #tpu.memory_space<vmem>>, %arg16: memref<64x16xbf16, #tpu.memory_space<vmem>>, %arg17: memref<64x16xf32, #tpu.memory_space<vmem>>) attributes {dimension_semantics = [#tpu.dimension_semantics<parallel>], iteration_bounds = array<i64: 1>, scalar_prefetch = 0 : i64, scratch_operands = 0 : i64, tpu.core_type = #tpu.core_type<tc>, window_params = [{transform_indices = @transform_0, window_bounds = array<i64: 64, 16>}, {transform_indices = @transform_1, window_bounds = array<i64: 64, 1>}, {pipeline_mode = #tpu.pipeline_mode<synchronous>, transform_indices = @transform_2, window_bounds = array<i64: 1, 16>}, {pipeline_mode = #tpu.pipeline_mode<synchronous>, transform_indices = @transform_3, window_bounds = array<i64: 1, 16>}, {pipeline_mode = #tpu.pipeline_mode<synchronous>, transform_indices = @transform_4, window_bounds = array<i64: 16, 16>}, {pipeline_mode = #tpu.pipeline_mode<synchronous>, transform_indices = @transform_5, window_bounds = array<i64: 1, 16>}, {pipeline_mode = #tpu.pipeline_mode<synchronous>, transform_indices = @transform_6, window_bounds = array<i64: 16, 16>}, {pipeline_mode = #tpu.pipeline_mode<synchronous>, transform_indices = @transform_7, window_bounds = array<i64: 1, 16>}, {pipeline_mode = #tpu.pipeline_mode<synchronous>, transform_indices = @transform_8, window_bounds = array<i64: 16, 16>}, {pipeline_mode = #tpu.pipeline_mode<synchronous>, transform_indices = @transform_9, window_bounds = array<i64: 1, 16>}, {pipeline_mode = #tpu.pipeline_mode<synchronous>, transform_indices = @transform_10, window_bounds = array<i64: 16, 16>}, {pipeline_mode = #tpu.pipeline_mode<synchronous>, transform_indices = @transform_11, window_bounds = array<i64: 1, 16>}, {pipeline_mode = #tpu.pipeline_mode<synchronous>, transform_indices = @transform_12, window_bounds = array<i64: 16, 16>}, {pipeline_mode = #tpu.pipeline_mode<synchronous>, transform_indices = @transform_13, window_bounds = array<i64: 1, 16>}, {transform_indices = @transform_14, window_bounds = array<i64: 64, 16>}, {transform_indices = @transform_15, window_bounds = array<i64: 64, 16>}, {transform_indices = @transform_16, window_bounds = array<i64: 64, 16>}]} {
    %c0 = arith.constant 0 : index
    %c0_0 = arith.constant 0 : index
    %0 = vector.load %arg1[%c0, %c0_0] : memref<64x16xf32, #tpu.memory_space<vmem>>, vector<64x16xf32>
    %c0_1 = arith.constant 0 : index
    %c0_2 = arith.constant 0 : index
    %1 = vector.load %arg3[%c0_1, %c0_2] : memref<1x16xf32, #tpu.memory_space<vmem>>, vector<1x16xf32>
    %c0_3 = arith.constant 0 : index
    %c0_4 = arith.constant 0 : index
    %2 = vector.load %arg4[%c0_3, %c0_4] : memref<1x16xf32, #tpu.memory_space<vmem>>, vector<1x16xf32>
    %cst = arith.constant dense<0.000000e+00> : vector<64xf32>
    %3 = vector.multi_reduction <add>, %0, %cst [1] : vector<64x16xf32> to vector<64xf32>
    %4 = vector.shape_cast %3 : vector<64xf32> to vector<64x1xf32>
    %cst_5 = arith.constant 1.600000e+01 : f32
    %5 = vector.broadcast %cst_5 : f32 to vector<64x1xf32>
    %6 = arith.divf %4, %5 : vector<64x1xf32>
    %7 = vector.broadcast %6 : vector<64x1xf32> to vector<64x16xf32>
    %8 = arith.subf %0, %7 : vector<64x16xf32>
    %9 = arith.mulf %8, %8 : vector<64x16xf32>
    %cst_6 = arith.constant dense<0.000000e+00> : vector<64xf32>
    %10 = vector.multi_reduction <add>, %9, %cst_6 [1] : vector<64x16xf32> to vector<64xf32>
    %11 = vector.shape_cast %10 : vector<64xf32> to vector<64x1xf32>
    %cst_7 = arith.constant 1.600000e+01 : f32
    %12 = vector.broadcast %cst_7 : f32 to vector<64x1xf32>
    %13 = arith.divf %11, %12 : vector<64x1xf32>
    %14 = vector.broadcast %6 : vector<64x1xf32> to vector<64x16xf32>
    %15 = arith.subf %0, %14 : vector<64x16xf32>
    %cst_8 = arith.constant 9.99999974E-6 : f32
    %16 = vector.broadcast %cst_8 : f32 to vector<64x1xf32>
    %17 = arith.addf %13, %16 : vector<64x1xf32>
    %18 = math.rsqrt %17 : vector<64x1xf32>
    %19 = vector.broadcast %18 : vector<64x1xf32> to vector<64x16xf32>
    %20 = arith.mulf %15, %19 : vector<64x16xf32>
    %21 = vector.broadcast %1 : vector<1x16xf32> to vector<64x16xf32>
    %22 = arith.mulf %20, %21 : vector<64x16xf32>
    %23 = vector.broadcast %2 : vector<1x16xf32> to vector<64x16xf32>
    %24 = arith.addf %22, %23 : vector<64x16xf32>
    %c0_9 = arith.constant 0 : index
    %c0_10 = arith.constant 0 : index
    %25 = vector.load %arg2[%c0_9, %c0_10] : memref<64x1xf32, #tpu.memory_space<vmem>>, vector<64x1xf32>
    %c0_11 = arith.constant 0 : index
    %c0_12 = arith.constant 0 : index
    %26 = vector.load %arg7[%c0_11, %c0_12] : memref<16x16xf32, #tpu.memory_space<vmem>>, vector<16x16xf32>
    %c0_13 = arith.constant 0 : index
    %c0_14 = arith.constant 0 : index
    %27 = vector.load %arg8[%c0_13, %c0_14] : memref<1x16xf32, #tpu.memory_space<vmem>>, vector<1x16xf32>
    %cst_15 = arith.constant dense<0.000000e+00> : vector<64x16xf32>
    %28 = tpu.matmul %24, %26, %cst_15 {dimension_numbers = #tpu.dot_dimension_numbers<[1], [0], [0], [1], [0, 0, 1, 1], [], []>} : vector<64x16xf32>, vector<16x16xf32>, vector<64x16xf32> -> vector<64x16xf32>
    %29 = vector.broadcast %27 : vector<1x16xf32> to vector<64x16xf32>
    %30 = arith.addf %28, %29 : vector<64x16xf32>
    %31 = arith.negf %30 : vector<64x16xf32>
    %32 = math.exp %31 : vector<64x16xf32>
    %cst_16 = arith.constant 1.000000e+00 : f32
    %33 = vector.broadcast %cst_16 : f32 to vector<64x16xf32>
    %34 = arith.addf %33, %32 : vector<64x16xf32>
    %35 = arith.divf %33, %34 : vector<64x16xf32>
    %c0_17 = arith.constant 0 : index
    %c0_18 = arith.constant 0 : index
    %36 = vector.load %arg5[%c0_17, %c0_18] : memref<16x16xf32, #tpu.memory_space<vmem>>, vector<16x16xf32>
    %c0_19 = arith.constant 0 : index
    %c0_20 = arith.constant 0 : index
    %37 = vector.load %arg6[%c0_19, %c0_20] : memref<1x16xf32, #tpu.memory_space<vmem>>, vector<1x16xf32>
    %cst_21 = arith.constant dense<0.000000e+00> : vector<64x16xf32>
    %38 = tpu.matmul %24, %36, %cst_21 {dimension_numbers = #tpu.dot_dimension_numbers<[1], [0], [0], [1], [0, 0, 1, 1], [], []>} : vector<64x16xf32>, vector<16x16xf32>, vector<64x16xf32> -> vector<64x16xf32>
    %39 = vector.broadcast %37 : vector<1x16xf32> to vector<64x16xf32>
    %40 = arith.addf %38, %39 : vector<64x16xf32>
    %41 = arith.mulf %35, %40 : vector<64x16xf32>
    %42 = vector.broadcast %25 : vector<64x1xf32> to vector<64x16xf32>
    %43 = arith.mulf %41, %42 : vector<64x16xf32>
    %c0_22 = arith.constant 0 : index
    %c0_23 = arith.constant 0 : index
    %44 = vector.load %arg11[%c0_22, %c0_23] : memref<16x16xf32, #tpu.memory_space<vmem>>, vector<16x16xf32>
    %c0_24 = arith.constant 0 : index
    %c0_25 = arith.constant 0 : index
    %45 = vector.load %arg12[%c0_24, %c0_25] : memref<1x16xf32, #tpu.memory_space<vmem>>, vector<1x16xf32>
    %cst_26 = arith.constant dense<0.000000e+00> : vector<64x16xf32>
    %46 = tpu.matmul %24, %44, %cst_26 {dimension_numbers = #tpu.dot_dimension_numbers<[1], [0], [0], [1], [0, 0, 1, 1], [], []>} : vector<64x16xf32>, vector<16x16xf32>, vector<64x16xf32> -> vector<64x16xf32>
    %47 = vector.broadcast %45 : vector<1x16xf32> to vector<64x16xf32>
    %48 = arith.addf %46, %47 : vector<64x16xf32>
    %49 = arith.negf %48 : vector<64x16xf32>
    %50 = math.exp %49 : vector<64x16xf32>
    %cst_27 = arith.constant 1.000000e+00 : f32
    %51 = vector.broadcast %cst_27 : f32 to vector<64x16xf32>
    %52 = arith.addf %51, %50 : vector<64x16xf32>
    %53 = arith.divf %51, %52 : vector<64x16xf32>
    %c0_28 = arith.constant 0 : index
    %c0_29 = arith.constant 0 : index
    %54 = vector.load %arg9[%c0_28, %c0_29] : memref<16x16xf32, #tpu.memory_space<vmem>>, vector<16x16xf32>
    %c0_30 = arith.constant 0 : index
    %c0_31 = arith.constant 0 : index
    %55 = vector.load %arg10[%c0_30, %c0_31] : memref<1x16xf32, #tpu.memory_space<vmem>>, vector<1x16xf32>
    %cst_32 = arith.constant dense<0.000000e+00> : vector<64x16xf32>
    %56 = tpu.matmul %24, %54, %cst_32 {dimension_numbers = #tpu.dot_dimension_numbers<[1], [0], [0], [1], [0, 0, 1, 1], [], []>} : vector<64x16xf32>, vector<16x16xf32>, vector<64x16xf32> -> vector<64x16xf32>
    %57 = vector.broadcast %55 : vector<1x16xf32> to vector<64x16xf32>
    %58 = arith.addf %56, %57 : vector<64x16xf32>
    %59 = arith.mulf %53, %58 : vector<64x16xf32>
    %60 = vector.broadcast %25 : vector<64x1xf32> to vector<64x16xf32>
    %61 = arith.mulf %59, %60 : vector<64x16xf32>
    %c0_33 = arith.constant 0 : index
    %c0_34 = arith.constant 0 : index
    %62 = vector.load %arg13[%c0_33, %c0_34] : memref<16x16xf32, #tpu.memory_space<vmem>>, vector<16x16xf32>
    %c0_35 = arith.constant 0 : index
    %c0_36 = arith.constant 0 : index
    %63 = vector.load %arg14[%c0_35, %c0_36] : memref<1x16xf32, #tpu.memory_space<vmem>>, vector<1x16xf32>
    %cst_37 = arith.constant dense<0.000000e+00> : vector<64x16xf32>
    %64 = tpu.matmul %24, %62, %cst_37 {dimension_numbers = #tpu.dot_dimension_numbers<[1], [0], [0], [1], [0, 0, 1, 1], [], []>} : vector<64x16xf32>, vector<16x16xf32>, vector<64x16xf32> -> vector<64x16xf32>
    %65 = vector.broadcast %63 : vector<1x16xf32> to vector<64x16xf32>
    %66 = arith.addf %64, %65 : vector<64x16xf32>
    %67 = arith.negf %66 : vector<64x16xf32>
    %68 = math.exp %67 : vector<64x16xf32>
    %cst_38 = arith.constant 1.000000e+00 : f32
    %69 = vector.broadcast %cst_38 : f32 to vector<64x16xf32>
    %70 = arith.addf %69, %68 : vector<64x16xf32>
    %71 = arith.divf %69, %70 : vector<64x16xf32>
    %72 = arith.truncf %43 : vector<64x16xf32> to vector<64x16xbf16>
    %c0_39 = arith.constant 0 : index
    %c0_40 = arith.constant 0 : index
    %73 = vector.load %arg15[%c0_39, %c0_40] : memref<64x16xbf16, #tpu.memory_space<vmem>>, vector<64x16xbf16>
    tpu.vector_store %arg15[%c0_39, %c0_40], %72 {strides = array<i32>} : memref<64x16xbf16, #tpu.memory_space<vmem>>, vector<64x16xbf16>,
    %74 = arith.truncf %61 : vector<64x16xf32> to vector<64x16xbf16>
    %c0_41 = arith.constant 0 : index
    %c0_42 = arith.constant 0 : index
    %75 = vector.load %arg16[%c0_41, %c0_42] : memref<64x16xbf16, #tpu.memory_space<vmem>>, vector<64x16xbf16>
    tpu.vector_store %arg16[%c0_41, %c0_42], %74 {strides = array<i32>} : memref<64x16xbf16, #tpu.memory_space<vmem>>, vector<64x16xbf16>,
    %c0_43 = arith.constant 0 : index
    %c0_44 = arith.constant 0 : index
    %76 = vector.load %arg17[%c0_43, %c0_44] : memref<64x16xf32, #tpu.memory_space<vmem>>, vector<64x16xf32>
    tpu.vector_store %arg17[%c0_43, %c0_44], %71 {strides = array<i32>} : memref<64x16xf32, #tpu.memory_space<vmem>>, vector<64x16xf32>,
    return
  }
  func.func @transform_0(%arg0: i32) -> (i32, i32) {
    %c0_i32 = arith.constant 0 : i32
    %c0_i32_0 = arith.constant 0 : i32
    return %arg0, %c0_i32 : i32, i32
  }
  func.func @transform_1(%arg0: i32) -> (i32, i32) {
    %c0_i32 = arith.constant 0 : i32
    %c0_i32_0 = arith.constant 0 : i32
    return %arg0, %c0_i32 : i32, i32
  }
  func.func @transform_2(%arg0: i32) -> (i32, i32) {
    %c0_i32 = arith.constant 0 : i32
    %c0_i32_0 = arith.constant 0 : i32
    %c0_i32_1 = arith.constant 0 : i32
    return %c0_i32, %c0_i32_0 : i32, i32
  }
  func.func @transform_3(%arg0: i32) -> (i32, i32) {
    %c0_i32 = arith.constant 0 : i32
    %c0_i32_0 = arith.constant 0 : i32
    %c0_i32_1 = arith.constant 0 : i32
    return %c0_i32, %c0_i32_0 : i32, i32
  }
  func.func @transform_4(%arg0: i32) -> (i32, i32) {
    %c0_i32 = arith.constant 0 : i32
    %c0_i32_0 = arith.constant 0 : i32
    %c0_i32_1 = arith.constant 0 : i32
    return %c0_i32, %c0_i32_0 : i32, i32
  }
  func.func @transform_5(%arg0: i32) -> (i32, i32) {
    %c0_i32 = arith.constant 0 : i32
    %c0_i32_0 = arith.constant 0 : i32
    %c0_i32_1 = arith.constant 0 : i32
    return %c0_i32, %c0_i32_0 : i32, i32
  }
  func.func @transform_6(%arg0: i32) -> (i32, i32) {
    %c0_i32 = arith.constant 0 : i32
    %c0_i32_0 = arith.constant 0 : i32
    %c0_i32_1 = arith.constant 0 : i32
    return %c0_i32, %c0_i32_0 : i32, i32
  }
  func.func @transform_7(%arg0: i32) -> (i32, i32) {
    %c0_i32 = arith.constant 0 : i32
    %c0_i32_0 = arith.constant 0 : i32
    %c0_i32_1 = arith.constant 0 : i32
    return %c0_i32, %c0_i32_0 : i32, i32
  }
  func.func @transform_8(%arg0: i32) -> (i32, i32) {
    %c0_i32 = arith.constant 0 : i32
    %c0_i32_0 = arith.constant 0 : i32
    %c0_i32_1 = arith.constant 0 : i32
    return %c0_i32, %c0_i32_0 : i32, i32
  }
  func.func @transform_9(%arg0: i32) -> (i32, i32) {
    %c0_i32 = arith.constant 0 : i32
    %c0_i32_0 = arith.constant 0 : i32
    %c0_i32_1 = arith.constant 0 : i32
    return %c0_i32, %c0_i32_0 : i32, i32
  }
  func.func @transform_10(%arg0: i32) -> (i32, i32) {
    %c0_i32 = arith.constant 0 : i32
    %c0_i32_0 = arith.constant 0 : i32
    %c0_i32_1 = arith.constant 0 : i32
    return %c0_i32, %c0_i32_0 : i32, i32
  }
  func.func @transform_11(%arg0: i32) -> (i32, i32) {
    %c0_i32 = arith.constant 0 : i32
    %c0_i32_0 = arith.constant 0 : i32
    %c0_i32_1 = arith.constant 0 : i32
    return %c0_i32, %c0_i32_0 : i32, i32
  }
  func.func @transform_12(%arg0: i32) -> (i32, i32) {
    %c0_i32 = arith.constant 0 : i32
    %c0_i32_0 = arith.constant 0 : i32
    %c0_i32_1 = arith.constant 0 : i32
    return %c0_i32, %c0_i32_0 : i32, i32
  }
  func.func @transform_13(%arg0: i32) -> (i32, i32) {
    %c0_i32 = arith.constant 0 : i32
    %c0_i32_0 = arith.constant 0 : i32
    %c0_i32_1 = arith.constant 0 : i32
    return %c0_i32, %c0_i32_0 : i32, i32
  }
  func.func @transform_14(%arg0: i32) -> (i32, i32) {
    %c0_i32 = arith.constant 0 : i32
    %c0_i32_0 = arith.constant 0 : i32
    return %arg0, %c0_i32 : i32, i32
  }
  func.func @transform_15(%arg0: i32) -> (i32, i32) {
    %c0_i32 = arith.constant 0 : i32
    %c0_i32_0 = arith.constant 0 : i32
    return %arg0, %c0_i32 : i32, i32
  }
  func.func @transform_16(%arg0: i32) -> (i32, i32) {
    %c0_i32 = arith.constant 0 : i32
    %c0_i32_0 = arith.constant 0 : i32
    return %arg0, %c0_i32 : i32, i32
  }
}

module attributes {stable_mosaic.version = 11 : i64} {
  func.func @_bmm_kernel(%arg0: i32, %arg1: i32, %arg2: i32, %arg3: i32, %arg4: memref<1x8x8xbf16, #tpu.memory_space<vmem>>, %arg5: memref<1x8x8xbf16, #tpu.memory_space<vmem>>, %arg6: memref<1x8x8xbf16, #tpu.memory_space<vmem>>, %arg7: memref<8x8xf32, #tpu.memory_space<vmem>>) attributes {dimension_semantics = [#tpu.dimension_semantics<parallel>, #tpu.dimension_semantics<parallel>, #tpu.dimension_semantics<parallel>, #tpu.dimension_semantics<arbitrary>], iteration_bounds = array<i64: 16, 1, 1, 1>, scalar_prefetch = 0 : i64, scratch_operands = 1 : i64, tpu.core_type = #tpu.core_type<tc>, window_params = [{transform_indices = @transform_0, window_bounds = array<i64: 1, 8, 8>}, {transform_indices = @transform_1, window_bounds = array<i64: 1, 8, 8>}, {transform_indices = @transform_2, window_bounds = array<i64: 1, 8, 8>}]} {
    %c0_i32 = arith.constant 0 : i32
    %0 = arith.cmpi eq, %arg3, %c0_i32 : i32
    %1 = arith.extui %0 : i1 to i32
    %c0_i32_0 = arith.constant 0 : i32
    %2 = arith.cmpi ne, %1, %c0_i32_0 : i32
    scf.if %2 {
      %cst_12 = arith.constant 0.000000e+00 : f32
      %14 = vector.broadcast %cst_12 : f32 to vector<8x8xf32>
      %c0_13 = arith.constant 0 : index
      %c0_14 = arith.constant 0 : index
      %15 = vector.load %arg7[%c0_13, %c0_14] : memref<8x8xf32, #tpu.memory_space<vmem>>, vector<8x8xf32>
      tpu.vector_store %arg7[%c0_13, %c0_14], %14 {strides = array<i32>} : memref<8x8xf32, #tpu.memory_space<vmem>>, vector<8x8xf32>,
    } else {
    }
    %c0 = arith.constant 0 : index
    %c0_1 = arith.constant 0 : index
    %3 = vector.load %arg7[%c0, %c0_1] : memref<8x8xf32, #tpu.memory_space<vmem>>, vector<8x8xf32>
    %c0_2 = arith.constant 0 : index
    %c0_3 = arith.constant 0 : index
    %c0_4 = arith.constant 0 : index
    %4 = vector.load %arg4[%c0_2, %c0_3, %c0_4] : memref<1x8x8xbf16, #tpu.memory_space<vmem>>, vector<1x8x8xbf16>
    %5 = vector.shape_cast %4 : vector<1x8x8xbf16> to vector<8x8xbf16>
    %c0_5 = arith.constant 0 : index
    %c0_6 = arith.constant 0 : index
    %c0_7 = arith.constant 0 : index
    %6 = vector.load %arg5[%c0_5, %c0_6, %c0_7] : memref<1x8x8xbf16, #tpu.memory_space<vmem>>, vector<1x8x8xbf16>
    %7 = vector.shape_cast %6 : vector<1x8x8xbf16> to vector<8x8xbf16>
    %cst = arith.constant dense<0.000000e+00> : vector<8x8xf32>
    %8 = tpu.matmul %5, %7, %cst {dimension_numbers = #tpu.dot_dimension_numbers<[1], [0], [0], [1], [0, 0, 1, 1], [], []>} : vector<8x8xbf16>, vector<8x8xbf16>, vector<8x8xf32> -> vector<8x8xf32>
    %9 = arith.addf %3, %8 : vector<8x8xf32>
    %c0_8 = arith.constant 0 : index
    %c0_9 = arith.constant 0 : index
    %10 = vector.load %arg7[%c0_8, %c0_9] : memref<8x8xf32, #tpu.memory_space<vmem>>, vector<8x8xf32>
    tpu.vector_store %arg7[%c0_8, %c0_9], %9 {strides = array<i32>} : memref<8x8xf32, #tpu.memory_space<vmem>>, vector<8x8xf32>,
    %c0_i32_10 = arith.constant 0 : i32
    %11 = arith.cmpi eq, %arg3, %c0_i32_10 : i32
    %12 = arith.extui %11 : i1 to i32
    %c0_i32_11 = arith.constant 0 : i32
    %13 = arith.cmpi ne, %12, %c0_i32_11 : i32
    scf.if %13 {
      %c0_12 = arith.constant 0 : index
      %c0_13 = arith.constant 0 : index
      %14 = vector.load %arg7[%c0_12, %c0_13] : memref<8x8xf32, #tpu.memory_space<vmem>>, vector<8x8xf32>
      %15 = arith.truncf %14 : vector<8x8xf32> to vector<8x8xbf16>
      %c0_14 = arith.constant 0 : index
      %c0_15 = arith.constant 0 : index
      %c0_16 = arith.constant 0 : index
      %16 = vector.load %arg6[%c0_14, %c0_15, %c0_16] : memref<1x8x8xbf16, #tpu.memory_space<vmem>>, vector<1x8x8xbf16>
      %17 = vector.shape_cast %16 : vector<1x8x8xbf16> to vector<8x8xbf16>
      %18 = vector.shape_cast %15 : vector<8x8xbf16> to vector<1x8x8xbf16>
      tpu.vector_store %arg6[%c0_14, %c0_15, %c0_16], %18 {strides = array<i32>} : memref<1x8x8xbf16, #tpu.memory_space<vmem>>, vector<1x8x8xbf16>,
    } else {
    }
    return
  }
  func.func @transform_0(%arg0: i32, %arg1: i32, %arg2: i32, %arg3: i32) -> (i32, i32, i32) {
    %c0_i32 = arith.constant 0 : i32
    return %arg0, %arg1, %arg3 : i32, i32, i32
  }
  func.func @transform_1(%arg0: i32, %arg1: i32, %arg2: i32, %arg3: i32) -> (i32, i32, i32) {
    %c0_i32 = arith.constant 0 : i32
    return %arg0, %arg3, %arg2 : i32, i32, i32
  }
  func.func @transform_2(%arg0: i32, %arg1: i32, %arg2: i32, %arg3: i32) -> (i32, i32, i32) {
    %c0_i32 = arith.constant 0 : i32
    return %arg0, %arg1, %arg2 : i32, i32, i32
  }
}

module attributes {stable_mosaic.version = 11 : i64} {
  func.func @_ln_linear_gate_kernel(%arg0: i32, %arg1: memref<64x16xbf16, #tpu.memory_space<vmem>>, %arg2: memref<64x16xf32, #tpu.memory_space<vmem>>, %arg3: memref<1x16xf32, #tpu.memory_space<vmem>>, %arg4: memref<1x16xf32, #tpu.memory_space<vmem>>, %arg5: memref<16x16xf32, #tpu.memory_space<vmem>>, %arg6: memref<1x16xf32, #tpu.memory_space<vmem>>, %arg7: memref<64x16xf32, #tpu.memory_space<vmem>>) attributes {dimension_semantics = [#tpu.dimension_semantics<parallel>], iteration_bounds = array<i64: 1>, scalar_prefetch = 0 : i64, scratch_operands = 0 : i64, tpu.core_type = #tpu.core_type<tc>, window_params = [{transform_indices = @transform_0, window_bounds = array<i64: 64, 16>}, {transform_indices = @transform_1, window_bounds = array<i64: 64, 16>}, {pipeline_mode = #tpu.pipeline_mode<synchronous>, transform_indices = @transform_2, window_bounds = array<i64: 1, 16>}, {pipeline_mode = #tpu.pipeline_mode<synchronous>, transform_indices = @transform_3, window_bounds = array<i64: 1, 16>}, {pipeline_mode = #tpu.pipeline_mode<synchronous>, transform_indices = @transform_4, window_bounds = array<i64: 16, 16>}, {pipeline_mode = #tpu.pipeline_mode<synchronous>, transform_indices = @transform_5, window_bounds = array<i64: 1, 16>}, {transform_indices = @transform_6, window_bounds = array<i64: 64, 16>}]} {
    %c0 = arith.constant 0 : index
    %c0_0 = arith.constant 0 : index
    %0 = vector.load %arg1[%c0, %c0_0] : memref<64x16xbf16, #tpu.memory_space<vmem>>, vector<64x16xbf16>
    %1 = arith.extf %0 : vector<64x16xbf16> to vector<64x16xf32>
    %c0_1 = arith.constant 0 : index
    %c0_2 = arith.constant 0 : index
    %2 = vector.load %arg3[%c0_1, %c0_2] : memref<1x16xf32, #tpu.memory_space<vmem>>, vector<1x16xf32>
    %c0_3 = arith.constant 0 : index
    %c0_4 = arith.constant 0 : index
    %3 = vector.load %arg4[%c0_3, %c0_4] : memref<1x16xf32, #tpu.memory_space<vmem>>, vector<1x16xf32>
    %cst = arith.constant dense<0.000000e+00> : vector<64xf32>
    %4 = vector.multi_reduction <add>, %1, %cst [1] : vector<64x16xf32> to vector<64xf32>
    %5 = vector.shape_cast %4 : vector<64xf32> to vector<64x1xf32>
    %cst_5 = arith.constant 1.600000e+01 : f32
    %6 = vector.broadcast %cst_5 : f32 to vector<64x1xf32>
    %7 = arith.divf %5, %6 : vector<64x1xf32>
    %8 = vector.broadcast %7 : vector<64x1xf32> to vector<64x16xf32>
    %9 = arith.subf %1, %8 : vector<64x16xf32>
    %10 = arith.mulf %9, %9 : vector<64x16xf32>
    %cst_6 = arith.constant dense<0.000000e+00> : vector<64xf32>
    %11 = vector.multi_reduction <add>, %10, %cst_6 [1] : vector<64x16xf32> to vector<64xf32>
    %12 = vector.shape_cast %11 : vector<64xf32> to vector<64x1xf32>
    %cst_7 = arith.constant 1.600000e+01 : f32
    %13 = vector.broadcast %cst_7 : f32 to vector<64x1xf32>
    %14 = arith.divf %12, %13 : vector<64x1xf32>
    %15 = vector.broadcast %7 : vector<64x1xf32> to vector<64x16xf32>
    %16 = arith.subf %1, %15 : vector<64x16xf32>
    %cst_8 = arith.constant 9.99999974E-6 : f32
    %17 = vector.broadcast %cst_8 : f32 to vector<64x1xf32>
    %18 = arith.addf %14, %17 : vector<64x1xf32>
    %19 = math.rsqrt %18 : vector<64x1xf32>
    %20 = vector.broadcast %19 : vector<64x1xf32> to vector<64x16xf32>
    %21 = arith.mulf %16, %20 : vector<64x16xf32>
    %22 = vector.broadcast %2 : vector<1x16xf32> to vector<64x16xf32>
    %23 = arith.mulf %21, %22 : vector<64x16xf32>
    %24 = vector.broadcast %3 : vector<1x16xf32> to vector<64x16xf32>
    %25 = arith.addf %23, %24 : vector<64x16xf32>
    %c0_9 = arith.constant 0 : index
    %c0_10 = arith.constant 0 : index
    %26 = vector.load %arg5[%c0_9, %c0_10] : memref<16x16xf32, #tpu.memory_space<vmem>>, vector<16x16xf32>
    %c0_11 = arith.constant 0 : index
    %c0_12 = arith.constant 0 : index
    %27 = vector.load %arg6[%c0_11, %c0_12] : memref<1x16xf32, #tpu.memory_space<vmem>>, vector<1x16xf32>
    %cst_13 = arith.constant dense<0.000000e+00> : vector<64x16xf32>
    %28 = tpu.matmul %25, %26, %cst_13 {dimension_numbers = #tpu.dot_dimension_numbers<[1], [0], [0], [1], [0, 0, 1, 1], [], []>} : vector<64x16xf32>, vector<16x16xf32>, vector<64x16xf32> -> vector<64x16xf32>
    %29 = vector.broadcast %27 : vector<1x16xf32> to vector<64x16xf32>
    %30 = arith.addf %28, %29 : vector<64x16xf32>
    %c0_14 = arith.constant 0 : index
    %c0_15 = arith.constant 0 : index
    %31 = vector.load %arg2[%c0_14, %c0_15] : memref<64x16xf32, #tpu.memory_space<vmem>>, vector<64x16xf32>
    %32 = arith.mulf %30, %31 : vector<64x16xf32>
    %c0_16 = arith.constant 0 : index
    %c0_17 = arith.constant 0 : index
    %33 = vector.load %arg7[%c0_16, %c0_17] : memref<64x16xf32, #tpu.memory_space<vmem>>, vector<64x16xf32>
    tpu.vector_store %arg7[%c0_16, %c0_17], %32 {strides = array<i32>} : memref<64x16xf32, #tpu.memory_space<vmem>>, vector<64x16xf32>,
    return
  }
  func.func @transform_0(%arg0: i32) -> (i32, i32) {
    %c0_i32 = arith.constant 0 : i32
    %c0_i32_0 = arith.constant 0 : i32
    return %arg0, %c0_i32 : i32, i32
  }
  func.func @transform_1(%arg0: i32) -> (i32, i32) {
    %c0_i32 = arith.constant 0 : i32
    %c0_i32_0 = arith.constant 0 : i32
    return %arg0, %c0_i32 : i32, i32
  }
  func.func @transform_2(%arg0: i32) -> (i32, i32) {
    %c0_i32 = arith.constant 0 : i32
    %c0_i32_0 = arith.constant 0 : i32
    %c0_i32_1 = arith.constant 0 : i32
    return %c0_i32, %c0_i32_0 : i32, i32
  }
  func.func @transform_3(%arg0: i32) -> (i32, i32) {
    %c0_i32 = arith.constant 0 : i32
    %c0_i32_0 = arith.constant 0 : i32
    %c0_i32_1 = arith.constant 0 : i32
    return %c0_i32, %c0_i32_0 : i32, i32
  }
  func.func @transform_4(%arg0: i32) -> (i32, i32) {
    %c0_i32 = arith.constant 0 : i32
    %c0_i32_0 = arith.constant 0 : i32
    %c0_i32_1 = arith.constant 0 : i32
    return %c0_i32, %c0_i32_0 : i32, i32
  }
  func.func @transform_5(%arg0: i32) -> (i32, i32) {
    %c0_i32 = arith.constant 0 : i32
    %c0_i32_0 = arith.constant 0 : i32
    %c0_i32_1 = arith.constant 0 : i32
    return %c0_i32, %c0_i32_0 : i32, i32
  }
  func.func @transform_6(%arg0: i32) -> (i32, i32) {
    %c0_i32 = arith.constant 0 : i32
    %c0_i32_0 = arith.constant 0 : i32
    return %arg0, %c0_i32 : i32, i32
  }
}

module attributes {stable_mosaic.version = 11 : i64} {
  func.func @_ln_linear_kernel(%arg0: i32, %arg1: memref<64x16xf32, #tpu.memory_space<vmem>>, %arg2: memref<1x16xf32, #tpu.memory_space<vmem>>, %arg3: memref<1x16xf32, #tpu.memory_space<vmem>>, %arg4: memref<16x2xf32, #tpu.memory_space<vmem>>, %arg5: memref<1x2xf32, #tpu.memory_space<vmem>>, %arg6: memref<64x2xf32, #tpu.memory_space<vmem>>) attributes {dimension_semantics = [#tpu.dimension_semantics<parallel>], iteration_bounds = array<i64: 1>, scalar_prefetch = 0 : i64, scratch_operands = 0 : i64, tpu.core_type = #tpu.core_type<tc>, window_params = [{transform_indices = @transform_0, window_bounds = array<i64: 64, 16>}, {pipeline_mode = #tpu.pipeline_mode<synchronous>, transform_indices = @transform_1, window_bounds = array<i64: 1, 16>}, {pipeline_mode = #tpu.pipeline_mode<synchronous>, transform_indices = @transform_2, window_bounds = array<i64: 1, 16>}, {pipeline_mode = #tpu.pipeline_mode<synchronous>, transform_indices = @transform_3, window_bounds = array<i64: 16, 2>}, {pipeline_mode = #tpu.pipeline_mode<synchronous>, transform_indices = @transform_4, window_bounds = array<i64: 1, 2>}, {transform_indices = @transform_5, window_bounds = array<i64: 64, 2>}]} {
    %c0 = arith.constant 0 : index
    %c0_0 = arith.constant 0 : index
    %0 = vector.load %arg1[%c0, %c0_0] : memref<64x16xf32, #tpu.memory_space<vmem>>, vector<64x16xf32>
    %c0_1 = arith.constant 0 : index
    %c0_2 = arith.constant 0 : index
    %1 = vector.load %arg2[%c0_1, %c0_2] : memref<1x16xf32, #tpu.memory_space<vmem>>, vector<1x16xf32>
    %c0_3 = arith.constant 0 : index
    %c0_4 = arith.constant 0 : index
    %2 = vector.load %arg3[%c0_3, %c0_4] : memref<1x16xf32, #tpu.memory_space<vmem>>, vector<1x16xf32>
    %cst = arith.constant dense<0.000000e+00> : vector<64xf32>
    %3 = vector.multi_reduction <add>, %0, %cst [1] : vector<64x16xf32> to vector<64xf32>
    %4 = vector.shape_cast %3 : vector<64xf32> to vector<64x1xf32>
    %cst_5 = arith.constant 1.600000e+01 : f32
    %5 = vector.broadcast %cst_5 : f32 to vector<64x1xf32>
    %6 = arith.divf %4, %5 : vector<64x1xf32>
    %7 = vector.broadcast %6 : vector<64x1xf32> to vector<64x16xf32>
    %8 = arith.subf %0, %7 : vector<64x16xf32>
    %9 = arith.mulf %8, %8 : vector<64x16xf32>
    %cst_6 = arith.constant dense<0.000000e+00> : vector<64xf32>
    %10 = vector.multi_reduction <add>, %9, %cst_6 [1] : vector<64x16xf32> to vector<64xf32>
    %11 = vector.shape_cast %10 : vector<64xf32> to vector<64x1xf32>
    %cst_7 = arith.constant 1.600000e+01 : f32
    %12 = vector.broadcast %cst_7 : f32 to vector<64x1xf32>
    %13 = arith.divf %11, %12 : vector<64x1xf32>
    %14 = vector.broadcast %6 : vector<64x1xf32> to vector<64x16xf32>
    %15 = arith.subf %0, %14 : vector<64x16xf32>
    %cst_8 = arith.constant 9.99999974E-6 : f32
    %16 = vector.broadcast %cst_8 : f32 to vector<64x1xf32>
    %17 = arith.addf %13, %16 : vector<64x1xf32>
    %18 = math.rsqrt %17 : vector<64x1xf32>
    %19 = vector.broadcast %18 : vector<64x1xf32> to vector<64x16xf32>
    %20 = arith.mulf %15, %19 : vector<64x16xf32>
    %21 = vector.broadcast %1 : vector<1x16xf32> to vector<64x16xf32>
    %22 = arith.mulf %20, %21 : vector<64x16xf32>
    %23 = vector.broadcast %2 : vector<1x16xf32> to vector<64x16xf32>
    %24 = arith.addf %22, %23 : vector<64x16xf32>
    %c0_9 = arith.constant 0 : index
    %c0_10 = arith.constant 0 : index
    %25 = vector.load %arg4[%c0_9, %c0_10] : memref<16x2xf32, #tpu.memory_space<vmem>>, vector<16x2xf32>
    %c0_11 = arith.constant 0 : index
    %c0_12 = arith.constant 0 : index
    %26 = vector.load %arg5[%c0_11, %c0_12] : memref<1x2xf32, #tpu.memory_space<vmem>>, vector<1x2xf32>
    %cst_13 = arith.constant dense<0.000000e+00> : vector<64x2xf32>
    %27 = tpu.matmul %24, %25, %cst_13 {dimension_numbers = #tpu.dot_dimension_numbers<[1], [0], [0], [1], [0, 0, 1, 1], [], []>} : vector<64x16xf32>, vector<16x2xf32>, vector<64x2xf32> -> vector<64x2xf32>
    %28 = vector.broadcast %26 : vector<1x2xf32> to vector<64x2xf32>
    %29 = arith.addf %27, %28 : vector<64x2xf32>
    %c0_14 = arith.constant 0 : index
    %c0_15 = arith.constant 0 : index
    %30 = vector.load %arg6[%c0_14, %c0_15] : memref<64x2xf32, #tpu.memory_space<vmem>>, vector<64x2xf32>
    tpu.vector_store %arg6[%c0_14, %c0_15], %29 {strides = array<i32>} : memref<64x2xf32, #tpu.memory_space<vmem>>, vector<64x2xf32>,
    return
  }
  func.func @transform_0(%arg0: i32) -> (i32, i32) {
    %c0_i32 = arith.constant 0 : i32
    %c0_i32_0 = arith.constant 0 : i32
    return %arg0, %c0_i32 : i32, i32
  }
  func.func @transform_1(%arg0: i32) -> (i32, i32) {
    %c0_i32 = arith.constant 0 : i32
    %c0_i32_0 = arith.constant 0 : i32
    %c0_i32_1 = arith.constant 0 : i32
    return %c0_i32, %c0_i32_0 : i32, i32
  }
  func.func @transform_2(%arg0: i32) -> (i32, i32) {
    %c0_i32 = arith.constant 0 : i32
    %c0_i32_0 = arith.constant 0 : i32
    %c0_i32_1 = arith.constant 0 : i32
    return %c0_i32, %c0_i32_0 : i32, i32
  }
  func.func @transform_3(%arg0: i32) -> (i32, i32) {
    %c0_i32 = arith.constant 0 : i32
    %c0_i32_0 = arith.constant 0 : i32
    %c0_i32_1 = arith.constant 0 : i32
    return %c0_i32, %c0_i32_0 : i32, i32
  }
  func.func @transform_4(%arg0: i32) -> (i32, i32) {
    %c0_i32 = arith.constant 0 : i32
    %c0_i32_0 = arith.constant 0 : i32
    %c0_i32_1 = arith.constant 0 : i32
    return %c0_i32, %c0_i32_0 : i32, i32
  }
  func.func @transform_5(%arg0: i32) -> (i32, i32) {
    %c0_i32 = arith.constant 0 : i32
    %c0_i32_0 = arith.constant 0 : i32
    return %arg0, %c0_i32 : i32, i32
  }
}

module attributes {stable_mosaic.version = 11 : i64} {
  func.func @_fused_attention_kernel(%arg0: i32, %arg1: i32, %arg2: memref<1x1x8x16xf32, #tpu.memory_space<vmem>>, %arg3: memref<1x2x8x8xbf16, #tpu.memory_space<vmem>>, %arg4: memref<1x1x1x8xf32, #tpu.memory_space<vmem>>, %arg5: memref<1x16xf32, #tpu.memory_space<vmem>>, %arg6: memref<1x16xf32, #tpu.memory_space<vmem>>, %arg7: memref<16x64xbf16, #tpu.memory_space<vmem>>, %arg8: memref<1x64xf32, #tpu.memory_space<vmem>>, %arg9: memref<16x16xbf16, #tpu.memory_space<vmem>>, %arg10: memref<1x16xf32, #tpu.memory_space<vmem>>, %arg11: memref<1x1x8x16xf32, #tpu.memory_space<vmem>>) attributes {dimension_semantics = [#tpu.dimension_semantics<parallel>, #tpu.dimension_semantics<parallel>], iteration_bounds = array<i64: 1, 8>, scalar_prefetch = 0 : i64, scratch_operands = 0 : i64, tpu.core_type = #tpu.core_type<tc>, window_params = [{transform_indices = @transform_0, window_bounds = array<i64: 1, 1, 8, 16>}, {transform_indices = @transform_1, window_bounds = array<i64: 1, 2, 8, 8>}, {transform_indices = @transform_2, window_bounds = array<i64: 1, 1, 1, 8>}, {pipeline_mode = #tpu.pipeline_mode<synchronous>, transform_indices = @transform_3, window_bounds = array<i64: 1, 16>}, {pipeline_mode = #tpu.pipeline_mode<synchronous>, transform_indices = @transform_4, window_bounds = array<i64: 1, 16>}, {pipeline_mode = #tpu.pipeline_mode<synchronous>, transform_indices = @transform_5, window_bounds = array<i64: 16, 64>}, {pipeline_mode = #tpu.pipeline_mode<synchronous>, transform_indices = @transform_6, window_bounds = array<i64: 1, 64>}, {pipeline_mode = #tpu.pipeline_mode<synchronous>, transform_indices = @transform_7, window_bounds = array<i64: 16, 16>}, {pipeline_mode = #tpu.pipeline_mode<synchronous>, transform_indices = @transform_8, window_bounds = array<i64: 1, 16>}, {transform_indices = @transform_9, window_bounds = array<i64: 1, 1, 8, 16>}]} {
    %c0 = arith.constant 0 : index
    %c0_0 = arith.constant 0 : index
    %c0_1 = arith.constant 0 : index
    %c0_2 = arith.constant 0 : index
    %0 = vector.load %arg2[%c0, %c0_0, %c0_1, %c0_2] : memref<1x1x8x16xf32, #tpu.memory_space<vmem>>, vector<1x1x8x16xf32>
    %1 = vector.shape_cast %0 : vector<1x1x8x16xf32> to vector<8x16xf32>
    %c0_3 = arith.constant 0 : index
    %c0_4 = arith.constant 0 : index
    %2 = vector.load %arg5[%c0_3, %c0_4] : memref<1x16xf32, #tpu.memory_space<vmem>>, vector<1x16xf32>
    %c0_5 = arith.constant 0 : index
    %c0_6 = arith.constant 0 : index
    %3 = vector.load %arg6[%c0_5, %c0_6] : memref<1x16xf32, #tpu.memory_space<vmem>>, vector<1x16xf32>
    %cst = arith.constant dense<0.000000e+00> : vector<8xf32>
    %4 = vector.multi_reduction <add>, %1, %cst [1] : vector<8x16xf32> to vector<8xf32>
    %5 = vector.shape_cast %4 : vector<8xf32> to vector<8x1xf32>
    %cst_7 = arith.constant 1.600000e+01 : f32
    %6 = vector.broadcast %cst_7 : f32 to vector<8x1xf32>
    %7 = arith.divf %5, %6 : vector<8x1xf32>
    %8 = vector.broadcast %7 : vector<8x1xf32> to vector<8x16xf32>
    %9 = arith.subf %1, %8 : vector<8x16xf32>
    %10 = arith.mulf %9, %9 : vector<8x16xf32>
    %cst_8 = arith.constant dense<0.000000e+00> : vector<8xf32>
    %11 = vector.multi_reduction <add>, %10, %cst_8 [1] : vector<8x16xf32> to vector<8xf32>
    %12 = vector.shape_cast %11 : vector<8xf32> to vector<8x1xf32>
    %cst_9 = arith.constant 1.600000e+01 : f32
    %13 = vector.broadcast %cst_9 : f32 to vector<8x1xf32>
    %14 = arith.divf %12, %13 : vector<8x1xf32>
    %15 = vector.broadcast %7 : vector<8x1xf32> to vector<8x16xf32>
    %16 = arith.subf %1, %15 : vector<8x16xf32>
    %cst_10 = arith.constant 9.99999974E-6 : f32
    %17 = vector.broadcast %cst_10 : f32 to vector<8x1xf32>
    %18 = arith.addf %14, %17 : vector<8x1xf32>
    %19 = math.rsqrt %18 : vector<8x1xf32>
    %20 = vector.broadcast %19 : vector<8x1xf32> to vector<8x16xf32>
    %21 = arith.mulf %16, %20 : vector<8x16xf32>
    %22 = vector.broadcast %2 : vector<1x16xf32> to vector<8x16xf32>
    %23 = arith.mulf %21, %22 : vector<8x16xf32>
    %24 = vector.broadcast %3 : vector<1x16xf32> to vector<8x16xf32>
    %25 = arith.addf %23, %24 : vector<8x16xf32>
    %26 = arith.truncf %25 : vector<8x16xf32> to vector<8x16xbf16>
    %c0_11 = arith.constant 0 : index
    %c0_12 = arith.constant 0 : index
    %27 = vector.load %arg7[%c0_11, %c0_12] : memref<16x64xbf16, #tpu.memory_space<vmem>>, vector<16x64xbf16>
    %cst_13 = arith.constant dense<0.000000e+00> : vector<8x64xf32>
    %28 = tpu.matmul %26, %27, %cst_13 {dimension_numbers = #tpu.dot_dimension_numbers<[1], [0], [0], [1], [0, 0, 1, 1], [], []>} : vector<8x16xbf16>, vector<16x64xbf16>, vector<8x64xf32> -> vector<8x64xf32>
    %c0_14 = arith.constant 0 : index
    %c0_15 = arith.constant 0 : index
    %29 = vector.load %arg8[%c0_14, %c0_15] : memref<1x64xf32, #tpu.memory_space<vmem>>, vector<1x64xf32>
    %30 = vector.broadcast %29 : vector<1x64xf32> to vector<8x64xf32>
    %31 = arith.addf %28, %30 : vector<8x64xf32>
    %c0_16 = arith.constant 0 : index
    %c0_17 = arith.constant 0 : index
    %c0_18 = arith.constant 0 : index
    %c0_19 = arith.constant 0 : index
    %32 = vector.load %arg4[%c0_16, %c0_17, %c0_18, %c0_19] : memref<1x1x1x8xf32, #tpu.memory_space<vmem>>, vector<1x1x1x8xf32>
    %33 = vector.shape_cast %32 : vector<1x1x1x8xf32> to vector<1x8xf32>
    %cst_20 = arith.constant 1.000000e+00 : f32
    %34 = vector.broadcast %cst_20 : f32 to vector<1x8xf32>
    %35 = arith.subf %33, %34 : vector<1x8xf32>
    %cst_21 = arith.constant 1.000000e+09 : f32
    %36 = vector.broadcast %cst_21 : f32 to vector<1x8xf32>
    %37 = arith.mulf %35, %36 : vector<1x8xf32>
    %38 = vector.extract_strided_slice %31 {offsets = [0, 0], sizes = [8, 8], strides = [1, 1]} : vector<8x64xf32> to vector<8x8xf32>
    %cst_22 = arith.constant 0.353553385 : f32
    %39 = vector.broadcast %cst_22 : f32 to vector<8x8xf32>
    %40 = arith.mulf %38, %39 : vector<8x8xf32>
    %41 = arith.truncf %40 : vector<8x8xf32> to vector<8x8xbf16>
    %42 = vector.extract_strided_slice %31 {offsets = [0, 16], sizes = [8, 8], strides = [1, 1]} : vector<8x64xf32> to vector<8x8xf32>
    %43 = arith.truncf %42 : vector<8x8xf32> to vector<8x8xbf16>
    %44 = vector.extract_strided_slice %31 {offsets = [0, 32], sizes = [8, 8], strides = [1, 1]} : vector<8x64xf32> to vector<8x8xf32>
    %cst_23 = arith.constant dense<0.000000e+00> : vector<8x8xf32>
    %45 = tpu.matmul %41, %43, %cst_23 {dimension_numbers = #tpu.dot_dimension_numbers<[1], [1], [0], [0], [0, 0, 1, 0], [], []>} : vector<8x8xbf16>, vector<8x8xbf16>, vector<8x8xf32> -> vector<8x8xf32>
    %c0_24 = arith.constant 0 : index
    %c0_25 = arith.constant 0 : index
    %c0_26 = arith.constant 0 : index
    %c0_27 = arith.constant 0 : index
    %46 = vector.load %arg3[%c0_24, %c0_25, %c0_26, %c0_27] : memref<1x2x8x8xbf16, #tpu.memory_space<vmem>>, vector<1x1x8x8xbf16>
    %47 = vector.shape_cast %46 : vector<1x1x8x8xbf16> to vector<8x8xbf16>
    %48 = arith.extf %47 : vector<8x8xbf16> to vector<8x8xf32>
    %49 = arith.addf %45, %48 : vector<8x8xf32>
    %50 = vector.broadcast %37 : vector<1x8xf32> to vector<8x8xf32>
    %51 = arith.addf %49, %50 : vector<8x8xf32>
    %cst_28 = arith.constant dense<0xFF800000> : vector<8xf32>
    %52 = vector.multi_reduction <maximumf>, %51, %cst_28 [1] : vector<8x8xf32> to vector<8xf32>
    %53 = vector.shape_cast %52 : vector<8xf32> to vector<8x1xf32>
    %54 = vector.broadcast %53 : vector<8x1xf32> to vector<8x8xf32>
    %55 = arith.subf %51, %54 : vector<8x8xf32>
    %56 = math.exp %55 : vector<8x8xf32>
    %cst_29 = arith.constant dense<0.000000e+00> : vector<8xf32>
    %57 = vector.multi_reduction <add>, %56, %cst_29 [1] : vector<8x8xf32> to vector<8xf32>
    %58 = vector.shape_cast %57 : vector<8xf32> to vector<8x1xf32>
    %59 = tpu.reciprocal %58 {approx = true} : vector<8x1xf32> -> vector<8x1xf32>
    %60 = vector.broadcast %59 : vector<8x1xf32> to vector<8x8xf32>
    %61 = arith.mulf %56, %60 : vector<8x8xf32>
    %62 = arith.truncf %61 : vector<8x8xf32> to vector<8x8xbf16>
    %63 = arith.truncf %44 : vector<8x8xf32> to vector<8x8xbf16>
    %cst_30 = arith.constant dense<0.000000e+00> : vector<8x8xf32>
    %64 = tpu.matmul %62, %63, %cst_30 {dimension_numbers = #tpu.dot_dimension_numbers<[1], [0], [0], [1], [0, 0, 1, 1], [], []>} : vector<8x8xbf16>, vector<8x8xbf16>, vector<8x8xf32> -> vector<8x8xf32>
    %65 = vector.extract_strided_slice %31 {offsets = [0, 8], sizes = [8, 8], strides = [1, 1]} : vector<8x64xf32> to vector<8x8xf32>
    %cst_31 = arith.constant 0.353553385 : f32
    %66 = vector.broadcast %cst_31 : f32 to vector<8x8xf32>
    %67 = arith.mulf %65, %66 : vector<8x8xf32>
    %68 = arith.truncf %67 : vector<8x8xf32> to vector<8x8xbf16>
    %69 = vector.extract_strided_slice %31 {offsets = [0, 24], sizes = [8, 8], strides = [1, 1]} : vector<8x64xf32> to vector<8x8xf32>
    %70 = arith.truncf %69 : vector<8x8xf32> to vector<8x8xbf16>
    %71 = vector.extract_strided_slice %31 {offsets = [0, 40], sizes = [8, 8], strides = [1, 1]} : vector<8x64xf32> to vector<8x8xf32>
    %cst_32 = arith.constant dense<0.000000e+00> : vector<8x8xf32>
    %72 = tpu.matmul %68, %70, %cst_32 {dimension_numbers = #tpu.dot_dimension_numbers<[1], [1], [0], [0], [0, 0, 1, 0], [], []>} : vector<8x8xbf16>, vector<8x8xbf16>, vector<8x8xf32> -> vector<8x8xf32>
    %c0_33 = arith.constant 0 : index
    %c1 = arith.constant 1 : index
    %c0_34 = arith.constant 0 : index
    %c0_35 = arith.constant 0 : index
    %73 = vector.load %arg3[%c0_33, %c1, %c0_34, %c0_35] : memref<1x2x8x8xbf16, #tpu.memory_space<vmem>>, vector<1x1x8x8xbf16>
    %74 = vector.shape_cast %73 : vector<1x1x8x8xbf16> to vector<8x8xbf16>
    %75 = arith.extf %74 : vector<8x8xbf16> to vector<8x8xf32>
    %76 = arith.addf %72, %75 : vector<8x8xf32>
    %77 = vector.broadcast %37 : vector<1x8xf32> to vector<8x8xf32>
    %78 = arith.addf %76, %77 : vector<8x8xf32>
    %cst_36 = arith.constant dense<0xFF800000> : vector<8xf32>
    %79 = vector.multi_reduction <maximumf>, %78, %cst_36 [1] : vector<8x8xf32> to vector<8xf32>
    %80 = vector.shape_cast %79 : vector<8xf32> to vector<8x1xf32>
    %81 = vector.broadcast %80 : vector<8x1xf32> to vector<8x8xf32>
    %82 = arith.subf %78, %81 : vector<8x8xf32>
    %83 = math.exp %82 : vector<8x8xf32>
    %cst_37 = arith.constant dense<0.000000e+00> : vector<8xf32>
    %84 = vector.multi_reduction <add>, %83, %cst_37 [1] : vector<8x8xf32> to vector<8xf32>
    %85 = vector.shape_cast %84 : vector<8xf32> to vector<8x1xf32>
    %86 = tpu.reciprocal %85 {approx = true} : vector<8x1xf32> -> vector<8x1xf32>
    %87 = vector.broadcast %86 : vector<8x1xf32> to vector<8x8xf32>
    %88 = arith.mulf %83, %87 : vector<8x8xf32>
    %89 = arith.truncf %88 : vector<8x8xf32> to vector<8x8xbf16>
    %90 = arith.truncf %71 : vector<8x8xf32> to vector<8x8xbf16>
    %cst_38 = arith.constant dense<0.000000e+00> : vector<8x8xf32>
    %91 = tpu.matmul %89, %90, %cst_38 {dimension_numbers = #tpu.dot_dimension_numbers<[1], [0], [0], [1], [0, 0, 1, 1], [], []>} : vector<8x8xbf16>, vector<8x8xbf16>, vector<8x8xf32> -> vector<8x8xf32>
    %92 = vector.extract_strided_slice %31 {offsets = [0, 48], sizes = [8, 16], strides = [1, 1]} : vector<8x64xf32> to vector<8x16xf32>
    %93 = arith.negf %92 : vector<8x16xf32>
    %94 = math.exp %93 : vector<8x16xf32>
    %cst_39 = arith.constant 1.000000e+00 : f32
    %95 = vector.broadcast %cst_39 : f32 to vector<8x16xf32>
    %96 = arith.addf %95, %94 : vector<8x16xf32>
    %97 = arith.divf %95, %96 : vector<8x16xf32>
    %98 = tpu.concatenate %64, %91 in 1 : vector<8x8xf32>, vector<8x8xf32> -> vector<8x16xf32>
    %99 = arith.mulf %98, %97 : vector<8x16xf32>
    %100 = arith.truncf %99 : vector<8x16xf32> to vector<8x16xbf16>
    %c0_40 = arith.constant 0 : index
    %c0_41 = arith.constant 0 : index
    %101 = vector.load %arg9[%c0_40, %c0_41] : memref<16x16xbf16, #tpu.memory_space<vmem>>, vector<16x16xbf16>
    %cst_42 = arith.constant dense<0.000000e+00> : vector<8x16xf32>
    %102 = tpu.matmul %100, %101, %cst_42 {dimension_numbers = #tpu.dot_dimension_numbers<[1], [0], [0], [1], [0, 0, 1, 1], [], []>} : vector<8x16xbf16>, vector<16x16xbf16>, vector<8x16xf32> -> vector<8x16xf32>
    %c0_43 = arith.constant 0 : index
    %c0_44 = arith.constant 0 : index
    %103 = vector.load %arg10[%c0_43, %c0_44] : memref<1x16xf32, #tpu.memory_space<vmem>>, vector<1x16xf32>
    %104 = vector.broadcast %103 : vector<1x16xf32> to vector<8x16xf32>
    %105 = arith.addf %102, %104 : vector<8x16xf32>
    %c0_45 = arith.constant 0 : index
    %c0_46 = arith.constant 0 : index
    %c0_47 = arith.constant 0 : index
    %c0_48 = arith.constant 0 : index
    %106 = vector.load %arg11[%c0_45, %c0_46, %c0_47, %c0_48] : memref<1x1x8x16xf32, #tpu.memory_space<vmem>>, vector<1x1x8x16xf32>
    %107 = vector.shape_cast %106 : vector<1x1x8x16xf32> to vector<8x16xf32>
    %108 = vector.shape_cast %105 : vector<8x16xf32> to vector<1x1x8x16xf32>
    tpu.vector_store %arg11[%c0_45, %c0_46, %c0_47, %c0_48], %108 {strides = array<i32>} : memref<1x1x8x16xf32, #tpu.memory_space<vmem>>, vector<1x1x8x16xf32>,
    return
  }
  func.func @transform_0(%arg0: i32, %arg1: i32) -> (i32, i32, i32, i32) {
    %c0_i32 = arith.constant 0 : i32
    %c0_i32_0 = arith.constant 0 : i32
    %c0_i32_1 = arith.constant 0 : i32
    return %arg0, %arg1, %c0_i32, %c0_i32_0 : i32, i32, i32, i32
  }
  func.func @transform_1(%arg0: i32, %arg1: i32) -> (i32, i32, i32, i32) {
    %c0_i32 = arith.constant 0 : i32
    %c0_i32_0 = arith.constant 0 : i32
    %c0_i32_1 = arith.constant 0 : i32
    %c0_i32_2 = arith.constant 0 : i32
    return %arg0, %c0_i32, %c0_i32_0, %c0_i32_1 : i32, i32, i32, i32
  }
  func.func @transform_2(%arg0: i32, %arg1: i32) -> (i32, i32, i32, i32) {
    %c0_i32 = arith.constant 0 : i32
    %c0_i32_0 = arith.constant 0 : i32
    %c0_i32_1 = arith.constant 0 : i32
    return %arg0, %arg1, %c0_i32, %c0_i32_0 : i32, i32, i32, i32
  }
  func.func @transform_3(%arg0: i32, %arg1: i32) -> (i32, i32) {
    %c0_i32 = arith.constant 0 : i32
    %c0_i32_0 = arith.constant 0 : i32
    %c0_i32_1 = arith.constant 0 : i32
    return %c0_i32, %c0_i32_0 : i32, i32
  }
  func.func @transform_4(%arg0: i32, %arg1: i32) -> (i32, i32) {
    %c0_i32 = arith.constant 0 : i32
    %c0_i32_0 = arith.constant 0 : i32
    %c0_i32_1 = arith.constant 0 : i32
    return %c0_i32, %c0_i32_0 : i32, i32
  }
  func.func @transform_5(%arg0: i32, %arg1: i32) -> (i32, i32) {
    %c0_i32 = arith.constant 0 : i32
    %c0_i32_0 = arith.constant 0 : i32
    %c0_i32_1 = arith.constant 0 : i32
    return %c0_i32, %c0_i32_0 : i32, i32
  }
  func.func @transform_6(%arg0: i32, %arg1: i32) -> (i32, i32) {
    %c0_i32 = arith.constant 0 : i32
    %c0_i32_0 = arith.constant 0 : i32
    %c0_i32_1 = arith.constant 0 : i32
    return %c0_i32, %c0_i32_0 : i32, i32
  }
  func.func @transform_7(%arg0: i32, %arg1: i32) -> (i32, i32) {
    %c0_i32 = arith.constant 0 : i32
    %c0_i32_0 = arith.constant 0 : i32
    %c0_i32_1 = arith.constant 0 : i32
    return %c0_i32, %c0_i32_0 : i32, i32
  }
  func.func @transform_8(%arg0: i32, %arg1: i32) -> (i32, i32) {
    %c0_i32 = arith.constant 0 : i32
    %c0_i32_0 = arith.constant 0 : i32
    %c0_i32_1 = arith.constant 0 : i32
    return %c0_i32, %c0_i32_0 : i32, i32
  }
  func.func @transform_9(%arg0: i32, %arg1: i32) -> (i32, i32, i32, i32) {
    %c0_i32 = arith.constant 0 : i32
    %c0_i32_0 = arith.constant 0 : i32
    %c0_i32_1 = arith.constant 0 : i32
    return %arg0, %arg1, %c0_i32, %c0_i32_0 : i32, i32, i32, i32
  }
}

module attributes {stable_mosaic.version = 11 : i64} {
  func.func @_linear_kernel(%arg0: i32, %arg1: memref<8x32xf32, #tpu.memory_space<vmem>>, %arg2: memref<32x32xf32, #tpu.memory_space<vmem>>, %arg3: memref<1x32xf32, #tpu.memory_space<vmem>>, %arg4: memref<8x32xf32, #tpu.memory_space<vmem>>) attributes {dimension_semantics = [#tpu.dimension_semantics<parallel>], iteration_bounds = array<i64: 1>, scalar_prefetch = 0 : i64, scratch_operands = 0 : i64, tpu.core_type = #tpu.core_type<tc>, window_params = [{transform_indices = @transform_0, window_bounds = array<i64: 8, 32>}, {pipeline_mode = #tpu.pipeline_mode<synchronous>, transform_indices = @transform_1, window_bounds = array<i64: 32, 32>}, {pipeline_mode = #tpu.pipeline_mode<synchronous>, transform_indices = @transform_2, window_bounds = array<i64: 1, 32>}, {transform_indices = @transform_3, window_bounds = array<i64: 8, 32>}]} {
    %c0 = arith.constant 0 : index
    %c0_0 = arith.constant 0 : index
    %0 = vector.load %arg1[%c0, %c0_0] : memref<8x32xf32, #tpu.memory_space<vmem>>, vector<8x32xf32>
    %c0_1 = arith.constant 0 : index
    %c0_2 = arith.constant 0 : index
    %1 = vector.load %arg2[%c0_1, %c0_2] : memref<32x32xf32, #tpu.memory_space<vmem>>, vector<32x32xf32>
    %c0_3 = arith.constant 0 : index
    %c0_4 = arith.constant 0 : index
    %2 = vector.load %arg3[%c0_3, %c0_4] : memref<1x32xf32, #tpu.memory_space<vmem>>, vector<1x32xf32>
    %cst = arith.constant dense<0.000000e+00> : vector<8x32xf32>
    %3 = tpu.matmul %0, %1, %cst {dimension_numbers = #tpu.dot_dimension_numbers<[1], [0], [0], [1], [0, 0, 1, 1], [], []>} : vector<8x32xf32>, vector<32x32xf32>, vector<8x32xf32> -> vector<8x32xf32>
    %4 = vector.broadcast %2 : vector<1x32xf32> to vector<8x32xf32>
    %5 = arith.addf %3, %4 : vector<8x32xf32>
    %c0_5 = arith.constant 0 : index
    %c0_6 = arith.constant 0 : index
    %6 = vector.load %arg4[%c0_5, %c0_6] : memref<8x32xf32, #tpu.memory_space<vmem>>, vector<8x32xf32>
    tpu.vector_store %arg4[%c0_5, %c0_6], %5 {strides = array<i32>} : memref<8x32xf32, #tpu.memory_space<vmem>>, vector<8x32xf32>,
    return
  }
  func.func @transform_0(%arg0: i32) -> (i32, i32) {
    %c0_i32 = arith.constant 0 : i32
    %c0_i32_0 = arith.constant 0 : i32
    return %arg0, %c0_i32 : i32, i32
  }
  func.func @transform_1(%arg0: i32) -> (i32, i32) {
    %c0_i32 = arith.constant 0 : i32
    %c0_i32_0 = arith.constant 0 : i32
    %c0_i32_1 = arith.constant 0 : i32
    return %c0_i32, %c0_i32_0 : i32, i32
  }
  func.func @transform_2(%arg0: i32) -> (i32, i32) {
    %c0_i32 = arith.constant 0 : i32
    %c0_i32_0 = arith.constant 0 : i32
    %c0_i32_1 = arith.constant 0 : i32
    return %c0_i32, %c0_i32_0 : i32, i32
  }
  func.func @transform_3(%arg0: i32) -> (i32, i32) {
    %c0_i32 = arith.constant 0 : i32
    %c0_i32_0 = arith.constant 0 : i32
    return %arg0, %c0_i32 : i32, i32
  }
}

module attributes {stable_mosaic.version = 11 : i64} {
  func.func @_transition_kernel(%arg0: i32, %arg1: memref<64x16xf32, #tpu.memory_space<vmem>>, %arg2: memref<64x1xf32, #tpu.memory_space<vmem>>, %arg3: memref<1x16xf32, #tpu.memory_space<vmem>>, %arg4: memref<1x16xf32, #tpu.memory_space<vmem>>, %arg5: memref<16x32xf32, #tpu.memory_space<vmem>>, %arg6: memref<1x32xf32, #tpu.memory_space<vmem>>, %arg7: memref<32x16xf32, #tpu.memory_space<vmem>>, %arg8: memref<1x16xf32, #tpu.memory_space<vmem>>, %arg9: memref<64x16xf32, #tpu.memory_space<vmem>>) attributes {dimension_semantics = [#tpu.dimension_semantics<parallel>], iteration_bounds = array<i64: 1>, scalar_prefetch = 0 : i64, scratch_operands = 0 : i64, tpu.core_type = #tpu.core_type<tc>, window_params = [{transform_indices = @transform_0, window_bounds = array<i64: 64, 16>}, {transform_indices = @transform_1, window_bounds = array<i64: 64, 1>}, {pipeline_mode = #tpu.pipeline_mode<synchronous>, transform_indices = @transform_2, window_bounds = array<i64: 1, 16>}, {pipeline_mode = #tpu.pipeline_mode<synchronous>, transform_indices = @transform_3, window_bounds = array<i64: 1, 16>}, {pipeline_mode = #tpu.pipeline_mode<synchronous>, transform_indices = @transform_4, window_bounds = array<i64: 16, 32>}, {pipeline_mode = #tpu.pipeline_mode<synchronous>, transform_indices = @transform_5, window_bounds = array<i64: 1, 32>}, {pipeline_mode = #tpu.pipeline_mode<synchronous>, transform_indices = @transform_6, window_bounds = array<i64: 32, 16>}, {pipeline_mode = #tpu.pipeline_mode<synchronous>, transform_indices = @transform_7, window_bounds = array<i64: 1, 16>}, {transform_indices = @transform_8, window_bounds = array<i64: 64, 16>}]} {
    %c0 = arith.constant 0 : index
    %c0_0 = arith.constant 0 : index
    %0 = vector.load %arg1[%c0, %c0_0] : memref<64x16xf32, #tpu.memory_space<vmem>>, vector<64x16xf32>
    %c0_1 = arith.constant 0 : index
    %c0_2 = arith.constant 0 : index
    %1 = vector.load %arg3[%c0_1, %c0_2] : memref<1x16xf32, #tpu.memory_space<vmem>>, vector<1x16xf32>
    %c0_3 = arith.constant 0 : index
    %c0_4 = arith.constant 0 : index
    %2 = vector.load %arg4[%c0_3, %c0_4] : memref<1x16xf32, #tpu.memory_space<vmem>>, vector<1x16xf32>
    %cst = arith.constant dense<0.000000e+00> : vector<64xf32>
    %3 = vector.multi_reduction <add>, %0, %cst [1] : vector<64x16xf32> to vector<64xf32>
    %4 = vector.shape_cast %3 : vector<64xf32> to vector<64x1xf32>
    %cst_5 = arith.constant 1.600000e+01 : f32
    %5 = vector.broadcast %cst_5 : f32 to vector<64x1xf32>
    %6 = arith.divf %4, %5 : vector<64x1xf32>
    %7 = vector.broadcast %6 : vector<64x1xf32> to vector<64x16xf32>
    %8 = arith.subf %0, %7 : vector<64x16xf32>
    %9 = arith.mulf %8, %8 : vector<64x16xf32>
    %cst_6 = arith.constant dense<0.000000e+00> : vector<64xf32>
    %10 = vector.multi_reduction <add>, %9, %cst_6 [1] : vector<64x16xf32> to vector<64xf32>
    %11 = vector.shape_cast %10 : vector<64xf32> to vector<64x1xf32>
    %cst_7 = arith.constant 1.600000e+01 : f32
    %12 = vector.broadcast %cst_7 : f32 to vector<64x1xf32>
    %13 = arith.divf %11, %12 : vector<64x1xf32>
    %14 = vector.broadcast %6 : vector<64x1xf32> to vector<64x16xf32>
    %15 = arith.subf %0, %14 : vector<64x16xf32>
    %cst_8 = arith.constant 9.99999974E-6 : f32
    %16 = vector.broadcast %cst_8 : f32 to vector<64x1xf32>
    %17 = arith.addf %13, %16 : vector<64x1xf32>
    %18 = math.rsqrt %17 : vector<64x1xf32>
    %19 = vector.broadcast %18 : vector<64x1xf32> to vector<64x16xf32>
    %20 = arith.mulf %15, %19 : vector<64x16xf32>
    %21 = vector.broadcast %1 : vector<1x16xf32> to vector<64x16xf32>
    %22 = arith.mulf %20, %21 : vector<64x16xf32>
    %23 = vector.broadcast %2 : vector<1x16xf32> to vector<64x16xf32>
    %24 = arith.addf %22, %23 : vector<64x16xf32>
    %c0_9 = arith.constant 0 : index
    %c0_10 = arith.constant 0 : index
    %25 = vector.load %arg5[%c0_9, %c0_10] : memref<16x32xf32, #tpu.memory_space<vmem>>, vector<16x32xf32>
    %c0_11 = arith.constant 0 : index
    %c0_12 = arith.constant 0 : index
    %26 = vector.load %arg6[%c0_11, %c0_12] : memref<1x32xf32, #tpu.memory_space<vmem>>, vector<1x32xf32>
    %cst_13 = arith.constant dense<0.000000e+00> : vector<64x32xf32>
    %27 = tpu.matmul %24, %25, %cst_13 {dimension_numbers = #tpu.dot_dimension_numbers<[1], [0], [0], [1], [0, 0, 1, 1], [], []>} : vector<64x16xf32>, vector<16x32xf32>, vector<64x32xf32> -> vector<64x32xf32>
    %28 = vector.broadcast %26 : vector<1x32xf32> to vector<64x32xf32>
    %29 = arith.addf %27, %28 : vector<64x32xf32>
    %cst_14 = arith.constant 0.000000e+00 : f32
    %30 = vector.broadcast %cst_14 : f32 to vector<64x32xf32>
    %31 = arith.maximumf %29, %30 : vector<64x32xf32>
    %c0_15 = arith.constant 0 : index
    %c0_16 = arith.constant 0 : index
    %32 = vector.load %arg7[%c0_15, %c0_16] : memref<32x16xf32, #tpu.memory_space<vmem>>, vector<32x16xf32>
    %c0_17 = arith.constant 0 : index
    %c0_18 = arith.constant 0 : index
    %33 = vector.load %arg8[%c0_17, %c0_18] : memref<1x16xf32, #tpu.memory_space<vmem>>, vector<1x16xf32>
    %cst_19 = arith.constant dense<0.000000e+00> : vector<64x16xf32>
    %34 = tpu.matmul %31, %32, %cst_19 {dimension_numbers = #tpu.dot_dimension_numbers<[1], [0], [0], [1], [0, 0, 1, 1], [], []>} : vector<64x32xf32>, vector<32x16xf32>, vector<64x16xf32> -> vector<64x16xf32>
    %35 = vector.broadcast %33 : vector<1x16xf32> to vector<64x16xf32>
    %36 = arith.addf %34, %35 : vector<64x16xf32>
    %c0_20 = arith.constant 0 : index
    %c0_21 = arith.constant 0 : index
    %37 = vector.load %arg2[%c0_20, %c0_21] : memref<64x1xf32, #tpu.memory_space<vmem>>, vector<64x1xf32>
    %38 = vector.broadcast %37 : vector<64x1xf32> to vector<64x16xf32>
    %39 = arith.mulf %36, %38 : vector<64x16xf32>
    %c0_22 = arith.constant 0 : index
    %c0_23 = arith.constant 0 : index
    %40 = vector.load %arg9[%c0_22, %c0_23] : memref<64x16xf32, #tpu.memory_space<vmem>>, vector<64x16xf32>
    tpu.vector_store %arg9[%c0_22, %c0_23], %39 {strides = array<i32>} : memref<64x16xf32, #tpu.memory_space<vmem>>, vector<64x16xf32>,
    return
  }
  func.func @transform_0(%arg0: i32) -> (i32, i32) {
    %c0_i32 = arith.constant 0 : i32
    %c0_i32_0 = arith.constant 0 : i32
    return %arg0, %c0_i32 : i32, i32
  }
  func.func @transform_1(%arg0: i32) -> (i32, i32) {
    %c0_i32 = arith.constant 0 : i32
    %c0_i32_0 = arith.constant 0 : i32
    return %arg0, %c0_i32 : i32, i32
  }
  func.func @transform_2(%arg0: i32) -> (i32, i32) {
    %c0_i32 = arith.constant 0 : i32
    %c0_i32_0 = arith.constant 0 : i32
    %c0_i32_1 = arith.constant 0 : i32
    return %c0_i32, %c0_i32_0 : i32, i32
  }
  func.func @transform_3(%arg0: i32) -> (i32, i32) {
    %c0_i32 = arith.constant 0 : i32
    %c0_i32_0 = arith.constant 0 : i32
    %c0_i32_1 = arith.constant 0 : i32
    return %c0_i32, %c0_i32_0 : i32, i32
  }
  func.func @transform_4(%arg0: i32) -> (i32, i32) {
    %c0_i32 = arith.constant 0 : i32
    %c0_i32_0 = arith.constant 0 : i32
    %c0_i32_1 = arith.constant 0 : i32
    return %c0_i32, %c0_i32_0 : i32, i32
  }
  func.func @transform_5(%arg0: i32) -> (i32, i32) {
    %c0_i32 = arith.constant 0 : i32
    %c0_i32_0 = arith.constant 0 : i32
    %c0_i32_1 = arith.constant 0 : i32
    return %c0_i32, %c0_i32_0 : i32, i32
  }
  func.func @transform_6(%arg0: i32) -> (i32, i32) {
    %c0_i32 = arith.constant 0 : i32
    %c0_i32_0 = arith.constant 0 : i32
    %c0_i32_1 = arith.constant 0 : i32
    return %c0_i32, %c0_i32_0 : i32, i32
  }
  func.func @transform_7(%arg0: i32) -> (i32, i32) {
    %c0_i32 = arith.constant 0 : i32
    %c0_i32_0 = arith.constant 0 : i32
    %c0_i32_1 = arith.constant 0 : i32
    return %c0_i32, %c0_i32_0 : i32, i32
  }
  func.func @transform_8(%arg0: i32) -> (i32, i32) {
    %c0_i32 = arith.constant 0 : i32
    %c0_i32_0 = arith.constant 0 : i32
    return %arg0, %c0_i32 : i32, i32
  }
}

</mosaic_0001>

<llo_original>
// kernel: evoformer_stack_forward.37
$region0: #{evoformer_stack_forward.37}
  #allocation0 [shape = 'u32[]', space=smem, size = 0x4, offset = 0x4, fixed_abs, tag = 'smem constant byte address 0x4 - core index']
  #allocation1 [shape = 'u32[144,128]{1,0:T(1,128)}', space=vmem, size = 0x12000, scoped, tag = 'internal scratch']
  %s0 = inlined_call_operand.vmem [shape: f32[64,16], index: 0, kind: input, shape index: {}]
  %s1 = inlined_call_operand.vmem [shape: f32[1,16], index: 1, kind: input, shape index: {}]
  %s2 = inlined_call_operand.vmem [shape: f32[1,16], index: 2, kind: input, shape index: {}]
  %s3 = inlined_call_operand.vmem [shape: f32[16,4], index: 3, kind: input, shape index: {}]
  %s4 = inlined_call_operand.vmem [shape: f32[1,4], index: 4, kind: input, shape index: {}]
  %s5 = inlined_call_operand.vmem [shape: f32[64,4], index: 5, kind: output, shape index: {}]
  %s6 = sld [smem:[#allocation0]]
  $region30: #{evoformer_stack_forward.37} parent=0
    _
  %s8 = ssub.s32 1, %s6
  %s9 = scalar_select 0, %s8, %s6
  // Predicated region
  $region2: #{evoformer_stack_forward.37} parent=0 // pred_check
    _
  $region3: #{evoformer_stack_forward.37} parent=0 // pred_check_branch
    %11 = sbr.rel (0) target = $region5
  $region4: #{evoformer_stack_forward.37} parent=0 // pred_region
    _
  $region5: #{evoformer_stack_forward.37} parent=0 // pred_fallthru
    _
  // Predicated region
  $region6: #{evoformer_stack_forward.37} parent=0 // pred_check
    _
  $region7: #{evoformer_stack_forward.37} parent=0 // pred_check_branch
    %13 = sbr.rel (0) target = $region9
  $region8: #{evoformer_stack_forward.37} parent=0 // pred_region
    _
  $region9: #{evoformer_stack_forward.37} parent=0 // pred_fallthru
    _
  // Predicated region
  $region10: #{evoformer_stack_forward.37} parent=0 // pred_check
    _
  $region11: #{evoformer_stack_forward.37} parent=0 // pred_check_branch
    %15 = sbr.rel (0) target = $region13
  $region12: #{evoformer_stack_forward.37} parent=0 // pred_region
    _
  $region13: #{evoformer_stack_forward.37} parent=0 // pred_fallthru
    _
  // Predicated region
  $region14: #{evoformer_stack_forward.37} parent=0 // pred_check
    _
  $region15: #{evoformer_stack_forward.37} parent=0 // pred_check_branch
    %17 = sbr.rel (0) target = $region17
  $region16: #{evoformer_stack_forward.37} parent=0 // pred_region
    _
  $region17: #{evoformer_stack_forward.37} parent=0 // pred_fallthru
    _
  // Predicated region
  $region18: #{evoformer_stack_forward.37} parent=0 // pred_check
    _
  $region19: #{evoformer_stack_forward.37} parent=0 // pred_check_branch
    %19 = sbr.rel (0) target = $region21
  $region20: #{evoformer_stack_forward.37} parent=0 // pred_region
    _
  $region21: #{evoformer_stack_forward.37} parent=0 // pred_fallthru
    _
  %v20 = vld [vmem:[%s0] sm:$0xff]
  %v21 = vld [vmem:[%s0 + $0x8] sm:$0xff]
  %v22 = vld [vmem:[%s0 + $0x10] sm:$0xff]
  %v23 = vld [vmem:[%s0 + $0x18] sm:$0xff]
  %v24 = vld [vmem:[%s0 + $0x20] sm:$0xff]
  %v25 = vld [vmem:[%s0 + $0x28] sm:$0xff]
  %v26 = vld [vmem:[%s0 + $0x30] sm:$0xff]
  %v27 = vld [vmem:[%s0 + $0x38] sm:$0xff]
  %v28 = vld [vmem:[%s1] sm:$0x1]
  %v29 = vld [vmem:[%s2] sm:$0x1]
  %vm30 = vcmask 130048
  %v31 = vsel %vm30, %v20, 0.0
  %32 = vadd.xlane.f32.xlu0 %v31
  %v33 = vpop.xlane.xlu0 %32
  %v34 = vsel %vm30, %v21, 0.0
  %35 = vadd.xlane.f32.xlu0 %v34
  %v36 = vpop.xlane.xlu0 %35
  %v37 = vsel %vm30, %v22, 0.0
  %38 = vadd.xlane.f32.xlu0 %v37
  %v39 = vpop.xlane.xlu0 %38
  %v40 = vsel %vm30, %v23, 0.0
  %41 = vadd.xlane.f32.xlu0 %v40
  %v42 = vpop.xlane.xlu0 %41
  %v43 = vsel %vm30, %v24, 0.0
  %44 = vadd.xlane.f32.xlu0 %v43
  %v45 = vpop.xlane.xlu0 %44
  %v46 = vsel %vm30, %v25, 0.0
  %47 = vadd.xlane.f32.xlu0 %v46
  %v48 = vpop.xlane.xlu0 %47
  %v49 = vsel %vm30, %v26, 0.0
  %50 = vadd.xlane.f32.xlu0 %v49
  %v51 = vpop.xlane.xlu0 %50
  %v52 = vsel %vm30, %v27, 0.0
  %53 = vadd.xlane.f32.xlu0 %v52
  %v54 = vpop.xlane.xlu0 %53
  %v55 = vrcp.pop 16.0
  %v56 = vmul.f32 %v33, %v55
  %v57 = vmul.f32 %v36, %v55
  %v58 = vmul.f32 %v39, %v55
  %v59 = vmul.f32 %v42, %v55
  %v60 = vmul.f32 %v45, %v55
  %v61 = vmul.f32 %v48, %v55
  %v62 = vmul.f32 %v51, %v55
  %v63 = vmul.f32 %v54, %v55
  %v64 = vsub.f32 %v20, %v56
  %v65 = vsub.f32 %v21, %v57
  %v66 = vsub.f32 %v22, %v58
  %v67 = vsub.f32 %v23, %v59
  %v68 = vsub.f32 %v24, %v60
  %v69 = vsub.f32 %v25, %v61
  %v70 = vsub.f32 %v26, %v62
  %v71 = vsub.f32 %v27, %v63
  %v72 = vmul.f32 %v64, %v64
  %v73 = vmul.f32 %v65, %v65
  %v74 = vmul.f32 %v66, %v66
  %v75 = vmul.f32 %v67, %v67
  %v76 = vmul.f32 %v68, %v68
  %v77 = vmul.f32 %v69, %v69
  %v78 = vmul.f32 %v70, %v70
  %v79 = vmul.f32 %v71, %v71
  %v80 = vsel %vm30, %v72, 0.0
  %81 = vadd.xlane.f32.xlu0 %v80
  %v82 = vpop.xlane.xlu0 %81
  %v83 = vsel %vm30, %v73, 0.0
  %84 = vadd.xlane.f32.xlu0 %v83
  %v85 = vpop.xlane.xlu0 %84
  %v86 = vsel %vm30, %v74, 0.0
  %87 = vadd.xlane.f32.xlu0 %v86
  %v88 = vpop.xlane.xlu0 %87
  %v89 = vsel %vm30, %v75, 0.0
  %90 = vadd.xlane.f32.xlu0 %v89
  %v91 = vpop.xlane.xlu0 %90
  %v92 = vsel %vm30, %v76, 0.0
  %93 = vadd.xlane.f32.xlu0 %v92
  %v94 = vpop.xlane.xlu0 %93
  %v95 = vsel %vm30, %v77, 0.0
  %96 = vadd.xlane.f32.xlu0 %v95
  %v97 = vpop.xlane.xlu0 %96
  %v98 = vsel %vm30, %v78, 0.0
  %99 = vadd.xlane.f32.xlu0 %v98
  %v100 = vpop.xlane.xlu0 %99
  %v101 = vsel %vm30, %v79, 0.0
  %102 = vadd.xlane.f32.xlu0 %v101
  %v103 = vpop.xlane.xlu0 %102
  %v104 = vmul.f32 %v82, %v55
  %v105 = vmul.f32 %v85, %v55
  %v106 = vmul.f32 %v88, %v55
  %v107 = vmul.f32 %v91, %v55
  %v108 = vmul.f32 %v94, %v55
  %v109 = vmul.f32 %v97, %v55
  %v110 = vmul.f32 %v100, %v55
  %v111 = vmul.f32 %v103, %v55
  %v112 = vadd.f32 %v104, 1e-05
  %v113 = vadd.f32 %v105, 1e-05
  %v114 = vadd.f32 %v106, 1e-05
  %v115 = vadd.f32 %v107, 1e-05
  %v116 = vadd.f32 %v108, 1e-05
  %v117 = vadd.f32 %v109, 1e-05
  %v118 = vadd.f32 %v110, 1e-05
  %v119 = vadd.f32 %v111, 1e-05
  %v120 = vrsqrt.pop %v112
  %v121 = vrsqrt.pop %v113
  %v122 = vrsqrt.pop %v114
  %v123 = vrsqrt.pop %v115
  %v124 = vrsqrt.pop %v116
  %v125 = vrsqrt.pop %v117
  %v126 = vrsqrt.pop %v118
  %v127 = vrsqrt.pop %v119
  %v128 = vmul.f32 %v64, %v120
  %v129 = vmul.f32 %v65, %v121
  %v130 = vmul.f32 %v66, %v122
  %v131 = vmul.f32 %v67, %v123
  %v132 = vmul.f32 %v68, %v124
  %v133 = vmul.f32 %v69, %v125
  %v134 = vmul.f32 %v70, %v126
  %v135 = vmul.f32 %v71, %v127
  %v137 = vlaneseq
  %v138 = vshrl.u32 %v137, 7
  %v139 = vsub.s32 0, %v138
  %v140 = vrot.slane %v28, %v139
  %v142 = vmul.f32 %v128, %v140
  %v143 = vmul.f32 %v129, %v140
  %v144 = vmul.f32 %v130, %v140
  %v145 = vmul.f32 %v131, %v140
  %v146 = vmul.f32 %v132, %v140
  %v147 = vmul.f32 %v133, %v140
  %v148 = vmul.f32 %v134, %v140
  %v149 = vmul.f32 %v135, %v140
  %v151 = vlaneseq
  %v152 = vshrl.u32 %v151, 7
  %v153 = vsub.s32 0, %v152
  %v154 = vrot.slane %v29, %v153
  %v156 = vadd.f32 %v142, %v154
  %v157 = vadd.f32 %v143, %v154
  %v158 = vadd.f32 %v144, %v154
  %v159 = vadd.f32 %v145, %v154
  %v160 = vadd.f32 %v146, %v154
  %v161 = vadd.f32 %v147, %v154
  %v162 = vadd.f32 %v148, %v154
  %v163 = vadd.f32 %v149, %v154
  %v164 = vld [vmem:[%s3] sm:$0xff]
  %v165 = vld [vmem:[%s3 + $0x8] sm:$0xff]
  %v166 = vld [vmem:[%s4] sm:$0x1]
  %v168 = vlaneseq
  %v169 = vshrl.u32 %v168, 7
  %v170 = vsub.s32 0, %v169
  %v171 = vrot.slane %v166, %v170
  %v174 = vsel %vm30, %v156, 0
  %v177 = vsel %vm30, %v157, 0
  %v180 = vsel %vm30, %v158, 0
  %v183 = vsel %vm30, %v159, 0
  %v186 = vsel %vm30, %v160, 0
  %v189 = vsel %vm30, %v161, 0
  %v192 = vsel %vm30, %v162, 0
  %v195 = vsel %vm30, %v163, 0
  %197 = vmatprep.subr.mxu0 0.0
  %198 = vmatpush1.msra.mxu0 %v164
  %199 = vmatprep.subr.mxu0 0.0
  %200 = vmatpush1.msra.mxu0 %v165
  %201 = vmatprep.subr.mxu0 0.0
  %202 = vmatpush1.msra.mxu0 0.0
  %203 = vmatprep.subr.mxu0 0.0
  %204 = vmatpush1.msra.mxu0 0.0
  %205 = vmatprep.subr.mxu0 0.0
  %206 = vmatpush1.msra.mxu0 0.0
  %207 = vmatprep.subr.mxu0 0.0
  %208 = vmatpush1.msra.mxu0 0.0
  %209 = vmatprep.subr.mxu0 0.0
  %210 = vmatpush1.msra.mxu0 0.0
  %211 = vmatprep.subr.mxu0 0.0
  %212 = vmatpush1.msra.mxu0 0.0
  %213 = vmatprep.subr.mxu0 0.0
  %214 = vmatpush1.msra.mxu0 0.0
  %215 = vmatprep.subr.mxu0 0.0
  %216 = vmatpush1.msra.mxu0 0.0
  %217 = vmatprep.subr.mxu0 0.0
  %218 = vmatpush1.msra.mxu0 0.0
  %219 = vmatprep.subr.mxu0 0.0
  %220 = vmatpush1.msra.mxu0 0.0
  %221 = vmatprep.subr.mxu0 0.0
  %222 = vmatpush1.msra.mxu0 0.0
  %223 = vmatprep.subr.mxu0 0.0
  %224 = vmatpush1.msra.mxu0 0.0
  %225 = vmatprep.subr.mxu0 0.0
  %226 = vmatpush1.msra.mxu0 0.0
  %227 = vmatprep.subr.mxu0 0.0
  %228 = vmatpush1.msra.mxu0 0.0
  %229 = vmatprep.subr.mxu0 0.0
  %230 = vmatpush1.msra.mxu0 0.0
  %231 = vmatprep.subr.mxu0 0.0
  %232 = vmatpush1.msra.mxu0 0.0
  %233 = vmatprep.subr.mxu0 0.0
  %234 = vmatpush1.msra.mxu0 0.0
  %235 = vmatprep.subr.mxu0 0.0
  %236 = vmatpush1.msra.mxu0 0.0
  %237 = vmatprep.subr.mxu0 0.0
  %238 = vmatpush1.msra.mxu0 0.0
  %239 = vmatprep.subr.mxu0 0.0
  %240 = vmatpush1.msra.mxu0 0.0
  %241 = vmatprep.subr.mxu0 0.0
  %242 = vmatpush1.msra.mxu0 0.0
  %243 = vmatprep.subr.mxu0 0.0
  %244 = vmatpush1.msra.mxu0 0.0
  %245 = vmatprep.subr.mxu0 0.0
  %246 = vmatpush1.msra.mxu0 0.0
  %247 = vmatprep.subr.mxu0 0.0
  %248 = vmatpush1.msra.mxu0 0.0
  %249 = vmatprep.subr.mxu0 0.0
  %250 = vmatpush1.msra.mxu0 0.0
  %251 = vmatprep.subr.mxu0 0.0
  %252 = vmatpush1.msra.mxu0 0.0
  %253 = vmatprep.subr.mxu0 0.0
  %254 = vmatpush1.msra.mxu0 0.0
  %255 = vmatprep.subr.mxu0 0.0
  %256 = vmatpush1.msra.mxu0 0.0
  %257 = vmatprep.subr.mxu0 0.0
  %258 = vmatpush1.msra.mxu0 0.0
  %259 = vmatprep.subr.mxu0 0.0
  %260 = vmatpush1.msra.mxu0 0.0
  %261 = vmatprep.mubr.f32.mxu0 0.0
  %262 = vmatmul.mubr.f32.gmra.mrb[0].mxu0 %v174
  %v263 = vpop.f32.mrb[0].mxu0
  %v264 = vadd.f32 %v171, %v263
  %v265 = vpop.f32.mrb[0].mxu0
  %266 = vmatprep.mubr.f32.mxu0 0.0
  %267 = vmatmul.mubr.f32.gmra.mrb[0].mxu0 %v177
  %v268 = vpop.f32.mrb[0].mxu0
  %v269 = vadd.f32 %v171, %v268
  %v270 = vpop.f32.mrb[0].mxu0
  %271 = vmatprep.mubr.f32.mxu0 0.0
  %272 = vmatmul.mubr.f32.gmra.mrb[0].mxu0 %v180
  %v273 = vpop.f32.mrb[0].mxu0
  %v274 = vadd.f32 %v171, %v273
  %v275 = vpop.f32.mrb[0].mxu0
  %276 = vmatprep.mubr.f32.mxu0 0.0
  %277 = vmatmul.mubr.f32.gmra.mrb[0].mxu0 %v183
  %v278 = vpop.f32.mrb[0].mxu0
  %v279 = vadd.f32 %v171, %v278
  %v280 = vpop.f32.mrb[0].mxu0
  %281 = vmatprep.mubr.f32.mxu0 0.0
  %282 = vmatmul.mubr.f32.gmra.mrb[0].mxu0 %v186
  %v283 = vpop.f32.mrb[0].mxu0
  %v284 = vadd.f32 %v171, %v283
  %v285 = vpop.f32.mrb[0].mxu0
  %286 = vmatprep.mubr.f32.mxu0 0.0
  %287 = vmatmul.mubr.f32.gmra.mrb[0].mxu0 %v189
  %v288 = vpop.f32.mrb[0].mxu0
  %v289 = vadd.f32 %v171, %v288
  %v290 = vpop.f32.mrb[0].mxu0
  %291 = vmatprep.mubr.f32.mxu0 0.0
  %292 = vmatmul.mubr.f32.gmra.mrb[0].mxu0 %v192
  %v293 = vpop.f32.mrb[0].mxu0
  %v294 = vadd.f32 %v171, %v293
  %v295 = vpop.f32.mrb[0].mxu0
  %296 = vmatprep.mubr.f32.mxu0 0.0
  %297 = vmatmul.mubr.f32.gmra.mrb[0].mxu0 %v195
  %v298 = vpop.f32.mrb[0].mxu0
  %v299 = vadd.f32 %v171, %v298
  %v300 = vpop.f32.mrb[0].mxu0
  %301 = vdwg.mxu0
  %vm302 = vcmask 31744
  %303 = vst.msk [vmem:[%s5] sm:$0xff] %vm302, %v264
  %304 = vst.msk [vmem:[%s5 + $0x8] sm:$0xff] %vm302, %v269
  %305 = vst.msk [vmem:[%s5 + $0x10] sm:$0xff] %vm302, %v274
  %306 = vst.msk [vmem:[%s5 + $0x18] sm:$0xff] %vm302, %v279
  %307 = vst.msk [vmem:[%s5 + $0x20] sm:$0xff] %vm302, %v284
  %308 = vst.msk [vmem:[%s5 + $0x28] sm:$0xff] %vm302, %v289
  %309 = vst.msk [vmem:[%s5 + $0x30] sm:$0xff] %vm302, %v294
  %310 = vst.msk [vmem:[%s5 + $0x38] sm:$0xff] %vm302, %v299
  // Predicated region
  $region22: #{evoformer_stack_forward.37} parent=0 // pred_check
    _
  $region23: #{evoformer_stack_forward.37} parent=0 // pred_check_branch
    %312 = sbr.rel (0) target = $region25
  $region24: #{evoformer_stack_forward.37} parent=0 // pred_region
    _
  $region25: #{evoformer_stack_forward.37} parent=0 // pred_fallthru
    _
  // Predicated region
  $region26: #{evoformer_stack_forward.37} parent=0 // pred_check
    _
  $region27: #{evoformer_stack_forward.37} parent=0 // pred_check_branch
    %314 = sbr.rel (0) target = $region29
  $region28: #{evoformer_stack_forward.37} parent=0 // pred_region
    _
  $region29: #{evoformer_stack_forward.37} parent=0 // pred_fallthru
    _

// kernel: evoformer_stack_forward.38
$region0: #{evoformer_stack_forward.38}
  #allocation0 [shape = 'u32[]', space=smem, size = 0x4, offset = 0x4, fixed_abs, tag = 'smem constant byte address 0x4 - core index']
  #allocation1 [shape = 'u32[144,128]{1,0:T(1,128)}', space=vmem, size = 0x12000, scoped, tag = 'internal scratch']
  %s0 = inlined_call_operand.vmem [shape: f32[1,4,8,32], index: 0, kind: input, shape index: {}]
  %s1 = inlined_call_operand.vmem [shape: bf16[1,4,8,8], index: 1, kind: input, shape index: {}]
  %s2 = inlined_call_operand.vmem [shape: f32[1,4,1,8], index: 2, kind: input, shape index: {}]
  %s3 = inlined_call_operand.vmem [shape: f32[1,32], index: 3, kind: input, shape index: {}]
  %s4 = inlined_call_operand.vmem [shape: f32[1,32], index: 4, kind: input, shape index: {}]
  %s5 = inlined_call_operand.vmem [shape: bf16[32,128], index: 5, kind: input, shape index: {}]
  %s6 = inlined_call_operand.vmem [shape: f32[1,128], index: 6, kind: input, shape index: {}]
  %s7 = inlined_call_operand.vmem [shape: bf16[32,32], index: 7, kind: input, shape index: {}]
  %s8 = inlined_call_operand.vmem [shape: f32[1,32], index: 8, kind: input, shape index: {}]
  %s9 = inlined_call_operand.vmem [shape: f32[1,4,8,32], index: 9, kind: output, shape index: {}]
  %s10 = sld [smem:[#allocation0]]
  $region69: #{evoformer_stack_forward.38} parent=0
    _
  %s12 = ssub.s32 1, %s10
  %s13 = scalar_select 0, %s12, %s10
  loop: start=0, step=1, limit=6
  $region2: #{evoformer_stack_forward.38} parent=0 // loop_pre_header
    _
  $region3: #{evoformer_stack_forward.38} parent=0 // loop_header
    %s15 = sphi 0, %s19
    %p16 = scmp.ge.s32.totalorder %s15, 6
    %s22 = sphi 0, %s34
    %s23 = sphi 0, %s30
    %s24 = sphi 0, %s22
    %s25 = sphi 0, %s23
    %s26 = sphi 0, %s24
    %s27 = sphi 0, %s25
    %s39 = sphi 0, %s41
    %s42 = sphi 0, %s39
    %s43 = sphi 0, %s42
    %s59 = sphi 0, %s43
    %s65 = sphi 0, %s67
    %s68 = sphi 0, %s65
    %s69 = sphi 0, %s68
    %s85 = sphi 0, %s69
    %s93 = sphi 0, %s95
    %s96 = sphi 0, %s93
    %s97 = sphi 0, %s96
    %s113 = sphi 0, %s97
    %s117 = sphi 0, %s117
    %s119 = sphi 0, %s117
    %s120 = sphi 0, %s119
    %s134 = sphi 0, %s120
    %s138 = sphi 0, %s138
    %s140 = sphi 0, %s138
    %s141 = sphi 0, %s140
    %s155 = sphi 0, %s141
    %s159 = sphi 0, %s159
    %s161 = sphi 0, %s159
    %s162 = sphi 0, %s161
    %s176 = sphi 0, %s162
    %s180 = sphi 0, %s180
    %s182 = sphi 0, %s180
    %s183 = sphi 0, %s182
    %s197 = sphi 0, %s183
    %s201 = sphi 0, %s201
    %s203 = sphi 0, %s201
    %s204 = sphi 0, %s203
    %s218 = sphi 0, %s204
    %s222 = sphi 0, %s222
    %s224 = sphi 0, %s222
    %s225 = sphi 0, %s224
    %s239 = sphi 0, %s225
    %s247 = sphi 0, %s249
    %s250 = sphi 0, %s247
    %s251 = sphi 0, %s250
    %s267 = sphi 0, %s251
  $region4: #{evoformer_stack_forward.38} parent=0 // loop_header_branch
    %18 = sbr.rel (%p16) target = $region8
  $region5: #{evoformer_stack_forward.38} parent=0 // loop_body
    %s20 = ssub.s32 %s15, 1
    %s21 = ssub.s32 %s15, 2
    %s28 = sadd.s32 1, %s23
    %p29 = scmp.ge.s32.totalorder %s28, 4
    %s30 = scalar_select %p29, 0, %s28
    %s31 = sadd.s32 1, %s22
    %s32 = scalar_select %p29, %s31, %s22
    %p33 = scmp.ge.s32.totalorder %s32, 1
    %s34 = scalar_select %p33, 0, %s32
    %s35 = ssub.s32 %s22, %s34
    %s36 = ssub.s32 %s23, %s30
    %s37 = sor.u32 %s35, %s36
    %p38 = scmp.eq.s32.totalorder %s37, 0
    %s40 = sadd.s32 %s39, 1
    %s41 = scalar_select %p38, %s39, %s40
    %p44 = pneg %p38
    %p45 = scmp.eq.s32.totalorder %s15, 3
    %p46 = por %p44, %p45
    %p47 = scmp.ne.s32.totalorder %s39, %s42
    %p48 = scmp.eq.s32.totalorder %s15, 0
    %p49 = por %p47, %p48
    %p50 = scmp.ne.s32.totalorder %s39, %s42
    %p51 = scmp.eq.s32.totalorder %s20, 3
    %p52 = por %p50, %p51
    %p53 = scmp.ne.s32.totalorder %s42, %s43
    %p54 = scmp.eq.s32.totalorder %s20, 0
    %p55 = por %p53, %p54
    %p56 = scmp.ne.s32.totalorder %s42, %s43
    %p57 = scmp.eq.s32.totalorder %s21, 3
    %p58 = por %p56, %p57
    %p60 = scmp.ne.s32.totalorder %s43, %s59
    %p61 = scmp.eq.s32.totalorder %s21, 0
    %p62 = por %p60, %p61
    %s63 = ssub.s32 %s22, %s34
    %p64 = scmp.eq.s32.totalorder %s63, 0
    %s66 = sadd.s32 %s65, 1
    %s67 = scalar_select %p64, %s65, %s66
    %p70 = pneg %p64
    %p71 = scmp.eq.s32.totalorder %s15, 3
    %p72 = por %p70, %p71
    %p73 = scmp.ne.s32.totalorder %s65, %s68
    %p74 = scmp.eq.s32.totalorder %s15, 0
    %p75 = por %p73, %p74
    %p76 = scmp.ne.s32.totalorder %s65, %s68
    %p77 = scmp.eq.s32.totalorder %s20, 3
    %p78 = por %p76, %p77
    %p79 = scmp.ne.s32.totalorder %s68, %s69
    %p80 = scmp.eq.s32.totalorder %s20, 0
    %p81 = por %p79, %p80
    %p82 = scmp.ne.s32.totalorder %s68, %s69
    %p83 = scmp.eq.s32.totalorder %s21, 3
    %p84 = por %p82, %p83
    %p86 = scmp.ne.s32.totalorder %s69, %s85
    %p87 = scmp.eq.s32.totalorder %s21, 0
    %p88 = por %p86, %p87
    %s89 = ssub.s32 %s22, %s34
    %s90 = ssub.s32 %s23, %s30
    %s91 = sor.u32 %s89, %s90
    %p92 = scmp.eq.s32.totalorder %s91, 0
    %s94 = sadd.s32 %s93, 1
    %s95 = scalar_select %p92, %s93, %s94
    %p98 = pneg %p92
    %p99 = scmp.eq.s32.totalorder %s15, 3
    %p100 = por %p98, %p99
    %p101 = scmp.ne.s32.totalorder %s93, %s96
    %p102 = scmp.eq.s32.totalorder %s15, 0
    %p103 = por %p101, %p102
    %p104 = scmp.ne.s32.totalorder %s93, %s96
    %p105 = scmp.eq.s32.totalorder %s20, 3
    %p106 = por %p104, %p105
    %p107 = scmp.ne.s32.totalorder %s96, %s97
    %p108 = scmp.eq.s32.totalorder %s20, 0
    %p109 = por %p107, %p108
    %p110 = scmp.ne.s32.totalorder %s96, %s97
    %p111 = scmp.eq.s32.totalorder %s21, 3
    %p112 = por %p110, %p111
    %p114 = scmp.ne.s32.totalorder %s97, %s113
    %p115 = scmp.eq.s32.totalorder %s21, 0
    %p116 = por %p114, %p115
    %s118 = sadd.s32 %s117, 1
    %p121 = scmp.eq.s32.totalorder %s15, 3
    %p122 = scmp.ne.s32.totalorder %s117, %s119
    %p123 = scmp.eq.s32.totalorder %s15, 0
    %p124 = por %p122, %p123
    %p125 = scmp.ne.s32.totalorder %s117, %s119
    %p126 = scmp.eq.s32.totalorder %s20, 3
    %p127 = por %p125, %p126
    %p128 = scmp.ne.s32.totalorder %s119, %s120
    %p129 = scmp.eq.s32.totalorder %s20, 0
    %p130 = por %p128, %p129
    %p131 = scmp.ne.s32.totalorder %s119, %s120
    %p132 = scmp.eq.s32.totalorder %s21, 3
    %p133 = por %p131, %p132
    %p135 = scmp.ne.s32.totalorder %s120, %s134
    %p136 = scmp.eq.s32.totalorder %s21, 0
    %p137 = por %p135, %p136
    %s139 = sadd.s32 %s138, 1
    %p142 = scmp.eq.s32.totalorder %s15, 3
    %p143 = scmp.ne.s32.totalorder %s138, %s140
    %p144 = scmp.eq.s32.totalorder %s15, 0
    %p145 = por %p143, %p144
    %p146 = scmp.ne.s32.totalorder %s138, %s140
    %p147 = scmp.eq.s32.totalorder %s20, 3
    %p148 = por %p146, %p147
    %p149 = scmp.ne.s32.totalorder %s140, %s141
    %p150 = scmp.eq.s32.totalorder %s20, 0
    %p151 = por %p149, %p150
    %p152 = scmp.ne.s32.totalorder %s140, %s141
    %p153 = scmp.eq.s32.totalorder %s21, 3
    %p154 = por %p152, %p153
    %p156 = scmp.ne.s32.totalorder %s141, %s155
    %p157 = scmp.eq.s32.totalorder %s21, 0
    %p158 = por %p156, %p157
    %s160 = sadd.s32 %s159, 1
    %p163 = scmp.eq.s32.totalorder %s15, 3
    %p164 = scmp.ne.s32.totalorder %s159, %s161
    %p165 = scmp.eq.s32.totalorder %s15, 0
    %p166 = por %p164, %p165
    %p167 = scmp.ne.s32.totalorder %s159, %s161
    %p168 = scmp.eq.s32.totalorder %s20, 3
    %p169 = por %p167, %p168
    %p170 = scmp.ne.s32.totalorder %s161, %s162
    %p171 = scmp.eq.s32.totalorder %s20, 0
    %p172 = por %p170, %p171
    %p173 = scmp.ne.s32.totalorder %s161, %s162
    %p174 = scmp.eq.s32.totalorder %s21, 3
    %p175 = por %p173, %p174
    %p177 = scmp.ne.s32.totalorder %s162, %s176
    %p178 = scmp.eq.s32.totalorder %s21, 0
    %p179 = por %p177, %p178
    %s181 = sadd.s32 %s180, 1
    %p184 = scmp.eq.s32.totalorder %s15, 3
    %p185 = scmp.ne.s32.totalorder %s180, %s182
    %p186 = scmp.eq.s32.totalorder %s15, 0
    %p187 = por %p185, %p186
    %p188 = scmp.ne.s32.totalorder %s180, %s182
    %p189 = scmp.eq.s32.totalorder %s20, 3
    %p190 = por %p188, %p189
    %p191 = scmp.ne.s32.totalorder %s182, %s183
    %p192 = scmp.eq.s32.totalorder %s20, 0
    %p193 = por %p191, %p192
    %p194 = scmp.ne.s32.totalorder %s182, %s183
    %p195 = scmp.eq.s32.totalorder %s21, 3
    %p196 = por %p194, %p195
    %p198 = scmp.ne.s32.totalorder %s183, %s197
    %p199 = scmp.eq.s32.totalorder %s21, 0
    %p200 = por %p198, %p199
    %s202 = sadd.s32 %s201, 1
    %p205 = scmp.eq.s32.totalorder %s15, 3
    %p206 = scmp.ne.s32.totalorder %s201, %s203
    %p207 = scmp.eq.s32.totalorder %s15, 0
    %p208 = por %p206, %p207
    %p209 = scmp.ne.s32.totalorder %s201, %s203
    %p210 = scmp.eq.s32.totalorder %s20, 3
    %p211 = por %p209, %p210
    %p212 = scmp.ne.s32.totalorder %s203, %s204
    %p213 = scmp.eq.s32.totalorder %s20, 0
    %p214 = por %p212, %p213
    %p215 = scmp.ne.s32.totalorder %s203, %s204
    %p216 = scmp.eq.s32.totalorder %s21, 3
    %p217 = por %p215, %p216
    %p219 = scmp.ne.s32.totalorder %s204, %s218
    %p220 = scmp.eq.s32.totalorder %s21, 0
    %p221 = por %p219, %p220
    %s223 = sadd.s32 %s222, 1
    %p226 = scmp.eq.s32.totalorder %s15, 3
    %p227 = scmp.ne.s32.totalorder %s222, %s224
    %p228 = scmp.eq.s32.totalorder %s15, 0
    %p229 = por %p227, %p228
    %p230 = scmp.ne.s32.totalorder %s222, %s224
    %p231 = scmp.eq.s32.totalorder %s20, 3
    %p232 = por %p230, %p231
    %p233 = scmp.ne.s32.totalorder %s224, %s225
    %p234 = scmp.eq.s32.totalorder %s20, 0
    %p235 = por %p233, %p234
    %p236 = scmp.ne.s32.totalorder %s224, %s225
    %p237 = scmp.eq.s32.totalorder %s21, 3
    %p238 = por %p236, %p237
    %p240 = scmp.ne.s32.totalorder %s225, %s239
    %p241 = scmp.eq.s32.totalorder %s21, 0
    %p242 = por %p240, %p241
    %s243 = ssub.s32 %s22, %s34
    %s244 = ssub.s32 %s23, %s30
    %s245 = sor.u32 %s243, %s244
    %p246 = scmp.eq.s32.totalorder %s245, 0
    %s248 = sadd.s32 %s247, 1
    %s249 = scalar_select %p246, %s247, %s248
    %p252 = pneg %p246
    %p253 = scmp.eq.s32.totalorder %s15, 3
    %p254 = por %p252, %p253
    %p255 = scmp.ne.s32.totalorder %s247, %s250
    %p256 = scmp.eq.s32.totalorder %s15, 0
    %p257 = por %p255, %p256
    %p258 = scmp.ne.s32.totalorder %s247, %s250
    %p259 = scmp.eq.s32.totalorder %s20, 3
    %p260 = por %p258, %p259
    %p261 = scmp.ne.s32.totalorder %s250, %s251
    %p262 = scmp.eq.s32.totalorder %s20, 0
    %p263 = por %p261, %p262
    %p264 = scmp.ne.s32.totalorder %s250, %s251
    %p265 = scmp.eq.s32.totalorder %s21, 3
    %p266 = por %p264, %p265
    %p268 = scmp.ne.s32.totalorder %s251, %s267
    %p269 = scmp.eq.s32.totalorder %s21, 0
    %p270 = por %p268, %p269
    %p271 = scmp.le.s32.totalorder 1, %s15
    %p272 = scmp.lt.s32.totalorder %s15, 5
    %p273 = pnand %p271, %p272
    %p274 = pneg %p273
    // Predicated region
    $region9: #{evoformer_stack_forward.38} parent=5 // pred_check
      _
    $region10: #{evoformer_stack_forward.38} parent=5 // pred_check_branch
      %276 = sbr.rel (%p273) target = $region12
    $region11: #{evoformer_stack_forward.38} parent=5 // pred_region
      %s277 = ssub.s32 %s15, 1
      // Predicated region
      $region13: #{evoformer_stack_forward.38} parent=11 // pred_check
        %p278 = pneg %p81
      $region14: #{evoformer_stack_forward.38} parent=11 // pred_check_branch
        %280 = sbr.rel (%p278) target = $region16
      $region15: #{evoformer_stack_forward.38} parent=11 // pred_region
        %p281 = scmp.lt.s32.totalorder %s24, 0
        %s282 = scalar_select %p281, %s24, 0
        %s283 = smul.addr %s282, 4
        %s284 = smul.addr %s283, 4
        %s285 = scalar_lea.vmem %s1, %s284
      $region16: #{evoformer_stack_forward.38} parent=11 // pred_fallthru
        _
      // Predicated region
      $region17: #{evoformer_stack_forward.38} parent=11 // pred_check
        %p286 = pneg %p130
      $region18: #{evoformer_stack_forward.38} parent=11 // pred_check_branch
        %288 = sbr.rel (%p286) target = $region20
      $region19: #{evoformer_stack_forward.38} parent=11 // pred_region
        _
      $region20: #{evoformer_stack_forward.38} parent=11 // pred_fallthru
        _
      // Predicated region
      $region21: #{evoformer_stack_forward.38} parent=11 // pred_check
        %p289 = pneg %p151
      $region22: #{evoformer_stack_forward.38} parent=11 // pred_check_branch
        %291 = sbr.rel (%p289) target = $region24
      $region23: #{evoformer_stack_forward.38} parent=11 // pred_region
        _
      $region24: #{evoformer_stack_forward.38} parent=11 // pred_fallthru
        _
      // Predicated region
      $region25: #{evoformer_stack_forward.38} parent=11 // pred_check
        %p292 = pneg %p172
      $region26: #{evoformer_stack_forward.38} parent=11 // pred_check_branch
        %294 = sbr.rel (%p292) target = $region28
      $region27: #{evoformer_stack_forward.38} parent=11 // pred_region
        _
      $region28: #{evoformer_stack_forward.38} parent=11 // pred_fallthru
        _
      // Predicated region
      $region29: #{evoformer_stack_forward.38} parent=11 // pred_check
        %p295 = pneg %p193
      $region30: #{evoformer_stack_forward.38} parent=11 // pred_check_branch
        %297 = sbr.rel (%p295) target = $region32
      $region31: #{evoformer_stack_forward.38} parent=11 // pred_region
        _
      $region32: #{evoformer_stack_forward.38} parent=11 // pred_fallthru
        _
      // Predicated region
      $region33: #{evoformer_stack_forward.38} parent=11 // pred_check
        %p298 = pneg %p214
      $region34: #{evoformer_stack_forward.38} parent=11 // pred_check_branch
        %300 = sbr.rel (%p298) target = $region36
      $region35: #{evoformer_stack_forward.38} parent=11 // pred_region
        _
      $region36: #{evoformer_stack_forward.38} parent=11 // pred_fallthru
        _
      // Predicated region
      $region37: #{evoformer_stack_forward.38} parent=11 // pred_check
        %p301 = pneg %p235
      $region38: #{evoformer_stack_forward.38} parent=11 // pred_check_branch
        %303 = sbr.rel (%p301) target = $region40
      $region39: #{evoformer_stack_forward.38} parent=11 // pred_region
        _
      $region40: #{evoformer_stack_forward.38} parent=11 // pred_fallthru
        _
    $region12: #{evoformer_stack_forward.38} parent=5 // pred_fallthru
      _
    %p304 = scmp.lt.s32.totalorder %s15, 4
    // Predicated region
    $region41: #{evoformer_stack_forward.38} parent=5 // pred_check
      %p305 = pneg %p304
    $region42: #{evoformer_stack_forward.38} parent=5 // pred_check_branch
      %307 = sbr.rel (%p305) target = $region44
    $region43: #{evoformer_stack_forward.38} parent=5 // pred_region
      // Predicated region
      $region45: #{evoformer_stack_forward.38} parent=43 // pred_check
        %p308 = pneg %p49
      $region46: #{evoformer_stack_forward.38} parent=43 // pred_check_branch
        %310 = sbr.rel (%p308) target = $region48
      $region47: #{evoformer_stack_forward.38} parent=43 // pred_region
        %p311 = scmp.lt.s32.totalorder %s22, 0
        %s312 = scalar_select %p311, %s22, 0
        %p313 = scmp.lt.s32.totalorder %s23, 3
        %s314 = scalar_select %p313, %s23, 3
        %s315 = smul.addr %s312, 4
        %s316 = sadd.s32 %s314, %s315
        %s317 = smul.addr %s316, 8
        %s318 = scalar_lea.vmem %s0, %s317
      $region48: #{evoformer_stack_forward.38} parent=43 // pred_fallthru
        _
      // Predicated region
      $region49: #{evoformer_stack_forward.38} parent=43 // pred_check
        %p319 = pneg %p103
      $region50: #{evoformer_stack_forward.38} parent=43 // pred_check_branch
        %321 = sbr.rel (%p319) target = $region52
      $region51: #{evoformer_stack_forward.38} parent=43 // pred_region
        %p322 = scmp.lt.s32.totalorder %s22, 0
        %s323 = scalar_select %p322, %s22, 0
        %p324 = scmp.lt.s32.totalorder %s23, 3
        %s325 = scalar_select %p324, %s23, 3
        %s326 = smul.addr %s323, 4
        %s327 = sadd.s32 %s325, %s326
        %s328 = scalar_lea.vmem %s2, %s327
      $region52: #{evoformer_stack_forward.38} parent=43 // pred_fallthru
        _
    $region44: #{evoformer_stack_forward.38} parent=5 // pred_fallthru
      _
    %p329 = scmp.le.s32.totalorder 1, %s15
    %p330 = scmp.lt.s32.totalorder %s15, 5
    %p331 = pnand %p329, %p330
    %p332 = pneg %p331
    // Predicated region
    $region53: #{evoformer_stack_forward.38} parent=5 // pred_check
      _
    $region54: #{evoformer_stack_forward.38} parent=5 // pred_check_branch
      %334 = sbr.rel (%p331) target = $region56
    $region55: #{evoformer_stack_forward.38} parent=5 // pred_region
      %s335 = ssub.s32 %s15, 1
      %p336 = scmp.lt.s32.totalorder %s24, 0
      %s337 = scalar_select %p336, %s24, 0
      %p338 = scmp.lt.s32.totalorder %s25, 3
      %s339 = scalar_select %p338, %s25, 3
      %s340 = smul.addr %s337, 4
      %s341 = sadd.s32 %s339, %s340
      %s342 = smul.addr %s341, 8
      %s343 = scalar_lea.vmem %s0, %s342
      %p344 = pneg %p55
      %p345 = pneg %p52
      %p346 = scmp.lt.s32.totalorder %s24, 0
      %s347 = scalar_select %p346, %s24, 0
      %s348 = smul.addr %s347, 4
      %s349 = smul.addr %s348, 4
      %s350 = scalar_lea.vmem %s1, %s349
      %p351 = pneg %p81
      %p352 = pneg %p78
      %p353 = scmp.lt.s32.totalorder %s24, 0
      %s354 = scalar_select %p353, %s24, 0
      %p355 = scmp.lt.s32.totalorder %s25, 3
      %s356 = scalar_select %p355, %s25, 3
      %s357 = smul.addr %s354, 4
      %s358 = sadd.s32 %s356, %s357
      %s359 = scalar_lea.vmem %s2, %s358
      %p360 = pneg %p109
      %p361 = pneg %p106
      %p362 = pneg %p130
      %p363 = pneg %p127
      %p364 = pneg %p151
      %p365 = pneg %p148
      %p366 = pneg %p172
      %p367 = pneg %p169
      %p368 = pneg %p193
      %p369 = pneg %p190
      %p370 = pneg %p214
      %p371 = pneg %p211
      %p372 = pneg %p235
      %p373 = pneg %p232
      %p374 = pneg %p263
      %p375 = pneg %p260
      %p376 = scmp.lt.s32.totalorder %s24, 0
      %s377 = scalar_select %p376, %s24, 0
      %p378 = scmp.lt.s32.totalorder %s25, 3
      %s379 = scalar_select %p378, %s25, 3
      %s380 = smul.addr %s377, 4
      %s381 = sadd.s32 %s379, %s380
      %s382 = smul.addr %s381, 8
      %s383 = scalar_lea.vmem %s9, %s382
      %p384 = scmp.lt.s32.totalorder %s24, 0
      %s385 = scalar_select %p384, %s24, 0
      %p386 = scmp.lt.s32.totalorder %s25, 3
      %s387 = scalar_select %p386, %s25, 3
      %s388 = smul.addr %s385, 4
      %s389 = sadd.s32 %s387, %s388
      %s390 = smul.addr %s389, 8
      %s391 = scalar_lea.vmem %s0, %s390
      %p392 = scmp.lt.s32.totalorder %s24, 0
      %s393 = scalar_select %p392, %s24, 0
      %s394 = smul.addr %s393, 4
      %s395 = smul.addr %s394, 4
      %s396 = scalar_lea.vmem %s1, %s395
      %p397 = scmp.lt.s32.totalorder %s24, 0
      %s398 = scalar_select %p397, %s24, 0
      %p399 = scmp.lt.s32.totalorder %s25, 3
      %s400 = scalar_select %p399, %s25, 3
      %s401 = smul.addr %s398, 4
      %s402 = sadd.s32 %s400, %s401
      %s403 = scalar_lea.vmem %s2, %s402
      %p404 = scmp.lt.s32.totalorder %s24, 0
      %s405 = scalar_select %p404, %s24, 0
      %p406 = scmp.lt.s32.totalorder %s25, 3
      %s407 = scalar_select %p406, %s25, 3
      %s408 = smul.addr %s405, 4
      %s409 = sadd.s32 %s407, %s408
      %s410 = smul.addr %s409, 8
      %s411 = scalar_lea.vmem %s9, %s410
      %v413 = vld [vmem:[%s391] sm:$0xff]
      %v414 = vld [vmem:[%s3] sm:$0x1]
      %v415 = vld [vmem:[%s4] sm:$0x1]
      %vm416 = vcmask 261120
      %v417 = vsel %vm416, %v413, 0.0
      %418 = vadd.xlane.f32.xlu0 %v417
      %v419 = vpop.xlane.xlu0 %418
      %v420 = vrcp.pop 32.0
      %v421 = vmul.f32 %v419, %v420
      %v422 = vsub.f32 %v413, %v421
      %v423 = vmul.f32 %v422, %v422
      %v424 = vsel %vm416, %v423, 0.0
      %425 = vadd.xlane.f32.xlu0 %v424
      %v426 = vpop.xlane.xlu0 %425
      %v427 = vmul.f32 %v426, %v420
      %v428 = vadd.f32 %v427, 1e-05
      %v429 = vrsqrt.pop %v428
      %v430 = vmul.f32 %v422, %v429
      %v432 = vlaneseq
      %v433 = vshrl.u32 %v432, 7
      %v434 = vsub.s32 0, %v433
      %v435 = vrot.slane %v414, %v434
      %v437 = vmul.f32 %v430, %v435
      %v439 = vlaneseq
      %v440 = vshrl.u32 %v439, 7
      %v441 = vsub.s32 0, %v440
      %v442 = vrot.slane %v415, %v441
      %v444 = vadd.f32 %v437, %v442
      %v445 = vpack.c.bf16 %v444, %v444
      %v446 = vld [vmem:[%s5] sm:$0xf]
      %v447 = vld [vmem:[%s5 + $0x4] sm:$0xf]
      %v448 = vld [vmem:[%s5 + $0x8] sm:$0xf]
      %v449 = vld [vmem:[%s5 + $0xc] sm:$0xf]
      %v450 = vld [vmem:[%s6] sm:$0x1]
      %v452 = vlaneseq
      %v453 = vshrl.u32 %v452, 7
      %v454 = vsub.s32 0, %v453
      %v455 = vrot.slane %v450, %v454
      %v461 = vunpack.c.l.b16 %v446
      %v462 = vunpack.c.l.b16 %v447
      %v463 = vunpack.c.l.b16 %v448
      %v464 = vunpack.c.l.b16 %v449
      %v465 = vpack.c.b16 %v462, %v461
      %v466 = vpack.c.b16 %v464, %v463
      %v470 = vsel %vm416, %v445, 0
      %472 = vmatprep.subr.bf16.mxu0 0
      %473 = vmatpush1.bf16.msra.mxu0 %v465
      %474 = vmatprep.subr.bf16.mxu0 0
      %475 = vmatpush1.bf16.msra.mxu0 %v466
      %476 = vmatprep.subr.bf16.mxu0 0
      %477 = vmatpush1.bf16.msra.mxu0 0
      %478 = vmatprep.subr.bf16.mxu0 0
      %479 = vmatpush1.bf16.msra.mxu0 0
      %480 = vmatprep.subr.bf16.mxu0 0
      %481 = vmatpush1.bf16.msra.mxu0 0
      %482 = vmatprep.subr.bf16.mxu0 0
      %483 = vmatpush1.bf16.msra.mxu0 0
      %484 = vmatprep.subr.bf16.mxu0 0
      %485 = vmatpush1.bf16.msra.mxu0 0
      %486 = vmatprep.subr.bf16.mxu0 0
      %487 = vmatpush1.bf16.msra.mxu0 0
      %488 = vmatprep.subr.bf16.mxu0 0
      %489 = vmatpush1.bf16.msra.mxu0 0
      %490 = vmatprep.subr.bf16.mxu0 0
      %491 = vmatpush1.bf16.msra.mxu0 0
      %492 = vmatprep.subr.bf16.mxu0 0
      %493 = vmatpush1.bf16.msra.mxu0 0
      %494 = vmatprep.subr.bf16.mxu0 0
      %495 = vmatpush1.bf16.msra.mxu0 0
      %496 = vmatprep.subr.bf16.mxu0 0
      %497 = vmatpush1.bf16.msra.mxu0 0
      %498 = vmatprep.subr.bf16.mxu0 0
      %499 = vmatpush1.bf16.msra.mxu0 0
      %500 = vmatprep.subr.bf16.mxu0 0
      %501 = vmatpush1.bf16.msra.mxu0 0
      %502 = vmatprep.subr.bf16.mxu0 0
      %503 = vmatpush1.bf16.msra.mxu0 0
      %504 = vmatprep.mubr.bf16.mxu0 0
      %505 = vmatmul.mubr.bf16.gmra.mrb[0].mxu0 %v470
      %v506 = vpop.f32.mrb[0].mxu0
      %v507 = vadd.f32 %v455, %v506
      %v508 = vpop.f32.mrb[0].mxu0
      %v509 = vpop.f32.mrb[0].mxu0
      %v510 = vpop.f32.mrb[0].mxu0
      %511 = vdwg.mxu0
      %v512 = vld [vmem:[%s403] sm:$0x1]
      %v513 = vsub.f32 %v512, 1.0
      %v514 = vmul.f32 %v513, 1e+09
      %v515 = vmul.f32 %v507, 0.35355338
      %v516 = vpack.c.bf16 %v515, %v515
      %v517 = vpack.c.bf16 %v507, %v507
      %v518 = vld [vmem:[%s396] sm:$0xf]
      %v519 = vunpack.c.l.bf16 %v518
      %521 = vrot.lane.b32.xlu0 %v517, 96
      %v522 = vpop.permute.xlu0 %521
      %vm523 = vcmask 64512
      %v525 = vsel %vm523, %v516, 0
      %v528 = vsel %vm523, %v522, 0
      %530 = vmatprep.subr.bf16.mxu0 0
      %531 = vmatpush1.bf16.xpose.msra.mxu0 %v528
      %532 = vmatprep.subr.bf16.mxu0 0
      %533 = vmatpush1.bf16.xpose.msra.mxu0 0
      %534 = vmatprep.subr.bf16.mxu0 0
      %535 = vmatpush1.bf16.xpose.msra.mxu0 0
      %536 = vmatprep.subr.bf16.mxu0 0
      %537 = vmatpush1.bf16.xpose.msra.mxu0 0
      %538 = vmatprep.subr.bf16.mxu0 0
      %539 = vmatpush1.bf16.xpose.msra.mxu0 0
      %540 = vmatprep.subr.bf16.mxu0 0
      %541 = vmatpush1.bf16.xpose.msra.mxu0 0
      %542 = vmatprep.subr.bf16.mxu0 0
      %543 = vmatpush1.bf16.xpose.msra.mxu0 0
      %544 = vmatprep.subr.bf16.mxu0 0
      %545 = vmatpush1.bf16.xpose.msra.mxu0 0
      %546 = vmatprep.subr.bf16.mxu0 0
      %547 = vmatpush1.bf16.xpose.msra.mxu0 0
      %548 = vmatprep.subr.bf16.mxu0 0
      %549 = vmatpush1.bf16.xpose.msra.mxu0 0
      %550 = vmatprep.subr.bf16.mxu0 0
      %551 = vmatpush1.bf16.xpose.msra.mxu0 0
      %552 = vmatprep.subr.bf16.mxu0 0
      %553 = vmatpush1.bf16.xpose.msra.mxu0 0
      %554 = vmatprep.subr.bf16.mxu0 0
      %555 = vmatpush1.bf16.xpose.msra.mxu0 0
      %556 = vmatprep.subr.bf16.mxu0 0
      %557 = vmatpush1.bf16.xpose.msra.mxu0 0
      %558 = vmatprep.subr.bf16.mxu0 0
      %559 = vmatpush1.bf16.xpose.msra.mxu0 0
      %560 = vmatprep.subr.bf16.mxu0 0
      %561 = vmatpush1.bf16.xpose.msra.mxu0 0
      %562 = vmatprep.mubr.bf16.mxu0 0
      %563 = vmatmul.mubr.bf16.gmra.mrb[0].mxu0 %v525
      %v564 = vpop.f32.mrb[0].mxu0
      %v565 = vadd.f32 %v519, %v564
      %v566 = vpop.f32.mrb[0].mxu0
      %v567 = vpop.f32.mrb[0].mxu0
      %v568 = vpop.f32.mrb[0].mxu0
      %569 = vdwg.mxu0
      %v571 = vlaneseq
      %v572 = vshrl.u32 %v571, 7
      %v573 = vsub.s32 0, %v572
      %v574 = vrot.slane %v514, %v573
      %v576 = vadd.f32 %v565, %v574
      %v577 = vsel %vm523, %v576, -inf
      %578 = vmax.xlane.f32.xlu0 %v577
      %v579 = vpop.xlane.xlu0 %578
      %v580 = vsub.f32 %v576, %v579
      %v581 = vmul.f32 %v580, 1.442695
      %v582 = vpow.pop %v581
      %v583 = vsel %vm523, %v582, 0.0
      %584 = vadd.xlane.f32.xlu0 %v583
      %v585 = vpop.xlane.xlu0 %584
      %v586 = vrcp.pop %v585
      %v587 = vmul.f32 %v582, %v586
      %v588 = vpack.c.bf16 %v587, %v587
      %589 = vrot.lane.b32.xlu0 %v517, 64
      %v590 = vpop.permute.xlu0 %589
      %v592 = vsel %vm523, %v588, 0
      %vm594 = vcmask 1043456
      %v596 = vsel %vm594, %v590, 0
      %598 = vmatprep.subr.bf16.mxu0 0
      %599 = vmatpush1.bf16.msra.mxu0 %v596
      %600 = vmatprep.subr.bf16.mxu0 0
      %601 = vmatpush1.bf16.msra.mxu0 0
      %602 = vmatprep.subr.bf16.mxu0 0
      %603 = vmatpush1.bf16.msra.mxu0 0
      %604 = vmatprep.subr.bf16.mxu0 0
      %605 = vmatpush1.bf16.msra.mxu0 0
      %606 = vmatprep.subr.bf16.mxu0 0
      %607 = vmatpush1.bf16.msra.mxu0 0
      %608 = vmatprep.subr.bf16.mxu0 0
      %609 = vmatpush1.bf16.msra.mxu0 0
      %610 = vmatprep.subr.bf16.mxu0 0
      %611 = vmatpush1.bf16.msra.mxu0 0
      %612 = vmatprep.subr.bf16.mxu0 0
      %613 = vmatpush1.bf16.msra.mxu0 0
      %614 = vmatprep.subr.bf16.mxu0 0
      %615 = vmatpush1.bf16.msra.mxu0 0
      %616 = vmatprep.subr.bf16.mxu0 0
      %617 = vmatpush1.bf16.msra.mxu0 0
      %618 = vmatprep.subr.bf16.mxu0 0
      %619 = vmatpush1.bf16.msra.mxu0 0
      %620 = vmatprep.subr.bf16.mxu0 0
      %621 = vmatpush1.bf16.msra.mxu0 0
      %622 = vmatprep.subr.bf16.mxu0 0
      %623 = vmatpush1.bf16.msra.mxu0 0
      %624 = vmatprep.subr.bf16.mxu0 0
      %625 = vmatpush1.bf16.msra.mxu0 0
      %626 = vmatprep.subr.bf16.mxu0 0
      %627 = vmatpush1.bf16.msra.mxu0 0
      %628 = vmatprep.subr.bf16.mxu0 0
      %629 = vmatpush1.bf16.msra.mxu0 0
      %630 = vmatprep.mubr.bf16.mxu0 0
      %631 = vmatmul.mubr.bf16.gmra.mrb[0].mxu0 %v592
      %v632 = vpop.f32.mrb[0].mxu0
      %v633 = vadd.f32 0.0, %v632
      %v634 = vpop.f32.mrb[0].mxu0
      %v635 = vpop.f32.mrb[0].mxu0
      %v636 = vpop.f32.mrb[0].mxu0
      %637 = vdwg.mxu0
      %s638 = scalar_lea.vmem %s396, 4
      %v639 = vld [vmem:[%s638] sm:$0xf]
      %v640 = vunpack.c.l.bf16 %v639
      %642 = vrot.lane.b32.xlu0 %v516, 120
      %v643 = vpop.permute.xlu0 %642
      %644 = vrot.lane.b32.xlu0 %v517, 88
      %v645 = vpop.permute.xlu0 %644
      %v647 = vsel %vm523, %v643, 0
      %v650 = vsel %vm523, %v645, 0
      %652 = vmatprep.subr.bf16.mxu0 0
      %653 = vmatpush1.bf16.xpose.msra.mxu0 %v650
      %654 = vmatprep.subr.bf16.mxu0 0
      %655 = vmatpush1.bf16.xpose.msra.mxu0 0
      %656 = vmatprep.subr.bf16.mxu0 0
      %657 = vmatpush1.bf16.xpose.msra.mxu0 0
      %658 = vmatprep.subr.bf16.mxu0 0
      %659 = vmatpush1.bf16.xpose.msra.mxu0 0
      %660 = vmatprep.subr.bf16.mxu0 0
      %661 = vmatpush1.bf16.xpose.msra.mxu0 0
      %662 = vmatprep.subr.bf16.mxu0 0
      %663 = vmatpush1.bf16.xpose.msra.mxu0 0
      %664 = vmatprep.subr.bf16.mxu0 0
      %665 = vmatpush1.bf16.xpose.msra.mxu0 0
      %666 = vmatprep.subr.bf16.mxu0 0
      %667 = vmatpush1.bf16.xpose.msra.mxu0 0
      %668 = vmatprep.subr.bf16.mxu0 0
      %669 = vmatpush1.bf16.xpose.msra.mxu0 0
      %670 = vmatprep.subr.bf16.mxu0 0
      %671 = vmatpush1.bf16.xpose.msra.mxu0 0
      %672 = vmatprep.subr.bf16.mxu0 0
      %673 = vmatpush1.bf16.xpose.msra.mxu0 0
      %674 = vmatprep.subr.bf16.mxu0 0
      %675 = vmatpush1.bf16.xpose.msra.mxu0 0
      %676 = vmatprep.subr.bf16.mxu0 0
      %677 = vmatpush1.bf16.xpose.msra.mxu0 0
      %678 = vmatprep.subr.bf16.mxu0 0
      %679 = vmatpush1.bf16.xpose.msra.mxu0 0
      %680 = vmatprep.subr.bf16.mxu0 0
      %681 = vmatpush1.bf16.xpose.msra.mxu0 0
      %682 = vmatprep.subr.bf16.mxu0 0
      %683 = vmatpush1.bf16.xpose.msra.mxu0 0
      %684 = vmatprep.mubr.bf16.mxu0 0
      %685 = vmatmul.mubr.bf16.gmra.mrb[0].mxu0 %v647
      %v686 = vpop.f32.mrb[0].mxu0
      %v687 = vadd.f32 %v640, %v686
      %v688 = vpop.f32.mrb[0].mxu0
      %v689 = vpop.f32.mrb[0].mxu0
      %v690 = vpop.f32.mrb[0].mxu0
      %691 = vdwg.mxu0
      %v692 = vadd.f32 %v687, %v574
      %v693 = vsel %vm523, %v692, -inf
      %694 = vmax.xlane.f32.xlu0 %v693
      %v695 = vpop.xlane.xlu0 %694
      %v696 = vsub.f32 %v692, %v695
      %v697 = vmul.f32 %v696, 1.442695
      %v698 = vpow.pop %v697
      %v699 = vsel %vm523, %v698, 0.0
      %700 = vadd.xlane.f32.xlu0 %v699
      %v701 = vpop.xlane.xlu0 %700
      %v702 = vrcp.pop %v701
      %v703 = vmul.f32 %v698, %v702
      %v704 = vpack.c.bf16 %v703, %v703
      %705 = vrot.lane.b32.xlu0 %v517, 56
      %v706 = vpop.permute.xlu0 %705
      %v708 = vsel %vm523, %v704, 0
      %v711 = vsel %vm594, %v706, 0
      %713 = vmatprep.subr.bf16.mxu0 0
      %714 = vmatpush1.bf16.msra.mxu0 %v711
      %715 = vmatprep.subr.bf16.mxu0 0
      %716 = vmatpush1.bf16.msra.mxu0 0
      %717 = vmatprep.subr.bf16.mxu0 0
      %718 = vmatpush1.bf16.msra.mxu0 0
      %719 = vmatprep.subr.bf16.mxu0 0
      %720 = vmatpush1.bf16.msra.mxu0 0
      %721 = vmatprep.subr.bf16.mxu0 0
      %722 = vmatpush1.bf16.msra.mxu0 0
      %723 = vmatprep.subr.bf16.mxu0 0
      %724 = vmatpush1.bf16.msra.mxu0 0
      %725 = vmatprep.subr.bf16.mxu0 0
      %726 = vmatpush1.bf16.msra.mxu0 0
      %727 = vmatprep.subr.bf16.mxu0 0
      %728 = vmatpush1.bf16.msra.mxu0 0
      %729 = vmatprep.subr.bf16.mxu0 0
      %730 = vmatpush1.bf16.msra.mxu0 0
      %731 = vmatprep.subr.bf16.mxu0 0
      %732 = vmatpush1.bf16.msra.mxu0 0
      %733 = vmatprep.subr.bf16.mxu0 0
      %734 = vmatpush1.bf16.msra.mxu0 0
      %735 = vmatprep.subr.bf16.mxu0 0
      %736 = vmatpush1.bf16.msra.mxu0 0
      %737 = vmatprep.subr.bf16.mxu0 0
      %738 = vmatpush1.bf16.msra.mxu0 0
      %739 = vmatprep.subr.bf16.mxu0 0
      %740 = vmatpush1.bf16.msra.mxu0 0
      %741 = vmatprep.subr.bf16.mxu0 0
      %742 = vmatpush1.bf16.msra.mxu0 0
      %743 = vmatprep.subr.bf16.mxu0 0
      %744 = vmatpush1.bf16.msra.mxu0 0
      %745 = vmatprep.mubr.bf16.mxu0 0
      %746 = vmatmul.mubr.bf16.gmra.mrb[0].mxu0 %v708
      %v747 = vpop.f32.mrb[0].mxu0
      %v748 = vadd.f32 0.0, %v747
      %v749 = vpop.f32.mrb[0].mxu0
      %v750 = vpop.f32.mrb[0].mxu0
      %v751 = vpop.f32.mrb[0].mxu0
      %752 = vdwg.mxu0
      %s753 = scalar_lea.vmem %s396, 8
      %v754 = vld [vmem:[%s753] sm:$0xf]
      %v755 = vunpack.c.l.bf16 %v754
      %756 = vrot.lane.b32.xlu0 %v516, 112
      %v757 = vpop.permute.xlu0 %756
      %758 = vrot.lane.b32.xlu0 %v517, 80
      %v759 = vpop.permute.xlu0 %758
      %v761 = vsel %vm523, %v757, 0
      %v764 = vsel %vm523, %v759, 0
      %766 = vmatprep.subr.bf16.mxu0 0
      %767 = vmatpush1.bf16.xpose.msra.mxu0 %v764
      %768 = vmatprep.subr.bf16.mxu0 0
      %769 = vmatpush1.bf16.xpose.msra.mxu0 0
      %770 = vmatprep.subr.bf16.mxu0 0
      %771 = vmatpush1.bf16.xpose.msra.mxu0 0
      %772 = vmatprep.subr.bf16.mxu0 0
      %773 = vmatpush1.bf16.xpose.msra.mxu0 0
      %774 = vmatprep.subr.bf16.mxu0 0
      %775 = vmatpush1.bf16.xpose.msra.mxu0 0
      %776 = vmatprep.subr.bf16.mxu0 0
      %777 = vmatpush1.bf16.xpose.msra.mxu0 0
      %778 = vmatprep.subr.bf16.mxu0 0
      %779 = vmatpush1.bf16.xpose.msra.mxu0 0
      %780 = vmatprep.subr.bf16.mxu0 0
      %781 = vmatpush1.bf16.xpose.msra.mxu0 0
      %782 = vmatprep.subr.bf16.mxu0 0
      %783 = vmatpush1.bf16.xpose.msra.mxu0 0
      %784 = vmatprep.subr.bf16.mxu0 0
      %785 = vmatpush1.bf16.xpose.msra.mxu0 0
      %786 = vmatprep.subr.bf16.mxu0 0
      %787 = vmatpush1.bf16.xpose.msra.mxu0 0
      %788 = vmatprep.subr.bf16.mxu0 0
      %789 = vmatpush1.bf16.xpose.msra.mxu0 0
      %790 = vmatprep.subr.bf16.mxu0 0
      %791 = vmatpush1.bf16.xpose.msra.mxu0 0
      %792 = vmatprep.subr.bf16.mxu0 0
      %793 = vmatpush1.bf16.xpose.msra.mxu0 0
      %794 = vmatprep.subr.bf16.mxu0 0
      %795 = vmatpush1.bf16.xpose.msra.mxu0 0
      %796 = vmatprep.subr.bf16.mxu0 0
      %797 = vmatpush1.bf16.xpose.msra.mxu0 0
      %798 = vmatprep.mubr.bf16.mxu0 0
      %799 = vmatmul.mubr.bf16.gmra.mrb[0].mxu0 %v761
      %v800 = vpop.f32.mrb[0].mxu0
      %v801 = vadd.f32 %v755, %v800
      %v802 = vpop.f32.mrb[0].mxu0
      %v803 = vpop.f32.mrb[0].mxu0
      %v804 = vpop.f32.mrb[0].mxu0
      %805 = vdwg.mxu0
      %v806 = vadd.f32 %v801, %v574
      %v807 = vsel %vm523, %v806, -inf
      %808 = vmax.xlane.f32.xlu0 %v807
      %v809 = vpop.xlane.xlu0 %808
      %v810 = vsub.f32 %v806, %v809
      %v811 = vmul.f32 %v810, 1.442695
      %v812 = vpow.pop %v811
      %v813 = vsel %vm523, %v812, 0.0
      %814 = vadd.xlane.f32.xlu0 %v813
      %v815 = vpop.xlane.xlu0 %814
      %v816 = vrcp.pop %v815
      %v817 = vmul.f32 %v812, %v816
      %v818 = vpack.c.bf16 %v817, %v817
      %819 = vrot.lane.b32.xlu0 %v517, 48
      %v820 = vpop.permute.xlu0 %819
      %v822 = vsel %vm523, %v818, 0
      %v825 = vsel %vm594, %v820, 0
      %827 = vmatprep.subr.bf16.mxu0 0
      %828 = vmatpush1.bf16.msra.mxu0 %v825
      %829 = vmatprep.subr.bf16.mxu0 0
      %830 = vmatpush1.bf16.msra.mxu0 0
      %831 = vmatprep.subr.bf16.mxu0 0
      %832 = vmatpush1.bf16.msra.mxu0 0
      %833 = vmatprep.subr.bf16.mxu0 0
      %834 = vmatpush1.bf16.msra.mxu0 0
      %835 = vmatprep.subr.bf16.mxu0 0
      %836 = vmatpush1.bf16.msra.mxu0 0
      %837 = vmatprep.subr.bf16.mxu0 0
      %838 = vmatpush1.bf16.msra.mxu0 0
      %839 = vmatprep.subr.bf16.mxu0 0
      %840 = vmatpush1.bf16.msra.mxu0 0
      %841 = vmatprep.subr.bf16.mxu0 0
      %842 = vmatpush1.bf16.msra.mxu0 0
      %843 = vmatprep.subr.bf16.mxu0 0
      %844 = vmatpush1.bf16.msra.mxu0 0
      %845 = vmatprep.subr.bf16.mxu0 0
      %846 = vmatpush1.bf16.msra.mxu0 0
      %847 = vmatprep.subr.bf16.mxu0 0
      %848 = vmatpush1.bf16.msra.mxu0 0
      %849 = vmatprep.subr.bf16.mxu0 0
      %850 = vmatpush1.bf16.msra.mxu0 0
      %851 = vmatprep.subr.bf16.mxu0 0
      %852 = vmatpush1.bf16.msra.mxu0 0
      %853 = vmatprep.subr.bf16.mxu0 0
      %854 = vmatpush1.bf16.msra.mxu0 0
      %855 = vmatprep.subr.bf16.mxu0 0
      %856 = vmatpush1.bf16.msra.mxu0 0
      %857 = vmatprep.subr.bf16.mxu0 0
      %858 = vmatpush1.bf16.msra.mxu0 0
      %859 = vmatprep.mubr.bf16.mxu0 0
      %860 = vmatmul.mubr.bf16.gmra.mrb[0].mxu0 %v822
      %v861 = vpop.f32.mrb[0].mxu0
      %v862 = vadd.f32 0.0, %v861
      %v863 = vpop.f32.mrb[0].mxu0
      %v864 = vpop.f32.mrb[0].mxu0
      %v865 = vpop.f32.mrb[0].mxu0
      %866 = vdwg.mxu0
      %s867 = scalar_lea.vmem %s396, 12
      %v868 = vld [vmem:[%s867] sm:$0xf]
      %v869 = vunpack.c.l.bf16 %v868
      %870 = vrot.lane.b32.xlu0 %v516, 104
      %v871 = vpop.permute.xlu0 %870
      %872 = vrot.lane.b32.xlu0 %v517, 72
      %v873 = vpop.permute.xlu0 %872
      %v875 = vsel %vm523, %v871, 0
      %v878 = vsel %vm523, %v873, 0
      %880 = vmatprep.subr.bf16.mxu0 0
      %881 = vmatpush1.bf16.xpose.msra.mxu0 %v878
      %882 = vmatprep.subr.bf16.mxu0 0
      %883 = vmatpush1.bf16.xpose.msra.mxu0 0
      %884 = vmatprep.subr.bf16.mxu0 0
      %885 = vmatpush1.bf16.xpose.msra.mxu0 0
      %886 = vmatprep.subr.bf16.mxu0 0
      %887 = vmatpush1.bf16.xpose.msra.mxu0 0
      %888 = vmatprep.subr.bf16.mxu0 0
      %889 = vmatpush1.bf16.xpose.msra.mxu0 0
      %890 = vmatprep.subr.bf16.mxu0 0
      %891 = vmatpush1.bf16.xpose.msra.mxu0 0
      %892 = vmatprep.subr.bf16.mxu0 0
      %893 = vmatpush1.bf16.xpose.msra.mxu0 0
      %894 = vmatprep.subr.bf16.mxu0 0
      %895 = vmatpush1.bf16.xpose.msra.mxu0 0
      %896 = vmatprep.subr.bf16.mxu0 0
      %897 = vmatpush1.bf16.xpose.msra.mxu0 0
      %898 = vmatprep.subr.bf16.mxu0 0
      %899 = vmatpush1.bf16.xpose.msra.mxu0 0
      %900 = vmatprep.subr.bf16.mxu0 0
      %901 = vmatpush1.bf16.xpose.msra.mxu0 0
      %902 = vmatprep.subr.bf16.mxu0 0
      %903 = vmatpush1.bf16.xpose.msra.mxu0 0
      %904 = vmatprep.subr.bf16.mxu0 0
      %905 = vmatpush1.bf16.xpose.msra.mxu0 0
      %906 = vmatprep.subr.bf16.mxu0 0
      %907 = vmatpush1.bf16.xpose.msra.mxu0 0
      %908 = vmatprep.subr.bf16.mxu0 0
      %909 = vmatpush1.bf16.xpose.msra.mxu0 0
      %910 = vmatprep.subr.bf16.mxu0 0
      %911 = vmatpush1.bf16.xpose.msra.mxu0 0
      %912 = vmatprep.mubr.bf16.mxu0 0
      %913 = vmatmul.mubr.bf16.gmra.mrb[0].mxu0 %v875
      %v914 = vpop.f32.mrb[0].mxu0
      %v915 = vadd.f32 %v869, %v914
      %v916 = vpop.f32.mrb[0].mxu0
      %v917 = vpop.f32.mrb[0].mxu0
      %v918 = vpop.f32.mrb[0].mxu0
      %919 = vdwg.mxu0
      %v920 = vadd.f32 %v915, %v574
      %v921 = vsel %vm523, %v920, -inf
      %922 = vmax.xlane.f32.xlu0 %v921
      %v923 = vpop.xlane.xlu0 %922
      %v924 = vsub.f32 %v920, %v923
      %v925 = vmul.f32 %v924, 1.442695
      %v926 = vpow.pop %v925
      %v927 = vsel %vm523, %v926, 0.0
      %928 = vadd.xlane.f32.xlu0 %v927
      %v929 = vpop.xlane.xlu0 %928
      %v930 = vrcp.pop %v929
      %v931 = vmul.f32 %v926, %v930
      %v932 = vpack.c.bf16 %v931, %v931
      %933 = vrot.lane.b32.xlu0 %v517, 40
      %v934 = vpop.permute.xlu0 %933
      %v936 = vsel %vm523, %v932, 0
      %v939 = vsel %vm594, %v934, 0
      %941 = vmatprep.subr.bf16.mxu0 0
      %942 = vmatpush1.bf16.msra.mxu0 %v939
      %943 = vmatprep.subr.bf16.mxu0 0
      %944 = vmatpush1.bf16.msra.mxu0 0
      %945 = vmatprep.subr.bf16.mxu0 0
      %946 = vmatpush1.bf16.msra.mxu0 0
      %947 = vmatprep.subr.bf16.mxu0 0
      %948 = vmatpush1.bf16.msra.mxu0 0
      %949 = vmatprep.subr.bf16.mxu0 0
      %950 = vmatpush1.bf16.msra.mxu0 0
      %951 = vmatprep.subr.bf16.mxu0 0
      %952 = vmatpush1.bf16.msra.mxu0 0
      %953 = vmatprep.subr.bf16.mxu0 0
      %954 = vmatpush1.bf16.msra.mxu0 0
      %955 = vmatprep.subr.bf16.mxu0 0
      %956 = vmatpush1.bf16.msra.mxu0 0
      %957 = vmatprep.subr.bf16.mxu0 0
      %958 = vmatpush1.bf16.msra.mxu0 0
      %959 = vmatprep.subr.bf16.mxu0 0
      %960 = vmatpush1.bf16.msra.mxu0 0
      %961 = vmatprep.subr.bf16.mxu0 0
      %962 = vmatpush1.bf16.msra.mxu0 0
      %963 = vmatprep.subr.bf16.mxu0 0
      %964 = vmatpush1.bf16.msra.mxu0 0
      %965 = vmatprep.subr.bf16.mxu0 0
      %966 = vmatpush1.bf16.msra.mxu0 0
      %967 = vmatprep.subr.bf16.mxu0 0
      %968 = vmatpush1.bf16.msra.mxu0 0
      %969 = vmatprep.subr.bf16.mxu0 0
      %970 = vmatpush1.bf16.msra.mxu0 0
      %971 = vmatprep.subr.bf16.mxu0 0
      %972 = vmatpush1.bf16.msra.mxu0 0
      %973 = vmatprep.mubr.bf16.mxu0 0
      %974 = vmatmul.mubr.bf16.gmra.mrb[0].mxu0 %v936
      %v975 = vpop.f32.mrb[0].mxu0
      %v976 = vadd.f32 0.0, %v975
      %v977 = vpop.f32.mrb[0].mxu0
      %v978 = vpop.f32.mrb[0].mxu0
      %v979 = vpop.f32.mrb[0].mxu0
      %980 = vdwg.mxu0
      %v981 = vxor.u32 %v507, 2147483648
      %v982 = vmul.f32 %v981, 1.442695
      %v983 = vpow.pop %v982
      %v984 = vadd.f32 %v983, 1.0
      %v985 = vrcp.pop %v984
      %v986 = vmul.f32 1.0, %v985
      %988 = vrot.lane.b32.xlu0 %v748, 8
      %v989 = vpop.permute.xlu0 %988
      %992 = vrot.lane.b32.xlu0 %v862, 16
      %v993 = vpop.permute.xlu0 %992
      %996 = vrot.lane.b32.xlu0 %v976, 24
      %v997 = vpop.permute.xlu0 %996
      %v999 = vsel %vm523, %v633, %v989
      %vm1000 = vcmask 130048
      %v1001 = vsel %vm1000, %v999, %v993
      %vm1002 = vcmask 195584
      %v1003 = vsel %vm1002, %v1001, %v997
      %1005 = vrot.lane.b32.xlu0 %v986, 32
      %v1006 = vpop.permute.xlu0 %1005
      %v1008 = vmul.f32 %v1003, %v1006
      %v1009 = vpack.c.bf16 %v1008, %v1008
      %v1010 = vld [vmem:[%s7] sm:$0xf]
      %v1011 = vld [vmem:[%s7 + $0x4] sm:$0xf]
      %v1012 = vld [vmem:[%s7 + $0x8] sm:$0xf]
      %v1013 = vld [vmem:[%s7 + $0xc] sm:$0xf]
      %v1014 = vld [vmem:[%s8] sm:$0x1]
      %v1016 = vlaneseq
      %v1017 = vshrl.u32 %v1016, 7
      %v1018 = vsub.s32 0, %v1017
      %v1019 = vrot.slane %v1014, %v1018
      %v1025 = vunpack.c.l.b16 %v1010
      %v1026 = vunpack.c.l.b16 %v1011
      %v1027 = vunpack.c.l.b16 %v1012
      %v1028 = vunpack.c.l.b16 %v1013
      %v1029 = vpack.c.b16 %v1026, %v1025
      %v1030 = vpack.c.b16 %v1028, %v1027
      %v1034 = vsel %vm416, %v1009, 0
      %1036 = vmatprep.subr.bf16.mxu0 0
      %1037 = vmatpush1.bf16.msra.mxu0 %v1029
      %1038 = vmatprep.subr.bf16.mxu0 0
      %1039 = vmatpush1.bf16.msra.mxu0 %v1030
      %1040 = vmatprep.subr.bf16.mxu0 0
      %1041 = vmatpush1.bf16.msra.mxu0 0
      %1042 = vmatprep.subr.bf16.mxu0 0
      %1043 = vmatpush1.bf16.msra.mxu0 0
      %1044 = vmatprep.subr.bf16.mxu0 0
      %1045 = vmatpush1.bf16.msra.mxu0 0
      %1046 = vmatprep.subr.bf16.mxu0 0
      %1047 = vmatpush1.bf16.msra.mxu0 0
      %1048 = vmatprep.subr.bf16.mxu0 0
      %1049 = vmatpush1.bf16.msra.mxu0 0
      %1050 = vmatprep.subr.bf16.mxu0 0
      %1051 = vmatpush1.bf16.msra.mxu0 0
      %1052 = vmatprep.subr.bf16.mxu0 0
      %1053 = vmatpush1.bf16.msra.mxu0 0
      %1054 = vmatprep.subr.bf16.mxu0 0
      %1055 = vmatpush1.bf16.msra.mxu0 0
      %1056 = vmatprep.subr.bf16.mxu0 0
      %1057 = vmatpush1.bf16.msra.mxu0 0
      %1058 = vmatprep.subr.bf16.mxu0 0
      %1059 = vmatpush1.bf16.msra.mxu0 0
      %1060 = vmatprep.subr.bf16.mxu0 0
      %1061 = vmatpush1.bf16.msra.mxu0 0
      %1062 = vmatprep.subr.bf16.mxu0 0
      %1063 = vmatpush1.bf16.msra.mxu0 0
      %1064 = vmatprep.subr.bf16.mxu0 0
      %1065 = vmatpush1.bf16.msra.mxu0 0
      %1066 = vmatprep.subr.bf16.mxu0 0
      %1067 = vmatpush1.bf16.msra.mxu0 0
      %1068 = vmatprep.mubr.bf16.mxu0 0
      %1069 = vmatmul.mubr.bf16.gmra.mrb[0].mxu0 %v1034
      %v1070 = vpop.f32.mrb[0].mxu0
      %v1071 = vadd.f32 %v1019, %v1070
      %v1072 = vpop.f32.mrb[0].mxu0
      %v1073 = vpop.f32.mrb[0].mxu0
      %v1074 = vpop.f32.mrb[0].mxu0
      %1075 = vdwg.mxu0
      %1076 = vst.msk [vmem:[%s411] sm:$0xff] %vm416, %v1071
      %p1077 = scmp.lt.s32.totalorder %s24, 0
      %s1078 = scalar_select %p1077, %s24, 0
      %p1079 = scmp.lt.s32.totalorder %s25, 3
      %s1080 = scalar_select %p1079, %s25, 3
      %s1081 = smul.addr %s1078, 4
      %s1082 = sadd.s32 %s1080, %s1081
      %s1083 = smul.addr %s1082, 8
      %s1084 = scalar_lea.vmem %s9, %s1083
      // Predicated region
      $region57: #{evoformer_stack_forward.38} parent=55 // pred_check
        %p1085 = pneg %p260
      $region58: #{evoformer_stack_forward.38} parent=55 // pred_check_branch
        %1087 = sbr.rel (%p1085) target = $region60
      $region59: #{evoformer_stack_forward.38} parent=55 // pred_region
        _
      $region60: #{evoformer_stack_forward.38} parent=55 // pred_fallthru
        _
    $region56: #{evoformer_stack_forward.38} parent=5 // pred_fallthru
      _
    %p1088 = scmp.le.s32.totalorder 2, %s15
    // Predicated region
    $region61: #{evoformer_stack_forward.38} parent=5 // pred_check
      %p1089 = pneg %p1088
    $region62: #{evoformer_stack_forward.38} parent=5 // pred_check_branch
      %1091 = sbr.rel (%p1089) target = $region64
    $region63: #{evoformer_stack_forward.38} parent=5 // pred_region
      %s1092 = ssub.s32 %s15, 2
      // Predicated region
      $region65: #{evoformer_stack_forward.38} parent=63 // pred_check
        %p1093 = pneg %p266
      $region66: #{evoformer_stack_forward.38} parent=63 // pred_check_branch
        %1095 = sbr.rel (%p1093) target = $region68
      $region67: #{evoformer_stack_forward.38} parent=63 // pred_region
        %p1096 = scmp.lt.s32.totalorder %s26, 0
        %s1097 = scalar_select %p1096, %s26, 0
        %p1098 = scmp.lt.s32.totalorder %s27, 3
        %s1099 = scalar_select %p1098, %s27, 3
        %s1100 = smul.addr %s1097, 4
        %s1101 = sadd.s32 %s1099, %s1100
        %s1102 = smul.addr %s1101, 8
        %s1103 = scalar_lea.vmem %s9, %s1102
      $region68: #{evoformer_stack_forward.38} parent=63 // pred_fallthru
        _
    $region64: #{evoformer_stack_forward.38} parent=5 // pred_fallthru
      _
  $region6: #{evoformer_stack_forward.38} parent=0 // loop_footer
    %s19 = sadd.s32 1, %s15
  $region7: #{evoformer_stack_forward.38} parent=0 // loop_footer_branch
    %14 = sbr.rel target = $region3
  $region8: #{evoformer_stack_forward.38} parent=0 // loop_exit
    _

// kernel: evoformer_stack_forward.39
$region0: #{evoformer_stack_forward.39}
  #allocation0 [shape = 'u32[]', space=smem, size = 0x4, offset = 0x4, fixed_abs, tag = 'smem constant byte address 0x4 - core index']
  #allocation1 [shape = 'u32[144,128]{1,0:T(1,128)}', space=vmem, size = 0x12000, scoped, tag = 'internal scratch']
  %s0 = inlined_call_operand.vmem [shape: f32[1,8,4,32], index: 0, kind: input, shape index: {}]
  %s1 = inlined_call_operand.vmem [shape: f32[1,8,1,4], index: 1, kind: input, shape index: {}]
  %s2 = inlined_call_operand.vmem [shape: f32[1,32], index: 2, kind: input, shape index: {}]
  %s3 = inlined_call_operand.vmem [shape: f32[1,32], index: 3, kind: input, shape index: {}]
  %s4 = inlined_call_operand.vmem [shape: bf16[32,128], index: 4, kind: input, shape index: {}]
  %s5 = inlined_call_operand.vmem [shape: f32[1,128], index: 5, kind: input, shape index: {}]
  %s6 = inlined_call_operand.vmem [shape: bf16[32,32], index: 6, kind: input, shape index: {}]
  %s7 = inlined_call_operand.vmem [shape: f32[1,32], index: 7, kind: input, shape index: {}]
  %s8 = inlined_call_operand.vmem [shape: f32[1,8,4,32], index: 8, kind: output, shape index: {}]
  %s9 = sld [smem:[#allocation0]]
  $region65: #{evoformer_stack_forward.39} parent=0
    _
  %s11 = ssub.s32 1, %s9
  %s12 = scalar_select 0, %s11, %s9
  loop: start=0, step=1, limit=10
  $region2: #{evoformer_stack_forward.39} parent=0 // loop_pre_header
    _
  $region3: #{evoformer_stack_forward.39} parent=0 // loop_header
    %s14 = sphi 0, %s18
    %p15 = scmp.ge.s32.totalorder %s14, 10
    %s21 = sphi 0, %s33
    %s22 = sphi 0, %s29
    %s23 = sphi 0, %s21
    %s24 = sphi 0, %s22
    %s25 = sphi 0, %s23
    %s26 = sphi 0, %s24
    %s38 = sphi 0, %s40
    %s41 = sphi 0, %s38
    %s42 = sphi 0, %s41
    %s58 = sphi 0, %s42
    %s66 = sphi 0, %s68
    %s69 = sphi 0, %s66
    %s70 = sphi 0, %s69
    %s86 = sphi 0, %s70
    %s90 = sphi 0, %s90
    %s92 = sphi 0, %s90
    %s93 = sphi 0, %s92
    %s107 = sphi 0, %s93
    %s111 = sphi 0, %s111
    %s113 = sphi 0, %s111
    %s114 = sphi 0, %s113
    %s128 = sphi 0, %s114
    %s132 = sphi 0, %s132
    %s134 = sphi 0, %s132
    %s135 = sphi 0, %s134
    %s149 = sphi 0, %s135
    %s153 = sphi 0, %s153
    %s155 = sphi 0, %s153
    %s156 = sphi 0, %s155
    %s170 = sphi 0, %s156
    %s174 = sphi 0, %s174
    %s176 = sphi 0, %s174
    %s177 = sphi 0, %s176
    %s191 = sphi 0, %s177
    %s195 = sphi 0, %s195
    %s197 = sphi 0, %s195
    %s198 = sphi 0, %s197
    %s212 = sphi 0, %s198
    %s220 = sphi 0, %s222
    %s223 = sphi 0, %s220
    %s224 = sphi 0, %s223
    %s240 = sphi 0, %s224
  $region4: #{evoformer_stack_forward.39} parent=0 // loop_header_branch
    %17 = sbr.rel (%p15) target = $region8
  $region5: #{evoformer_stack_forward.39} parent=0 // loop_body
    %s19 = ssub.s32 %s14, 1
    %s20 = ssub.s32 %s14, 2
    %s27 = sadd.s32 1, %s22
    %p28 = scmp.ge.s32.totalorder %s27, 8
    %s29 = scalar_select %p28, 0, %s27
    %s30 = sadd.s32 1, %s21
    %s31 = scalar_select %p28, %s30, %s21
    %p32 = scmp.ge.s32.totalorder %s31, 1
    %s33 = scalar_select %p32, 0, %s31
    %s34 = ssub.s32 %s21, %s33
    %s35 = ssub.s32 %s22, %s29
    %s36 = sor.u32 %s34, %s35
    %p37 = scmp.eq.s32.totalorder %s36, 0
    %s39 = sadd.s32 %s38, 1
    %s40 = scalar_select %p37, %s38, %s39
    %p43 = pneg %p37
    %p44 = scmp.eq.s32.totalorder %s14, 7
    %p45 = por %p43, %p44
    %p46 = scmp.ne.s32.totalorder %s38, %s41
    %p47 = scmp.eq.s32.totalorder %s14, 0
    %p48 = por %p46, %p47
    %p49 = scmp.ne.s32.totalorder %s38, %s41
    %p50 = scmp.eq.s32.totalorder %s19, 7
    %p51 = por %p49, %p50
    %p52 = scmp.ne.s32.totalorder %s41, %s42
    %p53 = scmp.eq.s32.totalorder %s19, 0
    %p54 = por %p52, %p53
    %p55 = scmp.ne.s32.totalorder %s41, %s42
    %p56 = scmp.eq.s32.totalorder %s20, 7
    %p57 = por %p55, %p56
    %p59 = scmp.ne.s32.totalorder %s42, %s58
    %p60 = scmp.eq.s32.totalorder %s20, 0
    %p61 = por %p59, %p60
    %s62 = ssub.s32 %s21, %s33
    %s63 = ssub.s32 %s22, %s29
    %s64 = sor.u32 %s62, %s63
    %p65 = scmp.eq.s32.totalorder %s64, 0
    %s67 = sadd.s32 %s66, 1
    %s68 = scalar_select %p65, %s66, %s67
    %p71 = pneg %p65
    %p72 = scmp.eq.s32.totalorder %s14, 7
    %p73 = por %p71, %p72
    %p74 = scmp.ne.s32.totalorder %s66, %s69
    %p75 = scmp.eq.s32.totalorder %s14, 0
    %p76 = por %p74, %p75
    %p77 = scmp.ne.s32.totalorder %s66, %s69
    %p78 = scmp.eq.s32.totalorder %s19, 7
    %p79 = por %p77, %p78
    %p80 = scmp.ne.s32.totalorder %s69, %s70
    %p81 = scmp.eq.s32.totalorder %s19, 0
    %p82 = por %p80, %p81
    %p83 = scmp.ne.s32.totalorder %s69, %s70
    %p84 = scmp.eq.s32.totalorder %s20, 7
    %p85 = por %p83, %p84
    %p87 = scmp.ne.s32.totalorder %s70, %s86
    %p88 = scmp.eq.s32.totalorder %s20, 0
    %p89 = por %p87, %p88
    %s91 = sadd.s32 %s90, 1
    %p94 = scmp.eq.s32.totalorder %s14, 7
    %p95 = scmp.ne.s32.totalorder %s90, %s92
    %p96 = scmp.eq.s32.totalorder %s14, 0
    %p97 = por %p95, %p96
    %p98 = scmp.ne.s32.totalorder %s90, %s92
    %p99 = scmp.eq.s32.totalorder %s19, 7
    %p100 = por %p98, %p99
    %p101 = scmp.ne.s32.totalorder %s92, %s93
    %p102 = scmp.eq.s32.totalorder %s19, 0
    %p103 = por %p101, %p102
    %p104 = scmp.ne.s32.totalorder %s92, %s93
    %p105 = scmp.eq.s32.totalorder %s20, 7
    %p106 = por %p104, %p105
    %p108 = scmp.ne.s32.totalorder %s93, %s107
    %p109 = scmp.eq.s32.totalorder %s20, 0
    %p110 = por %p108, %p109
    %s112 = sadd.s32 %s111, 1
    %p115 = scmp.eq.s32.totalorder %s14, 7
    %p116 = scmp.ne.s32.totalorder %s111, %s113
    %p117 = scmp.eq.s32.totalorder %s14, 0
    %p118 = por %p116, %p117
    %p119 = scmp.ne.s32.totalorder %s111, %s113
    %p120 = scmp.eq.s32.totalorder %s19, 7
    %p121 = por %p119, %p120
    %p122 = scmp.ne.s32.totalorder %s113, %s114
    %p123 = scmp.eq.s32.totalorder %s19, 0
    %p124 = por %p122, %p123
    %p125 = scmp.ne.s32.totalorder %s113, %s114
    %p126 = scmp.eq.s32.totalorder %s20, 7
    %p127 = por %p125, %p126
    %p129 = scmp.ne.s32.totalorder %s114, %s128
    %p130 = scmp.eq.s32.totalorder %s20, 0
    %p131 = por %p129, %p130
    %s133 = sadd.s32 %s132, 1
    %p136 = scmp.eq.s32.totalorder %s14, 7
    %p137 = scmp.ne.s32.totalorder %s132, %s134
    %p138 = scmp.eq.s32.totalorder %s14, 0
    %p139 = por %p137, %p138
    %p140 = scmp.ne.s32.totalorder %s132, %s134
    %p141 = scmp.eq.s32.totalorder %s19, 7
    %p142 = por %p140, %p141
    %p143 = scmp.ne.s32.totalorder %s134, %s135
    %p144 = scmp.eq.s32.totalorder %s19, 0
    %p145 = por %p143, %p144
    %p146 = scmp.ne.s32.totalorder %s134, %s135
    %p147 = scmp.eq.s32.totalorder %s20, 7
    %p148 = por %p146, %p147
    %p150 = scmp.ne.s32.totalorder %s135, %s149
    %p151 = scmp.eq.s32.totalorder %s20, 0
    %p152 = por %p150, %p151
    %s154 = sadd.s32 %s153, 1
    %p157 = scmp.eq.s32.totalorder %s14, 7
    %p158 = scmp.ne.s32.totalorder %s153, %s155
    %p159 = scmp.eq.s32.totalorder %s14, 0
    %p160 = por %p158, %p159
    %p161 = scmp.ne.s32.totalorder %s153, %s155
    %p162 = scmp.eq.s32.totalorder %s19, 7
    %p163 = por %p161, %p162
    %p164 = scmp.ne.s32.totalorder %s155, %s156
    %p165 = scmp.eq.s32.totalorder %s19, 0
    %p166 = por %p164, %p165
    %p167 = scmp.ne.s32.totalorder %s155, %s156
    %p168 = scmp.eq.s32.totalorder %s20, 7
    %p169 = por %p167, %p168
    %p171 = scmp.ne.s32.totalorder %s156, %s170
    %p172 = scmp.eq.s32.totalorder %s20, 0
    %p173 = por %p171, %p172
    %s175 = sadd.s32 %s174, 1
    %p178 = scmp.eq.s32.totalorder %s14, 7
    %p179 = scmp.ne.s32.totalorder %s174, %s176
    %p180 = scmp.eq.s32.totalorder %s14, 0
    %p181 = por %p179, %p180
    %p182 = scmp.ne.s32.totalorder %s174, %s176
    %p183 = scmp.eq.s32.totalorder %s19, 7
    %p184 = por %p182, %p183
    %p185 = scmp.ne.s32.totalorder %s176, %s177
    %p186 = scmp.eq.s32.totalorder %s19, 0
    %p187 = por %p185, %p186
    %p188 = scmp.ne.s32.totalorder %s176, %s177
    %p189 = scmp.eq.s32.totalorder %s20, 7
    %p190 = por %p188, %p189
    %p192 = scmp.ne.s32.totalorder %s177, %s191
    %p193 = scmp.eq.s32.totalorder %s20, 0
    %p194 = por %p192, %p193
    %s196 = sadd.s32 %s195, 1
    %p199 = scmp.eq.s32.totalorder %s14, 7
    %p200 = scmp.ne.s32.totalorder %s195, %s197
    %p201 = scmp.eq.s32.totalorder %s14, 0
    %p202 = por %p200, %p201
    %p203 = scmp.ne.s32.totalorder %s195, %s197
    %p204 = scmp.eq.s32.totalorder %s19, 7
    %p205 = por %p203, %p204
    %p206 = scmp.ne.s32.totalorder %s197, %s198
    %p207 = scmp.eq.s32.totalorder %s19, 0
    %p208 = por %p206, %p207
    %p209 = scmp.ne.s32.totalorder %s197, %s198
    %p210 = scmp.eq.s32.totalorder %s20, 7
    %p211 = por %p209, %p210
    %p213 = scmp.ne.s32.totalorder %s198, %s212
    %p214 = scmp.eq.s32.totalorder %s20, 0
    %p215 = por %p213, %p214
    %s216 = ssub.s32 %s21, %s33
    %s217 = ssub.s32 %s22, %s29
    %s218 = sor.u32 %s216, %s217
    %p219 = scmp.eq.s32.totalorder %s218, 0
    %s221 = sadd.s32 %s220, 1
    %s222 = scalar_select %p219, %s220, %s221
    %p225 = pneg %p219
    %p226 = scmp.eq.s32.totalorder %s14, 7
    %p227 = por %p225, %p226
    %p228 = scmp.ne.s32.totalorder %s220, %s223
    %p229 = scmp.eq.s32.totalorder %s14, 0
    %p230 = por %p228, %p229
    %p231 = scmp.ne.s32.totalorder %s220, %s223
    %p232 = scmp.eq.s32.totalorder %s19, 7
    %p233 = por %p231, %p232
    %p234 = scmp.ne.s32.totalorder %s223, %s224
    %p235 = scmp.eq.s32.totalorder %s19, 0
    %p236 = por %p234, %p235
    %p237 = scmp.ne.s32.totalorder %s223, %s224
    %p238 = scmp.eq.s32.totalorder %s20, 7
    %p239 = por %p237, %p238
    %p241 = scmp.ne.s32.totalorder %s224, %s240
    %p242 = scmp.eq.s32.totalorder %s20, 0
    %p243 = por %p241, %p242
    %p244 = scmp.le.s32.totalorder 1, %s14
    %p245 = scmp.lt.s32.totalorder %s14, 9
    %p246 = pnand %p244, %p245
    %p247 = pneg %p246
    // Predicated region
    $region9: #{evoformer_stack_forward.39} parent=5 // pred_check
      _
    $region10: #{evoformer_stack_forward.39} parent=5 // pred_check_branch
      %249 = sbr.rel (%p246) target = $region12
    $region11: #{evoformer_stack_forward.39} parent=5 // pred_region
      %s250 = ssub.s32 %s14, 1
      // Predicated region
      $region13: #{evoformer_stack_forward.39} parent=11 // pred_check
        %p251 = pneg %p103
      $region14: #{evoformer_stack_forward.39} parent=11 // pred_check_branch
        %253 = sbr.rel (%p251) target = $region16
      $region15: #{evoformer_stack_forward.39} parent=11 // pred_region
        _
      $region16: #{evoformer_stack_forward.39} parent=11 // pred_fallthru
        _
      // Predicated region
      $region17: #{evoformer_stack_forward.39} parent=11 // pred_check
        %p254 = pneg %p124
      $region18: #{evoformer_stack_forward.39} parent=11 // pred_check_branch
        %256 = sbr.rel (%p254) target = $region20
      $region19: #{evoformer_stack_forward.39} parent=11 // pred_region
        _
      $region20: #{evoformer_stack_forward.39} parent=11 // pred_fallthru
        _
      // Predicated region
      $region21: #{evoformer_stack_forward.39} parent=11 // pred_check
        %p257 = pneg %p145
      $region22: #{evoformer_stack_forward.39} parent=11 // pred_check_branch
        %259 = sbr.rel (%p257) target = $region24
      $region23: #{evoformer_stack_forward.39} parent=11 // pred_region
        _
      $region24: #{evoformer_stack_forward.39} parent=11 // pred_fallthru
        _
      // Predicated region
      $region25: #{evoformer_stack_forward.39} parent=11 // pred_check
        %p260 = pneg %p166
      $region26: #{evoformer_stack_forward.39} parent=11 // pred_check_branch
        %262 = sbr.rel (%p260) target = $region28
      $region27: #{evoformer_stack_forward.39} parent=11 // pred_region
        _
      $region28: #{evoformer_stack_forward.39} parent=11 // pred_fallthru
        _
      // Predicated region
      $region29: #{evoformer_stack_forward.39} parent=11 // pred_check
        %p263 = pneg %p187
      $region30: #{evoformer_stack_forward.39} parent=11 // pred_check_branch
        %265 = sbr.rel (%p263) target = $region32
      $region31: #{evoformer_stack_forward.39} parent=11 // pred_region
        _
      $region32: #{evoformer_stack_forward.39} parent=11 // pred_fallthru
        _
      // Predicated region
      $region33: #{evoformer_stack_forward.39} parent=11 // pred_check
        %p266 = pneg %p208
      $region34: #{evoformer_stack_forward.39} parent=11 // pred_check_branch
        %268 = sbr.rel (%p266) target = $region36
      $region35: #{evoformer_stack_forward.39} parent=11 // pred_region
        _
      $region36: #{evoformer_stack_forward.39} parent=11 // pred_fallthru
        _
    $region12: #{evoformer_stack_forward.39} parent=5 // pred_fallthru
      _
    %p269 = scmp.lt.s32.totalorder %s14, 8
    // Predicated region
    $region37: #{evoformer_stack_forward.39} parent=5 // pred_check
      %p270 = pneg %p269
    $region38: #{evoformer_stack_forward.39} parent=5 // pred_check_branch
      %272 = sbr.rel (%p270) target = $region40
    $region39: #{evoformer_stack_forward.39} parent=5 // pred_region
      // Predicated region
      $region41: #{evoformer_stack_forward.39} parent=39 // pred_check
        %p273 = pneg %p48
      $region42: #{evoformer_stack_forward.39} parent=39 // pred_check_branch
        %275 = sbr.rel (%p273) target = $region44
      $region43: #{evoformer_stack_forward.39} parent=39 // pred_region
        %p276 = scmp.lt.s32.totalorder %s21, 0
        %s277 = scalar_select %p276, %s21, 0
        %p278 = scmp.lt.s32.totalorder %s22, 7
        %s279 = scalar_select %p278, %s22, 7
        %s280 = smul.addr %s277, 8
        %s281 = sadd.s32 %s279, %s280
        %s282 = smul.addr %s281, 4
        %s283 = scalar_lea.vmem %s0, %s282
      $region44: #{evoformer_stack_forward.39} parent=39 // pred_fallthru
        _
      // Predicated region
      $region45: #{evoformer_stack_forward.39} parent=39 // pred_check
        %p284 = pneg %p76
      $region46: #{evoformer_stack_forward.39} parent=39 // pred_check_branch
        %286 = sbr.rel (%p284) target = $region48
      $region47: #{evoformer_stack_forward.39} parent=39 // pred_region
        %p287 = scmp.lt.s32.totalorder %s21, 0
        %s288 = scalar_select %p287, %s21, 0
        %p289 = scmp.lt.s32.totalorder %s22, 7
        %s290 = scalar_select %p289, %s22, 7
        %s291 = smul.addr %s288, 8
        %s292 = sadd.s32 %s290, %s291
        %s293 = scalar_lea.vmem %s1, %s292
      $region48: #{evoformer_stack_forward.39} parent=39 // pred_fallthru
        _
    $region40: #{evoformer_stack_forward.39} parent=5 // pred_fallthru
      _
    %p294 = scmp.le.s32.totalorder 1, %s14
    %p295 = scmp.lt.s32.totalorder %s14, 9
    %p296 = pnand %p294, %p295
    %p297 = pneg %p296
    // Predicated region
    $region49: #{evoformer_stack_forward.39} parent=5 // pred_check
      _
    $region50: #{evoformer_stack_forward.39} parent=5 // pred_check_branch
      %299 = sbr.rel (%p296) target = $region52
    $region51: #{evoformer_stack_forward.39} parent=5 // pred_region
      %s300 = ssub.s32 %s14, 1
      %p301 = scmp.lt.s32.totalorder %s23, 0
      %s302 = scalar_select %p301, %s23, 0
      %p303 = scmp.lt.s32.totalorder %s24, 7
      %s304 = scalar_select %p303, %s24, 7
      %s305 = smul.addr %s302, 8
      %s306 = sadd.s32 %s304, %s305
      %s307 = smul.addr %s306, 4
      %s308 = scalar_lea.vmem %s0, %s307
      %p309 = pneg %p54
      %p310 = pneg %p51
      %p311 = scmp.lt.s32.totalorder %s23, 0
      %s312 = scalar_select %p311, %s23, 0
      %p313 = scmp.lt.s32.totalorder %s24, 7
      %s314 = scalar_select %p313, %s24, 7
      %s315 = smul.addr %s312, 8
      %s316 = sadd.s32 %s314, %s315
      %s317 = scalar_lea.vmem %s1, %s316
      %p318 = pneg %p82
      %p319 = pneg %p79
      %p320 = pneg %p103
      %p321 = pneg %p100
      %p322 = pneg %p124
      %p323 = pneg %p121
      %p324 = pneg %p145
      %p325 = pneg %p142
      %p326 = pneg %p166
      %p327 = pneg %p163
      %p328 = pneg %p187
      %p329 = pneg %p184
      %p330 = pneg %p208
      %p331 = pneg %p205
      %p332 = pneg %p236
      %p333 = pneg %p233
      %p334 = scmp.lt.s32.totalorder %s23, 0
      %s335 = scalar_select %p334, %s23, 0
      %p336 = scmp.lt.s32.totalorder %s24, 7
      %s337 = scalar_select %p336, %s24, 7
      %s338 = smul.addr %s335, 8
      %s339 = sadd.s32 %s337, %s338
      %s340 = smul.addr %s339, 4
      %s341 = scalar_lea.vmem %s8, %s340
      %p342 = scmp.lt.s32.totalorder %s23, 0
      %s343 = scalar_select %p342, %s23, 0
      %p344 = scmp.lt.s32.totalorder %s24, 7
      %s345 = scalar_select %p344, %s24, 7
      %s346 = smul.addr %s343, 8
      %s347 = sadd.s32 %s345, %s346
      %s348 = smul.addr %s347, 4
      %s349 = scalar_lea.vmem %s0, %s348
      %p350 = scmp.lt.s32.totalorder %s23, 0
      %s351 = scalar_select %p350, %s23, 0
      %p352 = scmp.lt.s32.totalorder %s24, 7
      %s353 = scalar_select %p352, %s24, 7
      %s354 = smul.addr %s351, 8
      %s355 = sadd.s32 %s353, %s354
      %s356 = scalar_lea.vmem %s1, %s355
      %p357 = scmp.lt.s32.totalorder %s23, 0
      %s358 = scalar_select %p357, %s23, 0
      %p359 = scmp.lt.s32.totalorder %s24, 7
      %s360 = scalar_select %p359, %s24, 7
      %s361 = smul.addr %s358, 8
      %s362 = sadd.s32 %s360, %s361
      %s363 = smul.addr %s362, 4
      %s364 = scalar_lea.vmem %s8, %s363
      %v366 = vld [vmem:[%s349] sm:$0xf]
      %v367 = vld [vmem:[%s2] sm:$0x1]
      %v368 = vld [vmem:[%s3] sm:$0x1]
      %vm369 = vcmask 257024
      %v370 = vsel %vm369, %v366, 0.0
      %371 = vadd.xlane.f32.xlu0 %v370
      %v372 = vpop.xlane.xlu0 %371
      %v373 = vrcp.pop 32.0
      %v374 = vmul.f32 %v372, %v373
      %v375 = vsub.f32 %v366, %v374
      %v376 = vmul.f32 %v375, %v375
      %v377 = vsel %vm369, %v376, 0.0
      %378 = vadd.xlane.f32.xlu0 %v377
      %v379 = vpop.xlane.xlu0 %378
      %v380 = vmul.f32 %v379, %v373
      %v381 = vadd.f32 %v380, 1e-05
      %v382 = vrsqrt.pop %v381
      %v383 = vmul.f32 %v375, %v382
      %v385 = vlaneseq
      %v386 = vshrl.u32 %v385, 7
      %v387 = vsub.s32 0, %v386
      %v388 = vrot.slane %v367, %v387
      %v390 = vmul.f32 %v383, %v388
      %v392 = vlaneseq
      %v393 = vshrl.u32 %v392, 7
      %v394 = vsub.s32 0, %v393
      %v395 = vrot.slane %v368, %v394
      %v397 = vadd.f32 %v390, %v395
      %v398 = vpack.c.bf16 %v397, %v397
      %v399 = vld [vmem:[%s4] sm:$0xf]
      %v400 = vld [vmem:[%s4 + $0x4] sm:$0xf]
      %v401 = vld [vmem:[%s4 + $0x8] sm:$0xf]
      %v402 = vld [vmem:[%s4 + $0xc] sm:$0xf]
      %v403 = vld [vmem:[%s5] sm:$0x1]
      %v405 = vlaneseq
      %v406 = vshrl.u32 %v405, 7
      %v407 = vsub.s32 0, %v406
      %v408 = vrot.slane %v403, %v407
      %v414 = vunpack.c.l.b16 %v399
      %v415 = vunpack.c.l.b16 %v400
      %v416 = vunpack.c.l.b16 %v401
      %v417 = vunpack.c.l.b16 %v402
      %v418 = vpack.c.b16 %v415, %v414
      %v419 = vpack.c.b16 %v417, %v416
      %vm422 = vcmask 261120
      %v424 = vsel %vm422, %v398, 0
      %426 = vmatprep.subr.bf16.mxu0 0
      %427 = vmatpush1.bf16.msra.mxu0 %v418
      %428 = vmatprep.subr.bf16.mxu0 0
      %429 = vmatpush1.bf16.msra.mxu0 %v419
      %430 = vmatprep.subr.bf16.mxu0 0
      %431 = vmatpush1.bf16.msra.mxu0 0
      %432 = vmatprep.subr.bf16.mxu0 0
      %433 = vmatpush1.bf16.msra.mxu0 0
      %434 = vmatprep.subr.bf16.mxu0 0
      %435 = vmatpush1.bf16.msra.mxu0 0
      %436 = vmatprep.subr.bf16.mxu0 0
      %437 = vmatpush1.bf16.msra.mxu0 0
      %438 = vmatprep.subr.bf16.mxu0 0
      %439 = vmatpush1.bf16.msra.mxu0 0
      %440 = vmatprep.subr.bf16.mxu0 0
      %441 = vmatpush1.bf16.msra.mxu0 0
      %442 = vmatprep.subr.bf16.mxu0 0
      %443 = vmatpush1.bf16.msra.mxu0 0
      %444 = vmatprep.subr.bf16.mxu0 0
      %445 = vmatpush1.bf16.msra.mxu0 0
      %446 = vmatprep.subr.bf16.mxu0 0
      %447 = vmatpush1.bf16.msra.mxu0 0
      %448 = vmatprep.subr.bf16.mxu0 0
      %449 = vmatpush1.bf16.msra.mxu0 0
      %450 = vmatprep.subr.bf16.mxu0 0
      %451 = vmatpush1.bf16.msra.mxu0 0
      %452 = vmatprep.subr.bf16.mxu0 0
      %453 = vmatpush1.bf16.msra.mxu0 0
      %454 = vmatprep.subr.bf16.mxu0 0
      %455 = vmatpush1.bf16.msra.mxu0 0
      %456 = vmatprep.subr.bf16.mxu0 0
      %457 = vmatpush1.bf16.msra.mxu0 0
      %458 = vmatprep.mubr.bf16.mxu0 0
      %459 = vmatmul.mubr.bf16.gmra.mrb[0].mxu0 %v424
      %v460 = vpop.f32.mrb[0].mxu0
      %v461 = vadd.f32 %v408, %v460
      %v462 = vpop.f32.mrb[0].mxu0
      %v463 = vpop.f32.mrb[0].mxu0
      %v464 = vpop.f32.mrb[0].mxu0
      %465 = vdwg.mxu0
      %v466 = vld [vmem:[%s356] sm:$0x1]
      %v467 = vsub.f32 %v466, 1.0
      %v468 = vmul.f32 %v467, 1e+09
      %v469 = vmul.f32 %v461, 0.35355338
      %v470 = vpack.c.bf16 %v469, %v469
      %v471 = vpack.c.bf16 %v461, %v461
      %v473 = vlaneseq
      %v474 = vshrl.u32 %v473, 7
      %v475 = vsub.s32 0, %v474
      %v476 = vrot.slane %v468, %v475
      %479 = vrot.lane.b32.xlu0 %v471, 96
      %v480 = vpop.permute.xlu0 %479
      %vm481 = vcmask 64512
      %v483 = vsel %vm481, %v470, 0
      %v486 = vsel %vm481, %v480, 0
      %488 = vmatprep.subr.bf16.mxu0 0
      %489 = vmatpush1.bf16.xpose.msra.mxu0 %v486
      %490 = vmatprep.subr.bf16.mxu0 0
      %491 = vmatpush1.bf16.xpose.msra.mxu0 0
      %492 = vmatprep.subr.bf16.mxu0 0
      %493 = vmatpush1.bf16.xpose.msra.mxu0 0
      %494 = vmatprep.subr.bf16.mxu0 0
      %495 = vmatpush1.bf16.xpose.msra.mxu0 0
      %496 = vmatprep.subr.bf16.mxu0 0
      %497 = vmatpush1.bf16.xpose.msra.mxu0 0
      %498 = vmatprep.subr.bf16.mxu0 0
      %499 = vmatpush1.bf16.xpose.msra.mxu0 0
      %500 = vmatprep.subr.bf16.mxu0 0
      %501 = vmatpush1.bf16.xpose.msra.mxu0 0
      %502 = vmatprep.subr.bf16.mxu0 0
      %503 = vmatpush1.bf16.xpose.msra.mxu0 0
      %504 = vmatprep.subr.bf16.mxu0 0
      %505 = vmatpush1.bf16.xpose.msra.mxu0 0
      %506 = vmatprep.subr.bf16.mxu0 0
      %507 = vmatpush1.bf16.xpose.msra.mxu0 0
      %508 = vmatprep.subr.bf16.mxu0 0
      %509 = vmatpush1.bf16.xpose.msra.mxu0 0
      %510 = vmatprep.subr.bf16.mxu0 0
      %511 = vmatpush1.bf16.xpose.msra.mxu0 0
      %512 = vmatprep.subr.bf16.mxu0 0
      %513 = vmatpush1.bf16.xpose.msra.mxu0 0
      %514 = vmatprep.subr.bf16.mxu0 0
      %515 = vmatpush1.bf16.xpose.msra.mxu0 0
      %516 = vmatprep.subr.bf16.mxu0 0
      %517 = vmatpush1.bf16.xpose.msra.mxu0 0
      %518 = vmatprep.subr.bf16.mxu0 0
      %519 = vmatpush1.bf16.xpose.msra.mxu0 0
      %520 = vmatprep.mubr.bf16.mxu0 0
      %521 = vmatmul.mubr.bf16.gmra.mrb[0].mxu0 %v483
      %v522 = vpop.f32.mrb[0].mxu0
      %v523 = vadd.f32 %v476, %v522
      %v524 = vpop.f32.mrb[0].mxu0
      %v525 = vpop.f32.mrb[0].mxu0
      %v526 = vpop.f32.mrb[0].mxu0
      %527 = vdwg.mxu0
      %vm528 = vcmask 27648
      %v529 = vsel %vm528, %v523, -inf
      %530 = vmax.xlane.f32.xlu0 %v529
      %v531 = vpop.xlane.xlu0 %530
      %v532 = vsub.f32 %v523, %v531
      %v533 = vmul.f32 %v532, 1.442695
      %v534 = vpow.pop %v533
      %v535 = vsel %vm528, %v534, 0.0
      %536 = vadd.xlane.f32.xlu0 %v535
      %v537 = vpop.xlane.xlu0 %536
      %v538 = vrcp.pop %v537
      %v539 = vmul.f32 %v534, %v538
      %v540 = vpack.c.bf16 %v539, %v539
      %541 = vrot.lane.b32.xlu0 %v471, 64
      %v542 = vpop.permute.xlu0 %541
      %vm543 = vcmask 31744
      %v545 = vsel %vm543, %v540, 0
      %vm547 = vcmask 1041408
      %v549 = vsel %vm547, %v542, 0
      %551 = vmatprep.subr.bf16.mxu0 0
      %552 = vmatpush1.bf16.msra.mxu0 %v549
      %553 = vmatprep.subr.bf16.mxu0 0
      %554 = vmatpush1.bf16.msra.mxu0 0
      %555 = vmatprep.subr.bf16.mxu0 0
      %556 = vmatpush1.bf16.msra.mxu0 0
      %557 = vmatprep.subr.bf16.mxu0 0
      %558 = vmatpush1.bf16.msra.mxu0 0
      %559 = vmatprep.subr.bf16.mxu0 0
      %560 = vmatpush1.bf16.msra.mxu0 0
      %561 = vmatprep.subr.bf16.mxu0 0
      %562 = vmatpush1.bf16.msra.mxu0 0
      %563 = vmatprep.subr.bf16.mxu0 0
      %564 = vmatpush1.bf16.msra.mxu0 0
      %565 = vmatprep.subr.bf16.mxu0 0
      %566 = vmatpush1.bf16.msra.mxu0 0
      %567 = vmatprep.subr.bf16.mxu0 0
      %568 = vmatpush1.bf16.msra.mxu0 0
      %569 = vmatprep.subr.bf16.mxu0 0
      %570 = vmatpush1.bf16.msra.mxu0 0
      %571 = vmatprep.subr.bf16.mxu0 0
      %572 = vmatpush1.bf16.msra.mxu0 0
      %573 = vmatprep.subr.bf16.mxu0 0
      %574 = vmatpush1.bf16.msra.mxu0 0
      %575 = vmatprep.subr.bf16.mxu0 0
      %576 = vmatpush1.bf16.msra.mxu0 0
      %577 = vmatprep.subr.bf16.mxu0 0
      %578 = vmatpush1.bf16.msra.mxu0 0
      %579 = vmatprep.subr.bf16.mxu0 0
      %580 = vmatpush1.bf16.msra.mxu0 0
      %581 = vmatprep.subr.bf16.mxu0 0
      %582 = vmatpush1.bf16.msra.mxu0 0
      %583 = vmatprep.mubr.bf16.mxu0 0
      %584 = vmatmul.mubr.bf16.gmra.mrb[0].mxu0 %v545
      %v585 = vpop.f32.mrb[0].mxu0
      %v586 = vadd.f32 0.0, %v585
      %v587 = vpop.f32.mrb[0].mxu0
      %v588 = vpop.f32.mrb[0].mxu0
      %v589 = vpop.f32.mrb[0].mxu0
      %590 = vdwg.mxu0
      %592 = vrot.lane.b32.xlu0 %v470, 120
      %v593 = vpop.permute.xlu0 %592
      %594 = vrot.lane.b32.xlu0 %v471, 88
      %v595 = vpop.permute.xlu0 %594
      %v597 = vsel %vm481, %v593, 0
      %v600 = vsel %vm481, %v595, 0
      %602 = vmatprep.subr.bf16.mxu0 0
      %603 = vmatpush1.bf16.xpose.msra.mxu0 %v600
      %604 = vmatprep.subr.bf16.mxu0 0
      %605 = vmatpush1.bf16.xpose.msra.mxu0 0
      %606 = vmatprep.subr.bf16.mxu0 0
      %607 = vmatpush1.bf16.xpose.msra.mxu0 0
      %608 = vmatprep.subr.bf16.mxu0 0
      %609 = vmatpush1.bf16.xpose.msra.mxu0 0
      %610 = vmatprep.subr.bf16.mxu0 0
      %611 = vmatpush1.bf16.xpose.msra.mxu0 0
      %612 = vmatprep.subr.bf16.mxu0 0
      %613 = vmatpush1.bf16.xpose.msra.mxu0 0
      %614 = vmatprep.subr.bf16.mxu0 0
      %615 = vmatpush1.bf16.xpose.msra.mxu0 0
      %616 = vmatprep.subr.bf16.mxu0 0
      %617 = vmatpush1.bf16.xpose.msra.mxu0 0
      %618 = vmatprep.subr.bf16.mxu0 0
      %619 = vmatpush1.bf16.xpose.msra.mxu0 0
      %620 = vmatprep.subr.bf16.mxu0 0
      %621 = vmatpush1.bf16.xpose.msra.mxu0 0
      %622 = vmatprep.subr.bf16.mxu0 0
      %623 = vmatpush1.bf16.xpose.msra.mxu0 0
      %624 = vmatprep.subr.bf16.mxu0 0
      %625 = vmatpush1.bf16.xpose.msra.mxu0 0
      %626 = vmatprep.subr.bf16.mxu0 0
      %627 = vmatpush1.bf16.xpose.msra.mxu0 0
      %628 = vmatprep.subr.bf16.mxu0 0
      %629 = vmatpush1.bf16.xpose.msra.mxu0 0
      %630 = vmatprep.subr.bf16.mxu0 0
      %631 = vmatpush1.bf16.xpose.msra.mxu0 0
      %632 = vmatprep.subr.bf16.mxu0 0
      %633 = vmatpush1.bf16.xpose.msra.mxu0 0
      %634 = vmatprep.mubr.bf16.mxu0 0
      %635 = vmatmul.mubr.bf16.gmra.mrb[0].mxu0 %v597
      %v636 = vpop.f32.mrb[0].mxu0
      %v637 = vadd.f32 %v476, %v636
      %v638 = vpop.f32.mrb[0].mxu0
      %v639 = vpop.f32.mrb[0].mxu0
      %v640 = vpop.f32.mrb[0].mxu0
      %641 = vdwg.mxu0
      %v642 = vsel %vm528, %v637, -inf
      %643 = vmax.xlane.f32.xlu0 %v642
      %v644 = vpop.xlane.xlu0 %643
      %v645 = vsub.f32 %v637, %v644
      %v646 = vmul.f32 %v645, 1.442695
      %v647 = vpow.pop %v646
      %v648 = vsel %vm528, %v647, 0.0
      %649 = vadd.xlane.f32.xlu0 %v648
      %v650 = vpop.xlane.xlu0 %649
      %v651 = vrcp.pop %v650
      %v652 = vmul.f32 %v647, %v651
      %v653 = vpack.c.bf16 %v652, %v652
      %654 = vrot.lane.b32.xlu0 %v471, 56
      %v655 = vpop.permute.xlu0 %654
      %v657 = vsel %vm543, %v653, 0
      %v660 = vsel %vm547, %v655, 0
      %662 = vmatprep.subr.bf16.mxu0 0
      %663 = vmatpush1.bf16.msra.mxu0 %v660
      %664 = vmatprep.subr.bf16.mxu0 0
      %665 = vmatpush1.bf16.msra.mxu0 0
      %666 = vmatprep.subr.bf16.mxu0 0
      %667 = vmatpush1.bf16.msra.mxu0 0
      %668 = vmatprep.subr.bf16.mxu0 0
      %669 = vmatpush1.bf16.msra.mxu0 0
      %670 = vmatprep.subr.bf16.mxu0 0
      %671 = vmatpush1.bf16.msra.mxu0 0
      %672 = vmatprep.subr.bf16.mxu0 0
      %673 = vmatpush1.bf16.msra.mxu0 0
      %674 = vmatprep.subr.bf16.mxu0 0
      %675 = vmatpush1.bf16.msra.mxu0 0
      %676 = vmatprep.subr.bf16.mxu0 0
      %677 = vmatpush1.bf16.msra.mxu0 0
      %678 = vmatprep.subr.bf16.mxu0 0
      %679 = vmatpush1.bf16.msra.mxu0 0
      %680 = vmatprep.subr.bf16.mxu0 0
      %681 = vmatpush1.bf16.msra.mxu0 0
      %682 = vmatprep.subr.bf16.mxu0 0
      %683 = vmatpush1.bf16.msra.mxu0 0
      %684 = vmatprep.subr.bf16.mxu0 0
      %685 = vmatpush1.bf16.msra.mxu0 0
      %686 = vmatprep.subr.bf16.mxu0 0
      %687 = vmatpush1.bf16.msra.mxu0 0
      %688 = vmatprep.subr.bf16.mxu0 0
      %689 = vmatpush1.bf16.msra.mxu0 0
      %690 = vmatprep.subr.bf16.mxu0 0
      %691 = vmatpush1.bf16.msra.mxu0 0
      %692 = vmatprep.subr.bf16.mxu0 0
      %693 = vmatpush1.bf16.msra.mxu0 0
      %694 = vmatprep.mubr.bf16.mxu0 0
      %695 = vmatmul.mubr.bf16.gmra.mrb[0].mxu0 %v657
      %v696 = vpop.f32.mrb[0].mxu0
      %v697 = vadd.f32 0.0, %v696
      %v698 = vpop.f32.mrb[0].mxu0
      %v699 = vpop.f32.mrb[0].mxu0
      %v700 = vpop.f32.mrb[0].mxu0
      %701 = vdwg.mxu0
      %702 = vrot.lane.b32.xlu0 %v470, 112
      %v703 = vpop.permute.xlu0 %702
      %704 = vrot.lane.b32.xlu0 %v471, 80
      %v705 = vpop.permute.xlu0 %704
      %v707 = vsel %vm481, %v703, 0
      %v710 = vsel %vm481, %v705, 0
      %712 = vmatprep.subr.bf16.mxu0 0
      %713 = vmatpush1.bf16.xpose.msra.mxu0 %v710
      %714 = vmatprep.subr.bf16.mxu0 0
      %715 = vmatpush1.bf16.xpose.msra.mxu0 0
      %716 = vmatprep.subr.bf16.mxu0 0
      %717 = vmatpush1.bf16.xpose.msra.mxu0 0
      %718 = vmatprep.subr.bf16.mxu0 0
      %719 = vmatpush1.bf16.xpose.msra.mxu0 0
      %720 = vmatprep.subr.bf16.mxu0 0
      %721 = vmatpush1.bf16.xpose.msra.mxu0 0
      %722 = vmatprep.subr.bf16.mxu0 0
      %723 = vmatpush1.bf16.xpose.msra.mxu0 0
      %724 = vmatprep.subr.bf16.mxu0 0
      %725 = vmatpush1.bf16.xpose.msra.mxu0 0
      %726 = vmatprep.subr.bf16.mxu0 0
      %727 = vmatpush1.bf16.xpose.msra.mxu0 0
      %728 = vmatprep.subr.bf16.mxu0 0
      %729 = vmatpush1.bf16.xpose.msra.mxu0 0
      %730 = vmatprep.subr.bf16.mxu0 0
      %731 = vmatpush1.bf16.xpose.msra.mxu0 0
      %732 = vmatprep.subr.bf16.mxu0 0
      %733 = vmatpush1.bf16.xpose.msra.mxu0 0
      %734 = vmatprep.subr.bf16.mxu0 0
      %735 = vmatpush1.bf16.xpose.msra.mxu0 0
      %736 = vmatprep.subr.bf16.mxu0 0
      %737 = vmatpush1.bf16.xpose.msra.mxu0 0
      %738 = vmatprep.subr.bf16.mxu0 0
      %739 = vmatpush1.bf16.xpose.msra.mxu0 0
      %740 = vmatprep.subr.bf16.mxu0 0
      %741 = vmatpush1.bf16.xpose.msra.mxu0 0
      %742 = vmatprep.subr.bf16.mxu0 0
      %743 = vmatpush1.bf16.xpose.msra.mxu0 0
      %744 = vmatprep.mubr.bf16.mxu0 0
      %745 = vmatmul.mubr.bf16.gmra.mrb[0].mxu0 %v707
      %v746 = vpop.f32.mrb[0].mxu0
      %v747 = vadd.f32 %v476, %v746
      %v748 = vpop.f32.mrb[0].mxu0
      %v749 = vpop.f32.mrb[0].mxu0
      %v750 = vpop.f32.mrb[0].mxu0
      %751 = vdwg.mxu0
      %v752 = vsel %vm528, %v747, -inf
      %753 = vmax.xlane.f32.xlu0 %v752
      %v754 = vpop.xlane.xlu0 %753
      %v755 = vsub.f32 %v747, %v754
      %v756 = vmul.f32 %v755, 1.442695
      %v757 = vpow.pop %v756
      %v758 = vsel %vm528, %v757, 0.0
      %759 = vadd.xlane.f32.xlu0 %v758
      %v760 = vpop.xlane.xlu0 %759
      %v761 = vrcp.pop %v760
      %v762 = vmul.f32 %v757, %v761
      %v763 = vpack.c.bf16 %v762, %v762
      %764 = vrot.lane.b32.xlu0 %v471, 48
      %v765 = vpop.permute.xlu0 %764
      %v767 = vsel %vm543, %v763, 0
      %v770 = vsel %vm547, %v765, 0
      %772 = vmatprep.subr.bf16.mxu0 0
      %773 = vmatpush1.bf16.msra.mxu0 %v770
      %774 = vmatprep.subr.bf16.mxu0 0
      %775 = vmatpush1.bf16.msra.mxu0 0
      %776 = vmatprep.subr.bf16.mxu0 0
      %777 = vmatpush1.bf16.msra.mxu0 0
      %778 = vmatprep.subr.bf16.mxu0 0
      %779 = vmatpush1.bf16.msra.mxu0 0
      %780 = vmatprep.subr.bf16.mxu0 0
      %781 = vmatpush1.bf16.msra.mxu0 0
      %782 = vmatprep.subr.bf16.mxu0 0
      %783 = vmatpush1.bf16.msra.mxu0 0
      %784 = vmatprep.subr.bf16.mxu0 0
      %785 = vmatpush1.bf16.msra.mxu0 0
      %786 = vmatprep.subr.bf16.mxu0 0
      %787 = vmatpush1.bf16.msra.mxu0 0
      %788 = vmatprep.subr.bf16.mxu0 0
      %789 = vmatpush1.bf16.msra.mxu0 0
      %790 = vmatprep.subr.bf16.mxu0 0
      %791 = vmatpush1.bf16.msra.mxu0 0
      %792 = vmatprep.subr.bf16.mxu0 0
      %793 = vmatpush1.bf16.msra.mxu0 0
      %794 = vmatprep.subr.bf16.mxu0 0
      %795 = vmatpush1.bf16.msra.mxu0 0
      %796 = vmatprep.subr.bf16.mxu0 0
      %797 = vmatpush1.bf16.msra.mxu0 0
      %798 = vmatprep.subr.bf16.mxu0 0
      %799 = vmatpush1.bf16.msra.mxu0 0
      %800 = vmatprep.subr.bf16.mxu0 0
      %801 = vmatpush1.bf16.msra.mxu0 0
      %802 = vmatprep.subr.bf16.mxu0 0
      %803 = vmatpush1.bf16.msra.mxu0 0
      %804 = vmatprep.mubr.bf16.mxu0 0
      %805 = vmatmul.mubr.bf16.gmra.mrb[0].mxu0 %v767
      %v806 = vpop.f32.mrb[0].mxu0
      %v807 = vadd.f32 0.0, %v806
      %v808 = vpop.f32.mrb[0].mxu0
      %v809 = vpop.f32.mrb[0].mxu0
      %v810 = vpop.f32.mrb[0].mxu0
      %811 = vdwg.mxu0
      %812 = vrot.lane.b32.xlu0 %v470, 104
      %v813 = vpop.permute.xlu0 %812
      %814 = vrot.lane.b32.xlu0 %v471, 72
      %v815 = vpop.permute.xlu0 %814
      %v817 = vsel %vm481, %v813, 0
      %v820 = vsel %vm481, %v815, 0
      %822 = vmatprep.subr.bf16.mxu0 0
      %823 = vmatpush1.bf16.xpose.msra.mxu0 %v820
      %824 = vmatprep.subr.bf16.mxu0 0
      %825 = vmatpush1.bf16.xpose.msra.mxu0 0
      %826 = vmatprep.subr.bf16.mxu0 0
      %827 = vmatpush1.bf16.xpose.msra.mxu0 0
      %828 = vmatprep.subr.bf16.mxu0 0
      %829 = vmatpush1.bf16.xpose.msra.mxu0 0
      %830 = vmatprep.subr.bf16.mxu0 0
      %831 = vmatpush1.bf16.xpose.msra.mxu0 0
      %832 = vmatprep.subr.bf16.mxu0 0
      %833 = vmatpush1.bf16.xpose.msra.mxu0 0
      %834 = vmatprep.subr.bf16.mxu0 0
      %835 = vmatpush1.bf16.xpose.msra.mxu0 0
      %836 = vmatprep.subr.bf16.mxu0 0
      %837 = vmatpush1.bf16.xpose.msra.mxu0 0
      %838 = vmatprep.subr.bf16.mxu0 0
      %839 = vmatpush1.bf16.xpose.msra.mxu0 0
      %840 = vmatprep.subr.bf16.mxu0 0
      %841 = vmatpush1.bf16.xpose.msra.mxu0 0
      %842 = vmatprep.subr.bf16.mxu0 0
      %843 = vmatpush1.bf16.xpose.msra.mxu0 0
      %844 = vmatprep.subr.bf16.mxu0 0
      %845 = vmatpush1.bf16.xpose.msra.mxu0 0
      %846 = vmatprep.subr.bf16.mxu0 0
      %847 = vmatpush1.bf16.xpose.msra.mxu0 0
      %848 = vmatprep.subr.bf16.mxu0 0
      %849 = vmatpush1.bf16.xpose.msra.mxu0 0
      %850 = vmatprep.subr.bf16.mxu0 0
      %851 = vmatpush1.bf16.xpose.msra.mxu0 0
      %852 = vmatprep.subr.bf16.mxu0 0
      %853 = vmatpush1.bf16.xpose.msra.mxu0 0
      %854 = vmatprep.mubr.bf16.mxu0 0
      %855 = vmatmul.mubr.bf16.gmra.mrb[0].mxu0 %v817
      %v856 = vpop.f32.mrb[0].mxu0
      %v857 = vadd.f32 %v476, %v856
      %v858 = vpop.f32.mrb[0].mxu0
      %v859 = vpop.f32.mrb[0].mxu0
      %v860 = vpop.f32.mrb[0].mxu0
      %861 = vdwg.mxu0
      %v862 = vsel %vm528, %v857, -inf
      %863 = vmax.xlane.f32.xlu0 %v862
      %v864 = vpop.xlane.xlu0 %863
      %v865 = vsub.f32 %v857, %v864
      %v866 = vmul.f32 %v865, 1.442695
      %v867 = vpow.pop %v866
      %v868 = vsel %vm528, %v867, 0.0
      %869 = vadd.xlane.f32.xlu0 %v868
      %v870 = vpop.xlane.xlu0 %869
      %v871 = vrcp.pop %v870
      %v872 = vmul.f32 %v867, %v871
      %v873 = vpack.c.bf16 %v872, %v872
      %874 = vrot.lane.b32.xlu0 %v471, 40
      %v875 = vpop.permute.xlu0 %874
      %v877 = vsel %vm543, %v873, 0
      %v880 = vsel %vm547, %v875, 0
      %882 = vmatprep.subr.bf16.mxu0 0
      %883 = vmatpush1.bf16.msra.mxu0 %v880
      %884 = vmatprep.subr.bf16.mxu0 0
      %885 = vmatpush1.bf16.msra.mxu0 0
      %886 = vmatprep.subr.bf16.mxu0 0
      %887 = vmatpush1.bf16.msra.mxu0 0
      %888 = vmatprep.subr.bf16.mxu0 0
      %889 = vmatpush1.bf16.msra.mxu0 0
      %890 = vmatprep.subr.bf16.mxu0 0
      %891 = vmatpush1.bf16.msra.mxu0 0
      %892 = vmatprep.subr.bf16.mxu0 0
      %893 = vmatpush1.bf16.msra.mxu0 0
      %894 = vmatprep.subr.bf16.mxu0 0
      %895 = vmatpush1.bf16.msra.mxu0 0
      %896 = vmatprep.subr.bf16.mxu0 0
      %897 = vmatpush1.bf16.msra.mxu0 0
      %898 = vmatprep.subr.bf16.mxu0 0
      %899 = vmatpush1.bf16.msra.mxu0 0
      %900 = vmatprep.subr.bf16.mxu0 0
      %901 = vmatpush1.bf16.msra.mxu0 0
      %902 = vmatprep.subr.bf16.mxu0 0
      %903 = vmatpush1.bf16.msra.mxu0 0
      %904 = vmatprep.subr.bf16.mxu0 0
      %905 = vmatpush1.bf16.msra.mxu0 0
      %906 = vmatprep.subr.bf16.mxu0 0
      %907 = vmatpush1.bf16.msra.mxu0 0
      %908 = vmatprep.subr.bf16.mxu0 0
      %909 = vmatpush1.bf16.msra.mxu0 0
      %910 = vmatprep.subr.bf16.mxu0 0
      %911 = vmatpush1.bf16.msra.mxu0 0
      %912 = vmatprep.subr.bf16.mxu0 0
      %913 = vmatpush1.bf16.msra.mxu0 0
      %914 = vmatprep.mubr.bf16.mxu0 0
      %915 = vmatmul.mubr.bf16.gmra.mrb[0].mxu0 %v877
      %v916 = vpop.f32.mrb[0].mxu0
      %v917 = vadd.f32 0.0, %v916
      %v918 = vpop.f32.mrb[0].mxu0
      %v919 = vpop.f32.mrb[0].mxu0
      %v920 = vpop.f32.mrb[0].mxu0
      %921 = vdwg.mxu0
      %v922 = vxor.u32 %v461, 2147483648
      %v923 = vmul.f32 %v922, 1.442695
      %v924 = vpow.pop %v923
      %v925 = vadd.f32 %v924, 1.0
      %v926 = vrcp.pop %v925
      %v927 = vmul.f32 1.0, %v926
      %929 = vrot.lane.b32.xlu0 %v697, 8
      %v930 = vpop.permute.xlu0 %929
      %933 = vrot.lane.b32.xlu0 %v807, 16
      %v934 = vpop.permute.xlu0 %933
      %937 = vrot.lane.b32.xlu0 %v917, 24
      %v938 = vpop.permute.xlu0 %937
      %v940 = vsel %vm481, %v586, %v930
      %vm941 = vcmask 130048
      %v942 = vsel %vm941, %v940, %v934
      %vm943 = vcmask 195584
      %v944 = vsel %vm943, %v942, %v938
      %946 = vrot.lane.b32.xlu0 %v927, 32
      %v947 = vpop.permute.xlu0 %946
      %v949 = vmul.f32 %v944, %v947
      %v950 = vpack.c.bf16 %v949, %v949
      %v951 = vld [vmem:[%s6] sm:$0xf]
      %v952 = vld [vmem:[%s6 + $0x4] sm:$0xf]
      %v953 = vld [vmem:[%s6 + $0x8] sm:$0xf]
      %v954 = vld [vmem:[%s6 + $0xc] sm:$0xf]
      %v955 = vld [vmem:[%s7] sm:$0x1]
      %v957 = vlaneseq
      %v958 = vshrl.u32 %v957, 7
      %v959 = vsub.s32 0, %v958
      %v960 = vrot.slane %v955, %v959
      %v966 = vunpack.c.l.b16 %v951
      %v967 = vunpack.c.l.b16 %v952
      %v968 = vunpack.c.l.b16 %v953
      %v969 = vunpack.c.l.b16 %v954
      %v970 = vpack.c.b16 %v967, %v966
      %v971 = vpack.c.b16 %v969, %v968
      %v975 = vsel %vm422, %v950, 0
      %977 = vmatprep.subr.bf16.mxu0 0
      %978 = vmatpush1.bf16.msra.mxu0 %v970
      %979 = vmatprep.subr.bf16.mxu0 0
      %980 = vmatpush1.bf16.msra.mxu0 %v971
      %981 = vmatprep.subr.bf16.mxu0 0
      %982 = vmatpush1.bf16.msra.mxu0 0
      %983 = vmatprep.subr.bf16.mxu0 0
      %984 = vmatpush1.bf16.msra.mxu0 0
      %985 = vmatprep.subr.bf16.mxu0 0
      %986 = vmatpush1.bf16.msra.mxu0 0
      %987 = vmatprep.subr.bf16.mxu0 0
      %988 = vmatpush1.bf16.msra.mxu0 0
      %989 = vmatprep.subr.bf16.mxu0 0
      %990 = vmatpush1.bf16.msra.mxu0 0
      %991 = vmatprep.subr.bf16.mxu0 0
      %992 = vmatpush1.bf16.msra.mxu0 0
      %993 = vmatprep.subr.bf16.mxu0 0
      %994 = vmatpush1.bf16.msra.mxu0 0
      %995 = vmatprep.subr.bf16.mxu0 0
      %996 = vmatpush1.bf16.msra.mxu0 0
      %997 = vmatprep.subr.bf16.mxu0 0
      %998 = vmatpush1.bf16.msra.mxu0 0
      %999 = vmatprep.subr.bf16.mxu0 0
      %1000 = vmatpush1.bf16.msra.mxu0 0
      %1001 = vmatprep.subr.bf16.mxu0 0
      %1002 = vmatpush1.bf16.msra.mxu0 0
      %1003 = vmatprep.subr.bf16.mxu0 0
      %1004 = vmatpush1.bf16.msra.mxu0 0
      %1005 = vmatprep.subr.bf16.mxu0 0
      %1006 = vmatpush1.bf16.msra.mxu0 0
      %1007 = vmatprep.subr.bf16.mxu0 0
      %1008 = vmatpush1.bf16.msra.mxu0 0
      %1009 = vmatprep.mubr.bf16.mxu0 0
      %1010 = vmatmul.mubr.bf16.gmra.mrb[0].mxu0 %v975
      %v1011 = vpop.f32.mrb[0].mxu0
      %v1012 = vadd.f32 %v960, %v1011
      %v1013 = vpop.f32.mrb[0].mxu0
      %v1014 = vpop.f32.mrb[0].mxu0
      %v1015 = vpop.f32.mrb[0].mxu0
      %1016 = vdwg.mxu0
      %1017 = vst.msk [vmem:[%s364] sm:$0xf] %vm369, %v1012
      %p1018 = scmp.lt.s32.totalorder %s23, 0
      %s1019 = scalar_select %p1018, %s23, 0
      %p1020 = scmp.lt.s32.totalorder %s24, 7
      %s1021 = scalar_select %p1020, %s24, 7
      %s1022 = smul.addr %s1019, 8
      %s1023 = sadd.s32 %s1021, %s1022
      %s1024 = smul.addr %s1023, 4
      %s1025 = scalar_lea.vmem %s8, %s1024
      // Predicated region
      $region53: #{evoformer_stack_forward.39} parent=51 // pred_check
        %p1026 = pneg %p233
      $region54: #{evoformer_stack_forward.39} parent=51 // pred_check_branch
        %1028 = sbr.rel (%p1026) target = $region56
      $region55: #{evoformer_stack_forward.39} parent=51 // pred_region
        _
      $region56: #{evoformer_stack_forward.39} parent=51 // pred_fallthru
        _
    $region52: #{evoformer_stack_forward.39} parent=5 // pred_fallthru
      _
    %p1029 = scmp.le.s32.totalorder 2, %s14
    // Predicated region
    $region57: #{evoformer_stack_forward.39} parent=5 // pred_check
      %p1030 = pneg %p1029
    $region58: #{evoformer_stack_forward.39} parent=5 // pred_check_branch
      %1032 = sbr.rel (%p1030) target = $region60
    $region59: #{evoformer_stack_forward.39} parent=5 // pred_region
      %s1033 = ssub.s32 %s14, 2
      // Predicated region
      $region61: #{evoformer_stack_forward.39} parent=59 // pred_check
        %p1034 = pneg %p239
      $region62: #{evoformer_stack_forward.39} parent=59 // pred_check_branch
        %1036 = sbr.rel (%p1034) target = $region64
      $region63: #{evoformer_stack_forward.39} parent=59 // pred_region
        %p1037 = scmp.lt.s32.totalorder %s25, 0
        %s1038 = scalar_select %p1037, %s25, 0
        %p1039 = scmp.lt.s32.totalorder %s26, 7
        %s1040 = scalar_select %p1039, %s26, 7
        %s1041 = smul.addr %s1038, 8
        %s1042 = sadd.s32 %s1040, %s1041
        %s1043 = smul.addr %s1042, 4
        %s1044 = scalar_lea.vmem %s8, %s1043
      $region64: #{evoformer_stack_forward.39} parent=59 // pred_fallthru
        _
    $region60: #{evoformer_stack_forward.39} parent=5 // pred_fallthru
      _
  $region6: #{evoformer_stack_forward.39} parent=0 // loop_footer
    %s18 = sadd.s32 1, %s14
  $region7: #{evoformer_stack_forward.39} parent=0 // loop_footer_branch
    %13 = sbr.rel target = $region3
  $region8: #{evoformer_stack_forward.39} parent=0 // loop_exit
    _

// kernel: evoformer_stack_forward.40
$region0: #{evoformer_stack_forward.40}
  #allocation0 [shape = 'u32[]', space=smem, size = 0x4, offset = 0x4, fixed_abs, tag = 'smem constant byte address 0x4 - core index']
  #allocation1 [shape = 'u32[144,128]{1,0:T(1,128)}', space=vmem, size = 0x12000, scoped, tag = 'internal scratch']
  %s0 = inlined_call_operand.vmem [shape: f32[32,32], index: 0, kind: input, shape index: {}]
  %s1 = inlined_call_operand.vmem [shape: f32[32,1], index: 1, kind: input, shape index: {}]
  %s2 = inlined_call_operand.vmem [shape: f32[1,32], index: 2, kind: input, shape index: {}]
  %s3 = inlined_call_operand.vmem [shape: f32[1,32], index: 3, kind: input, shape index: {}]
  %s4 = inlined_call_operand.vmem [shape: f32[32,64], index: 4, kind: input, shape index: {}]
  %s5 = inlined_call_operand.vmem [shape: f32[1,64], index: 5, kind: input, shape index: {}]
  %s6 = inlined_call_operand.vmem [shape: f32[64,32], index: 6, kind: input, shape index: {}]
  %s7 = inlined_call_operand.vmem [shape: f32[1,32], index: 7, kind: input, shape index: {}]
  %s8 = inlined_call_operand.vmem [shape: f32[32,32], index: 8, kind: output, shape index: {}]
  %s9 = sld [smem:[#allocation0]]
  $region42: #{evoformer_stack_forward.40} parent=0
    _
  %s11 = ssub.s32 1, %s9
  %s12 = scalar_select 0, %s11, %s9
  // Predicated region
  $region2: #{evoformer_stack_forward.40} parent=0 // pred_check
    _
  $region3: #{evoformer_stack_forward.40} parent=0 // pred_check_branch
    %14 = sbr.rel (0) target = $region5
  $region4: #{evoformer_stack_forward.40} parent=0 // pred_region
    _
  $region5: #{evoformer_stack_forward.40} parent=0 // pred_fallthru
    _
  // Predicated region
  $region6: #{evoformer_stack_forward.40} parent=0 // pred_check
    _
  $region7: #{evoformer_stack_forward.40} parent=0 // pred_check_branch
    %16 = sbr.rel (0) target = $region9
  $region8: #{evoformer_stack_forward.40} parent=0 // pred_region
    _
  $region9: #{evoformer_stack_forward.40} parent=0 // pred_fallthru
    _
  // Predicated region
  $region10: #{evoformer_stack_forward.40} parent=0 // pred_check
    _
  $region11: #{evoformer_stack_forward.40} parent=0 // pred_check_branch
    %18 = sbr.rel (0) target = $region13
  $region12: #{evoformer_stack_forward.40} parent=0 // pred_region
    _
  $region13: #{evoformer_stack_forward.40} parent=0 // pred_fallthru
    _
  // Predicated region
  $region14: #{evoformer_stack_forward.40} parent=0 // pred_check
    _
  $region15: #{evoformer_stack_forward.40} parent=0 // pred_check_branch
    %20 = sbr.rel (0) target = $region17
  $region16: #{evoformer_stack_forward.40} parent=0 // pred_region
    _
  $region17: #{evoformer_stack_forward.40} parent=0 // pred_fallthru
    _
  // Predicated region
  $region18: #{evoformer_stack_forward.40} parent=0 // pred_check
    _
  $region19: #{evoformer_stack_forward.40} parent=0 // pred_check_branch
    %22 = sbr.rel (0) target = $region21
  $region20: #{evoformer_stack_forward.40} parent=0 // pred_region
    _
  $region21: #{evoformer_stack_forward.40} parent=0 // pred_fallthru
    _
  // Predicated region
  $region22: #{evoformer_stack_forward.40} parent=0 // pred_check
    _
  $region23: #{evoformer_stack_forward.40} parent=0 // pred_check_branch
    %24 = sbr.rel (0) target = $region25
  $region24: #{evoformer_stack_forward.40} parent=0 // pred_region
    _
  $region25: #{evoformer_stack_forward.40} parent=0 // pred_fallthru
    _
  // Predicated region
  $region26: #{evoformer_stack_forward.40} parent=0 // pred_check
    _
  $region27: #{evoformer_stack_forward.40} parent=0 // pred_check_branch
    %26 = sbr.rel (0) target = $region29
  $region28: #{evoformer_stack_forward.40} parent=0 // pred_region
    _
  $region29: #{evoformer_stack_forward.40} parent=0 // pred_fallthru
    _
  // Predicated region
  $region30: #{evoformer_stack_forward.40} parent=0 // pred_check
    _
  $region31: #{evoformer_stack_forward.40} parent=0 // pred_check_branch
    %28 = sbr.rel (0) target = $region33
  $region32: #{evoformer_stack_forward.40} parent=0 // pred_region
    _
  $region33: #{evoformer_stack_forward.40} parent=0 // pred_fallthru
    _
  %v29 = vld [vmem:[%s0] sm:$0xff]
  %v30 = vld [vmem:[%s0 + $0x8] sm:$0xff]
  %v31 = vld [vmem:[%s0 + $0x10] sm:$0xff]
  %v32 = vld [vmem:[%s0 + $0x18] sm:$0xff]
  %v33 = vld [vmem:[%s2] sm:$0x1]
  %v34 = vld [vmem:[%s3] sm:$0x1]
  %vm35 = vcmask 261120
  %v36 = vsel %vm35, %v29, 0.0
  %37 = vadd.xlane.f32.xlu0 %v36
  %v38 = vpop.xlane.xlu0 %37
  %v39 = vsel %vm35, %v30, 0.0
  %40 = vadd.xlane.f32.xlu0 %v39
  %v41 = vpop.xlane.xlu0 %40
  %v42 = vsel %vm35, %v31, 0.0
  %43 = vadd.xlane.f32.xlu0 %v42
  %v44 = vpop.xlane.xlu0 %43
  %v45 = vsel %vm35, %v32, 0.0
  %46 = vadd.xlane.f32.xlu0 %v45
  %v47 = vpop.xlane.xlu0 %46
  %v48 = vrcp.pop 32.0
  %v49 = vmul.f32 %v38, %v48
  %v50 = vmul.f32 %v41, %v48
  %v51 = vmul.f32 %v44, %v48
  %v52 = vmul.f32 %v47, %v48
  %v53 = vsub.f32 %v29, %v49
  %v54 = vsub.f32 %v30, %v50
  %v55 = vsub.f32 %v31, %v51
  %v56 = vsub.f32 %v32, %v52
  %v57 = vmul.f32 %v53, %v53
  %v58 = vmul.f32 %v54, %v54
  %v59 = vmul.f32 %v55, %v55
  %v60 = vmul.f32 %v56, %v56
  %v61 = vsel %vm35, %v57, 0.0
  %62 = vadd.xlane.f32.xlu0 %v61
  %v63 = vpop.xlane.xlu0 %62
  %v64 = vsel %vm35, %v58, 0.0
  %65 = vadd.xlane.f32.xlu0 %v64
  %v66 = vpop.xlane.xlu0 %65
  %v67 = vsel %vm35, %v59, 0.0
  %68 = vadd.xlane.f32.xlu0 %v67
  %v69 = vpop.xlane.xlu0 %68
  %v70 = vsel %vm35, %v60, 0.0
  %71 = vadd.xlane.f32.xlu0 %v70
  %v72 = vpop.xlane.xlu0 %71
  %v73 = vmul.f32 %v63, %v48
  %v74 = vmul.f32 %v66, %v48
  %v75 = vmul.f32 %v69, %v48
  %v76 = vmul.f32 %v72, %v48
  %v77 = vadd.f32 %v73, 1e-05
  %v78 = vadd.f32 %v74, 1e-05
  %v79 = vadd.f32 %v75, 1e-05
  %v80 = vadd.f32 %v76, 1e-05
  %v81 = vrsqrt.pop %v77
  %v82 = vrsqrt.pop %v78
  %v83 = vrsqrt.pop %v79
  %v84 = vrsqrt.pop %v80
  %v85 = vmul.f32 %v53, %v81
  %v86 = vmul.f32 %v54, %v82
  %v87 = vmul.f32 %v55, %v83
  %v88 = vmul.f32 %v56, %v84
  %v90 = vlaneseq
  %v91 = vshrl.u32 %v90, 7
  %v92 = vsub.s32 0, %v91
  %v93 = vrot.slane %v33, %v92
  %v95 = vmul.f32 %v85, %v93
  %v96 = vmul.f32 %v86, %v93
  %v97 = vmul.f32 %v87, %v93
  %v98 = vmul.f32 %v88, %v93
  %v100 = vlaneseq
  %v101 = vshrl.u32 %v100, 7
  %v102 = vsub.s32 0, %v101
  %v103 = vrot.slane %v34, %v102
  %v105 = vadd.f32 %v95, %v103
  %v106 = vadd.f32 %v96, %v103
  %v107 = vadd.f32 %v97, %v103
  %v108 = vadd.f32 %v98, %v103
  %v109 = vld [vmem:[%s4] sm:$0xff]
  %v110 = vld [vmem:[%s4 + $0x8] sm:$0xff]
  %v111 = vld [vmem:[%s4 + $0x10] sm:$0xff]
  %v112 = vld [vmem:[%s4 + $0x18] sm:$0xff]
  %v113 = vld [vmem:[%s5] sm:$0x1]
  %v115 = vlaneseq
  %v116 = vshrl.u32 %v115, 7
  %v117 = vsub.s32 0, %v116
  %v118 = vrot.slane %v113, %v117
  %v121 = vsel %vm35, %v105, 0
  %v124 = vsel %vm35, %v106, 0
  %v127 = vsel %vm35, %v107, 0
  %v130 = vsel %vm35, %v108, 0
  %132 = vmatprep.subr.mxu0 0.0
  %133 = vmatpush1.msra.mxu0 %v109
  %134 = vmatprep.subr.mxu0 0.0
  %135 = vmatpush1.msra.mxu0 %v110
  %136 = vmatprep.subr.mxu0 0.0
  %137 = vmatpush1.msra.mxu0 %v111
  %138 = vmatprep.subr.mxu0 0.0
  %139 = vmatpush1.msra.mxu0 %v112
  %140 = vmatprep.subr.mxu0 0.0
  %141 = vmatpush1.msra.mxu0 0.0
  %142 = vmatprep.subr.mxu0 0.0
  %143 = vmatpush1.msra.mxu0 0.0
  %144 = vmatprep.subr.mxu0 0.0
  %145 = vmatpush1.msra.mxu0 0.0
  %146 = vmatprep.subr.mxu0 0.0
  %147 = vmatpush1.msra.mxu0 0.0
  %148 = vmatprep.subr.mxu0 0.0
  %149 = vmatpush1.msra.mxu0 0.0
  %150 = vmatprep.subr.mxu0 0.0
  %151 = vmatpush1.msra.mxu0 0.0
  %152 = vmatprep.subr.mxu0 0.0
  %153 = vmatpush1.msra.mxu0 0.0
  %154 = vmatprep.subr.mxu0 0.0
  %155 = vmatpush1.msra.mxu0 0.0
  %156 = vmatprep.subr.mxu0 0.0
  %157 = vmatpush1.msra.mxu0 0.0
  %158 = vmatprep.subr.mxu0 0.0
  %159 = vmatpush1.msra.mxu0 0.0
  %160 = vmatprep.subr.mxu0 0.0
  %161 = vmatpush1.msra.mxu0 0.0
  %162 = vmatprep.subr.mxu0 0.0
  %163 = vmatpush1.msra.mxu0 0.0
  %164 = vmatprep.subr.mxu0 0.0
  %165 = vmatpush1.msra.mxu0 0.0
  %166 = vmatprep.subr.mxu0 0.0
  %167 = vmatpush1.msra.mxu0 0.0
  %168 = vmatprep.subr.mxu0 0.0
  %169 = vmatpush1.msra.mxu0 0.0
  %170 = vmatprep.subr.mxu0 0.0
  %171 = vmatpush1.msra.mxu0 0.0
  %172 = vmatprep.subr.mxu0 0.0
  %173 = vmatpush1.msra.mxu0 0.0
  %174 = vmatprep.subr.mxu0 0.0
  %175 = vmatpush1.msra.mxu0 0.0
  %176 = vmatprep.subr.mxu0 0.0
  %177 = vmatpush1.msra.mxu0 0.0
  %178 = vmatprep.subr.mxu0 0.0
  %179 = vmatpush1.msra.mxu0 0.0
  %180 = vmatprep.subr.mxu0 0.0
  %181 = vmatpush1.msra.mxu0 0.0
  %182 = vmatprep.subr.mxu0 0.0
  %183 = vmatpush1.msra.mxu0 0.0
  %184 = vmatprep.subr.mxu0 0.0
  %185 = vmatpush1.msra.mxu0 0.0
  %186 = vmatprep.subr.mxu0 0.0
  %187 = vmatpush1.msra.mxu0 0.0
  %188 = vmatprep.subr.mxu0 0.0
  %189 = vmatpush1.msra.mxu0 0.0
  %190 = vmatprep.subr.mxu0 0.0
  %191 = vmatpush1.msra.mxu0 0.0
  %192 = vmatprep.subr.mxu0 0.0
  %193 = vmatpush1.msra.mxu0 0.0
  %194 = vmatprep.subr.mxu0 0.0
  %195 = vmatpush1.msra.mxu0 0.0
  %196 = vmatprep.mubr.f32.mxu0 0.0
  %197 = vmatmul.mubr.f32.gmra.mrb[0].mxu0 %v121
  %v198 = vpop.f32.mrb[0].mxu0
  %v199 = vadd.f32 %v118, %v198
  %v200 = vpop.f32.mrb[0].mxu0
  %201 = vmatprep.mubr.f32.mxu0 0.0
  %202 = vmatmul.mubr.f32.gmra.mrb[0].mxu0 %v124
  %v203 = vpop.f32.mrb[0].mxu0
  %v204 = vadd.f32 %v118, %v203
  %v205 = vpop.f32.mrb[0].mxu0
  %206 = vmatprep.mubr.f32.mxu0 0.0
  %207 = vmatmul.mubr.f32.gmra.mrb[0].mxu0 %v127
  %v208 = vpop.f32.mrb[0].mxu0
  %v209 = vadd.f32 %v118, %v208
  %v210 = vpop.f32.mrb[0].mxu0
  %211 = vmatprep.mubr.f32.mxu0 0.0
  %212 = vmatmul.mubr.f32.gmra.mrb[0].mxu0 %v130
  %v213 = vpop.f32.mrb[0].mxu0
  %v214 = vadd.f32 %v118, %v213
  %v215 = vpop.f32.mrb[0].mxu0
  %216 = vdwg.mxu0
  %v217 = vmax.f32 %v199, 0.0
  %v218 = vmax.f32 %v204, 0.0
  %v219 = vmax.f32 %v209, 0.0
  %v220 = vmax.f32 %v214, 0.0
  %v221 = vld [vmem:[%s6] sm:$0xff]
  %v222 = vld [vmem:[%s6 + $0x8] sm:$0xff]
  %v223 = vld [vmem:[%s6 + $0x10] sm:$0xff]
  %v224 = vld [vmem:[%s6 + $0x18] sm:$0xff]
  %v225 = vld [vmem:[%s6 + $0x20] sm:$0xff]
  %v226 = vld [vmem:[%s6 + $0x28] sm:$0xff]
  %v227 = vld [vmem:[%s6 + $0x30] sm:$0xff]
  %v228 = vld [vmem:[%s6 + $0x38] sm:$0xff]
  %v229 = vld [vmem:[%s7] sm:$0x1]
  %v231 = vlaneseq
  %v232 = vshrl.u32 %v231, 7
  %v233 = vsub.s32 0, %v232
  %v234 = vrot.slane %v229, %v233
  %vm236 = vcmask 523264
  %v238 = vsel %vm236, %v217, 0
  %v241 = vsel %vm236, %v218, 0
  %v244 = vsel %vm236, %v219, 0
  %v247 = vsel %vm236, %v220, 0
  %249 = vmatprep.subr.mxu0 0.0
  %250 = vmatpush1.msra.mxu0 %v221
  %251 = vmatprep.subr.mxu0 0.0
  %252 = vmatpush1.msra.mxu0 %v222
  %253 = vmatprep.subr.mxu0 0.0
  %254 = vmatpush1.msra.mxu0 %v223
  %255 = vmatprep.subr.mxu0 0.0
  %256 = vmatpush1.msra.mxu0 %v224
  %257 = vmatprep.subr.mxu0 0.0
  %258 = vmatpush1.msra.mxu0 %v225
  %259 = vmatprep.subr.mxu0 0.0
  %260 = vmatpush1.msra.mxu0 %v226
  %261 = vmatprep.subr.mxu0 0.0
  %262 = vmatpush1.msra.mxu0 %v227
  %263 = vmatprep.subr.mxu0 0.0
  %264 = vmatpush1.msra.mxu0 %v228
  %265 = vmatprep.subr.mxu0 0.0
  %266 = vmatpush1.msra.mxu0 0.0
  %267 = vmatprep.subr.mxu0 0.0
  %268 = vmatpush1.msra.mxu0 0.0
  %269 = vmatprep.subr.mxu0 0.0
  %270 = vmatpush1.msra.mxu0 0.0
  %271 = vmatprep.subr.mxu0 0.0
  %272 = vmatpush1.msra.mxu0 0.0
  %273 = vmatprep.subr.mxu0 0.0
  %274 = vmatpush1.msra.mxu0 0.0
  %275 = vmatprep.subr.mxu0 0.0
  %276 = vmatpush1.msra.mxu0 0.0
  %277 = vmatprep.subr.mxu0 0.0
  %278 = vmatpush1.msra.mxu0 0.0
  %279 = vmatprep.subr.mxu0 0.0
  %280 = vmatpush1.msra.mxu0 0.0
  %281 = vmatprep.subr.mxu0 0.0
  %282 = vmatpush1.msra.mxu0 0.0
  %283 = vmatprep.subr.mxu0 0.0
  %284 = vmatpush1.msra.mxu0 0.0
  %285 = vmatprep.subr.mxu0 0.0
  %286 = vmatpush1.msra.mxu0 0.0
  %287 = vmatprep.subr.mxu0 0.0
  %288 = vmatpush1.msra.mxu0 0.0
  %289 = vmatprep.subr.mxu0 0.0
  %290 = vmatpush1.msra.mxu0 0.0
  %291 = vmatprep.subr.mxu0 0.0
  %292 = vmatpush1.msra.mxu0 0.0
  %293 = vmatprep.subr.mxu0 0.0
  %294 = vmatpush1.msra.mxu0 0.0
  %295 = vmatprep.subr.mxu0 0.0
  %296 = vmatpush1.msra.mxu0 0.0
  %297 = vmatprep.subr.mxu0 0.0
  %298 = vmatpush1.msra.mxu0 0.0
  %299 = vmatprep.subr.mxu0 0.0
  %300 = vmatpush1.msra.mxu0 0.0
  %301 = vmatprep.subr.mxu0 0.0
  %302 = vmatpush1.msra.mxu0 0.0
  %303 = vmatprep.subr.mxu0 0.0
  %304 = vmatpush1.msra.mxu0 0.0
  %305 = vmatprep.subr.mxu0 0.0
  %306 = vmatpush1.msra.mxu0 0.0
  %307 = vmatprep.subr.mxu0 0.0
  %308 = vmatpush1.msra.mxu0 0.0
  %309 = vmatprep.subr.mxu0 0.0
  %310 = vmatpush1.msra.mxu0 0.0
  %311 = vmatprep.subr.mxu0 0.0
  %312 = vmatpush1.msra.mxu0 0.0
  %313 = vmatprep.mubr.f32.mxu0 0.0
  %314 = vmatmul.mubr.f32.gmra.mrb[0].mxu0 %v238
  %v315 = vpop.f32.mrb[0].mxu0
  %v316 = vadd.f32 %v234, %v315
  %v317 = vpop.f32.mrb[0].mxu0
  %318 = vmatprep.mubr.f32.mxu0 0.0
  %319 = vmatmul.mubr.f32.gmra.mrb[0].mxu0 %v241
  %v320 = vpop.f32.mrb[0].mxu0
  %v321 = vadd.f32 %v234, %v320
  %v322 = vpop.f32.mrb[0].mxu0
  %323 = vmatprep.mubr.f32.mxu0 0.0
  %324 = vmatmul.mubr.f32.gmra.mrb[0].mxu0 %v244
  %v325 = vpop.f32.mrb[0].mxu0
  %v326 = vadd.f32 %v234, %v325
  %v327 = vpop.f32.mrb[0].mxu0
  %328 = vmatprep.mubr.f32.mxu0 0.0
  %329 = vmatmul.mubr.f32.gmra.mrb[0].mxu0 %v247
  %v330 = vpop.f32.mrb[0].mxu0
  %v331 = vadd.f32 %v234, %v330
  %v332 = vpop.f32.mrb[0].mxu0
  %333 = vdwg.mxu0
  %v334 = vld [vmem:[%s1] sm:$0xff]
  %v335 = vld [vmem:[%s1 + $0x8] sm:$0xff]
  %v336 = vld [vmem:[%s1 + $0x10] sm:$0xff]
  %v337 = vld [vmem:[%s1 + $0x18] sm:$0xff]
  %339 = vset.pattern.permute.xlu0 0
  %340 = vperm.xlu0 %339, %v334
  %v341 = vpop.permute.xlu0 %340
  %344 = vset.pattern.permute.xlu0 0
  %345 = vperm.xlu0 %344, %v335
  %v346 = vpop.permute.xlu0 %345
  %349 = vset.pattern.permute.xlu0 0
  %350 = vperm.xlu0 %349, %v336
  %v351 = vpop.permute.xlu0 %350
  %354 = vset.pattern.permute.xlu0 0
  %355 = vperm.xlu0 %354, %v337
  %v356 = vpop.permute.xlu0 %355
  %v358 = vmul.f32 %v316, %v341
  %v359 = vmul.f32 %v321, %v346
  %v360 = vmul.f32 %v326, %v351
  %v361 = vmul.f32 %v331, %v356
  %362 = vst.msk [vmem:[%s8] sm:$0xff] %vm35, %v358
  %363 = vst.msk [vmem:[%s8 + $0x8] sm:$0xff] %vm35, %v359
  %364 = vst.msk [vmem:[%s8 + $0x10] sm:$0xff] %vm35, %v360
  %365 = vst.msk [vmem:[%s8 + $0x18] sm:$0xff] %vm35, %v361
  // Predicated region
  $region34: #{evoformer_stack_forward.40} parent=0 // pred_check
    _
  $region35: #{evoformer_stack_forward.40} parent=0 // pred_check_branch
    %367 = sbr.rel (0) target = $region37
  $region36: #{evoformer_stack_forward.40} parent=0 // pred_region
    _
  $region37: #{evoformer_stack_forward.40} parent=0 // pred_fallthru
    _
  // Predicated region
  $region38: #{evoformer_stack_forward.40} parent=0 // pred_check
    _
  $region39: #{evoformer_stack_forward.40} parent=0 // pred_check_branch
    %369 = sbr.rel (0) target = $region41
  $region40: #{evoformer_stack_forward.40} parent=0 // pred_region
    _
  $region41: #{evoformer_stack_forward.40} parent=0 // pred_fallthru
    _

// kernel: evoformer_stack_forward.41
$region0: #{evoformer_stack_forward.41}
  #allocation0 [shape = 'u32[]', space=smem, size = 0x4, offset = 0x4, fixed_abs, tag = 'smem constant byte address 0x4 - core index']
  #allocation1 [shape = 'u32[144,128]{1,0:T(1,128)}', space=vmem, size = 0x12000, scoped, tag = 'internal scratch']
  %s0 = inlined_call_operand.vmem [shape: f32[32,32], index: 0, kind: input, shape index: {}]
  %s1 = inlined_call_operand.vmem [shape: f32[32,1], index: 1, kind: input, shape index: {}]
  %s2 = inlined_call_operand.vmem [shape: f32[1,32], index: 2, kind: input, shape index: {}]
  %s3 = inlined_call_operand.vmem [shape: f32[1,32], index: 3, kind: input, shape index: {}]
  %s4 = inlined_call_operand.vmem [shape: f32[32,8], index: 4, kind: input, shape index: {}]
  %s5 = inlined_call_operand.vmem [shape: f32[1,8], index: 5, kind: input, shape index: {}]
  %s6 = inlined_call_operand.vmem [shape: f32[32,8], index: 6, kind: input, shape index: {}]
  %s7 = inlined_call_operand.vmem [shape: f32[1,8], index: 7, kind: input, shape index: {}]
  %s8 = inlined_call_operand.vmem [shape: bf16[32,8], index: 8, kind: output, shape index: {0}]
  %s9 = inlined_call_operand.vmem [shape: bf16[32,8], index: 9, kind: output, shape index: {1}]
  %10 = xla_tuple %s8, %s9
  %s11 = sld [smem:[#allocation0]]
  $region50: #{evoformer_stack_forward.41} parent=0
    _
  %s13 = ssub.s32 1, %s11
  %s14 = scalar_select 0, %s13, %s11
  // Predicated region
  $region2: #{evoformer_stack_forward.41} parent=0 // pred_check
    _
  $region3: #{evoformer_stack_forward.41} parent=0 // pred_check_branch
    %16 = sbr.rel (0) target = $region5
  $region4: #{evoformer_stack_forward.41} parent=0 // pred_region
    _
  $region5: #{evoformer_stack_forward.41} parent=0 // pred_fallthru
    _
  // Predicated region
  $region6: #{evoformer_stack_forward.41} parent=0 // pred_check
    _
  $region7: #{evoformer_stack_forward.41} parent=0 // pred_check_branch
    %18 = sbr.rel (0) target = $region9
  $region8: #{evoformer_stack_forward.41} parent=0 // pred_region
    _
  $region9: #{evoformer_stack_forward.41} parent=0 // pred_fallthru
    _
  // Predicated region
  $region10: #{evoformer_stack_forward.41} parent=0 // pred_check
    _
  $region11: #{evoformer_stack_forward.41} parent=0 // pred_check_branch
    %20 = sbr.rel (0) target = $region13
  $region12: #{evoformer_stack_forward.41} parent=0 // pred_region
    _
  $region13: #{evoformer_stack_forward.41} parent=0 // pred_fallthru
    _
  // Predicated region
  $region14: #{evoformer_stack_forward.41} parent=0 // pred_check
    _
  $region15: #{evoformer_stack_forward.41} parent=0 // pred_check_branch
    %22 = sbr.rel (0) target = $region17
  $region16: #{evoformer_stack_forward.41} parent=0 // pred_region
    _
  $region17: #{evoformer_stack_forward.41} parent=0 // pred_fallthru
    _
  // Predicated region
  $region18: #{evoformer_stack_forward.41} parent=0 // pred_check
    _
  $region19: #{evoformer_stack_forward.41} parent=0 // pred_check_branch
    %24 = sbr.rel (0) target = $region21
  $region20: #{evoformer_stack_forward.41} parent=0 // pred_region
    _
  $region21: #{evoformer_stack_forward.41} parent=0 // pred_fallthru
    _
  // Predicated region
  $region22: #{evoformer_stack_forward.41} parent=0 // pred_check
    _
  $region23: #{evoformer_stack_forward.41} parent=0 // pred_check_branch
    %26 = sbr.rel (0) target = $region25
  $region24: #{evoformer_stack_forward.41} parent=0 // pred_region
    _
  $region25: #{evoformer_stack_forward.41} parent=0 // pred_fallthru
    _
  // Predicated region
  $region26: #{evoformer_stack_forward.41} parent=0 // pred_check
    _
  $region27: #{evoformer_stack_forward.41} parent=0 // pred_check_branch
    %28 = sbr.rel (0) target = $region29
  $region28: #{evoformer_stack_forward.41} parent=0 // pred_region
    _
  $region29: #{evoformer_stack_forward.41} parent=0 // pred_fallthru
    _
  // Predicated region
  $region30: #{evoformer_stack_forward.41} parent=0 // pred_check
    _
  $region31: #{evoformer_stack_forward.41} parent=0 // pred_check_branch
    %30 = sbr.rel (0) target = $region33
  $region32: #{evoformer_stack_forward.41} parent=0 // pred_region
    _
  $region33: #{evoformer_stack_forward.41} parent=0 // pred_fallthru
    _
  %v31 = vld [vmem:[%s0] sm:$0xff]
  %v32 = vld [vmem:[%s0 + $0x8] sm:$0xff]
  %v33 = vld [vmem:[%s0 + $0x10] sm:$0xff]
  %v34 = vld [vmem:[%s0 + $0x18] sm:$0xff]
  %v35 = vld [vmem:[%s2] sm:$0x1]
  %v36 = vld [vmem:[%s3] sm:$0x1]
  %vm37 = vcmask 261120
  %v38 = vsel %vm37, %v31, 0.0
  %39 = vadd.xlane.f32.xlu0 %v38
  %v40 = vpop.xlane.xlu0 %39
  %v41 = vsel %vm37, %v32, 0.0
  %42 = vadd.xlane.f32.xlu0 %v41
  %v43 = vpop.xlane.xlu0 %42
  %v44 = vsel %vm37, %v33, 0.0
  %45 = vadd.xlane.f32.xlu0 %v44
  %v46 = vpop.xlane.xlu0 %45
  %v47 = vsel %vm37, %v34, 0.0
  %48 = vadd.xlane.f32.xlu0 %v47
  %v49 = vpop.xlane.xlu0 %48
  %v50 = vrcp.pop 32.0
  %v51 = vmul.f32 %v40, %v50
  %v52 = vmul.f32 %v43, %v50
  %v53 = vmul.f32 %v46, %v50
  %v54 = vmul.f32 %v49, %v50
  %v55 = vsub.f32 %v31, %v51
  %v56 = vsub.f32 %v32, %v52
  %v57 = vsub.f32 %v33, %v53
  %v58 = vsub.f32 %v34, %v54
  %v59 = vmul.f32 %v55, %v55
  %v60 = vmul.f32 %v56, %v56
  %v61 = vmul.f32 %v57, %v57
  %v62 = vmul.f32 %v58, %v58
  %v63 = vsel %vm37, %v59, 0.0
  %64 = vadd.xlane.f32.xlu0 %v63
  %v65 = vpop.xlane.xlu0 %64
  %v66 = vsel %vm37, %v60, 0.0
  %67 = vadd.xlane.f32.xlu0 %v66
  %v68 = vpop.xlane.xlu0 %67
  %v69 = vsel %vm37, %v61, 0.0
  %70 = vadd.xlane.f32.xlu0 %v69
  %v71 = vpop.xlane.xlu0 %70
  %v72 = vsel %vm37, %v62, 0.0
  %73 = vadd.xlane.f32.xlu0 %v72
  %v74 = vpop.xlane.xlu0 %73
  %v75 = vmul.f32 %v65, %v50
  %v76 = vmul.f32 %v68, %v50
  %v77 = vmul.f32 %v71, %v50
  %v78 = vmul.f32 %v74, %v50
  %v79 = vadd.f32 %v75, 1e-05
  %v80 = vadd.f32 %v76, 1e-05
  %v81 = vadd.f32 %v77, 1e-05
  %v82 = vadd.f32 %v78, 1e-05
  %v83 = vrsqrt.pop %v79
  %v84 = vrsqrt.pop %v80
  %v85 = vrsqrt.pop %v81
  %v86 = vrsqrt.pop %v82
  %v87 = vmul.f32 %v55, %v83
  %v88 = vmul.f32 %v56, %v84
  %v89 = vmul.f32 %v57, %v85
  %v90 = vmul.f32 %v58, %v86
  %v92 = vlaneseq
  %v93 = vshrl.u32 %v92, 7
  %v94 = vsub.s32 0, %v93
  %v95 = vrot.slane %v35, %v94
  %v97 = vmul.f32 %v87, %v95
  %v98 = vmul.f32 %v88, %v95
  %v99 = vmul.f32 %v89, %v95
  %v100 = vmul.f32 %v90, %v95
  %v102 = vlaneseq
  %v103 = vshrl.u32 %v102, 7
  %v104 = vsub.s32 0, %v103
  %v105 = vrot.slane %v36, %v104
  %v107 = vadd.f32 %v97, %v105
  %v108 = vadd.f32 %v98, %v105
  %v109 = vadd.f32 %v99, %v105
  %v110 = vadd.f32 %v100, %v105
  %v111 = vld [vmem:[%s1] sm:$0xff]
  %v112 = vld [vmem:[%s1 + $0x8] sm:$0xff]
  %v113 = vld [vmem:[%s1 + $0x10] sm:$0xff]
  %v114 = vld [vmem:[%s1 + $0x18] sm:$0xff]
  %v115 = vld [vmem:[%s4] sm:$0xff]
  %v116 = vld [vmem:[%s4 + $0x8] sm:$0xff]
  %v117 = vld [vmem:[%s4 + $0x10] sm:$0xff]
  %v118 = vld [vmem:[%s4 + $0x18] sm:$0xff]
  %v119 = vld [vmem:[%s5] sm:$0x1]
  %v121 = vlaneseq
  %v122 = vshrl.u32 %v121, 7
  %v123 = vsub.s32 0, %v122
  %v124 = vrot.slane %v119, %v123
  %v127 = vsel %vm37, %v107, 0
  %v130 = vsel %vm37, %v108, 0
  %v133 = vsel %vm37, %v109, 0
  %v136 = vsel %vm37, %v110, 0
  %138 = vmatprep.subr.mxu0 0.0
  %139 = vmatpush1.msra.mxu0 %v115
  %140 = vmatprep.subr.mxu0 0.0
  %141 = vmatpush1.msra.mxu0 %v116
  %142 = vmatprep.subr.mxu0 0.0
  %143 = vmatpush1.msra.mxu0 %v117
  %144 = vmatprep.subr.mxu0 0.0
  %145 = vmatpush1.msra.mxu0 %v118
  %146 = vmatprep.subr.mxu0 0.0
  %147 = vmatpush1.msra.mxu0 0.0
  %148 = vmatprep.subr.mxu0 0.0
  %149 = vmatpush1.msra.mxu0 0.0
  %150 = vmatprep.subr.mxu0 0.0
  %151 = vmatpush1.msra.mxu0 0.0
  %152 = vmatprep.subr.mxu0 0.0
  %153 = vmatpush1.msra.mxu0 0.0
  %154 = vmatprep.subr.mxu0 0.0
  %155 = vmatpush1.msra.mxu0 0.0
  %156 = vmatprep.subr.mxu0 0.0
  %157 = vmatpush1.msra.mxu0 0.0
  %158 = vmatprep.subr.mxu0 0.0
  %159 = vmatpush1.msra.mxu0 0.0
  %160 = vmatprep.subr.mxu0 0.0
  %161 = vmatpush1.msra.mxu0 0.0
  %162 = vmatprep.subr.mxu0 0.0
  %163 = vmatpush1.msra.mxu0 0.0
  %164 = vmatprep.subr.mxu0 0.0
  %165 = vmatpush1.msra.mxu0 0.0
  %166 = vmatprep.subr.mxu0 0.0
  %167 = vmatpush1.msra.mxu0 0.0
  %168 = vmatprep.subr.mxu0 0.0
  %169 = vmatpush1.msra.mxu0 0.0
  %170 = vmatprep.subr.mxu0 0.0
  %171 = vmatpush1.msra.mxu0 0.0
  %172 = vmatprep.subr.mxu0 0.0
  %173 = vmatpush1.msra.mxu0 0.0
  %174 = vmatprep.subr.mxu0 0.0
  %175 = vmatpush1.msra.mxu0 0.0
  %176 = vmatprep.subr.mxu0 0.0
  %177 = vmatpush1.msra.mxu0 0.0
  %178 = vmatprep.subr.mxu0 0.0
  %179 = vmatpush1.msra.mxu0 0.0
  %180 = vmatprep.subr.mxu0 0.0
  %181 = vmatpush1.msra.mxu0 0.0
  %182 = vmatprep.subr.mxu0 0.0
  %183 = vmatpush1.msra.mxu0 0.0
  %184 = vmatprep.subr.mxu0 0.0
  %185 = vmatpush1.msra.mxu0 0.0
  %186 = vmatprep.subr.mxu0 0.0
  %187 = vmatpush1.msra.mxu0 0.0
  %188 = vmatprep.subr.mxu0 0.0
  %189 = vmatpush1.msra.mxu0 0.0
  %190 = vmatprep.subr.mxu0 0.0
  %191 = vmatpush1.msra.mxu0 0.0
  %192 = vmatprep.subr.mxu0 0.0
  %193 = vmatpush1.msra.mxu0 0.0
  %194 = vmatprep.subr.mxu0 0.0
  %195 = vmatpush1.msra.mxu0 0.0
  %196 = vmatprep.subr.mxu0 0.0
  %197 = vmatpush1.msra.mxu0 0.0
  %198 = vmatprep.subr.mxu0 0.0
  %199 = vmatpush1.msra.mxu0 0.0
  %200 = vmatprep.subr.mxu0 0.0
  %201 = vmatpush1.msra.mxu0 0.0
  %202 = vmatprep.mubr.f32.mxu0 0.0
  %203 = vmatmul.mubr.f32.gmra.mrb[0].mxu0 %v127
  %v204 = vpop.f32.mrb[0].mxu0
  %v205 = vadd.f32 %v124, %v204
  %v206 = vpop.f32.mrb[0].mxu0
  %207 = vmatprep.mubr.f32.mxu0 0.0
  %208 = vmatmul.mubr.f32.gmra.mrb[0].mxu0 %v130
  %v209 = vpop.f32.mrb[0].mxu0
  %v210 = vadd.f32 %v124, %v209
  %v211 = vpop.f32.mrb[0].mxu0
  %212 = vmatprep.mubr.f32.mxu0 0.0
  %213 = vmatmul.mubr.f32.gmra.mrb[0].mxu0 %v133
  %v214 = vpop.f32.mrb[0].mxu0
  %v215 = vadd.f32 %v124, %v214
  %v216 = vpop.f32.mrb[0].mxu0
  %217 = vmatprep.mubr.f32.mxu0 0.0
  %218 = vmatmul.mubr.f32.gmra.mrb[0].mxu0 %v136
  %v219 = vpop.f32.mrb[0].mxu0
  %v220 = vadd.f32 %v124, %v219
  %v221 = vpop.f32.mrb[0].mxu0
  %222 = vdwg.mxu0
  %224 = vset.pattern.permute.xlu0 0
  %225 = vperm.xlu0 %224, %v111
  %v226 = vpop.permute.xlu0 %225
  %229 = vset.pattern.permute.xlu0 0
  %230 = vperm.xlu0 %229, %v112
  %v231 = vpop.permute.xlu0 %230
  %234 = vset.pattern.permute.xlu0 0
  %235 = vperm.xlu0 %234, %v113
  %v236 = vpop.permute.xlu0 %235
  %239 = vset.pattern.permute.xlu0 0
  %240 = vperm.xlu0 %239, %v114
  %v241 = vpop.permute.xlu0 %240
  %v243 = vmul.f32 %v205, %v226
  %v244 = vmul.f32 %v210, %v231
  %v245 = vmul.f32 %v215, %v236
  %v246 = vmul.f32 %v220, %v241
  %v247 = vpack.c.bf16 %v244, %v243
  %v248 = vpack.c.bf16 %v246, %v245
  %v251 = vunpack.c.l.b16 %v247
  %v252 = vunpack.c.h.b16 %v247
  %v253 = vunpack.c.l.b16 %v248
  %v254 = vunpack.c.h.b16 %v248
  %v255 = vpack.c.b16 %v251, %v251
  %v256 = vpack.c.b16 %v252, %v252
  %v257 = vpack.c.b16 %v253, %v253
  %v258 = vpack.c.b16 %v254, %v254
  %vm263 = vcmask 60416
  %264 = vst.msk [vmem:[%s8] sm:$0xf] %vm263, %v255
  %265 = vst.msk [vmem:[%s8 + $0x4] sm:$0xf] %vm263, %v256
  %266 = vst.msk [vmem:[%s8 + $0x8] sm:$0xf] %vm263, %v257
  %267 = vst.msk [vmem:[%s8 + $0xc] sm:$0xf] %vm263, %v258
  %v268 = vld [vmem:[%s6] sm:$0xff]
  %v269 = vld [vmem:[%s6 + $0x8] sm:$0xff]
  %v270 = vld [vmem:[%s6 + $0x10] sm:$0xff]
  %v271 = vld [vmem:[%s6 + $0x18] sm:$0xff]
  %v272 = vld [vmem:[%s7] sm:$0x1]
  %v274 = vlaneseq
  %v275 = vshrl.u32 %v274, 7
  %v276 = vsub.s32 0, %v275
  %v277 = vrot.slane %v272, %v276
  %279 = vmatprep.subr.mxu0 0.0
  %280 = vmatpush1.msra.mxu0 %v268
  %281 = vmatprep.subr.mxu0 0.0
  %282 = vmatpush1.msra.mxu0 %v269
  %283 = vmatprep.subr.mxu0 0.0
  %284 = vmatpush1.msra.mxu0 %v270
  %285 = vmatprep.subr.mxu0 0.0
  %286 = vmatpush1.msra.mxu0 %v271
  %287 = vmatprep.subr.mxu0 0.0
  %288 = vmatpush1.msra.mxu0 0.0
  %289 = vmatprep.subr.mxu0 0.0
  %290 = vmatpush1.msra.mxu0 0.0
  %291 = vmatprep.subr.mxu0 0.0
  %292 = vmatpush1.msra.mxu0 0.0
  %293 = vmatprep.subr.mxu0 0.0
  %294 = vmatpush1.msra.mxu0 0.0
  %295 = vmatprep.subr.mxu0 0.0
  %296 = vmatpush1.msra.mxu0 0.0
  %297 = vmatprep.subr.mxu0 0.0
  %298 = vmatpush1.msra.mxu0 0.0
  %299 = vmatprep.subr.mxu0 0.0
  %300 = vmatpush1.msra.mxu0 0.0
  %301 = vmatprep.subr.mxu0 0.0
  %302 = vmatpush1.msra.mxu0 0.0
  %303 = vmatprep.subr.mxu0 0.0
  %304 = vmatpush1.msra.mxu0 0.0
  %305 = vmatprep.subr.mxu0 0.0
  %306 = vmatpush1.msra.mxu0 0.0
  %307 = vmatprep.subr.mxu0 0.0
  %308 = vmatpush1.msra.mxu0 0.0
  %309 = vmatprep.subr.mxu0 0.0
  %310 = vmatpush1.msra.mxu0 0.0
  %311 = vmatprep.subr.mxu0 0.0
  %312 = vmatpush1.msra.mxu0 0.0
  %313 = vmatprep.subr.mxu0 0.0
  %314 = vmatpush1.msra.mxu0 0.0
  %315 = vmatprep.subr.mxu0 0.0
  %316 = vmatpush1.msra.mxu0 0.0
  %317 = vmatprep.subr.mxu0 0.0
  %318 = vmatpush1.msra.mxu0 0.0
  %319 = vmatprep.subr.mxu0 0.0
  %320 = vmatpush1.msra.mxu0 0.0
  %321 = vmatprep.subr.mxu0 0.0
  %322 = vmatpush1.msra.mxu0 0.0
  %323 = vmatprep.subr.mxu0 0.0
  %324 = vmatpush1.msra.mxu0 0.0
  %325 = vmatprep.subr.mxu0 0.0
  %326 = vmatpush1.msra.mxu0 0.0
  %327 = vmatprep.subr.mxu0 0.0
  %328 = vmatpush1.msra.mxu0 0.0
  %329 = vmatprep.subr.mxu0 0.0
  %330 = vmatpush1.msra.mxu0 0.0
  %331 = vmatprep.subr.mxu0 0.0
  %332 = vmatpush1.msra.mxu0 0.0
  %333 = vmatprep.subr.mxu0 0.0
  %334 = vmatpush1.msra.mxu0 0.0
  %335 = vmatprep.subr.mxu0 0.0
  %336 = vmatpush1.msra.mxu0 0.0
  %337 = vmatprep.subr.mxu0 0.0
  %338 = vmatpush1.msra.mxu0 0.0
  %339 = vmatprep.subr.mxu0 0.0
  %340 = vmatpush1.msra.mxu0 0.0
  %341 = vmatprep.subr.mxu0 0.0
  %342 = vmatpush1.msra.mxu0 0.0
  %343 = vmatprep.mubr.f32.mxu0 0.0
  %344 = vmatmul.mubr.f32.gmra.mrb[0].mxu0 %v127
  %v345 = vpop.f32.mrb[0].mxu0
  %v346 = vadd.f32 %v277, %v345
  %v347 = vpop.f32.mrb[0].mxu0
  %348 = vmatprep.mubr.f32.mxu0 0.0
  %349 = vmatmul.mubr.f32.gmra.mrb[0].mxu0 %v130
  %v350 = vpop.f32.mrb[0].mxu0
  %v351 = vadd.f32 %v277, %v350
  %v352 = vpop.f32.mrb[0].mxu0
  %353 = vmatprep.mubr.f32.mxu0 0.0
  %354 = vmatmul.mubr.f32.gmra.mrb[0].mxu0 %v133
  %v355 = vpop.f32.mrb[0].mxu0
  %v356 = vadd.f32 %v277, %v355
  %v357 = vpop.f32.mrb[0].mxu0
  %358 = vmatprep.mubr.f32.mxu0 0.0
  %359 = vmatmul.mubr.f32.gmra.mrb[0].mxu0 %v136
  %v360 = vpop.f32.mrb[0].mxu0
  %v361 = vadd.f32 %v277, %v360
  %v362 = vpop.f32.mrb[0].mxu0
  %363 = vdwg.mxu0
  %v364 = vmul.f32 %v346, %v226
  %v365 = vmul.f32 %v351, %v231
  %v366 = vmul.f32 %v356, %v236
  %v367 = vmul.f32 %v361, %v241
  %v368 = vpack.c.bf16 %v365, %v364
  %v369 = vpack.c.bf16 %v367, %v366
  %v372 = vunpack.c.l.b16 %v368
  %v373 = vunpack.c.h.b16 %v368
  %v374 = vunpack.c.l.b16 %v369
  %v375 = vunpack.c.h.b16 %v369
  %v376 = vpack.c.b16 %v372, %v372
  %v377 = vpack.c.b16 %v373, %v373
  %v378 = vpack.c.b16 %v374, %v374
  %v379 = vpack.c.b16 %v375, %v375
  %384 = vst.msk [vmem:[%s9] sm:$0xf] %vm263, %v376
  %385 = vst.msk [vmem:[%s9 + $0x4] sm:$0xf] %vm263, %v377
  %386 = vst.msk [vmem:[%s9 + $0x8] sm:$0xf] %vm263, %v378
  %387 = vst.msk [vmem:[%s9 + $0xc] sm:$0xf] %vm263, %v379
  // Predicated region
  $region34: #{evoformer_stack_forward.41} parent=0 // pred_check
    _
  $region35: #{evoformer_stack_forward.41} parent=0 // pred_check_branch
    %389 = sbr.rel (0) target = $region37
  $region36: #{evoformer_stack_forward.41} parent=0 // pred_region
    _
  $region37: #{evoformer_stack_forward.41} parent=0 // pred_fallthru
    _
  // Predicated region
  $region38: #{evoformer_stack_forward.41} parent=0 // pred_check
    _
  $region39: #{evoformer_stack_forward.41} parent=0 // pred_check_branch
    %391 = sbr.rel (0) target = $region41
  $region40: #{evoformer_stack_forward.41} parent=0 // pred_region
    _
  $region41: #{evoformer_stack_forward.41} parent=0 // pred_fallthru
    _
  // Predicated region
  $region42: #{evoformer_stack_forward.41} parent=0 // pred_check
    _
  $region43: #{evoformer_stack_forward.41} parent=0 // pred_check_branch
    %393 = sbr.rel (0) target = $region45
  $region44: #{evoformer_stack_forward.41} parent=0 // pred_region
    _
  $region45: #{evoformer_stack_forward.41} parent=0 // pred_fallthru
    _
  // Predicated region
  $region46: #{evoformer_stack_forward.41} parent=0 // pred_check
    _
  $region47: #{evoformer_stack_forward.41} parent=0 // pred_check_branch
    %395 = sbr.rel (0) target = $region49
  $region48: #{evoformer_stack_forward.41} parent=0 // pred_region
    _
  $region49: #{evoformer_stack_forward.41} parent=0 // pred_fallthru
    _

// kernel: evoformer_stack_forward.42
$region0: #{evoformer_stack_forward.42}
  #allocation0 [shape = 'u32[]', space=smem, size = 0x4, offset = 0x4, fixed_abs, tag = 'smem constant byte address 0x4 - core index']
  #allocation1 [shape = 'u32[144,128]{1,0:T(1,128)}', space=vmem, size = 0x12000, scoped, tag = 'internal scratch']
  #allocation2 [shape = 'f32[64,64]{1,0:T(8,128)}', space=vmem, size = 0x8000, scoped, tag = 'scratch operand']
  %s0 = inlined_call_operand.vmem [shape: bf16[1,64,4], index: 0, kind: input, shape index: {}]
  %s1 = inlined_call_operand.vmem [shape: bf16[1,4,64], index: 1, kind: input, shape index: {}]
  %s2 = inlined_call_operand.vmem [shape: bf16[1,64,64], index: 2, kind: output, shape index: {}]
  %s3 = sld [smem:[#allocation0]]
  $region26: #{evoformer_stack_forward.42} parent=0
    _
  %s5 = ssub.s32 1, %s3
  %s6 = scalar_select 0, %s5, %s3
  // Predicated region
  $region2: #{evoformer_stack_forward.42} parent=0 // pred_check
    _
  $region3: #{evoformer_stack_forward.42} parent=0 // pred_check_branch
    %8 = sbr.rel (0) target = $region5
  $region4: #{evoformer_stack_forward.42} parent=0 // pred_region
    _
  $region5: #{evoformer_stack_forward.42} parent=0 // pred_fallthru
    _
  // Predicated region
  $region6: #{evoformer_stack_forward.42} parent=0 // pred_check
    _
  $region7: #{evoformer_stack_forward.42} parent=0 // pred_check_branch
    %10 = sbr.rel (0) target = $region9
  $region8: #{evoformer_stack_forward.42} parent=0 // pred_region
    _
  $region9: #{evoformer_stack_forward.42} parent=0 // pred_fallthru
    _
  %p12 = scmp.eq.s32.totalorder 0, 0
  // Predicated region
  $region10: #{evoformer_stack_forward.42} parent=0 // pred_check
    %p13 = pneg %p12
  $region11: #{evoformer_stack_forward.42} parent=0 // pred_check_branch
    %15 = sbr.rel (%p13) target = $region13
  $region12: #{evoformer_stack_forward.42} parent=0 // pred_region
    %vm16 = vcmask 523264
    %17 = vst.msk [vmem:[#allocation2] sm:$0xff] %vm16, 0.0
    %18 = vst.msk [vmem:[#allocation2 + $0x8] sm:$0xff] %vm16, 0.0
    %19 = vst.msk [vmem:[#allocation2 + $0x10] sm:$0xff] %vm16, 0.0
    %20 = vst.msk [vmem:[#allocation2 + $0x18] sm:$0xff] %vm16, 0.0
    %21 = vst.msk [vmem:[#allocation2 + $0x20] sm:$0xff] %vm16, 0.0
    %22 = vst.msk [vmem:[#allocation2 + $0x28] sm:$0xff] %vm16, 0.0
    %23 = vst.msk [vmem:[#allocation2 + $0x30] sm:$0xff] %vm16, 0.0
    %24 = vst.msk [vmem:[#allocation2 + $0x38] sm:$0xff] %vm16, 0.0
  $region13: #{evoformer_stack_forward.42} parent=0 // pred_fallthru
    _
  %v25 = vld [vmem:[#allocation2] sm:$0xff]
  %v26 = vld [vmem:[#allocation2 + $0x8] sm:$0xff]
  %v27 = vld [vmem:[#allocation2 + $0x10] sm:$0xff]
  %v28 = vld [vmem:[#allocation2 + $0x18] sm:$0xff]
  %v29 = vld [vmem:[#allocation2 + $0x20] sm:$0xff]
  %v30 = vld [vmem:[#allocation2 + $0x28] sm:$0xff]
  %v31 = vld [vmem:[#allocation2 + $0x30] sm:$0xff]
  %v32 = vld [vmem:[#allocation2 + $0x38] sm:$0xff]
  %v33 = vld [vmem:[%s0] sm:$0xf]
  %v34 = vld [vmem:[%s0 + $0x4] sm:$0xf]
  %v35 = vld [vmem:[%s0 + $0x8] sm:$0xf]
  %v36 = vld [vmem:[%s0 + $0xc] sm:$0xf]
  %v37 = vld [vmem:[%s0 + $0x10] sm:$0xf]
  %v38 = vld [vmem:[%s0 + $0x14] sm:$0xf]
  %v39 = vld [vmem:[%s0 + $0x18] sm:$0xf]
  %v40 = vld [vmem:[%s0 + $0x1c] sm:$0xf]
  %v41 = vld [vmem:[%s1] sm:$0x3]
  %v50 = vunpack.c.l.b16 %v33
  %v51 = vunpack.c.l.b16 %v34
  %v52 = vunpack.c.l.b16 %v35
  %v53 = vunpack.c.l.b16 %v36
  %v54 = vunpack.c.l.b16 %v37
  %v55 = vunpack.c.l.b16 %v38
  %v56 = vunpack.c.l.b16 %v39
  %v57 = vunpack.c.l.b16 %v40
  %v58 = vpack.c.b16 %v51, %v50
  %v59 = vpack.c.b16 %v53, %v52
  %v60 = vpack.c.b16 %v55, %v54
  %v61 = vpack.c.b16 %v57, %v56
  %vm62 = vcmask 31744
  %v64 = vsel %vm62, %v58, 0
  %v67 = vsel %vm62, %v59, 0
  %v70 = vsel %vm62, %v60, 0
  %v73 = vsel %vm62, %v61, 0
  %vm75 = vcmask 1041408
  %v77 = vsel %vm75, %v41, 0
  %79 = vmatprep.subr.bf16.mxu0 0
  %80 = vmatpush1.bf16.msra.mxu0 %v77
  %81 = vmatprep.subr.bf16.mxu0 0
  %82 = vmatpush1.bf16.msra.mxu0 0
  %83 = vmatprep.subr.bf16.mxu0 0
  %84 = vmatpush1.bf16.msra.mxu0 0
  %85 = vmatprep.subr.bf16.mxu0 0
  %86 = vmatpush1.bf16.msra.mxu0 0
  %87 = vmatprep.subr.bf16.mxu0 0
  %88 = vmatpush1.bf16.msra.mxu0 0
  %89 = vmatprep.subr.bf16.mxu0 0
  %90 = vmatpush1.bf16.msra.mxu0 0
  %91 = vmatprep.subr.bf16.mxu0 0
  %92 = vmatpush1.bf16.msra.mxu0 0
  %93 = vmatprep.subr.bf16.mxu0 0
  %94 = vmatpush1.bf16.msra.mxu0 0
  %95 = vmatprep.subr.bf16.mxu0 0
  %96 = vmatpush1.bf16.msra.mxu0 0
  %97 = vmatprep.subr.bf16.mxu0 0
  %98 = vmatpush1.bf16.msra.mxu0 0
  %99 = vmatprep.subr.bf16.mxu0 0
  %100 = vmatpush1.bf16.msra.mxu0 0
  %101 = vmatprep.subr.bf16.mxu0 0
  %102 = vmatpush1.bf16.msra.mxu0 0
  %103 = vmatprep.subr.bf16.mxu0 0
  %104 = vmatpush1.bf16.msra.mxu0 0
  %105 = vmatprep.subr.bf16.mxu0 0
  %106 = vmatpush1.bf16.msra.mxu0 0
  %107 = vmatprep.subr.bf16.mxu0 0
  %108 = vmatpush1.bf16.msra.mxu0 0
  %109 = vmatprep.subr.bf16.mxu0 0
  %110 = vmatpush1.bf16.msra.mxu0 0
  %111 = vmatprep.mubr.bf16.mxu0 0
  %112 = vmatmul.mubr.bf16.gmra.mrb[0].mxu0 %v64
  %v113 = vpop.f32.mrb[0].mxu0
  %v114 = vadd.f32 0.0, %v113
  %v115 = vpop.f32.mrb[0].mxu0
  %v116 = vpop.f32.mrb[0].mxu0
  %v117 = vadd.f32 0.0, %v116
  %v118 = vpop.f32.mrb[0].mxu0
  %119 = vmatprep.mubr.bf16.mxu0 0
  %120 = vmatmul.mubr.bf16.gmra.mrb[0].mxu0 %v67
  %v121 = vpop.f32.mrb[0].mxu0
  %v122 = vadd.f32 0.0, %v121
  %v123 = vpop.f32.mrb[0].mxu0
  %v124 = vpop.f32.mrb[0].mxu0
  %v125 = vadd.f32 0.0, %v124
  %v126 = vpop.f32.mrb[0].mxu0
  %127 = vmatprep.mubr.bf16.mxu0 0
  %128 = vmatmul.mubr.bf16.gmra.mrb[0].mxu0 %v70
  %v129 = vpop.f32.mrb[0].mxu0
  %v130 = vadd.f32 0.0, %v129
  %v131 = vpop.f32.mrb[0].mxu0
  %v132 = vpop.f32.mrb[0].mxu0
  %v133 = vadd.f32 0.0, %v132
  %v134 = vpop.f32.mrb[0].mxu0
  %135 = vmatprep.mubr.bf16.mxu0 0
  %136 = vmatmul.mubr.bf16.gmra.mrb[0].mxu0 %v73
  %v137 = vpop.f32.mrb[0].mxu0
  %v138 = vadd.f32 0.0, %v137
  %v139 = vpop.f32.mrb[0].mxu0
  %v140 = vpop.f32.mrb[0].mxu0
  %v141 = vadd.f32 0.0, %v140
  %v142 = vpop.f32.mrb[0].mxu0
  %143 = vdwg.mxu0
  %v144 = vadd.f32 %v25, %v114
  %v145 = vadd.f32 %v26, %v117
  %v146 = vadd.f32 %v27, %v122
  %v147 = vadd.f32 %v28, %v125
  %v148 = vadd.f32 %v29, %v130
  %v149 = vadd.f32 %v30, %v133
  %v150 = vadd.f32 %v31, %v138
  %v151 = vadd.f32 %v32, %v141
  %vm152 = vcmask 523264
  %153 = vst.msk [vmem:[#allocation2] sm:$0xff] %vm152, %v144
  %154 = vst.msk [vmem:[#allocation2 + $0x8] sm:$0xff] %vm152, %v145
  %155 = vst.msk [vmem:[#allocation2 + $0x10] sm:$0xff] %vm152, %v146
  %156 = vst.msk [vmem:[#allocation2 + $0x18] sm:$0xff] %vm152, %v147
  %157 = vst.msk [vmem:[#allocation2 + $0x20] sm:$0xff] %vm152, %v148
  %158 = vst.msk [vmem:[#allocation2 + $0x28] sm:$0xff] %vm152, %v149
  %159 = vst.msk [vmem:[#allocation2 + $0x30] sm:$0xff] %vm152, %v150
  %160 = vst.msk [vmem:[#allocation2 + $0x38] sm:$0xff] %vm152, %v151
  // Predicated region
  $region14: #{evoformer_stack_forward.42} parent=0 // pred_check
    %p161 = pneg %p12
  $region15: #{evoformer_stack_forward.42} parent=0 // pred_check_branch
    %163 = sbr.rel (%p161) target = $region17
  $region16: #{evoformer_stack_forward.42} parent=0 // pred_region
    %v164 = vld [vmem:[#allocation2] sm:$0xff]
    %v165 = vld [vmem:[#allocation2 + $0x8] sm:$0xff]
    %v166 = vld [vmem:[#allocation2 + $0x10] sm:$0xff]
    %v167 = vld [vmem:[#allocation2 + $0x18] sm:$0xff]
    %v168 = vld [vmem:[#allocation2 + $0x20] sm:$0xff]
    %v169 = vld [vmem:[#allocation2 + $0x28] sm:$0xff]
    %v170 = vld [vmem:[#allocation2 + $0x30] sm:$0xff]
    %v171 = vld [vmem:[#allocation2 + $0x38] sm:$0xff]
    %v172 = vpack.c.bf16 %v165, %v164
    %v173 = vpack.c.bf16 %v167, %v166
    %v174 = vpack.c.bf16 %v169, %v168
    %v175 = vpack.c.bf16 %v171, %v170
    %v180 = vunpack.c.l.b16 %v172
    %v181 = vunpack.c.h.b16 %v172
    %v182 = vunpack.c.l.b16 %v173
    %v183 = vunpack.c.h.b16 %v173
    %v184 = vunpack.c.l.b16 %v174
    %v185 = vunpack.c.h.b16 %v174
    %v186 = vunpack.c.l.b16 %v175
    %v187 = vunpack.c.h.b16 %v175
    %v188 = vpack.c.b16 %v180, %v180
    %v189 = vpack.c.b16 %v181, %v181
    %v190 = vpack.c.b16 %v182, %v182
    %v191 = vpack.c.b16 %v183, %v183
    %v192 = vpack.c.b16 %v184, %v184
    %v193 = vpack.c.b16 %v185, %v185
    %v194 = vpack.c.b16 %v186, %v186
    %v195 = vpack.c.b16 %v187, %v187
    %vm204 = vcmask 519168
    %205 = vst.msk [vmem:[%s2] sm:$0xf] %vm204, %v188
    %206 = vst.msk [vmem:[%s2 + $0x4] sm:$0xf] %vm204, %v189
    %207 = vst.msk [vmem:[%s2 + $0x8] sm:$0xf] %vm204, %v190
    %208 = vst.msk [vmem:[%s2 + $0xc] sm:$0xf] %vm204, %v191
    %209 = vst.msk [vmem:[%s2 + $0x10] sm:$0xf] %vm204, %v192
    %210 = vst.msk [vmem:[%s2 + $0x14] sm:$0xf] %vm204, %v193
    %211 = vst.msk [vmem:[%s2 + $0x18] sm:$0xf] %vm204, %v194
    %212 = vst.msk [vmem:[%s2 + $0x1c] sm:$0xf] %vm204, %v195
  $region17: #{evoformer_stack_forward.42} parent=0 // pred_fallthru
    _
  // Predicated region
  $region18: #{evoformer_stack_forward.42} parent=0 // pred_check
    _
  $region19: #{evoformer_stack_forward.42} parent=0 // pred_check_branch
    %214 = sbr.rel (0) target = $region21
  $region20: #{evoformer_stack_forward.42} parent=0 // pred_region
    _
  $region21: #{evoformer_stack_forward.42} parent=0 // pred_fallthru
    _
  // Predicated region
  $region22: #{evoformer_stack_forward.42} parent=0 // pred_check
    _
  $region23: #{evoformer_stack_forward.42} parent=0 // pred_check_branch
    %216 = sbr.rel (0) target = $region25
  $region24: #{evoformer_stack_forward.42} parent=0 // pred_region
    _
  $region25: #{evoformer_stack_forward.42} parent=0 // pred_fallthru
    _

// kernel: evoformer_stack_forward.43
$region0: #{evoformer_stack_forward.43}
  #allocation0 [shape = 'u32[]', space=smem, size = 0x4, offset = 0x4, fixed_abs, tag = 'smem constant byte address 0x4 - core index']
  #allocation1 [shape = 'u32[144,128]{1,0:T(1,128)}', space=vmem, size = 0x12000, scoped, tag = 'internal scratch']
  %s0 = inlined_call_operand.vmem [shape: bf16[64,64], index: 0, kind: input, shape index: {}]
  %s1 = inlined_call_operand.vmem [shape: f32[64,1], index: 1, kind: input, shape index: {}]
  %s2 = inlined_call_operand.vmem [shape: f32[64,16], index: 2, kind: input, shape index: {}]
  %s3 = inlined_call_operand.vmem [shape: f32[1,16], index: 3, kind: input, shape index: {}]
  %s4 = inlined_call_operand.vmem [shape: f32[64,16], index: 4, kind: output, shape index: {}]
  %s5 = sld [smem:[#allocation0]]
  $region26: #{evoformer_stack_forward.43} parent=0
    _
  %s7 = ssub.s32 1, %s5
  %s8 = scalar_select 0, %s7, %s5
  // Predicated region
  $region2: #{evoformer_stack_forward.43} parent=0 // pred_check
    _
  $region3: #{evoformer_stack_forward.43} parent=0 // pred_check_branch
    %10 = sbr.rel (0) target = $region5
  $region4: #{evoformer_stack_forward.43} parent=0 // pred_region
    _
  $region5: #{evoformer_stack_forward.43} parent=0 // pred_fallthru
    _
  // Predicated region
  $region6: #{evoformer_stack_forward.43} parent=0 // pred_check
    _
  $region7: #{evoformer_stack_forward.43} parent=0 // pred_check_branch
    %12 = sbr.rel (0) target = $region9
  $region8: #{evoformer_stack_forward.43} parent=0 // pred_region
    _
  $region9: #{evoformer_stack_forward.43} parent=0 // pred_fallthru
    _
  // Predicated region
  $region10: #{evoformer_stack_forward.43} parent=0 // pred_check
    _
  $region11: #{evoformer_stack_forward.43} parent=0 // pred_check_branch
    %14 = sbr.rel (0) target = $region13
  $region12: #{evoformer_stack_forward.43} parent=0 // pred_region
    _
  $region13: #{evoformer_stack_forward.43} parent=0 // pred_fallthru
    _
  // Predicated region
  $region14: #{evoformer_stack_forward.43} parent=0 // pred_check
    _
  $region15: #{evoformer_stack_forward.43} parent=0 // pred_check_branch
    %16 = sbr.rel (0) target = $region17
  $region16: #{evoformer_stack_forward.43} parent=0 // pred_region
    _
  $region17: #{evoformer_stack_forward.43} parent=0 // pred_fallthru
    _
  %v17 = vld [vmem:[%s0] sm:$0xf]
  %v18 = vld [vmem:[%s0 + $0x4] sm:$0xf]
  %v19 = vld [vmem:[%s0 + $0x8] sm:$0xf]
  %v20 = vld [vmem:[%s0 + $0xc] sm:$0xf]
  %v21 = vld [vmem:[%s0 + $0x10] sm:$0xf]
  %v22 = vld [vmem:[%s0 + $0x14] sm:$0xf]
  %v23 = vld [vmem:[%s0 + $0x18] sm:$0xf]
  %v24 = vld [vmem:[%s0 + $0x1c] sm:$0xf]
  %v25 = vunpack.c.l.bf16 %v17
  %v26 = vunpack.c.l.bf16 %v18
  %v27 = vunpack.c.l.bf16 %v19
  %v28 = vunpack.c.l.bf16 %v20
  %v29 = vunpack.c.l.bf16 %v21
  %v30 = vunpack.c.l.bf16 %v22
  %v31 = vunpack.c.l.bf16 %v23
  %v32 = vunpack.c.l.bf16 %v24
  %v33 = vld [vmem:[%s2] sm:$0xff]
  %v34 = vld [vmem:[%s2 + $0x8] sm:$0xff]
  %v35 = vld [vmem:[%s2 + $0x10] sm:$0xff]
  %v36 = vld [vmem:[%s2 + $0x18] sm:$0xff]
  %v37 = vld [vmem:[%s2 + $0x20] sm:$0xff]
  %v38 = vld [vmem:[%s2 + $0x28] sm:$0xff]
  %v39 = vld [vmem:[%s2 + $0x30] sm:$0xff]
  %v40 = vld [vmem:[%s2 + $0x38] sm:$0xff]
  %v41 = vld [vmem:[%s3] sm:$0x1]
  %v43 = vlaneseq
  %v44 = vshrl.u32 %v43, 7
  %v45 = vsub.s32 0, %v44
  %v46 = vrot.slane %v41, %v45
  %vm48 = vcmask 523264
  %v50 = vsel %vm48, %v25, 0
  %v53 = vsel %vm48, %v26, 0
  %v56 = vsel %vm48, %v27, 0
  %v59 = vsel %vm48, %v28, 0
  %v62 = vsel %vm48, %v29, 0
  %v65 = vsel %vm48, %v30, 0
  %v68 = vsel %vm48, %v31, 0
  %v71 = vsel %vm48, %v32, 0
  %73 = vmatprep.subr.mxu0 0.0
  %74 = vmatpush1.msra.mxu0 %v33
  %75 = vmatprep.subr.mxu0 0.0
  %76 = vmatpush1.msra.mxu0 %v34
  %77 = vmatprep.subr.mxu0 0.0
  %78 = vmatpush1.msra.mxu0 %v35
  %79 = vmatprep.subr.mxu0 0.0
  %80 = vmatpush1.msra.mxu0 %v36
  %81 = vmatprep.subr.mxu0 0.0
  %82 = vmatpush1.msra.mxu0 %v37
  %83 = vmatprep.subr.mxu0 0.0
  %84 = vmatpush1.msra.mxu0 %v38
  %85 = vmatprep.subr.mxu0 0.0
  %86 = vmatpush1.msra.mxu0 %v39
  %87 = vmatprep.subr.mxu0 0.0
  %88 = vmatpush1.msra.mxu0 %v40
  %89 = vmatprep.subr.mxu0 0.0
  %90 = vmatpush1.msra.mxu0 0.0
  %91 = vmatprep.subr.mxu0 0.0
  %92 = vmatpush1.msra.mxu0 0.0
  %93 = vmatprep.subr.mxu0 0.0
  %94 = vmatpush1.msra.mxu0 0.0
  %95 = vmatprep.subr.mxu0 0.0
  %96 = vmatpush1.msra.mxu0 0.0
  %97 = vmatprep.subr.mxu0 0.0
  %98 = vmatpush1.msra.mxu0 0.0
  %99 = vmatprep.subr.mxu0 0.0
  %100 = vmatpush1.msra.mxu0 0.0
  %101 = vmatprep.subr.mxu0 0.0
  %102 = vmatpush1.msra.mxu0 0.0
  %103 = vmatprep.subr.mxu0 0.0
  %104 = vmatpush1.msra.mxu0 0.0
  %105 = vmatprep.subr.mxu0 0.0
  %106 = vmatpush1.msra.mxu0 0.0
  %107 = vmatprep.subr.mxu0 0.0
  %108 = vmatpush1.msra.mxu0 0.0
  %109 = vmatprep.subr.mxu0 0.0
  %110 = vmatpush1.msra.mxu0 0.0
  %111 = vmatprep.subr.mxu0 0.0
  %112 = vmatpush1.msra.mxu0 0.0
  %113 = vmatprep.subr.mxu0 0.0
  %114 = vmatpush1.msra.mxu0 0.0
  %115 = vmatprep.subr.mxu0 0.0
  %116 = vmatpush1.msra.mxu0 0.0
  %117 = vmatprep.subr.mxu0 0.0
  %118 = vmatpush1.msra.mxu0 0.0
  %119 = vmatprep.subr.mxu0 0.0
  %120 = vmatpush1.msra.mxu0 0.0
  %121 = vmatprep.subr.mxu0 0.0
  %122 = vmatpush1.msra.mxu0 0.0
  %123 = vmatprep.subr.mxu0 0.0
  %124 = vmatpush1.msra.mxu0 0.0
  %125 = vmatprep.subr.mxu0 0.0
  %126 = vmatpush1.msra.mxu0 0.0
  %127 = vmatprep.subr.mxu0 0.0
  %128 = vmatpush1.msra.mxu0 0.0
  %129 = vmatprep.subr.mxu0 0.0
  %130 = vmatpush1.msra.mxu0 0.0
  %131 = vmatprep.subr.mxu0 0.0
  %132 = vmatpush1.msra.mxu0 0.0
  %133 = vmatprep.subr.mxu0 0.0
  %134 = vmatpush1.msra.mxu0 0.0
  %135 = vmatprep.subr.mxu0 0.0
  %136 = vmatpush1.msra.mxu0 0.0
  %137 = vmatprep.mubr.f32.mxu0 0.0
  %138 = vmatmul.mubr.f32.gmra.mrb[0].mxu0 %v50
  %v139 = vpop.f32.mrb[0].mxu0
  %v140 = vadd.f32 %v46, %v139
  %v141 = vpop.f32.mrb[0].mxu0
  %142 = vmatprep.mubr.f32.mxu0 0.0
  %143 = vmatmul.mubr.f32.gmra.mrb[0].mxu0 %v53
  %v144 = vpop.f32.mrb[0].mxu0
  %v145 = vadd.f32 %v46, %v144
  %v146 = vpop.f32.mrb[0].mxu0
  %147 = vmatprep.mubr.f32.mxu0 0.0
  %148 = vmatmul.mubr.f32.gmra.mrb[0].mxu0 %v56
  %v149 = vpop.f32.mrb[0].mxu0
  %v150 = vadd.f32 %v46, %v149
  %v151 = vpop.f32.mrb[0].mxu0
  %152 = vmatprep.mubr.f32.mxu0 0.0
  %153 = vmatmul.mubr.f32.gmra.mrb[0].mxu0 %v59
  %v154 = vpop.f32.mrb[0].mxu0
  %v155 = vadd.f32 %v46, %v154
  %v156 = vpop.f32.mrb[0].mxu0
  %157 = vmatprep.mubr.f32.mxu0 0.0
  %158 = vmatmul.mubr.f32.gmra.mrb[0].mxu0 %v62
  %v159 = vpop.f32.mrb[0].mxu0
  %v160 = vadd.f32 %v46, %v159
  %v161 = vpop.f32.mrb[0].mxu0
  %162 = vmatprep.mubr.f32.mxu0 0.0
  %163 = vmatmul.mubr.f32.gmra.mrb[0].mxu0 %v65
  %v164 = vpop.f32.mrb[0].mxu0
  %v165 = vadd.f32 %v46, %v164
  %v166 = vpop.f32.mrb[0].mxu0
  %167 = vmatprep.mubr.f32.mxu0 0.0
  %168 = vmatmul.mubr.f32.gmra.mrb[0].mxu0 %v68
  %v169 = vpop.f32.mrb[0].mxu0
  %v170 = vadd.f32 %v46, %v169
  %v171 = vpop.f32.mrb[0].mxu0
  %172 = vmatprep.mubr.f32.mxu0 0.0
  %173 = vmatmul.mubr.f32.gmra.mrb[0].mxu0 %v71
  %v174 = vpop.f32.mrb[0].mxu0
  %v175 = vadd.f32 %v46, %v174
  %v176 = vpop.f32.mrb[0].mxu0
  %177 = vdwg.mxu0
  %v178 = vld [vmem:[%s1] sm:$0xff]
  %v179 = vld [vmem:[%s1 + $0x8] sm:$0xff]
  %v180 = vld [vmem:[%s1 + $0x10] sm:$0xff]
  %v181 = vld [vmem:[%s1 + $0x18] sm:$0xff]
  %v182 = vld [vmem:[%s1 + $0x20] sm:$0xff]
  %v183 = vld [vmem:[%s1 + $0x28] sm:$0xff]
  %v184 = vld [vmem:[%s1 + $0x30] sm:$0xff]
  %v185 = vld [vmem:[%s1 + $0x38] sm:$0xff]
  %187 = vset.pattern.permute.xlu0 0
  %188 = vperm.xlu0 %187, %v178
  %v189 = vpop.permute.xlu0 %188
  %192 = vset.pattern.permute.xlu0 0
  %193 = vperm.xlu0 %192, %v179
  %v194 = vpop.permute.xlu0 %193
  %197 = vset.pattern.permute.xlu0 0
  %198 = vperm.xlu0 %197, %v180
  %v199 = vpop.permute.xlu0 %198
  %202 = vset.pattern.permute.xlu0 0
  %203 = vperm.xlu0 %202, %v181
  %v204 = vpop.permute.xlu0 %203
  %207 = vset.pattern.permute.xlu0 0
  %208 = vperm.xlu0 %207, %v182
  %v209 = vpop.permute.xlu0 %208
  %212 = vset.pattern.permute.xlu0 0
  %213 = vperm.xlu0 %212, %v183
  %v214 = vpop.permute.xlu0 %213
  %217 = vset.pattern.permute.xlu0 0
  %218 = vperm.xlu0 %217, %v184
  %v219 = vpop.permute.xlu0 %218
  %222 = vset.pattern.permute.xlu0 0
  %223 = vperm.xlu0 %222, %v185
  %v224 = vpop.permute.xlu0 %223
  %v226 = vmul.f32 %v140, %v189
  %v227 = vmul.f32 %v145, %v194
  %v228 = vmul.f32 %v150, %v199
  %v229 = vmul.f32 %v155, %v204
  %v230 = vmul.f32 %v160, %v209
  %v231 = vmul.f32 %v165, %v214
  %v232 = vmul.f32 %v170, %v219
  %v233 = vmul.f32 %v175, %v224
  %vm234 = vcmask 130048
  %235 = vst.msk [vmem:[%s4] sm:$0xff] %vm234, %v226
  %236 = vst.msk [vmem:[%s4 + $0x8] sm:$0xff] %vm234, %v227
  %237 = vst.msk [vmem:[%s4 + $0x10] sm:$0xff] %vm234, %v228
  %238 = vst.msk [vmem:[%s4 + $0x18] sm:$0xff] %vm234, %v229
  %239 = vst.msk [vmem:[%s4 + $0x20] sm:$0xff] %vm234, %v230
  %240 = vst.msk [vmem:[%s4 + $0x28] sm:$0xff] %vm234, %v231
  %241 = vst.msk [vmem:[%s4 + $0x30] sm:$0xff] %vm234, %v232
  %242 = vst.msk [vmem:[%s4 + $0x38] sm:$0xff] %vm234, %v233
  // Predicated region
  $region18: #{evoformer_stack_forward.43} parent=0 // pred_check
    _
  $region19: #{evoformer_stack_forward.43} parent=0 // pred_check_branch
    %244 = sbr.rel (0) target = $region21
  $region20: #{evoformer_stack_forward.43} parent=0 // pred_region
    _
  $region21: #{evoformer_stack_forward.43} parent=0 // pred_fallthru
    _
  // Predicated region
  $region22: #{evoformer_stack_forward.43} parent=0 // pred_check
    _
  $region23: #{evoformer_stack_forward.43} parent=0 // pred_check_branch
    %246 = sbr.rel (0) target = $region25
  $region24: #{evoformer_stack_forward.43} parent=0 // pred_region
    _
  $region25: #{evoformer_stack_forward.43} parent=0 // pred_fallthru
    _

// kernel: evoformer_stack_forward.45
$region0: #{evoformer_stack_forward.45}
  #allocation0 [shape = 'u32[]', space=smem, size = 0x4, offset = 0x4, fixed_abs, tag = 'smem constant byte address 0x4 - core index']
  #allocation1 [shape = 'u32[144,128]{1,0:T(1,128)}', space=vmem, size = 0x12000, scoped, tag = 'internal scratch']
  #allocation2 [shape = 'f32[8,8]{1,0:T(8,128)}', space=vmem, size = 0x1000, scoped, tag = 'scratch operand']
  %s0 = inlined_call_operand.vmem [shape: bf16[16,8,8], index: 0, kind: input, shape index: {}]
  %s1 = inlined_call_operand.vmem [shape: bf16[16,8,8], index: 1, kind: input, shape index: {}]
  %s2 = inlined_call_operand.vmem [shape: bf16[16,8,8], index: 2, kind: output, shape index: {}]
  %s3 = sld [smem:[#allocation0]]
  $region49: #{evoformer_stack_forward.45} parent=0
    _
  %s5 = ssub.s32 1, %s3
  %s6 = scalar_select 0, %s5, %s3
  loop: start=0, step=1, limit=18
  $region2: #{evoformer_stack_forward.45} parent=0 // loop_pre_header
    _
  $region3: #{evoformer_stack_forward.45} parent=0 // loop_header
    %s8 = sphi 0, %s12
    %p9 = scmp.ge.s32.totalorder %s8, 18
    %s15 = sphi 0, %s41
    %s16 = sphi 0, %s37
    %s17 = sphi 0, %s33
    %s18 = sphi 0, %s29
    %s19 = sphi 0, %s15
    %s20 = sphi 0, %s16
    %s21 = sphi 0, %s17
    %s22 = sphi 0, %s18
    %s23 = sphi 0, %s19
    %s24 = sphi 0, %s20
    %s25 = sphi 0, %s21
    %s26 = sphi 0, %s22
    %s48 = sphi 0, %s50
    %s51 = sphi 0, %s48
    %s52 = sphi 0, %s51
    %s68 = sphi 0, %s52
    %s78 = sphi 0, %s80
    %s81 = sphi 0, %s78
    %s82 = sphi 0, %s81
    %s98 = sphi 0, %s82
    %s108 = sphi 0, %s110
    %s111 = sphi 0, %s108
    %s112 = sphi 0, %s111
    %s128 = sphi 0, %s112
  $region4: #{evoformer_stack_forward.45} parent=0 // loop_header_branch
    %11 = sbr.rel (%p9) target = $region8
  $region5: #{evoformer_stack_forward.45} parent=0 // loop_body
    %s13 = ssub.s32 %s8, 1
    %s14 = ssub.s32 %s8, 2
    %s27 = sadd.s32 1, %s18
    %p28 = scmp.ge.s32.totalorder %s27, 1
    %s29 = scalar_select %p28, 0, %s27
    %s30 = sadd.s32 1, %s17
    %s31 = scalar_select %p28, %s30, %s17
    %p32 = scmp.ge.s32.totalorder %s31, 1
    %s33 = scalar_select %p32, 0, %s31
    %s34 = sadd.s32 1, %s16
    %s35 = scalar_select %p32, %s34, %s16
    %p36 = scmp.ge.s32.totalorder %s35, 1
    %s37 = scalar_select %p36, 0, %s35
    %s38 = sadd.s32 1, %s15
    %s39 = scalar_select %p36, %s38, %s15
    %p40 = scmp.ge.s32.totalorder %s39, 16
    %s41 = scalar_select %p40, 0, %s39
    %s42 = ssub.s32 %s15, %s41
    %s43 = ssub.s32 %s16, %s37
    %s44 = sor.u32 %s42, %s43
    %s45 = ssub.s32 %s18, %s29
    %s46 = sor.u32 %s44, %s45
    %p47 = scmp.eq.s32.totalorder %s46, 0
    %s49 = sadd.s32 %s48, 1
    %s50 = scalar_select %p47, %s48, %s49
    %p53 = pneg %p47
    %p54 = scmp.eq.s32.totalorder %s8, 15
    %p55 = por %p53, %p54
    %p56 = scmp.ne.s32.totalorder %s48, %s51
    %p57 = scmp.eq.s32.totalorder %s8, 0
    %p58 = por %p56, %p57
    %p59 = scmp.ne.s32.totalorder %s48, %s51
    %p60 = scmp.eq.s32.totalorder %s13, 15
    %p61 = por %p59, %p60
    %p62 = scmp.ne.s32.totalorder %s51, %s52
    %p63 = scmp.eq.s32.totalorder %s13, 0
    %p64 = por %p62, %p63
    %p65 = scmp.ne.s32.totalorder %s51, %s52
    %p66 = scmp.eq.s32.totalorder %s14, 15
    %p67 = por %p65, %p66
    %p69 = scmp.ne.s32.totalorder %s52, %s68
    %p70 = scmp.eq.s32.totalorder %s14, 0
    %p71 = por %p69, %p70
    %s72 = ssub.s32 %s15, %s41
    %s73 = ssub.s32 %s18, %s29
    %s74 = sor.u32 %s72, %s73
    %s75 = ssub.s32 %s17, %s33
    %s76 = sor.u32 %s74, %s75
    %p77 = scmp.eq.s32.totalorder %s76, 0
    %s79 = sadd.s32 %s78, 1
    %s80 = scalar_select %p77, %s78, %s79
    %p83 = pneg %p77
    %p84 = scmp.eq.s32.totalorder %s8, 15
    %p85 = por %p83, %p84
    %p86 = scmp.ne.s32.totalorder %s78, %s81
    %p87 = scmp.eq.s32.totalorder %s8, 0
    %p88 = por %p86, %p87
    %p89 = scmp.ne.s32.totalorder %s78, %s81
    %p90 = scmp.eq.s32.totalorder %s13, 15
    %p91 = por %p89, %p90
    %p92 = scmp.ne.s32.totalorder %s81, %s82
    %p93 = scmp.eq.s32.totalorder %s13, 0
    %p94 = por %p92, %p93
    %p95 = scmp.ne.s32.totalorder %s81, %s82
    %p96 = scmp.eq.s32.totalorder %s14, 15
    %p97 = por %p95, %p96
    %p99 = scmp.ne.s32.totalorder %s82, %s98
    %p100 = scmp.eq.s32.totalorder %s14, 0
    %p101 = por %p99, %p100
    %s102 = ssub.s32 %s15, %s41
    %s103 = ssub.s32 %s16, %s37
    %s104 = sor.u32 %s102, %s103
    %s105 = ssub.s32 %s17, %s33
    %s106 = sor.u32 %s104, %s105
    %p107 = scmp.eq.s32.totalorder %s106, 0
    %s109 = sadd.s32 %s108, 1
    %s110 = scalar_select %p107, %s108, %s109
    %p113 = pneg %p107
    %p114 = scmp.eq.s32.totalorder %s8, 15
    %p115 = por %p113, %p114
    %p116 = scmp.ne.s32.totalorder %s108, %s111
    %p117 = scmp.eq.s32.totalorder %s8, 0
    %p118 = por %p116, %p117
    %p119 = scmp.ne.s32.totalorder %s108, %s111
    %p120 = scmp.eq.s32.totalorder %s13, 15
    %p121 = por %p119, %p120
    %p122 = scmp.ne.s32.totalorder %s111, %s112
    %p123 = scmp.eq.s32.totalorder %s13, 0
    %p124 = por %p122, %p123
    %p125 = scmp.ne.s32.totalorder %s111, %s112
    %p126 = scmp.eq.s32.totalorder %s14, 15
    %p127 = por %p125, %p126
    %p129 = scmp.ne.s32.totalorder %s112, %s128
    %p130 = scmp.eq.s32.totalorder %s14, 0
    %p131 = por %p129, %p130
    %p132 = scmp.le.s32.totalorder 1, %s8
    %p133 = scmp.lt.s32.totalorder %s8, 17
    %p134 = pnand %p132, %p133
    %p135 = pneg %p134
    // Predicated region
    $region9: #{evoformer_stack_forward.45} parent=5 // pred_check
      _
    $region10: #{evoformer_stack_forward.45} parent=5 // pred_check_branch
      %137 = sbr.rel (%p134) target = $region12
    $region11: #{evoformer_stack_forward.45} parent=5 // pred_region
      %s138 = ssub.s32 %s8, 1
    $region12: #{evoformer_stack_forward.45} parent=5 // pred_fallthru
      _
    %p139 = scmp.lt.s32.totalorder %s8, 16
    // Predicated region
    $region13: #{evoformer_stack_forward.45} parent=5 // pred_check
      %p140 = pneg %p139
    $region14: #{evoformer_stack_forward.45} parent=5 // pred_check_branch
      %142 = sbr.rel (%p140) target = $region16
    $region15: #{evoformer_stack_forward.45} parent=5 // pred_region
      // Predicated region
      $region17: #{evoformer_stack_forward.45} parent=15 // pred_check
        %p143 = pneg %p58
      $region18: #{evoformer_stack_forward.45} parent=15 // pred_check_branch
        %145 = sbr.rel (%p143) target = $region20
      $region19: #{evoformer_stack_forward.45} parent=15 // pred_region
        %p146 = scmp.lt.s32.totalorder %s15, 15
        %s147 = scalar_select %p146, %s15, 15
        %p148 = scmp.lt.s32.totalorder %s16, 0
        %s149 = scalar_select %p148, %s16, 0
        %p150 = scmp.lt.s32.totalorder %s18, 0
        %s151 = scalar_select %p150, %s18, 0
        %s152 = sadd.s32 %s151, %s149
        %s153 = sadd.s32 %s152, %s147
        %s154 = smul.addr %s153, 4
        %s155 = scalar_lea.vmem %s0, %s154
      $region20: #{evoformer_stack_forward.45} parent=15 // pred_fallthru
        _
      // Predicated region
      $region21: #{evoformer_stack_forward.45} parent=15 // pred_check
        %p156 = pneg %p88
      $region22: #{evoformer_stack_forward.45} parent=15 // pred_check_branch
        %158 = sbr.rel (%p156) target = $region24
      $region23: #{evoformer_stack_forward.45} parent=15 // pred_region
        %p159 = scmp.lt.s32.totalorder %s15, 15
        %s160 = scalar_select %p159, %s15, 15
        %p161 = scmp.lt.s32.totalorder %s18, 0
        %s162 = scalar_select %p161, %s18, 0
        %p163 = scmp.lt.s32.totalorder %s17, 0
        %s164 = scalar_select %p163, %s17, 0
        %s165 = sadd.s32 %s164, %s162
        %s166 = sadd.s32 %s165, %s160
        %s167 = smul.addr %s166, 4
        %s168 = scalar_lea.vmem %s1, %s167
      $region24: #{evoformer_stack_forward.45} parent=15 // pred_fallthru
        _
    $region16: #{evoformer_stack_forward.45} parent=5 // pred_fallthru
      _
    %p169 = scmp.le.s32.totalorder 1, %s8
    %p170 = scmp.lt.s32.totalorder %s8, 17
    %p171 = pnand %p169, %p170
    %p172 = pneg %p171
    // Predicated region
    $region25: #{evoformer_stack_forward.45} parent=5 // pred_check
      _
    $region26: #{evoformer_stack_forward.45} parent=5 // pred_check_branch
      %174 = sbr.rel (%p171) target = $region28
    $region27: #{evoformer_stack_forward.45} parent=5 // pred_region
      %s175 = ssub.s32 %s8, 1
      %p176 = scmp.lt.s32.totalorder %s19, 15
      %s177 = scalar_select %p176, %s19, 15
      %p178 = scmp.lt.s32.totalorder %s20, 0
      %s179 = scalar_select %p178, %s20, 0
      %p180 = scmp.lt.s32.totalorder %s22, 0
      %s181 = scalar_select %p180, %s22, 0
      %s182 = sadd.s32 %s181, %s179
      %s183 = sadd.s32 %s182, %s177
      %s184 = smul.addr %s183, 4
      %s185 = scalar_lea.vmem %s0, %s184
      %p186 = pneg %p64
      %p187 = pneg %p61
      %p188 = scmp.lt.s32.totalorder %s19, 15
      %s189 = scalar_select %p188, %s19, 15
      %p190 = scmp.lt.s32.totalorder %s22, 0
      %s191 = scalar_select %p190, %s22, 0
      %p192 = scmp.lt.s32.totalorder %s21, 0
      %s193 = scalar_select %p192, %s21, 0
      %s194 = sadd.s32 %s193, %s191
      %s195 = sadd.s32 %s194, %s189
      %s196 = smul.addr %s195, 4
      %s197 = scalar_lea.vmem %s1, %s196
      %p198 = pneg %p94
      %p199 = pneg %p91
      %p200 = pneg %p124
      %p201 = pneg %p121
      %p202 = scmp.lt.s32.totalorder %s19, 15
      %s203 = scalar_select %p202, %s19, 15
      %p204 = scmp.lt.s32.totalorder %s20, 0
      %s205 = scalar_select %p204, %s20, 0
      %p206 = scmp.lt.s32.totalorder %s21, 0
      %s207 = scalar_select %p206, %s21, 0
      %s208 = sadd.s32 %s207, %s205
      %s209 = sadd.s32 %s208, %s203
      %s210 = smul.addr %s209, 4
      %s211 = scalar_lea.vmem %s2, %s210
      %p212 = scmp.lt.s32.totalorder %s19, 15
      %s213 = scalar_select %p212, %s19, 15
      %p214 = scmp.lt.s32.totalorder %s20, 0
      %s215 = scalar_select %p214, %s20, 0
      %p216 = scmp.lt.s32.totalorder %s22, 0
      %s217 = scalar_select %p216, %s22, 0
      %s218 = sadd.s32 %s217, %s215
      %s219 = sadd.s32 %s218, %s213
      %s220 = smul.addr %s219, 4
      %s221 = scalar_lea.vmem %s0, %s220
      %p222 = scmp.lt.s32.totalorder %s19, 15
      %s223 = scalar_select %p222, %s19, 15
      %p224 = scmp.lt.s32.totalorder %s22, 0
      %s225 = scalar_select %p224, %s22, 0
      %p226 = scmp.lt.s32.totalorder %s21, 0
      %s227 = scalar_select %p226, %s21, 0
      %s228 = sadd.s32 %s227, %s225
      %s229 = sadd.s32 %s228, %s223
      %s230 = smul.addr %s229, 4
      %s231 = scalar_lea.vmem %s1, %s230
      %p232 = scmp.lt.s32.totalorder %s19, 15
      %s233 = scalar_select %p232, %s19, 15
      %p234 = scmp.lt.s32.totalorder %s20, 0
      %s235 = scalar_select %p234, %s20, 0
      %p236 = scmp.lt.s32.totalorder %s21, 0
      %s237 = scalar_select %p236, %s21, 0
      %s238 = sadd.s32 %s237, %s235
      %s239 = sadd.s32 %s238, %s233
      %s240 = smul.addr %s239, 4
      %s241 = scalar_lea.vmem %s2, %s240
      %p243 = scmp.eq.s32.totalorder %s22, 0
      // Predicated region
      $region29: #{evoformer_stack_forward.45} parent=27 // pred_check
        %p244 = pneg %p243
      $region30: #{evoformer_stack_forward.45} parent=27 // pred_check_branch
        %246 = sbr.rel (%p244) target = $region32
      $region31: #{evoformer_stack_forward.45} parent=27 // pred_region
        %vm247 = vcmask 64512
        %248 = vst.msk [vmem:[#allocation2] sm:$0xff] %vm247, 0.0
      $region32: #{evoformer_stack_forward.45} parent=27 // pred_fallthru
        _
      %v249 = vld [vmem:[#allocation2] sm:$0xff]
      %v250 = vld [vmem:[%s221] sm:$0xf]
      %v251 = vld [vmem:[%s231] sm:$0xf]
      %vm252 = vcmask 64512
      %v254 = vsel %vm252, %v250, 0
      %vm256 = vcmask 1043456
      %v258 = vsel %vm256, %v251, 0
      %260 = vmatprep.subr.bf16.mxu0 0
      %261 = vmatpush1.bf16.msra.mxu0 %v258
      %262 = vmatprep.subr.bf16.mxu0 0
      %263 = vmatpush1.bf16.msra.mxu0 0
      %264 = vmatprep.subr.bf16.mxu0 0
      %265 = vmatpush1.bf16.msra.mxu0 0
      %266 = vmatprep.subr.bf16.mxu0 0
      %267 = vmatpush1.bf16.msra.mxu0 0
      %268 = vmatprep.subr.bf16.mxu0 0
      %269 = vmatpush1.bf16.msra.mxu0 0
      %270 = vmatprep.subr.bf16.mxu0 0
      %271 = vmatpush1.bf16.msra.mxu0 0
      %272 = vmatprep.subr.bf16.mxu0 0
      %273 = vmatpush1.bf16.msra.mxu0 0
      %274 = vmatprep.subr.bf16.mxu0 0
      %275 = vmatpush1.bf16.msra.mxu0 0
      %276 = vmatprep.subr.bf16.mxu0 0
      %277 = vmatpush1.bf16.msra.mxu0 0
      %278 = vmatprep.subr.bf16.mxu0 0
      %279 = vmatpush1.bf16.msra.mxu0 0
      %280 = vmatprep.subr.bf16.mxu0 0
      %281 = vmatpush1.bf16.msra.mxu0 0
      %282 = vmatprep.subr.bf16.mxu0 0
      %283 = vmatpush1.bf16.msra.mxu0 0
      %284 = vmatprep.subr.bf16.mxu0 0
      %285 = vmatpush1.bf16.msra.mxu0 0
      %286 = vmatprep.subr.bf16.mxu0 0
      %287 = vmatpush1.bf16.msra.mxu0 0
      %288 = vmatprep.subr.bf16.mxu0 0
      %289 = vmatpush1.bf16.msra.mxu0 0
      %290 = vmatprep.subr.bf16.mxu0 0
      %291 = vmatpush1.bf16.msra.mxu0 0
      %292 = vmatprep.mubr.bf16.mxu0 0
      %293 = vmatmul.mubr.bf16.gmra.mrb[0].mxu0 %v254
      %v294 = vpop.f32.mrb[0].mxu0
      %v295 = vadd.f32 0.0, %v294
      %v296 = vpop.f32.mrb[0].mxu0
      %v297 = vpop.f32.mrb[0].mxu0
      %v298 = vpop.f32.mrb[0].mxu0
      %299 = vdwg.mxu0
      %v300 = vadd.f32 %v249, %v295
      %301 = vst.msk [vmem:[#allocation2] sm:$0xff] %vm252, %v300
      // Predicated region
      $region33: #{evoformer_stack_forward.45} parent=27 // pred_check
        %p302 = pneg %p243
      $region34: #{evoformer_stack_forward.45} parent=27 // pred_check_branch
        %304 = sbr.rel (%p302) target = $region36
      $region35: #{evoformer_stack_forward.45} parent=27 // pred_region
        %v305 = vld [vmem:[#allocation2] sm:$0xff]
        %v306 = vpack.c.bf16 %v305, %v305
        %vm307 = vcmask 60416
        %308 = vst.msk [vmem:[%s241] sm:$0xf] %vm307, %v306
      $region36: #{evoformer_stack_forward.45} parent=27 // pred_fallthru
        _
      %p309 = scmp.lt.s32.totalorder %s19, 15
      %s310 = scalar_select %p309, %s19, 15
      %p311 = scmp.lt.s32.totalorder %s20, 0
      %s312 = scalar_select %p311, %s20, 0
      %p313 = scmp.lt.s32.totalorder %s21, 0
      %s314 = scalar_select %p313, %s21, 0
      %s315 = sadd.s32 %s314, %s312
      %s316 = sadd.s32 %s315, %s310
      %s317 = smul.addr %s316, 4
      %s318 = scalar_lea.vmem %s2, %s317
      // Predicated region
      $region37: #{evoformer_stack_forward.45} parent=27 // pred_check
        %p319 = pneg %p121
      $region38: #{evoformer_stack_forward.45} parent=27 // pred_check_branch
        %321 = sbr.rel (%p319) target = $region40
      $region39: #{evoformer_stack_forward.45} parent=27 // pred_region
        _
      $region40: #{evoformer_stack_forward.45} parent=27 // pred_fallthru
        _
    $region28: #{evoformer_stack_forward.45} parent=5 // pred_fallthru
      _
    %p322 = scmp.le.s32.totalorder 2, %s8
    // Predicated region
    $region41: #{evoformer_stack_forward.45} parent=5 // pred_check
      %p323 = pneg %p322
    $region42: #{evoformer_stack_forward.45} parent=5 // pred_check_branch
      %325 = sbr.rel (%p323) target = $region44
    $region43: #{evoformer_stack_forward.45} parent=5 // pred_region
      %s326 = ssub.s32 %s8, 2
      // Predicated region
      $region45: #{evoformer_stack_forward.45} parent=43 // pred_check
        %p327 = pneg %p127
      $region46: #{evoformer_stack_forward.45} parent=43 // pred_check_branch
        %329 = sbr.rel (%p327) target = $region48
      $region47: #{evoformer_stack_forward.45} parent=43 // pred_region
        %p330 = scmp.lt.s32.totalorder %s23, 15
        %s331 = scalar_select %p330, %s23, 15
        %p332 = scmp.lt.s32.totalorder %s24, 0
        %s333 = scalar_select %p332, %s24, 0
        %p334 = scmp.lt.s32.totalorder %s25, 0
        %s335 = scalar_select %p334, %s25, 0
        %s336 = sadd.s32 %s335, %s333
        %s337 = sadd.s32 %s336, %s331
        %s338 = smul.addr %s337, 4
        %s339 = scalar_lea.vmem %s2, %s338
      $region48: #{evoformer_stack_forward.45} parent=43 // pred_fallthru
        _
    $region44: #{evoformer_stack_forward.45} parent=5 // pred_fallthru
      _
  $region6: #{evoformer_stack_forward.45} parent=0 // loop_footer
    %s12 = sadd.s32 1, %s8
  $region7: #{evoformer_stack_forward.45} parent=0 // loop_footer_branch
    %7 = sbr.rel target = $region3
  $region8: #{evoformer_stack_forward.45} parent=0 // loop_exit
    _

// kernel: evoformer_stack_forward.44
$region0: #{evoformer_stack_forward.44}
  #allocation0 [shape = 'u32[]', space=smem, size = 0x4, offset = 0x4, fixed_abs, tag = 'smem constant byte address 0x4 - core index']
  #allocation1 [shape = 'u32[144,128]{1,0:T(1,128)}', space=vmem, size = 0x12000, scoped, tag = 'internal scratch']
  %s0 = inlined_call_operand.vmem [shape: f32[64,16], index: 0, kind: input, shape index: {}]
  %s1 = inlined_call_operand.vmem [shape: f32[64,1], index: 1, kind: input, shape index: {}]
  %s2 = inlined_call_operand.vmem [shape: f32[1,16], index: 2, kind: input, shape index: {}]
  %s3 = inlined_call_operand.vmem [shape: f32[1,16], index: 3, kind: input, shape index: {}]
  %s4 = inlined_call_operand.vmem [shape: f32[16,16], index: 4, kind: input, shape index: {}]
  %s5 = inlined_call_operand.vmem [shape: f32[1,16], index: 5, kind: input, shape index: {}]
  %s6 = inlined_call_operand.vmem [shape: f32[16,16], index: 6, kind: input, shape index: {}]
  %s7 = inlined_call_operand.vmem [shape: f32[1,16], index: 7, kind: input, shape index: {}]
  %s8 = inlined_call_operand.vmem [shape: f32[16,16], index: 8, kind: input, shape index: {}]
  %s9 = inlined_call_operand.vmem [shape: f32[1,16], index: 9, kind: input, shape index: {}]
  %s10 = inlined_call_operand.vmem [shape: f32[16,16], index: 10, kind: input, shape index: {}]
  %s11 = inlined_call_operand.vmem [shape: f32[1,16], index: 11, kind: input, shape index: {}]
  %s12 = inlined_call_operand.vmem [shape: f32[16,16], index: 12, kind: input, shape index: {}]
  %s13 = inlined_call_operand.vmem [shape: f32[1,16], index: 13, kind: input, shape index: {}]
  %s14 = inlined_call_operand.vmem [shape: bf16[64,16], index: 14, kind: output, shape index: {0}]
  %s15 = inlined_call_operand.vmem [shape: bf16[64,16], index: 15, kind: output, shape index: {1}]
  %s16 = inlined_call_operand.vmem [shape: f32[64,16], index: 16, kind: output, shape index: {2}]
  %17 = xla_tuple %s14, %s15, %s16
  %s18 = sld [smem:[#allocation0]]
  $region82: #{evoformer_stack_forward.44} parent=0
    _
  %s20 = ssub.s32 1, %s18
  %s21 = scalar_select 0, %s20, %s18
  // Predicated region
  $region2: #{evoformer_stack_forward.44} parent=0 // pred_check
    _
  $region3: #{evoformer_stack_forward.44} parent=0 // pred_check_branch
    %23 = sbr.rel (0) target = $region5
  $region4: #{evoformer_stack_forward.44} parent=0 // pred_region
    _
  $region5: #{evoformer_stack_forward.44} parent=0 // pred_fallthru
    _
  // Predicated region
  $region6: #{evoformer_stack_forward.44} parent=0 // pred_check
    _
  $region7: #{evoformer_stack_forward.44} parent=0 // pred_check_branch
    %25 = sbr.rel (0) target = $region9
  $region8: #{evoformer_stack_forward.44} parent=0 // pred_region
    _
  $region9: #{evoformer_stack_forward.44} parent=0 // pred_fallthru
    _
  // Predicated region
  $region10: #{evoformer_stack_forward.44} parent=0 // pred_check
    _
  $region11: #{evoformer_stack_forward.44} parent=0 // pred_check_branch
    %27 = sbr.rel (0) target = $region13
  $region12: #{evoformer_stack_forward.44} parent=0 // pred_region
    _
  $region13: #{evoformer_stack_forward.44} parent=0 // pred_fallthru
    _
  // Predicated region
  $region14: #{evoformer_stack_forward.44} parent=0 // pred_check
    _
  $region15: #{evoformer_stack_forward.44} parent=0 // pred_check_branch
    %29 = sbr.rel (0) target = $region17
  $region16: #{evoformer_stack_forward.44} parent=0 // pred_region
    _
  $region17: #{evoformer_stack_forward.44} parent=0 // pred_fallthru
    _
  // Predicated region
  $region18: #{evoformer_stack_forward.44} parent=0 // pred_check
    _
  $region19: #{evoformer_stack_forward.44} parent=0 // pred_check_branch
    %31 = sbr.rel (0) target = $region21
  $region20: #{evoformer_stack_forward.44} parent=0 // pred_region
    _
  $region21: #{evoformer_stack_forward.44} parent=0 // pred_fallthru
    _
  // Predicated region
  $region22: #{evoformer_stack_forward.44} parent=0 // pred_check
    _
  $region23: #{evoformer_stack_forward.44} parent=0 // pred_check_branch
    %33 = sbr.rel (0) target = $region25
  $region24: #{evoformer_stack_forward.44} parent=0 // pred_region
    _
  $region25: #{evoformer_stack_forward.44} parent=0 // pred_fallthru
    _
  // Predicated region
  $region26: #{evoformer_stack_forward.44} parent=0 // pred_check
    _
  $region27: #{evoformer_stack_forward.44} parent=0 // pred_check_branch
    %35 = sbr.rel (0) target = $region29
  $region28: #{evoformer_stack_forward.44} parent=0 // pred_region
    _
  $region29: #{evoformer_stack_forward.44} parent=0 // pred_fallthru
    _
  // Predicated region
  $region30: #{evoformer_stack_forward.44} parent=0 // pred_check
    _
  $region31: #{evoformer_stack_forward.44} parent=0 // pred_check_branch
    %37 = sbr.rel (0) target = $region33
  $region32: #{evoformer_stack_forward.44} parent=0 // pred_region
    _
  $region33: #{evoformer_stack_forward.44} parent=0 // pred_fallthru
    _
  // Predicated region
  $region34: #{evoformer_stack_forward.44} parent=0 // pred_check
    _
  $region35: #{evoformer_stack_forward.44} parent=0 // pred_check_branch
    %39 = sbr.rel (0) target = $region37
  $region36: #{evoformer_stack_forward.44} parent=0 // pred_region
    _
  $region37: #{evoformer_stack_forward.44} parent=0 // pred_fallthru
    _
  // Predicated region
  $region38: #{evoformer_stack_forward.44} parent=0 // pred_check
    _
  $region39: #{evoformer_stack_forward.44} parent=0 // pred_check_branch
    %41 = sbr.rel (0) target = $region41
  $region40: #{evoformer_stack_forward.44} parent=0 // pred_region
    _
  $region41: #{evoformer_stack_forward.44} parent=0 // pred_fallthru
    _
  // Predicated region
  $region42: #{evoformer_stack_forward.44} parent=0 // pred_check
    _
  $region43: #{evoformer_stack_forward.44} parent=0 // pred_check_branch
    %43 = sbr.rel (0) target = $region45
  $region44: #{evoformer_stack_forward.44} parent=0 // pred_region
    _
  $region45: #{evoformer_stack_forward.44} parent=0 // pred_fallthru
    _
  // Predicated region
  $region46: #{evoformer_stack_forward.44} parent=0 // pred_check
    _
  $region47: #{evoformer_stack_forward.44} parent=0 // pred_check_branch
    %45 = sbr.rel (0) target = $region49
  $region48: #{evoformer_stack_forward.44} parent=0 // pred_region
    _
  $region49: #{evoformer_stack_forward.44} parent=0 // pred_fallthru
    _
  // Predicated region
  $region50: #{evoformer_stack_forward.44} parent=0 // pred_check
    _
  $region51: #{evoformer_stack_forward.44} parent=0 // pred_check_branch
    %47 = sbr.rel (0) target = $region53
  $region52: #{evoformer_stack_forward.44} parent=0 // pred_region
    _
  $region53: #{evoformer_stack_forward.44} parent=0 // pred_fallthru
    _
  // Predicated region
  $region54: #{evoformer_stack_forward.44} parent=0 // pred_check
    _
  $region55: #{evoformer_stack_forward.44} parent=0 // pred_check_branch
    %49 = sbr.rel (0) target = $region57
  $region56: #{evoformer_stack_forward.44} parent=0 // pred_region
    _
  $region57: #{evoformer_stack_forward.44} parent=0 // pred_fallthru
    _
  %v50 = vld [vmem:[%s0] sm:$0xff]
  %v51 = vld [vmem:[%s0 + $0x8] sm:$0xff]
  %v52 = vld [vmem:[%s0 + $0x10] sm:$0xff]
  %v53 = vld [vmem:[%s0 + $0x18] sm:$0xff]
  %v54 = vld [vmem:[%s0 + $0x20] sm:$0xff]
  %v55 = vld [vmem:[%s0 + $0x28] sm:$0xff]
  %v56 = vld [vmem:[%s0 + $0x30] sm:$0xff]
  %v57 = vld [vmem:[%s0 + $0x38] sm:$0xff]
  %v58 = vld [vmem:[%s2] sm:$0x1]
  %v59 = vld [vmem:[%s3] sm:$0x1]
  %vm60 = vcmask 130048
  %v61 = vsel %vm60, %v50, 0.0
  %62 = vadd.xlane.f32.xlu0 %v61
  %v63 = vpop.xlane.xlu0 %62
  %v64 = vsel %vm60, %v51, 0.0
  %65 = vadd.xlane.f32.xlu0 %v64
  %v66 = vpop.xlane.xlu0 %65
  %v67 = vsel %vm60, %v52, 0.0
  %68 = vadd.xlane.f32.xlu0 %v67
  %v69 = vpop.xlane.xlu0 %68
  %v70 = vsel %vm60, %v53, 0.0
  %71 = vadd.xlane.f32.xlu0 %v70
  %v72 = vpop.xlane.xlu0 %71
  %v73 = vsel %vm60, %v54, 0.0
  %74 = vadd.xlane.f32.xlu0 %v73
  %v75 = vpop.xlane.xlu0 %74
  %v76 = vsel %vm60, %v55, 0.0
  %77 = vadd.xlane.f32.xlu0 %v76
  %v78 = vpop.xlane.xlu0 %77
  %v79 = vsel %vm60, %v56, 0.0
  %80 = vadd.xlane.f32.xlu0 %v79
  %v81 = vpop.xlane.xlu0 %80
  %v82 = vsel %vm60, %v57, 0.0
  %83 = vadd.xlane.f32.xlu0 %v82
  %v84 = vpop.xlane.xlu0 %83
  %v85 = vrcp.pop 16.0
  %v86 = vmul.f32 %v63, %v85
  %v87 = vmul.f32 %v66, %v85
  %v88 = vmul.f32 %v69, %v85
  %v89 = vmul.f32 %v72, %v85
  %v90 = vmul.f32 %v75, %v85
  %v91 = vmul.f32 %v78, %v85
  %v92 = vmul.f32 %v81, %v85
  %v93 = vmul.f32 %v84, %v85
  %v94 = vsub.f32 %v50, %v86
  %v95 = vsub.f32 %v51, %v87
  %v96 = vsub.f32 %v52, %v88
  %v97 = vsub.f32 %v53, %v89
  %v98 = vsub.f32 %v54, %v90
  %v99 = vsub.f32 %v55, %v91
  %v100 = vsub.f32 %v56, %v92
  %v101 = vsub.f32 %v57, %v93
  %v102 = vmul.f32 %v94, %v94
  %v103 = vmul.f32 %v95, %v95
  %v104 = vmul.f32 %v96, %v96
  %v105 = vmul.f32 %v97, %v97
  %v106 = vmul.f32 %v98, %v98
  %v107 = vmul.f32 %v99, %v99
  %v108 = vmul.f32 %v100, %v100
  %v109 = vmul.f32 %v101, %v101
  %v110 = vsel %vm60, %v102, 0.0
  %111 = vadd.xlane.f32.xlu0 %v110
  %v112 = vpop.xlane.xlu0 %111
  %v113 = vsel %vm60, %v103, 0.0
  %114 = vadd.xlane.f32.xlu0 %v113
  %v115 = vpop.xlane.xlu0 %114
  %v116 = vsel %vm60, %v104, 0.0
  %117 = vadd.xlane.f32.xlu0 %v116
  %v118 = vpop.xlane.xlu0 %117
  %v119 = vsel %vm60, %v105, 0.0
  %120 = vadd.xlane.f32.xlu0 %v119
  %v121 = vpop.xlane.xlu0 %120
  %v122 = vsel %vm60, %v106, 0.0
  %123 = vadd.xlane.f32.xlu0 %v122
  %v124 = vpop.xlane.xlu0 %123
  %v125 = vsel %vm60, %v107, 0.0
  %126 = vadd.xlane.f32.xlu0 %v125
  %v127 = vpop.xlane.xlu0 %126
  %v128 = vsel %vm60, %v108, 0.0
  %129 = vadd.xlane.f32.xlu0 %v128
  %v130 = vpop.xlane.xlu0 %129
  %v131 = vsel %vm60, %v109, 0.0
  %132 = vadd.xlane.f32.xlu0 %v131
  %v133 = vpop.xlane.xlu0 %132
  %v134 = vmul.f32 %v112, %v85
  %v135 = vmul.f32 %v115, %v85
  %v136 = vmul.f32 %v118, %v85
  %v137 = vmul.f32 %v121, %v85
  %v138 = vmul.f32 %v124, %v85
  %v139 = vmul.f32 %v127, %v85
  %v140 = vmul.f32 %v130, %v85
  %v141 = vmul.f32 %v133, %v85
  %v142 = vadd.f32 %v134, 1e-05
  %v143 = vadd.f32 %v135, 1e-05
  %v144 = vadd.f32 %v136, 1e-05
  %v145 = vadd.f32 %v137, 1e-05
  %v146 = vadd.f32 %v138, 1e-05
  %v147 = vadd.f32 %v139, 1e-05
  %v148 = vadd.f32 %v140, 1e-05
  %v149 = vadd.f32 %v141, 1e-05
  %v150 = vrsqrt.pop %v142
  %v151 = vrsqrt.pop %v143
  %v152 = vrsqrt.pop %v144
  %v153 = vrsqrt.pop %v145
  %v154 = vrsqrt.pop %v146
  %v155 = vrsqrt.pop %v147
  %v156 = vrsqrt.pop %v148
  %v157 = vrsqrt.pop %v149
  %v158 = vmul.f32 %v94, %v150
  %v159 = vmul.f32 %v95, %v151
  %v160 = vmul.f32 %v96, %v152
  %v161 = vmul.f32 %v97, %v153
  %v162 = vmul.f32 %v98, %v154
  %v163 = vmul.f32 %v99, %v155
  %v164 = vmul.f32 %v100, %v156
  %v165 = vmul.f32 %v101, %v157
  %v167 = vlaneseq
  %v168 = vshrl.u32 %v167, 7
  %v169 = vsub.s32 0, %v168
  %v170 = vrot.slane %v58, %v169
  %v172 = vmul.f32 %v158, %v170
  %v173 = vmul.f32 %v159, %v170
  %v174 = vmul.f32 %v160, %v170
  %v175 = vmul.f32 %v161, %v170
  %v176 = vmul.f32 %v162, %v170
  %v177 = vmul.f32 %v163, %v170
  %v178 = vmul.f32 %v164, %v170
  %v179 = vmul.f32 %v165, %v170
  %v181 = vlaneseq
  %v182 = vshrl.u32 %v181, 7
  %v183 = vsub.s32 0, %v182
  %v184 = vrot.slane %v59, %v183
  %v186 = vadd.f32 %v172, %v184
  %v187 = vadd.f32 %v173, %v184
  %v188 = vadd.f32 %v174, %v184
  %v189 = vadd.f32 %v175, %v184
  %v190 = vadd.f32 %v176, %v184
  %v191 = vadd.f32 %v177, %v184
  %v192 = vadd.f32 %v178, %v184
  %v193 = vadd.f32 %v179, %v184
  %v194 = vld [vmem:[%s1] sm:$0xff]
  %v195 = vld [vmem:[%s1 + $0x8] sm:$0xff]
  %v196 = vld [vmem:[%s1 + $0x10] sm:$0xff]
  %v197 = vld [vmem:[%s1 + $0x18] sm:$0xff]
  %v198 = vld [vmem:[%s1 + $0x20] sm:$0xff]
  %v199 = vld [vmem:[%s1 + $0x28] sm:$0xff]
  %v200 = vld [vmem:[%s1 + $0x30] sm:$0xff]
  %v201 = vld [vmem:[%s1 + $0x38] sm:$0xff]
  %v202 = vld [vmem:[%s6] sm:$0xff]
  %v203 = vld [vmem:[%s6 + $0x8] sm:$0xff]
  %v204 = vld [vmem:[%s7] sm:$0x1]
  %v206 = vlaneseq
  %v207 = vshrl.u32 %v206, 7
  %v208 = vsub.s32 0, %v207
  %v209 = vrot.slane %v204, %v208
  %v212 = vsel %vm60, %v186, 0
  %v215 = vsel %vm60, %v187, 0
  %v218 = vsel %vm60, %v188, 0
  %v221 = vsel %vm60, %v189, 0
  %v224 = vsel %vm60, %v190, 0
  %v227 = vsel %vm60, %v191, 0
  %v230 = vsel %vm60, %v192, 0
  %v233 = vsel %vm60, %v193, 0
  %235 = vmatprep.subr.mxu0 0.0
  %236 = vmatpush1.msra.mxu0 %v202
  %237 = vmatprep.subr.mxu0 0.0
  %238 = vmatpush1.msra.mxu0 %v203
  %239 = vmatprep.subr.mxu0 0.0
  %240 = vmatpush1.msra.mxu0 0.0
  %241 = vmatprep.subr.mxu0 0.0
  %242 = vmatpush1.msra.mxu0 0.0
  %243 = vmatprep.subr.mxu0 0.0
  %244 = vmatpush1.msra.mxu0 0.0
  %245 = vmatprep.subr.mxu0 0.0
  %246 = vmatpush1.msra.mxu0 0.0
  %247 = vmatprep.subr.mxu0 0.0
  %248 = vmatpush1.msra.mxu0 0.0
  %249 = vmatprep.subr.mxu0 0.0
  %250 = vmatpush1.msra.mxu0 0.0
  %251 = vmatprep.subr.mxu0 0.0
  %252 = vmatpush1.msra.mxu0 0.0
  %253 = vmatprep.subr.mxu0 0.0
  %254 = vmatpush1.msra.mxu0 0.0
  %255 = vmatprep.subr.mxu0 0.0
  %256 = vmatpush1.msra.mxu0 0.0
  %257 = vmatprep.subr.mxu0 0.0
  %258 = vmatpush1.msra.mxu0 0.0
  %259 = vmatprep.subr.mxu0 0.0
  %260 = vmatpush1.msra.mxu0 0.0
  %261 = vmatprep.subr.mxu0 0.0
  %262 = vmatpush1.msra.mxu0 0.0
  %263 = vmatprep.subr.mxu0 0.0
  %264 = vmatpush1.msra.mxu0 0.0
  %265 = vmatprep.subr.mxu0 0.0
  %266 = vmatpush1.msra.mxu0 0.0
  %267 = vmatprep.subr.mxu0 0.0
  %268 = vmatpush1.msra.mxu0 0.0
  %269 = vmatprep.subr.mxu0 0.0
  %270 = vmatpush1.msra.mxu0 0.0
  %271 = vmatprep.subr.mxu0 0.0
  %272 = vmatpush1.msra.mxu0 0.0
  %273 = vmatprep.subr.mxu0 0.0
  %274 = vmatpush1.msra.mxu0 0.0
  %275 = vmatprep.subr.mxu0 0.0
  %276 = vmatpush1.msra.mxu0 0.0
  %277 = vmatprep.subr.mxu0 0.0
  %278 = vmatpush1.msra.mxu0 0.0
  %279 = vmatprep.subr.mxu0 0.0
  %280 = vmatpush1.msra.mxu0 0.0
  %281 = vmatprep.subr.mxu0 0.0
  %282 = vmatpush1.msra.mxu0 0.0
  %283 = vmatprep.subr.mxu0 0.0
  %284 = vmatpush1.msra.mxu0 0.0
  %285 = vmatprep.subr.mxu0 0.0
  %286 = vmatpush1.msra.mxu0 0.0
  %287 = vmatprep.subr.mxu0 0.0
  %288 = vmatpush1.msra.mxu0 0.0
  %289 = vmatprep.subr.mxu0 0.0
  %290 = vmatpush1.msra.mxu0 0.0
  %291 = vmatprep.subr.mxu0 0.0
  %292 = vmatpush1.msra.mxu0 0.0
  %293 = vmatprep.subr.mxu0 0.0
  %294 = vmatpush1.msra.mxu0 0.0
  %295 = vmatprep.subr.mxu0 0.0
  %296 = vmatpush1.msra.mxu0 0.0
  %297 = vmatprep.subr.mxu0 0.0
  %298 = vmatpush1.msra.mxu0 0.0
  %299 = vmatprep.mubr.f32.mxu0 0.0
  %300 = vmatmul.mubr.f32.gmra.mrb[0].mxu0 %v212
  %v301 = vpop.f32.mrb[0].mxu0
  %v302 = vadd.f32 %v209, %v301
  %v303 = vpop.f32.mrb[0].mxu0
  %304 = vmatprep.mubr.f32.mxu0 0.0
  %305 = vmatmul.mubr.f32.gmra.mrb[0].mxu0 %v215
  %v306 = vpop.f32.mrb[0].mxu0
  %v307 = vadd.f32 %v209, %v306
  %v308 = vpop.f32.mrb[0].mxu0
  %309 = vmatprep.mubr.f32.mxu0 0.0
  %310 = vmatmul.mubr.f32.gmra.mrb[0].mxu0 %v218
  %v311 = vpop.f32.mrb[0].mxu0
  %v312 = vadd.f32 %v209, %v311
  %v313 = vpop.f32.mrb[0].mxu0
  %314 = vmatprep.mubr.f32.mxu0 0.0
  %315 = vmatmul.mubr.f32.gmra.mrb[0].mxu0 %v221
  %v316 = vpop.f32.mrb[0].mxu0
  %v317 = vadd.f32 %v209, %v316
  %v318 = vpop.f32.mrb[0].mxu0
  %319 = vmatprep.mubr.f32.mxu0 0.0
  %320 = vmatmul.mubr.f32.gmra.mrb[0].mxu0 %v224
  %v321 = vpop.f32.mrb[0].mxu0
  %v322 = vadd.f32 %v209, %v321
  %v323 = vpop.f32.mrb[0].mxu0
  %324 = vmatprep.mubr.f32.mxu0 0.0
  %325 = vmatmul.mubr.f32.gmra.mrb[0].mxu0 %v227
  %v326 = vpop.f32.mrb[0].mxu0
  %v327 = vadd.f32 %v209, %v326
  %v328 = vpop.f32.mrb[0].mxu0
  %329 = vmatprep.mubr.f32.mxu0 0.0
  %330 = vmatmul.mubr.f32.gmra.mrb[0].mxu0 %v230
  %v331 = vpop.f32.mrb[0].mxu0
  %v332 = vadd.f32 %v209, %v331
  %v333 = vpop.f32.mrb[0].mxu0
  %334 = vmatprep.mubr.f32.mxu0 0.0
  %335 = vmatmul.mubr.f32.gmra.mrb[0].mxu0 %v233
  %v336 = vpop.f32.mrb[0].mxu0
  %v337 = vadd.f32 %v209, %v336
  %v338 = vpop.f32.mrb[0].mxu0
  %339 = vdwg.mxu0
  %v340 = vxor.u32 %v302, 2147483648
  %v341 = vxor.u32 %v307, 2147483648
  %v342 = vxor.u32 %v312, 2147483648
  %v343 = vxor.u32 %v317, 2147483648
  %v344 = vxor.u32 %v322, 2147483648
  %v345 = vxor.u32 %v327, 2147483648
  %v346 = vxor.u32 %v332, 2147483648
  %v347 = vxor.u32 %v337, 2147483648
  %v348 = vmul.f32 %v340, 1.442695
  %v349 = vpow.pop %v348
  %v350 = vmul.f32 %v341, 1.442695
  %v351 = vpow.pop %v350
  %v352 = vmul.f32 %v342, 1.442695
  %v353 = vpow.pop %v352
  %v354 = vmul.f32 %v343, 1.442695
  %v355 = vpow.pop %v354
  %v356 = vmul.f32 %v344, 1.442695
  %v357 = vpow.pop %v356
  %v358 = vmul.f32 %v345, 1.442695
  %v359 = vpow.pop %v358
  %v360 = vmul.f32 %v346, 1.442695
  %v361 = vpow.pop %v360
  %v362 = vmul.f32 %v347, 1.442695
  %v363 = vpow.pop %v362
  %v364 = vadd.f32 %v349, 1.0
  %v365 = vadd.f32 %v351, 1.0
  %v366 = vadd.f32 %v353, 1.0
  %v367 = vadd.f32 %v355, 1.0
  %v368 = vadd.f32 %v357, 1.0
  %v369 = vadd.f32 %v359, 1.0
  %v370 = vadd.f32 %v361, 1.0
  %v371 = vadd.f32 %v363, 1.0
  %v372 = vrcp.pop %v364
  %v373 = vmul.f32 1.0, %v372
  %v374 = vrcp.pop %v365
  %v375 = vmul.f32 1.0, %v374
  %v376 = vrcp.pop %v366
  %v377 = vmul.f32 1.0, %v376
  %v378 = vrcp.pop %v367
  %v379 = vmul.f32 1.0, %v378
  %v380 = vrcp.pop %v368
  %v381 = vmul.f32 1.0, %v380
  %v382 = vrcp.pop %v369
  %v383 = vmul.f32 1.0, %v382
  %v384 = vrcp.pop %v370
  %v385 = vmul.f32 1.0, %v384
  %v386 = vrcp.pop %v371
  %v387 = vmul.f32 1.0, %v386
  %v388 = vld [vmem:[%s4] sm:$0xff]
  %v389 = vld [vmem:[%s4 + $0x8] sm:$0xff]
  %v390 = vld [vmem:[%s5] sm:$0x1]
  %v392 = vlaneseq
  %v393 = vshrl.u32 %v392, 7
  %v394 = vsub.s32 0, %v393
  %v395 = vrot.slane %v390, %v394
  %397 = vmatprep.subr.mxu0 0.0
  %398 = vmatpush1.msra.mxu0 %v388
  %399 = vmatprep.subr.mxu0 0.0
  %400 = vmatpush1.msra.mxu0 %v389
  %401 = vmatprep.subr.mxu0 0.0
  %402 = vmatpush1.msra.mxu0 0.0
  %403 = vmatprep.subr.mxu0 0.0
  %404 = vmatpush1.msra.mxu0 0.0
  %405 = vmatprep.subr.mxu0 0.0
  %406 = vmatpush1.msra.mxu0 0.0
  %407 = vmatprep.subr.mxu0 0.0
  %408 = vmatpush1.msra.mxu0 0.0
  %409 = vmatprep.subr.mxu0 0.0
  %410 = vmatpush1.msra.mxu0 0.0
  %411 = vmatprep.subr.mxu0 0.0
  %412 = vmatpush1.msra.mxu0 0.0
  %413 = vmatprep.subr.mxu0 0.0
  %414 = vmatpush1.msra.mxu0 0.0
  %415 = vmatprep.subr.mxu0 0.0
  %416 = vmatpush1.msra.mxu0 0.0
  %417 = vmatprep.subr.mxu0 0.0
  %418 = vmatpush1.msra.mxu0 0.0
  %419 = vmatprep.subr.mxu0 0.0
  %420 = vmatpush1.msra.mxu0 0.0
  %421 = vmatprep.subr.mxu0 0.0
  %422 = vmatpush1.msra.mxu0 0.0
  %423 = vmatprep.subr.mxu0 0.0
  %424 = vmatpush1.msra.mxu0 0.0
  %425 = vmatprep.subr.mxu0 0.0
  %426 = vmatpush1.msra.mxu0 0.0
  %427 = vmatprep.subr.mxu0 0.0
  %428 = vmatpush1.msra.mxu0 0.0
  %429 = vmatprep.subr.mxu0 0.0
  %430 = vmatpush1.msra.mxu0 0.0
  %431 = vmatprep.subr.mxu0 0.0
  %432 = vmatpush1.msra.mxu0 0.0
  %433 = vmatprep.subr.mxu0 0.0
  %434 = vmatpush1.msra.mxu0 0.0
  %435 = vmatprep.subr.mxu0 0.0
  %436 = vmatpush1.msra.mxu0 0.0
  %437 = vmatprep.subr.mxu0 0.0
  %438 = vmatpush1.msra.mxu0 0.0
  %439 = vmatprep.subr.mxu0 0.0
  %440 = vmatpush1.msra.mxu0 0.0
  %441 = vmatprep.subr.mxu0 0.0
  %442 = vmatpush1.msra.mxu0 0.0
  %443 = vmatprep.subr.mxu0 0.0
  %444 = vmatpush1.msra.mxu0 0.0
  %445 = vmatprep.subr.mxu0 0.0
  %446 = vmatpush1.msra.mxu0 0.0
  %447 = vmatprep.subr.mxu0 0.0
  %448 = vmatpush1.msra.mxu0 0.0
  %449 = vmatprep.subr.mxu0 0.0
  %450 = vmatpush1.msra.mxu0 0.0
  %451 = vmatprep.subr.mxu0 0.0
  %452 = vmatpush1.msra.mxu0 0.0
  %453 = vmatprep.subr.mxu0 0.0
  %454 = vmatpush1.msra.mxu0 0.0
  %455 = vmatprep.subr.mxu0 0.0
  %456 = vmatpush1.msra.mxu0 0.0
  %457 = vmatprep.subr.mxu0 0.0
  %458 = vmatpush1.msra.mxu0 0.0
  %459 = vmatprep.subr.mxu0 0.0
  %460 = vmatpush1.msra.mxu0 0.0
  %461 = vmatprep.mubr.f32.mxu0 0.0
  %462 = vmatmul.mubr.f32.gmra.mrb[0].mxu0 %v212
  %v463 = vpop.f32.mrb[0].mxu0
  %v464 = vadd.f32 %v395, %v463
  %v465 = vpop.f32.mrb[0].mxu0
  %466 = vmatprep.mubr.f32.mxu0 0.0
  %467 = vmatmul.mubr.f32.gmra.mrb[0].mxu0 %v215
  %v468 = vpop.f32.mrb[0].mxu0
  %v469 = vadd.f32 %v395, %v468
  %v470 = vpop.f32.mrb[0].mxu0
  %471 = vmatprep.mubr.f32.mxu0 0.0
  %472 = vmatmul.mubr.f32.gmra.mrb[0].mxu0 %v218
  %v473 = vpop.f32.mrb[0].mxu0
  %v474 = vadd.f32 %v395, %v473
  %v475 = vpop.f32.mrb[0].mxu0
  %476 = vmatprep.mubr.f32.mxu0 0.0
  %477 = vmatmul.mubr.f32.gmra.mrb[0].mxu0 %v221
  %v478 = vpop.f32.mrb[0].mxu0
  %v479 = vadd.f32 %v395, %v478
  %v480 = vpop.f32.mrb[0].mxu0
  %481 = vmatprep.mubr.f32.mxu0 0.0
  %482 = vmatmul.mubr.f32.gmra.mrb[0].mxu0 %v224
  %v483 = vpop.f32.mrb[0].mxu0
  %v484 = vadd.f32 %v395, %v483
  %v485 = vpop.f32.mrb[0].mxu0
  %486 = vmatprep.mubr.f32.mxu0 0.0
  %487 = vmatmul.mubr.f32.gmra.mrb[0].mxu0 %v227
  %v488 = vpop.f32.mrb[0].mxu0
  %v489 = vadd.f32 %v395, %v488
  %v490 = vpop.f32.mrb[0].mxu0
  %491 = vmatprep.mubr.f32.mxu0 0.0
  %492 = vmatmul.mubr.f32.gmra.mrb[0].mxu0 %v230
  %v493 = vpop.f32.mrb[0].mxu0
  %v494 = vadd.f32 %v395, %v493
  %v495 = vpop.f32.mrb[0].mxu0
  %496 = vmatprep.mubr.f32.mxu0 0.0
  %497 = vmatmul.mubr.f32.gmra.mrb[0].mxu0 %v233
  %v498 = vpop.f32.mrb[0].mxu0
  %v499 = vadd.f32 %v395, %v498
  %v500 = vpop.f32.mrb[0].mxu0
  %501 = vdwg.mxu0
  %v502 = vmul.f32 %v373, %v464
  %v503 = vmul.f32 %v375, %v469
  %v504 = vmul.f32 %v377, %v474
  %v505 = vmul.f32 %v379, %v479
  %v506 = vmul.f32 %v381, %v484
  %v507 = vmul.f32 %v383, %v489
  %v508 = vmul.f32 %v385, %v494
  %v509 = vmul.f32 %v387, %v499
  %511 = vset.pattern.permute.xlu0 0
  %512 = vperm.xlu0 %511, %v194
  %v513 = vpop.permute.xlu0 %512
  %516 = vset.pattern.permute.xlu0 0
  %517 = vperm.xlu0 %516, %v195
  %v518 = vpop.permute.xlu0 %517
  %521 = vset.pattern.permute.xlu0 0
  %522 = vperm.xlu0 %521, %v196
  %v523 = vpop.permute.xlu0 %522
  %526 = vset.pattern.permute.xlu0 0
  %527 = vperm.xlu0 %526, %v197
  %v528 = vpop.permute.xlu0 %527
  %531 = vset.pattern.permute.xlu0 0
  %532 = vperm.xlu0 %531, %v198
  %v533 = vpop.permute.xlu0 %532
  %536 = vset.pattern.permute.xlu0 0
  %537 = vperm.xlu0 %536, %v199
  %v538 = vpop.permute.xlu0 %537
  %541 = vset.pattern.permute.xlu0 0
  %542 = vperm.xlu0 %541, %v200
  %v543 = vpop.permute.xlu0 %542
  %546 = vset.pattern.permute.xlu0 0
  %547 = vperm.xlu0 %546, %v201
  %v548 = vpop.permute.xlu0 %547
  %v550 = vmul.f32 %v502, %v513
  %v551 = vmul.f32 %v503, %v518
  %v552 = vmul.f32 %v504, %v523
  %v553 = vmul.f32 %v505, %v528
  %v554 = vmul.f32 %v506, %v533
  %v555 = vmul.f32 %v507, %v538
  %v556 = vmul.f32 %v508, %v543
  %v557 = vmul.f32 %v509, %v548
  %v558 = vld [vmem:[%s10] sm:$0xff]
  %v559 = vld [vmem:[%s10 + $0x8] sm:$0xff]
  %v560 = vld [vmem:[%s11] sm:$0x1]
  %v562 = vlaneseq
  %v563 = vshrl.u32 %v562, 7
  %v564 = vsub.s32 0, %v563
  %v565 = vrot.slane %v560, %v564
  %567 = vmatprep.subr.mxu0 0.0
  %568 = vmatpush1.msra.mxu0 %v558
  %569 = vmatprep.subr.mxu0 0.0
  %570 = vmatpush1.msra.mxu0 %v559
  %571 = vmatprep.subr.mxu0 0.0
  %572 = vmatpush1.msra.mxu0 0.0
  %573 = vmatprep.subr.mxu0 0.0
  %574 = vmatpush1.msra.mxu0 0.0
  %575 = vmatprep.subr.mxu0 0.0
  %576 = vmatpush1.msra.mxu0 0.0
  %577 = vmatprep.subr.mxu0 0.0
  %578 = vmatpush1.msra.mxu0 0.0
  %579 = vmatprep.subr.mxu0 0.0
  %580 = vmatpush1.msra.mxu0 0.0
  %581 = vmatprep.subr.mxu0 0.0
  %582 = vmatpush1.msra.mxu0 0.0
  %583 = vmatprep.subr.mxu0 0.0
  %584 = vmatpush1.msra.mxu0 0.0
  %585 = vmatprep.subr.mxu0 0.0
  %586 = vmatpush1.msra.mxu0 0.0
  %587 = vmatprep.subr.mxu0 0.0
  %588 = vmatpush1.msra.mxu0 0.0
  %589 = vmatprep.subr.mxu0 0.0
  %590 = vmatpush1.msra.mxu0 0.0
  %591 = vmatprep.subr.mxu0 0.0
  %592 = vmatpush1.msra.mxu0 0.0
  %593 = vmatprep.subr.mxu0 0.0
  %594 = vmatpush1.msra.mxu0 0.0
  %595 = vmatprep.subr.mxu0 0.0
  %596 = vmatpush1.msra.mxu0 0.0
  %597 = vmatprep.subr.mxu0 0.0
  %598 = vmatpush1.msra.mxu0 0.0
  %599 = vmatprep.subr.mxu0 0.0
  %600 = vmatpush1.msra.mxu0 0.0
  %601 = vmatprep.subr.mxu0 0.0
  %602 = vmatpush1.msra.mxu0 0.0
  %603 = vmatprep.subr.mxu0 0.0
  %604 = vmatpush1.msra.mxu0 0.0
  %605 = vmatprep.subr.mxu0 0.0
  %606 = vmatpush1.msra.mxu0 0.0
  %607 = vmatprep.subr.mxu0 0.0
  %608 = vmatpush1.msra.mxu0 0.0
  %609 = vmatprep.subr.mxu0 0.0
  %610 = vmatpush1.msra.mxu0 0.0
  %611 = vmatprep.subr.mxu0 0.0
  %612 = vmatpush1.msra.mxu0 0.0
  %613 = vmatprep.subr.mxu0 0.0
  %614 = vmatpush1.msra.mxu0 0.0
  %615 = vmatprep.subr.mxu0 0.0
  %616 = vmatpush1.msra.mxu0 0.0
  %617 = vmatprep.subr.mxu0 0.0
  %618 = vmatpush1.msra.mxu0 0.0
  %619 = vmatprep.subr.mxu0 0.0
  %620 = vmatpush1.msra.mxu0 0.0
  %621 = vmatprep.subr.mxu0 0.0
  %622 = vmatpush1.msra.mxu0 0.0
  %623 = vmatprep.subr.mxu0 0.0
  %624 = vmatpush1.msra.mxu0 0.0
  %625 = vmatprep.subr.mxu0 0.0
  %626 = vmatpush1.msra.mxu0 0.0
  %627 = vmatprep.subr.mxu0 0.0
  %628 = vmatpush1.msra.mxu0 0.0
  %629 = vmatprep.subr.mxu0 0.0
  %630 = vmatpush1.msra.mxu0 0.0
  %631 = vmatprep.mubr.f32.mxu0 0.0
  %632 = vmatmul.mubr.f32.gmra.mrb[0].mxu0 %v212
  %v633 = vpop.f32.mrb[0].mxu0
  %v634 = vadd.f32 %v565, %v633
  %v635 = vpop.f32.mrb[0].mxu0
  %636 = vmatprep.mubr.f32.mxu0 0.0
  %637 = vmatmul.mubr.f32.gmra.mrb[0].mxu0 %v215
  %v638 = vpop.f32.mrb[0].mxu0
  %v639 = vadd.f32 %v565, %v638
  %v640 = vpop.f32.mrb[0].mxu0
  %641 = vmatprep.mubr.f32.mxu0 0.0
  %642 = vmatmul.mubr.f32.gmra.mrb[0].mxu0 %v218
  %v643 = vpop.f32.mrb[0].mxu0
  %v644 = vadd.f32 %v565, %v643
  %v645 = vpop.f32.mrb[0].mxu0
  %646 = vmatprep.mubr.f32.mxu0 0.0
  %647 = vmatmul.mubr.f32.gmra.mrb[0].mxu0 %v221
  %v648 = vpop.f32.mrb[0].mxu0
  %v649 = vadd.f32 %v565, %v648
  %v650 = vpop.f32.mrb[0].mxu0
  %651 = vmatprep.mubr.f32.mxu0 0.0
  %652 = vmatmul.mubr.f32.gmra.mrb[0].mxu0 %v224
  %v653 = vpop.f32.mrb[0].mxu0
  %v654 = vadd.f32 %v565, %v653
  %v655 = vpop.f32.mrb[0].mxu0
  %656 = vmatprep.mubr.f32.mxu0 0.0
  %657 = vmatmul.mubr.f32.gmra.mrb[0].mxu0 %v227
  %v658 = vpop.f32.mrb[0].mxu0
  %v659 = vadd.f32 %v565, %v658
  %v660 = vpop.f32.mrb[0].mxu0
  %661 = vmatprep.mubr.f32.mxu0 0.0
  %662 = vmatmul.mubr.f32.gmra.mrb[0].mxu0 %v230
  %v663 = vpop.f32.mrb[0].mxu0
  %v664 = vadd.f32 %v565, %v663
  %v665 = vpop.f32.mrb[0].mxu0
  %666 = vmatprep.mubr.f32.mxu0 0.0
  %667 = vmatmul.mubr.f32.gmra.mrb[0].mxu0 %v233
  %v668 = vpop.f32.mrb[0].mxu0
  %v669 = vadd.f32 %v565, %v668
  %v670 = vpop.f32.mrb[0].mxu0
  %671 = vdwg.mxu0
  %v672 = vxor.u32 %v634, 2147483648
  %v673 = vxor.u32 %v639, 2147483648
  %v674 = vxor.u32 %v644, 2147483648
  %v675 = vxor.u32 %v649, 2147483648
  %v676 = vxor.u32 %v654, 2147483648
  %v677 = vxor.u32 %v659, 2147483648
  %v678 = vxor.u32 %v664, 2147483648
  %v679 = vxor.u32 %v669, 2147483648
  %v680 = vmul.f32 %v672, 1.442695
  %v681 = vpow.pop %v680
  %v682 = vmul.f32 %v673, 1.442695
  %v683 = vpow.pop %v682
  %v684 = vmul.f32 %v674, 1.442695
  %v685 = vpow.pop %v684
  %v686 = vmul.f32 %v675, 1.442695
  %v687 = vpow.pop %v686
  %v688 = vmul.f32 %v676, 1.442695
  %v689 = vpow.pop %v688
  %v690 = vmul.f32 %v677, 1.442695
  %v691 = vpow.pop %v690
  %v692 = vmul.f32 %v678, 1.442695
  %v693 = vpow.pop %v692
  %v694 = vmul.f32 %v679, 1.442695
  %v695 = vpow.pop %v694
  %v696 = vadd.f32 %v681, 1.0
  %v697 = vadd.f32 %v683, 1.0
  %v698 = vadd.f32 %v685, 1.0
  %v699 = vadd.f32 %v687, 1.0
  %v700 = vadd.f32 %v689, 1.0
  %v701 = vadd.f32 %v691, 1.0
  %v702 = vadd.f32 %v693, 1.0
  %v703 = vadd.f32 %v695, 1.0
  %v704 = vrcp.pop %v696
  %v705 = vmul.f32 1.0, %v704
  %v706 = vrcp.pop %v697
  %v707 = vmul.f32 1.0, %v706
  %v708 = vrcp.pop %v698
  %v709 = vmul.f32 1.0, %v708
  %v710 = vrcp.pop %v699
  %v711 = vmul.f32 1.0, %v710
  %v712 = vrcp.pop %v700
  %v713 = vmul.f32 1.0, %v712
  %v714 = vrcp.pop %v701
  %v715 = vmul.f32 1.0, %v714
  %v716 = vrcp.pop %v702
  %v717 = vmul.f32 1.0, %v716
  %v718 = vrcp.pop %v703
  %v719 = vmul.f32 1.0, %v718
  %v720 = vld [vmem:[%s8] sm:$0xff]
  %v721 = vld [vmem:[%s8 + $0x8] sm:$0xff]
  %v722 = vld [vmem:[%s9] sm:$0x1]
  %v724 = vlaneseq
  %v725 = vshrl.u32 %v724, 7
  %v726 = vsub.s32 0, %v725
  %v727 = vrot.slane %v722, %v726
  %729 = vmatprep.subr.mxu0 0.0
  %730 = vmatpush1.msra.mxu0 %v720
  %731 = vmatprep.subr.mxu0 0.0
  %732 = vmatpush1.msra.mxu0 %v721
  %733 = vmatprep.subr.mxu0 0.0
  %734 = vmatpush1.msra.mxu0 0.0
  %735 = vmatprep.subr.mxu0 0.0
  %736 = vmatpush1.msra.mxu0 0.0
  %737 = vmatprep.subr.mxu0 0.0
  %738 = vmatpush1.msra.mxu0 0.0
  %739 = vmatprep.subr.mxu0 0.0
  %740 = vmatpush1.msra.mxu0 0.0
  %741 = vmatprep.subr.mxu0 0.0
  %742 = vmatpush1.msra.mxu0 0.0
  %743 = vmatprep.subr.mxu0 0.0
  %744 = vmatpush1.msra.mxu0 0.0
  %745 = vmatprep.subr.mxu0 0.0
  %746 = vmatpush1.msra.mxu0 0.0
  %747 = vmatprep.subr.mxu0 0.0
  %748 = vmatpush1.msra.mxu0 0.0
  %749 = vmatprep.subr.mxu0 0.0
  %750 = vmatpush1.msra.mxu0 0.0
  %751 = vmatprep.subr.mxu0 0.0
  %752 = vmatpush1.msra.mxu0 0.0
  %753 = vmatprep.subr.mxu0 0.0
  %754 = vmatpush1.msra.mxu0 0.0
  %755 = vmatprep.subr.mxu0 0.0
  %756 = vmatpush1.msra.mxu0 0.0
  %757 = vmatprep.subr.mxu0 0.0
  %758 = vmatpush1.msra.mxu0 0.0
  %759 = vmatprep.subr.mxu0 0.0
  %760 = vmatpush1.msra.mxu0 0.0
  %761 = vmatprep.subr.mxu0 0.0
  %762 = vmatpush1.msra.mxu0 0.0
  %763 = vmatprep.subr.mxu0 0.0
  %764 = vmatpush1.msra.mxu0 0.0
  %765 = vmatprep.subr.mxu0 0.0
  %766 = vmatpush1.msra.mxu0 0.0
  %767 = vmatprep.subr.mxu0 0.0
  %768 = vmatpush1.msra.mxu0 0.0
  %769 = vmatprep.subr.mxu0 0.0
  %770 = vmatpush1.msra.mxu0 0.0
  %771 = vmatprep.subr.mxu0 0.0
  %772 = vmatpush1.msra.mxu0 0.0
  %773 = vmatprep.subr.mxu0 0.0
  %774 = vmatpush1.msra.mxu0 0.0
  %775 = vmatprep.subr.mxu0 0.0
  %776 = vmatpush1.msra.mxu0 0.0
  %777 = vmatprep.subr.mxu0 0.0
  %778 = vmatpush1.msra.mxu0 0.0
  %779 = vmatprep.subr.mxu0 0.0
  %780 = vmatpush1.msra.mxu0 0.0
  %781 = vmatprep.subr.mxu0 0.0
  %782 = vmatpush1.msra.mxu0 0.0
  %783 = vmatprep.subr.mxu0 0.0
  %784 = vmatpush1.msra.mxu0 0.0
  %785 = vmatprep.subr.mxu0 0.0
  %786 = vmatpush1.msra.mxu0 0.0
  %787 = vmatprep.subr.mxu0 0.0
  %788 = vmatpush1.msra.mxu0 0.0
  %789 = vmatprep.subr.mxu0 0.0
  %790 = vmatpush1.msra.mxu0 0.0
  %791 = vmatprep.subr.mxu0 0.0
  %792 = vmatpush1.msra.mxu0 0.0
  %793 = vmatprep.mubr.f32.mxu0 0.0
  %794 = vmatmul.mubr.f32.gmra.mrb[0].mxu0 %v212
  %v795 = vpop.f32.mrb[0].mxu0
  %v796 = vadd.f32 %v727, %v795
  %v797 = vpop.f32.mrb[0].mxu0
  %798 = vmatprep.mubr.f32.mxu0 0.0
  %799 = vmatmul.mubr.f32.gmra.mrb[0].mxu0 %v215
  %v800 = vpop.f32.mrb[0].mxu0
  %v801 = vadd.f32 %v727, %v800
  %v802 = vpop.f32.mrb[0].mxu0
  %803 = vmatprep.mubr.f32.mxu0 0.0
  %804 = vmatmul.mubr.f32.gmra.mrb[0].mxu0 %v218
  %v805 = vpop.f32.mrb[0].mxu0
  %v806 = vadd.f32 %v727, %v805
  %v807 = vpop.f32.mrb[0].mxu0
  %808 = vmatprep.mubr.f32.mxu0 0.0
  %809 = vmatmul.mubr.f32.gmra.mrb[0].mxu0 %v221
  %v810 = vpop.f32.mrb[0].mxu0
  %v811 = vadd.f32 %v727, %v810
  %v812 = vpop.f32.mrb[0].mxu0
  %813 = vmatprep.mubr.f32.mxu0 0.0
  %814 = vmatmul.mubr.f32.gmra.mrb[0].mxu0 %v224
  %v815 = vpop.f32.mrb[0].mxu0
  %v816 = vadd.f32 %v727, %v815
  %v817 = vpop.f32.mrb[0].mxu0
  %818 = vmatprep.mubr.f32.mxu0 0.0
  %819 = vmatmul.mubr.f32.gmra.mrb[0].mxu0 %v227
  %v820 = vpop.f32.mrb[0].mxu0
  %v821 = vadd.f32 %v727, %v820
  %v822 = vpop.f32.mrb[0].mxu0
  %823 = vmatprep.mubr.f32.mxu0 0.0
  %824 = vmatmul.mubr.f32.gmra.mrb[0].mxu0 %v230
  %v825 = vpop.f32.mrb[0].mxu0
  %v826 = vadd.f32 %v727, %v825
  %v827 = vpop.f32.mrb[0].mxu0
  %828 = vmatprep.mubr.f32.mxu0 0.0
  %829 = vmatmul.mubr.f32.gmra.mrb[0].mxu0 %v233
  %v830 = vpop.f32.mrb[0].mxu0
  %v831 = vadd.f32 %v727, %v830
  %v832 = vpop.f32.mrb[0].mxu0
  %833 = vdwg.mxu0
  %v834 = vmul.f32 %v705, %v796
  %v835 = vmul.f32 %v707, %v801
  %v836 = vmul.f32 %v709, %v806
  %v837 = vmul.f32 %v711, %v811
  %v838 = vmul.f32 %v713, %v816
  %v839 = vmul.f32 %v715, %v821
  %v840 = vmul.f32 %v717, %v826
  %v841 = vmul.f32 %v719, %v831
  %v842 = vmul.f32 %v834, %v513
  %v843 = vmul.f32 %v835, %v518
  %v844 = vmul.f32 %v836, %v523
  %v845 = vmul.f32 %v837, %v528
  %v846 = vmul.f32 %v838, %v533
  %v847 = vmul.f32 %v839, %v538
  %v848 = vmul.f32 %v840, %v543
  %v849 = vmul.f32 %v841, %v548
  %v850 = vld [vmem:[%s12] sm:$0xff]
  %v851 = vld [vmem:[%s12 + $0x8] sm:$0xff]
  %v852 = vld [vmem:[%s13] sm:$0x1]
  %v854 = vlaneseq
  %v855 = vshrl.u32 %v854, 7
  %v856 = vsub.s32 0, %v855
  %v857 = vrot.slane %v852, %v856
  %859 = vmatprep.subr.mxu0 0.0
  %860 = vmatpush1.msra.mxu0 %v850
  %861 = vmatprep.subr.mxu0 0.0
  %862 = vmatpush1.msra.mxu0 %v851
  %863 = vmatprep.subr.mxu0 0.0
  %864 = vmatpush1.msra.mxu0 0.0
  %865 = vmatprep.subr.mxu0 0.0
  %866 = vmatpush1.msra.mxu0 0.0
  %867 = vmatprep.subr.mxu0 0.0
  %868 = vmatpush1.msra.mxu0 0.0
  %869 = vmatprep.subr.mxu0 0.0
  %870 = vmatpush1.msra.mxu0 0.0
  %871 = vmatprep.subr.mxu0 0.0
  %872 = vmatpush1.msra.mxu0 0.0
  %873 = vmatprep.subr.mxu0 0.0
  %874 = vmatpush1.msra.mxu0 0.0
  %875 = vmatprep.subr.mxu0 0.0
  %876 = vmatpush1.msra.mxu0 0.0
  %877 = vmatprep.subr.mxu0 0.0
  %878 = vmatpush1.msra.mxu0 0.0
  %879 = vmatprep.subr.mxu0 0.0
  %880 = vmatpush1.msra.mxu0 0.0
  %881 = vmatprep.subr.mxu0 0.0
  %882 = vmatpush1.msra.mxu0 0.0
  %883 = vmatprep.subr.mxu0 0.0
  %884 = vmatpush1.msra.mxu0 0.0
  %885 = vmatprep.subr.mxu0 0.0
  %886 = vmatpush1.msra.mxu0 0.0
  %887 = vmatprep.subr.mxu0 0.0
  %888 = vmatpush1.msra.mxu0 0.0
  %889 = vmatprep.subr.mxu0 0.0
  %890 = vmatpush1.msra.mxu0 0.0
  %891 = vmatprep.subr.mxu0 0.0
  %892 = vmatpush1.msra.mxu0 0.0
  %893 = vmatprep.subr.mxu0 0.0
  %894 = vmatpush1.msra.mxu0 0.0
  %895 = vmatprep.subr.mxu0 0.0
  %896 = vmatpush1.msra.mxu0 0.0
  %897 = vmatprep.subr.mxu0 0.0
  %898 = vmatpush1.msra.mxu0 0.0
  %899 = vmatprep.subr.mxu0 0.0
  %900 = vmatpush1.msra.mxu0 0.0
  %901 = vmatprep.subr.mxu0 0.0
  %902 = vmatpush1.msra.mxu0 0.0
  %903 = vmatprep.subr.mxu0 0.0
  %904 = vmatpush1.msra.mxu0 0.0
  %905 = vmatprep.subr.mxu0 0.0
  %906 = vmatpush1.msra.mxu0 0.0
  %907 = vmatprep.subr.mxu0 0.0
  %908 = vmatpush1.msra.mxu0 0.0
  %909 = vmatprep.subr.mxu0 0.0
  %910 = vmatpush1.msra.mxu0 0.0
  %911 = vmatprep.subr.mxu0 0.0
  %912 = vmatpush1.msra.mxu0 0.0
  %913 = vmatprep.subr.mxu0 0.0
  %914 = vmatpush1.msra.mxu0 0.0
  %915 = vmatprep.subr.mxu0 0.0
  %916 = vmatpush1.msra.mxu0 0.0
  %917 = vmatprep.subr.mxu0 0.0
  %918 = vmatpush1.msra.mxu0 0.0
  %919 = vmatprep.subr.mxu0 0.0
  %920 = vmatpush1.msra.mxu0 0.0
  %921 = vmatprep.subr.mxu0 0.0
  %922 = vmatpush1.msra.mxu0 0.0
  %923 = vmatprep.mubr.f32.mxu0 0.0
  %924 = vmatmul.mubr.f32.gmra.mrb[0].mxu0 %v212
  %v925 = vpop.f32.mrb[0].mxu0
  %v926 = vadd.f32 %v857, %v925
  %v927 = vpop.f32.mrb[0].mxu0
  %928 = vmatprep.mubr.f32.mxu0 0.0
  %929 = vmatmul.mubr.f32.gmra.mrb[0].mxu0 %v215
  %v930 = vpop.f32.mrb[0].mxu0
  %v931 = vadd.f32 %v857, %v930
  %v932 = vpop.f32.mrb[0].mxu0
  %933 = vmatprep.mubr.f32.mxu0 0.0
  %934 = vmatmul.mubr.f32.gmra.mrb[0].mxu0 %v218
  %v935 = vpop.f32.mrb[0].mxu0
  %v936 = vadd.f32 %v857, %v935
  %v937 = vpop.f32.mrb[0].mxu0
  %938 = vmatprep.mubr.f32.mxu0 0.0
  %939 = vmatmul.mubr.f32.gmra.mrb[0].mxu0 %v221
  %v940 = vpop.f32.mrb[0].mxu0
  %v941 = vadd.f32 %v857, %v940
  %v942 = vpop.f32.mrb[0].mxu0
  %943 = vmatprep.mubr.f32.mxu0 0.0
  %944 = vmatmul.mubr.f32.gmra.mrb[0].mxu0 %v224
  %v945 = vpop.f32.mrb[0].mxu0
  %v946 = vadd.f32 %v857, %v945
  %v947 = vpop.f32.mrb[0].mxu0
  %948 = vmatprep.mubr.f32.mxu0 0.0
  %949 = vmatmul.mubr.f32.gmra.mrb[0].mxu0 %v227
  %v950 = vpop.f32.mrb[0].mxu0
  %v951 = vadd.f32 %v857, %v950
  %v952 = vpop.f32.mrb[0].mxu0
  %953 = vmatprep.mubr.f32.mxu0 0.0
  %954 = vmatmul.mubr.f32.gmra.mrb[0].mxu0 %v230
  %v955 = vpop.f32.mrb[0].mxu0
  %v956 = vadd.f32 %v857, %v955
  %v957 = vpop.f32.mrb[0].mxu0
  %958 = vmatprep.mubr.f32.mxu0 0.0
  %959 = vmatmul.mubr.f32.gmra.mrb[0].mxu0 %v233
  %v960 = vpop.f32.mrb[0].mxu0
  %v961 = vadd.f32 %v857, %v960
  %v962 = vpop.f32.mrb[0].mxu0
  %963 = vdwg.mxu0
  %v964 = vxor.u32 %v926, 2147483648
  %v965 = vxor.u32 %v931, 2147483648
  %v966 = vxor.u32 %v936, 2147483648
  %v967 = vxor.u32 %v941, 2147483648
  %v968 = vxor.u32 %v946, 2147483648
  %v969 = vxor.u32 %v951, 2147483648
  %v970 = vxor.u32 %v956, 2147483648
  %v971 = vxor.u32 %v961, 2147483648
  %v972 = vmul.f32 %v964, 1.442695
  %v973 = vpow.pop %v972
  %v974 = vmul.f32 %v965, 1.442695
  %v975 = vpow.pop %v974
  %v976 = vmul.f32 %v966, 1.442695
  %v977 = vpow.pop %v976
  %v978 = vmul.f32 %v967, 1.442695
  %v979 = vpow.pop %v978
  %v980 = vmul.f32 %v968, 1.442695
  %v981 = vpow.pop %v980
  %v982 = vmul.f32 %v969, 1.442695
  %v983 = vpow.pop %v982
  %v984 = vmul.f32 %v970, 1.442695
  %v985 = vpow.pop %v984
  %v986 = vmul.f32 %v971, 1.442695
  %v987 = vpow.pop %v986
  %v988 = vadd.f32 %v973, 1.0
  %v989 = vadd.f32 %v975, 1.0
  %v990 = vadd.f32 %v977, 1.0
  %v991 = vadd.f32 %v979, 1.0
  %v992 = vadd.f32 %v981, 1.0
  %v993 = vadd.f32 %v983, 1.0
  %v994 = vadd.f32 %v985, 1.0
  %v995 = vadd.f32 %v987, 1.0
  %v996 = vrcp.pop %v988
  %v997 = vmul.f32 1.0, %v996
  %v998 = vrcp.pop %v989
  %v999 = vmul.f32 1.0, %v998
  %v1000 = vrcp.pop %v990
  %v1001 = vmul.f32 1.0, %v1000
  %v1002 = vrcp.pop %v991
  %v1003 = vmul.f32 1.0, %v1002
  %v1004 = vrcp.pop %v992
  %v1005 = vmul.f32 1.0, %v1004
  %v1006 = vrcp.pop %v993
  %v1007 = vmul.f32 1.0, %v1006
  %v1008 = vrcp.pop %v994
  %v1009 = vmul.f32 1.0, %v1008
  %v1010 = vrcp.pop %v995
  %v1011 = vmul.f32 1.0, %v1010
  %v1012 = vpack.c.bf16 %v551, %v550
  %v1013 = vpack.c.bf16 %v553, %v552
  %v1014 = vpack.c.bf16 %v555, %v554
  %v1015 = vpack.c.bf16 %v557, %v556
  %v1020 = vunpack.c.l.b16 %v1012
  %v1021 = vunpack.c.h.b16 %v1012
  %v1022 = vunpack.c.l.b16 %v1013
  %v1023 = vunpack.c.h.b16 %v1013
  %v1024 = vunpack.c.l.b16 %v1014
  %v1025 = vunpack.c.h.b16 %v1014
  %v1026 = vunpack.c.l.b16 %v1015
  %v1027 = vunpack.c.h.b16 %v1015
  %v1028 = vpack.c.b16 %v1020, %v1020
  %v1029 = vpack.c.b16 %v1021, %v1021
  %v1030 = vpack.c.b16 %v1022, %v1022
  %v1031 = vpack.c.b16 %v1023, %v1023
  %v1032 = vpack.c.b16 %v1024, %v1024
  %v1033 = vpack.c.b16 %v1025, %v1025
  %v1034 = vpack.c.b16 %v1026, %v1026
  %v1035 = vpack.c.b16 %v1027, %v1027
  %vm1044 = vcmask 125952
  %1045 = vst.msk [vmem:[%s14] sm:$0xf] %vm1044, %v1028
  %1046 = vst.msk [vmem:[%s14 + $0x4] sm:$0xf] %vm1044, %v1029
  %1047 = vst.msk [vmem:[%s14 + $0x8] sm:$0xf] %vm1044, %v1030
  %1048 = vst.msk [vmem:[%s14 + $0xc] sm:$0xf] %vm1044, %v1031
  %1049 = vst.msk [vmem:[%s14 + $0x10] sm:$0xf] %vm1044, %v1032
  %1050 = vst.msk [vmem:[%s14 + $0x14] sm:$0xf] %vm1044, %v1033
  %1051 = vst.msk [vmem:[%s14 + $0x18] sm:$0xf] %vm1044, %v1034
  %1052 = vst.msk [vmem:[%s14 + $0x1c] sm:$0xf] %vm1044, %v1035
  %v1053 = vpack.c.bf16 %v843, %v842
  %v1054 = vpack.c.bf16 %v845, %v844
  %v1055 = vpack.c.bf16 %v847, %v846
  %v1056 = vpack.c.bf16 %v849, %v848
  %v1061 = vunpack.c.l.b16 %v1053
  %v1062 = vunpack.c.h.b16 %v1053
  %v1063 = vunpack.c.l.b16 %v1054
  %v1064 = vunpack.c.h.b16 %v1054
  %v1065 = vunpack.c.l.b16 %v1055
  %v1066 = vunpack.c.h.b16 %v1055
  %v1067 = vunpack.c.l.b16 %v1056
  %v1068 = vunpack.c.h.b16 %v1056
  %v1069 = vpack.c.b16 %v1061, %v1061
  %v1070 = vpack.c.b16 %v1062, %v1062
  %v1071 = vpack.c.b16 %v1063, %v1063
  %v1072 = vpack.c.b16 %v1064, %v1064
  %v1073 = vpack.c.b16 %v1065, %v1065
  %v1074 = vpack.c.b16 %v1066, %v1066
  %v1075 = vpack.c.b16 %v1067, %v1067
  %v1076 = vpack.c.b16 %v1068, %v1068
  %1085 = vst.msk [vmem:[%s15] sm:$0xf] %vm1044, %v1069
  %1086 = vst.msk [vmem:[%s15 + $0x4] sm:$0xf] %vm1044, %v1070
  %1087 = vst.msk [vmem:[%s15 + $0x8] sm:$0xf] %vm1044, %v1071
  %1088 = vst.msk [vmem:[%s15 + $0xc] sm:$0xf] %vm1044, %v1072
  %1089 = vst.msk [vmem:[%s15 + $0x10] sm:$0xf] %vm1044, %v1073
  %1090 = vst.msk [vmem:[%s15 + $0x14] sm:$0xf] %vm1044, %v1074
  %1091 = vst.msk [vmem:[%s15 + $0x18] sm:$0xf] %vm1044, %v1075
  %1092 = vst.msk [vmem:[%s15 + $0x1c] sm:$0xf] %vm1044, %v1076
  %1093 = vst.msk [vmem:[%s16] sm:$0xff] %vm60, %v997
  %1094 = vst.msk [vmem:[%s16 + $0x8] sm:$0xff] %vm60, %v999
  %1095 = vst.msk [vmem:[%s16 + $0x10] sm:$0xff] %vm60, %v1001
  %1096 = vst.msk [vmem:[%s16 + $0x18] sm:$0xff] %vm60, %v1003
  %1097 = vst.msk [vmem:[%s16 + $0x20] sm:$0xff] %vm60, %v1005
  %1098 = vst.msk [vmem:[%s16 + $0x28] sm:$0xff] %vm60, %v1007
  %1099 = vst.msk [vmem:[%s16 + $0x30] sm:$0xff] %vm60, %v1009
  %1100 = vst.msk [vmem:[%s16 + $0x38] sm:$0xff] %vm60, %v1011
  // Predicated region
  $region58: #{evoformer_stack_forward.44} parent=0 // pred_check
    _
  $region59: #{evoformer_stack_forward.44} parent=0 // pred_check_branch
    %1102 = sbr.rel (0) target = $region61
  $region60: #{evoformer_stack_forward.44} parent=0 // pred_region
    _
  $region61: #{evoformer_stack_forward.44} parent=0 // pred_fallthru
    _
  // Predicated region
  $region62: #{evoformer_stack_forward.44} parent=0 // pred_check
    _
  $region63: #{evoformer_stack_forward.44} parent=0 // pred_check_branch
    %1104 = sbr.rel (0) target = $region65
  $region64: #{evoformer_stack_forward.44} parent=0 // pred_region
    _
  $region65: #{evoformer_stack_forward.44} parent=0 // pred_fallthru
    _
  // Predicated region
  $region66: #{evoformer_stack_forward.44} parent=0 // pred_check
    _
  $region67: #{evoformer_stack_forward.44} parent=0 // pred_check_branch
    %1106 = sbr.rel (0) target = $region69
  $region68: #{evoformer_stack_forward.44} parent=0 // pred_region
    _
  $region69: #{evoformer_stack_forward.44} parent=0 // pred_fallthru
    _
  // Predicated region
  $region70: #{evoformer_stack_forward.44} parent=0 // pred_check
    _
  $region71: #{evoformer_stack_forward.44} parent=0 // pred_check_branch
    %1108 = sbr.rel (0) target = $region73
  $region72: #{evoformer_stack_forward.44} parent=0 // pred_region
    _
  $region73: #{evoformer_stack_forward.44} parent=0 // pred_fallthru
    _
  // Predicated region
  $region74: #{evoformer_stack_forward.44} parent=0 // pred_check
    _
  $region75: #{evoformer_stack_forward.44} parent=0 // pred_check_branch
    %1110 = sbr.rel (0) target = $region77
  $region76: #{evoformer_stack_forward.44} parent=0 // pred_region
    _
  $region77: #{evoformer_stack_forward.44} parent=0 // pred_fallthru
    _
  // Predicated region
  $region78: #{evoformer_stack_forward.44} parent=0 // pred_check
    _
  $region79: #{evoformer_stack_forward.44} parent=0 // pred_check_branch
    %1112 = sbr.rel (0) target = $region81
  $region80: #{evoformer_stack_forward.44} parent=0 // pred_region
    _
  $region81: #{evoformer_stack_forward.44} parent=0 // pred_fallthru
    _

// kernel: evoformer_stack_forward.46
$region0: #{evoformer_stack_forward.46}
  #allocation0 [shape = 'u32[]', space=smem, size = 0x4, offset = 0x4, fixed_abs, tag = 'smem constant byte address 0x4 - core index']
  #allocation1 [shape = 'u32[144,128]{1,0:T(1,128)}', space=vmem, size = 0x12000, scoped, tag = 'internal scratch']
  %s0 = inlined_call_operand.vmem [shape: bf16[64,16], index: 0, kind: input, shape index: {}]
  %s1 = inlined_call_operand.vmem [shape: f32[64,16], index: 1, kind: input, shape index: {}]
  %s2 = inlined_call_operand.vmem [shape: f32[1,16], index: 2, kind: input, shape index: {}]
  %s3 = inlined_call_operand.vmem [shape: f32[1,16], index: 3, kind: input, shape index: {}]
  %s4 = inlined_call_operand.vmem [shape: f32[16,16], index: 4, kind: input, shape index: {}]
  %s5 = inlined_call_operand.vmem [shape: f32[1,16], index: 5, kind: input, shape index: {}]
  %s6 = inlined_call_operand.vmem [shape: f32[64,16], index: 6, kind: output, shape index: {}]
  %s7 = sld [smem:[#allocation0]]
  $region34: #{evoformer_stack_forward.46} parent=0
    _
  %s9 = ssub.s32 1, %s7
  %s10 = scalar_select 0, %s9, %s7
  // Predicated region
  $region2: #{evoformer_stack_forward.46} parent=0 // pred_check
    _
  $region3: #{evoformer_stack_forward.46} parent=0 // pred_check_branch
    %12 = sbr.rel (0) target = $region5
  $region4: #{evoformer_stack_forward.46} parent=0 // pred_region
    _
  $region5: #{evoformer_stack_forward.46} parent=0 // pred_fallthru
    _
  // Predicated region
  $region6: #{evoformer_stack_forward.46} parent=0 // pred_check
    _
  $region7: #{evoformer_stack_forward.46} parent=0 // pred_check_branch
    %14 = sbr.rel (0) target = $region9
  $region8: #{evoformer_stack_forward.46} parent=0 // pred_region
    _
  $region9: #{evoformer_stack_forward.46} parent=0 // pred_fallthru
    _
  // Predicated region
  $region10: #{evoformer_stack_forward.46} parent=0 // pred_check
    _
  $region11: #{evoformer_stack_forward.46} parent=0 // pred_check_branch
    %16 = sbr.rel (0) target = $region13
  $region12: #{evoformer_stack_forward.46} parent=0 // pred_region
    _
  $region13: #{evoformer_stack_forward.46} parent=0 // pred_fallthru
    _
  // Predicated region
  $region14: #{evoformer_stack_forward.46} parent=0 // pred_check
    _
  $region15: #{evoformer_stack_forward.46} parent=0 // pred_check_branch
    %18 = sbr.rel (0) target = $region17
  $region16: #{evoformer_stack_forward.46} parent=0 // pred_region
    _
  $region17: #{evoformer_stack_forward.46} parent=0 // pred_fallthru
    _
  // Predicated region
  $region18: #{evoformer_stack_forward.46} parent=0 // pred_check
    _
  $region19: #{evoformer_stack_forward.46} parent=0 // pred_check_branch
    %20 = sbr.rel (0) target = $region21
  $region20: #{evoformer_stack_forward.46} parent=0 // pred_region
    _
  $region21: #{evoformer_stack_forward.46} parent=0 // pred_fallthru
    _
  // Predicated region
  $region22: #{evoformer_stack_forward.46} parent=0 // pred_check
    _
  $region23: #{evoformer_stack_forward.46} parent=0 // pred_check_branch
    %22 = sbr.rel (0) target = $region25
  $region24: #{evoformer_stack_forward.46} parent=0 // pred_region
    _
  $region25: #{evoformer_stack_forward.46} parent=0 // pred_fallthru
    _
  %v23 = vld [vmem:[%s0] sm:$0xf]
  %v24 = vld [vmem:[%s0 + $0x4] sm:$0xf]
  %v25 = vld [vmem:[%s0 + $0x8] sm:$0xf]
  %v26 = vld [vmem:[%s0 + $0xc] sm:$0xf]
  %v27 = vld [vmem:[%s0 + $0x10] sm:$0xf]
  %v28 = vld [vmem:[%s0 + $0x14] sm:$0xf]
  %v29 = vld [vmem:[%s0 + $0x18] sm:$0xf]
  %v30 = vld [vmem:[%s0 + $0x1c] sm:$0xf]
  %v31 = vunpack.c.l.bf16 %v23
  %v32 = vunpack.c.l.bf16 %v24
  %v33 = vunpack.c.l.bf16 %v25
  %v34 = vunpack.c.l.bf16 %v26
  %v35 = vunpack.c.l.bf16 %v27
  %v36 = vunpack.c.l.bf16 %v28
  %v37 = vunpack.c.l.bf16 %v29
  %v38 = vunpack.c.l.bf16 %v30
  %v39 = vld [vmem:[%s2] sm:$0x1]
  %v40 = vld [vmem:[%s3] sm:$0x1]
  %vm41 = vcmask 130048
  %v42 = vsel %vm41, %v31, 0.0
  %43 = vadd.xlane.f32.xlu0 %v42
  %v44 = vpop.xlane.xlu0 %43
  %v45 = vsel %vm41, %v32, 0.0
  %46 = vadd.xlane.f32.xlu0 %v45
  %v47 = vpop.xlane.xlu0 %46
  %v48 = vsel %vm41, %v33, 0.0
  %49 = vadd.xlane.f32.xlu0 %v48
  %v50 = vpop.xlane.xlu0 %49
  %v51 = vsel %vm41, %v34, 0.0
  %52 = vadd.xlane.f32.xlu0 %v51
  %v53 = vpop.xlane.xlu0 %52
  %v54 = vsel %vm41, %v35, 0.0
  %55 = vadd.xlane.f32.xlu0 %v54
  %v56 = vpop.xlane.xlu0 %55
  %v57 = vsel %vm41, %v36, 0.0
  %58 = vadd.xlane.f32.xlu0 %v57
  %v59 = vpop.xlane.xlu0 %58
  %v60 = vsel %vm41, %v37, 0.0
  %61 = vadd.xlane.f32.xlu0 %v60
  %v62 = vpop.xlane.xlu0 %61
  %v63 = vsel %vm41, %v38, 0.0
  %64 = vadd.xlane.f32.xlu0 %v63
  %v65 = vpop.xlane.xlu0 %64
  %v66 = vrcp.pop 16.0
  %v67 = vmul.f32 %v44, %v66
  %v68 = vmul.f32 %v47, %v66
  %v69 = vmul.f32 %v50, %v66
  %v70 = vmul.f32 %v53, %v66
  %v71 = vmul.f32 %v56, %v66
  %v72 = vmul.f32 %v59, %v66
  %v73 = vmul.f32 %v62, %v66
  %v74 = vmul.f32 %v65, %v66
  %v75 = vsub.f32 %v31, %v67
  %v76 = vsub.f32 %v32, %v68
  %v77 = vsub.f32 %v33, %v69
  %v78 = vsub.f32 %v34, %v70
  %v79 = vsub.f32 %v35, %v71
  %v80 = vsub.f32 %v36, %v72
  %v81 = vsub.f32 %v37, %v73
  %v82 = vsub.f32 %v38, %v74
  %v83 = vmul.f32 %v75, %v75
  %v84 = vmul.f32 %v76, %v76
  %v85 = vmul.f32 %v77, %v77
  %v86 = vmul.f32 %v78, %v78
  %v87 = vmul.f32 %v79, %v79
  %v88 = vmul.f32 %v80, %v80
  %v89 = vmul.f32 %v81, %v81
  %v90 = vmul.f32 %v82, %v82
  %v91 = vsel %vm41, %v83, 0.0
  %92 = vadd.xlane.f32.xlu0 %v91
  %v93 = vpop.xlane.xlu0 %92
  %v94 = vsel %vm41, %v84, 0.0
  %95 = vadd.xlane.f32.xlu0 %v94
  %v96 = vpop.xlane.xlu0 %95
  %v97 = vsel %vm41, %v85, 0.0
  %98 = vadd.xlane.f32.xlu0 %v97
  %v99 = vpop.xlane.xlu0 %98
  %v100 = vsel %vm41, %v86, 0.0
  %101 = vadd.xlane.f32.xlu0 %v100
  %v102 = vpop.xlane.xlu0 %101
  %v103 = vsel %vm41, %v87, 0.0
  %104 = vadd.xlane.f32.xlu0 %v103
  %v105 = vpop.xlane.xlu0 %104
  %v106 = vsel %vm41, %v88, 0.0
  %107 = vadd.xlane.f32.xlu0 %v106
  %v108 = vpop.xlane.xlu0 %107
  %v109 = vsel %vm41, %v89, 0.0
  %110 = vadd.xlane.f32.xlu0 %v109
  %v111 = vpop.xlane.xlu0 %110
  %v112 = vsel %vm41, %v90, 0.0
  %113 = vadd.xlane.f32.xlu0 %v112
  %v114 = vpop.xlane.xlu0 %113
  %v115 = vmul.f32 %v93, %v66
  %v116 = vmul.f32 %v96, %v66
  %v117 = vmul.f32 %v99, %v66
  %v118 = vmul.f32 %v102, %v66
  %v119 = vmul.f32 %v105, %v66
  %v120 = vmul.f32 %v108, %v66
  %v121 = vmul.f32 %v111, %v66
  %v122 = vmul.f32 %v114, %v66
  %v123 = vadd.f32 %v115, 1e-05
  %v124 = vadd.f32 %v116, 1e-05
  %v125 = vadd.f32 %v117, 1e-05
  %v126 = vadd.f32 %v118, 1e-05
  %v127 = vadd.f32 %v119, 1e-05
  %v128 = vadd.f32 %v120, 1e-05
  %v129 = vadd.f32 %v121, 1e-05
  %v130 = vadd.f32 %v122, 1e-05
  %v131 = vrsqrt.pop %v123
  %v132 = vrsqrt.pop %v124
  %v133 = vrsqrt.pop %v125
  %v134 = vrsqrt.pop %v126
  %v135 = vrsqrt.pop %v127
  %v136 = vrsqrt.pop %v128
  %v137 = vrsqrt.pop %v129
  %v138 = vrsqrt.pop %v130
  %v139 = vmul.f32 %v75, %v131
  %v140 = vmul.f32 %v76, %v132
  %v141 = vmul.f32 %v77, %v133
  %v142 = vmul.f32 %v78, %v134
  %v143 = vmul.f32 %v79, %v135
  %v144 = vmul.f32 %v80, %v136
  %v145 = vmul.f32 %v81, %v137
  %v146 = vmul.f32 %v82, %v138
  %v148 = vlaneseq
  %v149 = vshrl.u32 %v148, 7
  %v150 = vsub.s32 0, %v149
  %v151 = vrot.slane %v39, %v150
  %v153 = vmul.f32 %v139, %v151
  %v154 = vmul.f32 %v140, %v151
  %v155 = vmul.f32 %v141, %v151
  %v156 = vmul.f32 %v142, %v151
  %v157 = vmul.f32 %v143, %v151
  %v158 = vmul.f32 %v144, %v151
  %v159 = vmul.f32 %v145, %v151
  %v160 = vmul.f32 %v146, %v151
  %v162 = vlaneseq
  %v163 = vshrl.u32 %v162, 7
  %v164 = vsub.s32 0, %v163
  %v165 = vrot.slane %v40, %v164
  %v167 = vadd.f32 %v153, %v165
  %v168 = vadd.f32 %v154, %v165
  %v169 = vadd.f32 %v155, %v165
  %v170 = vadd.f32 %v156, %v165
  %v171 = vadd.f32 %v157, %v165
  %v172 = vadd.f32 %v158, %v165
  %v173 = vadd.f32 %v159, %v165
  %v174 = vadd.f32 %v160, %v165
  %v175 = vld [vmem:[%s4] sm:$0xff]
  %v176 = vld [vmem:[%s4 + $0x8] sm:$0xff]
  %v177 = vld [vmem:[%s5] sm:$0x1]
  %v179 = vlaneseq
  %v180 = vshrl.u32 %v179, 7
  %v181 = vsub.s32 0, %v180
  %v182 = vrot.slane %v177, %v181
  %v185 = vsel %vm41, %v167, 0
  %v188 = vsel %vm41, %v168, 0
  %v191 = vsel %vm41, %v169, 0
  %v194 = vsel %vm41, %v170, 0
  %v197 = vsel %vm41, %v171, 0
  %v200 = vsel %vm41, %v172, 0
  %v203 = vsel %vm41, %v173, 0
  %v206 = vsel %vm41, %v174, 0
  %208 = vmatprep.subr.mxu0 0.0
  %209 = vmatpush1.msra.mxu0 %v175
  %210 = vmatprep.subr.mxu0 0.0
  %211 = vmatpush1.msra.mxu0 %v176
  %212 = vmatprep.subr.mxu0 0.0
  %213 = vmatpush1.msra.mxu0 0.0
  %214 = vmatprep.subr.mxu0 0.0
  %215 = vmatpush1.msra.mxu0 0.0
  %216 = vmatprep.subr.mxu0 0.0
  %217 = vmatpush1.msra.mxu0 0.0
  %218 = vmatprep.subr.mxu0 0.0
  %219 = vmatpush1.msra.mxu0 0.0
  %220 = vmatprep.subr.mxu0 0.0
  %221 = vmatpush1.msra.mxu0 0.0
  %222 = vmatprep.subr.mxu0 0.0
  %223 = vmatpush1.msra.mxu0 0.0
  %224 = vmatprep.subr.mxu0 0.0
  %225 = vmatpush1.msra.mxu0 0.0
  %226 = vmatprep.subr.mxu0 0.0
  %227 = vmatpush1.msra.mxu0 0.0
  %228 = vmatprep.subr.mxu0 0.0
  %229 = vmatpush1.msra.mxu0 0.0
  %230 = vmatprep.subr.mxu0 0.0
  %231 = vmatpush1.msra.mxu0 0.0
  %232 = vmatprep.subr.mxu0 0.0
  %233 = vmatpush1.msra.mxu0 0.0
  %234 = vmatprep.subr.mxu0 0.0
  %235 = vmatpush1.msra.mxu0 0.0
  %236 = vmatprep.subr.mxu0 0.0
  %237 = vmatpush1.msra.mxu0 0.0
  %238 = vmatprep.subr.mxu0 0.0
  %239 = vmatpush1.msra.mxu0 0.0
  %240 = vmatprep.subr.mxu0 0.0
  %241 = vmatpush1.msra.mxu0 0.0
  %242 = vmatprep.subr.mxu0 0.0
  %243 = vmatpush1.msra.mxu0 0.0
  %244 = vmatprep.subr.mxu0 0.0
  %245 = vmatpush1.msra.mxu0 0.0
  %246 = vmatprep.subr.mxu0 0.0
  %247 = vmatpush1.msra.mxu0 0.0
  %248 = vmatprep.subr.mxu0 0.0
  %249 = vmatpush1.msra.mxu0 0.0
  %250 = vmatprep.subr.mxu0 0.0
  %251 = vmatpush1.msra.mxu0 0.0
  %252 = vmatprep.subr.mxu0 0.0
  %253 = vmatpush1.msra.mxu0 0.0
  %254 = vmatprep.subr.mxu0 0.0
  %255 = vmatpush1.msra.mxu0 0.0
  %256 = vmatprep.subr.mxu0 0.0
  %257 = vmatpush1.msra.mxu0 0.0
  %258 = vmatprep.subr.mxu0 0.0
  %259 = vmatpush1.msra.mxu0 0.0
  %260 = vmatprep.subr.mxu0 0.0
  %261 = vmatpush1.msra.mxu0 0.0
  %262 = vmatprep.subr.mxu0 0.0
  %263 = vmatpush1.msra.mxu0 0.0
  %264 = vmatprep.subr.mxu0 0.0
  %265 = vmatpush1.msra.mxu0 0.0
  %266 = vmatprep.subr.mxu0 0.0
  %267 = vmatpush1.msra.mxu0 0.0
  %268 = vmatprep.subr.mxu0 0.0
  %269 = vmatpush1.msra.mxu0 0.0
  %270 = vmatprep.subr.mxu0 0.0
  %271 = vmatpush1.msra.mxu0 0.0
  %272 = vmatprep.mubr.f32.mxu0 0.0
  %273 = vmatmul.mubr.f32.gmra.mrb[0].mxu0 %v185
  %v274 = vpop.f32.mrb[0].mxu0
  %v275 = vadd.f32 %v182, %v274
  %v276 = vpop.f32.mrb[0].mxu0
  %277 = vmatprep.mubr.f32.mxu0 0.0
  %278 = vmatmul.mubr.f32.gmra.mrb[0].mxu0 %v188
  %v279 = vpop.f32.mrb[0].mxu0
  %v280 = vadd.f32 %v182, %v279
  %v281 = vpop.f32.mrb[0].mxu0
  %282 = vmatprep.mubr.f32.mxu0 0.0
  %283 = vmatmul.mubr.f32.gmra.mrb[0].mxu0 %v191
  %v284 = vpop.f32.mrb[0].mxu0
  %v285 = vadd.f32 %v182, %v284
  %v286 = vpop.f32.mrb[0].mxu0
  %287 = vmatprep.mubr.f32.mxu0 0.0
  %288 = vmatmul.mubr.f32.gmra.mrb[0].mxu0 %v194
  %v289 = vpop.f32.mrb[0].mxu0
  %v290 = vadd.f32 %v182, %v289
  %v291 = vpop.f32.mrb[0].mxu0
  %292 = vmatprep.mubr.f32.mxu0 0.0
  %293 = vmatmul.mubr.f32.gmra.mrb[0].mxu0 %v197
  %v294 = vpop.f32.mrb[0].mxu0
  %v295 = vadd.f32 %v182, %v294
  %v296 = vpop.f32.mrb[0].mxu0
  %297 = vmatprep.mubr.f32.mxu0 0.0
  %298 = vmatmul.mubr.f32.gmra.mrb[0].mxu0 %v200
  %v299 = vpop.f32.mrb[0].mxu0
  %v300 = vadd.f32 %v182, %v299
  %v301 = vpop.f32.mrb[0].mxu0
  %302 = vmatprep.mubr.f32.mxu0 0.0
  %303 = vmatmul.mubr.f32.gmra.mrb[0].mxu0 %v203
  %v304 = vpop.f32.mrb[0].mxu0
  %v305 = vadd.f32 %v182, %v304
  %v306 = vpop.f32.mrb[0].mxu0
  %307 = vmatprep.mubr.f32.mxu0 0.0
  %308 = vmatmul.mubr.f32.gmra.mrb[0].mxu0 %v206
  %v309 = vpop.f32.mrb[0].mxu0
  %v310 = vadd.f32 %v182, %v309
  %v311 = vpop.f32.mrb[0].mxu0
  %312 = vdwg.mxu0
  %v313 = vld [vmem:[%s1] sm:$0xff]
  %v314 = vld [vmem:[%s1 + $0x8] sm:$0xff]
  %v315 = vld [vmem:[%s1 + $0x10] sm:$0xff]
  %v316 = vld [vmem:[%s1 + $0x18] sm:$0xff]
  %v317 = vld [vmem:[%s1 + $0x20] sm:$0xff]
  %v318 = vld [vmem:[%s1 + $0x28] sm:$0xff]
  %v319 = vld [vmem:[%s1 + $0x30] sm:$0xff]
  %v320 = vld [vmem:[%s1 + $0x38] sm:$0xff]
  %v321 = vmul.f32 %v275, %v313
  %v322 = vmul.f32 %v280, %v314
  %v323 = vmul.f32 %v285, %v315
  %v324 = vmul.f32 %v290, %v316
  %v325 = vmul.f32 %v295, %v317
  %v326 = vmul.f32 %v300, %v318
  %v327 = vmul.f32 %v305, %v319
  %v328 = vmul.f32 %v310, %v320
  %329 = vst.msk [vmem:[%s6] sm:$0xff] %vm41, %v321
  %330 = vst.msk [vmem:[%s6 + $0x8] sm:$0xff] %vm41, %v322
  %331 = vst.msk [vmem:[%s6 + $0x10] sm:$0xff] %vm41, %v323
  %332 = vst.msk [vmem:[%s6 + $0x18] sm:$0xff] %vm41, %v324
  %333 = vst.msk [vmem:[%s6 + $0x20] sm:$0xff] %vm41, %v325
  %334 = vst.msk [vmem:[%s6 + $0x28] sm:$0xff] %vm41, %v326
  %335 = vst.msk [vmem:[%s6 + $0x30] sm:$0xff] %vm41, %v327
  %336 = vst.msk [vmem:[%s6 + $0x38] sm:$0xff] %vm41, %v328
  // Predicated region
  $region26: #{evoformer_stack_forward.46} parent=0 // pred_check
    _
  $region27: #{evoformer_stack_forward.46} parent=0 // pred_check_branch
    %338 = sbr.rel (0) target = $region29
  $region28: #{evoformer_stack_forward.46} parent=0 // pred_region
    _
  $region29: #{evoformer_stack_forward.46} parent=0 // pred_fallthru
    _
  // Predicated region
  $region30: #{evoformer_stack_forward.46} parent=0 // pred_check
    _
  $region31: #{evoformer_stack_forward.46} parent=0 // pred_check_branch
    %340 = sbr.rel (0) target = $region33
  $region32: #{evoformer_stack_forward.46} parent=0 // pred_region
    _
  $region33: #{evoformer_stack_forward.46} parent=0 // pred_fallthru
    _

// kernel: evoformer_stack_forward.50
$region0: #{evoformer_stack_forward.50}
  #allocation0 [shape = 'u32[]', space=smem, size = 0x4, offset = 0x4, fixed_abs, tag = 'smem constant byte address 0x4 - core index']
  #allocation1 [shape = 'u32[144,128]{1,0:T(1,128)}', space=vmem, size = 0x12000, scoped, tag = 'internal scratch']
  %s0 = inlined_call_operand.vmem [shape: f32[64,16], index: 0, kind: input, shape index: {}]
  %s1 = inlined_call_operand.vmem [shape: f32[1,16], index: 1, kind: input, shape index: {}]
  %s2 = inlined_call_operand.vmem [shape: f32[1,16], index: 2, kind: input, shape index: {}]
  %s3 = inlined_call_operand.vmem [shape: f32[16,2], index: 3, kind: input, shape index: {}]
  %s4 = inlined_call_operand.vmem [shape: f32[1,2], index: 4, kind: input, shape index: {}]
  %s5 = inlined_call_operand.vmem [shape: f32[64,2], index: 5, kind: output, shape index: {}]
  %s6 = sld [smem:[#allocation0]]
  $region30: #{evoformer_stack_forward.50} parent=0
    _
  %s8 = ssub.s32 1, %s6
  %s9 = scalar_select 0, %s8, %s6
  // Predicated region
  $region2: #{evoformer_stack_forward.50} parent=0 // pred_check
    _
  $region3: #{evoformer_stack_forward.50} parent=0 // pred_check_branch
    %11 = sbr.rel (0) target = $region5
  $region4: #{evoformer_stack_forward.50} parent=0 // pred_region
    _
  $region5: #{evoformer_stack_forward.50} parent=0 // pred_fallthru
    _
  // Predicated region
  $region6: #{evoformer_stack_forward.50} parent=0 // pred_check
    _
  $region7: #{evoformer_stack_forward.50} parent=0 // pred_check_branch
    %13 = sbr.rel (0) target = $region9
  $region8: #{evoformer_stack_forward.50} parent=0 // pred_region
    _
  $region9: #{evoformer_stack_forward.50} parent=0 // pred_fallthru
    _
  // Predicated region
  $region10: #{evoformer_stack_forward.50} parent=0 // pred_check
    _
  $region11: #{evoformer_stack_forward.50} parent=0 // pred_check_branch
    %15 = sbr.rel (0) target = $region13
  $region12: #{evoformer_stack_forward.50} parent=0 // pred_region
    _
  $region13: #{evoformer_stack_forward.50} parent=0 // pred_fallthru
    _
  // Predicated region
  $region14: #{evoformer_stack_forward.50} parent=0 // pred_check
    _
  $region15: #{evoformer_stack_forward.50} parent=0 // pred_check_branch
    %17 = sbr.rel (0) target = $region17
  $region16: #{evoformer_stack_forward.50} parent=0 // pred_region
    _
  $region17: #{evoformer_stack_forward.50} parent=0 // pred_fallthru
    _
  // Predicated region
  $region18: #{evoformer_stack_forward.50} parent=0 // pred_check
    _
  $region19: #{evoformer_stack_forward.50} parent=0 // pred_check_branch
    %19 = sbr.rel (0) target = $region21
  $region20: #{evoformer_stack_forward.50} parent=0 // pred_region
    _
  $region21: #{evoformer_stack_forward.50} parent=0 // pred_fallthru
    _
  %v20 = vld [vmem:[%s0] sm:$0xff]
  %v21 = vld [vmem:[%s0 + $0x8] sm:$0xff]
  %v22 = vld [vmem:[%s0 + $0x10] sm:$0xff]
  %v23 = vld [vmem:[%s0 + $0x18] sm:$0xff]
  %v24 = vld [vmem:[%s0 + $0x20] sm:$0xff]
  %v25 = vld [vmem:[%s0 + $0x28] sm:$0xff]
  %v26 = vld [vmem:[%s0 + $0x30] sm:$0xff]
  %v27 = vld [vmem:[%s0 + $0x38] sm:$0xff]
  %v28 = vld [vmem:[%s1] sm:$0x1]
  %v29 = vld [vmem:[%s2] sm:$0x1]
  %vm30 = vcmask 130048
  %v31 = vsel %vm30, %v20, 0.0
  %32 = vadd.xlane.f32.xlu0 %v31
  %v33 = vpop.xlane.xlu0 %32
  %v34 = vsel %vm30, %v21, 0.0
  %35 = vadd.xlane.f32.xlu0 %v34
  %v36 = vpop.xlane.xlu0 %35
  %v37 = vsel %vm30, %v22, 0.0
  %38 = vadd.xlane.f32.xlu0 %v37
  %v39 = vpop.xlane.xlu0 %38
  %v40 = vsel %vm30, %v23, 0.0
  %41 = vadd.xlane.f32.xlu0 %v40
  %v42 = vpop.xlane.xlu0 %41
  %v43 = vsel %vm30, %v24, 0.0
  %44 = vadd.xlane.f32.xlu0 %v43
  %v45 = vpop.xlane.xlu0 %44
  %v46 = vsel %vm30, %v25, 0.0
  %47 = vadd.xlane.f32.xlu0 %v46
  %v48 = vpop.xlane.xlu0 %47
  %v49 = vsel %vm30, %v26, 0.0
  %50 = vadd.xlane.f32.xlu0 %v49
  %v51 = vpop.xlane.xlu0 %50
  %v52 = vsel %vm30, %v27, 0.0
  %53 = vadd.xlane.f32.xlu0 %v52
  %v54 = vpop.xlane.xlu0 %53
  %v55 = vrcp.pop 16.0
  %v56 = vmul.f32 %v33, %v55
  %v57 = vmul.f32 %v36, %v55
  %v58 = vmul.f32 %v39, %v55
  %v59 = vmul.f32 %v42, %v55
  %v60 = vmul.f32 %v45, %v55
  %v61 = vmul.f32 %v48, %v55
  %v62 = vmul.f32 %v51, %v55
  %v63 = vmul.f32 %v54, %v55
  %v64 = vsub.f32 %v20, %v56
  %v65 = vsub.f32 %v21, %v57
  %v66 = vsub.f32 %v22, %v58
  %v67 = vsub.f32 %v23, %v59
  %v68 = vsub.f32 %v24, %v60
  %v69 = vsub.f32 %v25, %v61
  %v70 = vsub.f32 %v26, %v62
  %v71 = vsub.f32 %v27, %v63
  %v72 = vmul.f32 %v64, %v64
  %v73 = vmul.f32 %v65, %v65
  %v74 = vmul.f32 %v66, %v66
  %v75 = vmul.f32 %v67, %v67
  %v76 = vmul.f32 %v68, %v68
  %v77 = vmul.f32 %v69, %v69
  %v78 = vmul.f32 %v70, %v70
  %v79 = vmul.f32 %v71, %v71
  %v80 = vsel %vm30, %v72, 0.0
  %81 = vadd.xlane.f32.xlu0 %v80
  %v82 = vpop.xlane.xlu0 %81
  %v83 = vsel %vm30, %v73, 0.0
  %84 = vadd.xlane.f32.xlu0 %v83
  %v85 = vpop.xlane.xlu0 %84
  %v86 = vsel %vm30, %v74, 0.0
  %87 = vadd.xlane.f32.xlu0 %v86
  %v88 = vpop.xlane.xlu0 %87
  %v89 = vsel %vm30, %v75, 0.0
  %90 = vadd.xlane.f32.xlu0 %v89
  %v91 = vpop.xlane.xlu0 %90
  %v92 = vsel %vm30, %v76, 0.0
  %93 = vadd.xlane.f32.xlu0 %v92
  %v94 = vpop.xlane.xlu0 %93
  %v95 = vsel %vm30, %v77, 0.0
  %96 = vadd.xlane.f32.xlu0 %v95
  %v97 = vpop.xlane.xlu0 %96
  %v98 = vsel %vm30, %v78, 0.0
  %99 = vadd.xlane.f32.xlu0 %v98
  %v100 = vpop.xlane.xlu0 %99
  %v101 = vsel %vm30, %v79, 0.0
  %102 = vadd.xlane.f32.xlu0 %v101
  %v103 = vpop.xlane.xlu0 %102
  %v104 = vmul.f32 %v82, %v55
  %v105 = vmul.f32 %v85, %v55
  %v106 = vmul.f32 %v88, %v55
  %v107 = vmul.f32 %v91, %v55
  %v108 = vmul.f32 %v94, %v55
  %v109 = vmul.f32 %v97, %v55
  %v110 = vmul.f32 %v100, %v55
  %v111 = vmul.f32 %v103, %v55
  %v112 = vadd.f32 %v104, 1e-05
  %v113 = vadd.f32 %v105, 1e-05
  %v114 = vadd.f32 %v106, 1e-05
  %v115 = vadd.f32 %v107, 1e-05
  %v116 = vadd.f32 %v108, 1e-05
  %v117 = vadd.f32 %v109, 1e-05
  %v118 = vadd.f32 %v110, 1e-05
  %v119 = vadd.f32 %v111, 1e-05
  %v120 = vrsqrt.pop %v112
  %v121 = vrsqrt.pop %v113
  %v122 = vrsqrt.pop %v114
  %v123 = vrsqrt.pop %v115
  %v124 = vrsqrt.pop %v116
  %v125 = vrsqrt.pop %v117
  %v126 = vrsqrt.pop %v118
  %v127 = vrsqrt.pop %v119
  %v128 = vmul.f32 %v64, %v120
  %v129 = vmul.f32 %v65, %v121
  %v130 = vmul.f32 %v66, %v122
  %v131 = vmul.f32 %v67, %v123
  %v132 = vmul.f32 %v68, %v124
  %v133 = vmul.f32 %v69, %v125
  %v134 = vmul.f32 %v70, %v126
  %v135 = vmul.f32 %v71, %v127
  %v137 = vlaneseq
  %v138 = vshrl.u32 %v137, 7
  %v139 = vsub.s32 0, %v138
  %v140 = vrot.slane %v28, %v139
  %v142 = vmul.f32 %v128, %v140
  %v143 = vmul.f32 %v129, %v140
  %v144 = vmul.f32 %v130, %v140
  %v145 = vmul.f32 %v131, %v140
  %v146 = vmul.f32 %v132, %v140
  %v147 = vmul.f32 %v133, %v140
  %v148 = vmul.f32 %v134, %v140
  %v149 = vmul.f32 %v135, %v140
  %v151 = vlaneseq
  %v152 = vshrl.u32 %v151, 7
  %v153 = vsub.s32 0, %v152
  %v154 = vrot.slane %v29, %v153
  %v156 = vadd.f32 %v142, %v154
  %v157 = vadd.f32 %v143, %v154
  %v158 = vadd.f32 %v144, %v154
  %v159 = vadd.f32 %v145, %v154
  %v160 = vadd.f32 %v146, %v154
  %v161 = vadd.f32 %v147, %v154
  %v162 = vadd.f32 %v148, %v154
  %v163 = vadd.f32 %v149, %v154
  %v164 = vld [vmem:[%s3] sm:$0xff]
  %v165 = vld [vmem:[%s3 + $0x8] sm:$0xff]
  %v166 = vld [vmem:[%s4] sm:$0x1]
  %v168 = vlaneseq
  %v169 = vshrl.u32 %v168, 7
  %v170 = vsub.s32 0, %v169
  %v171 = vrot.slane %v166, %v170
  %v174 = vsel %vm30, %v156, 0
  %v177 = vsel %vm30, %v157, 0
  %v180 = vsel %vm30, %v158, 0
  %v183 = vsel %vm30, %v159, 0
  %v186 = vsel %vm30, %v160, 0
  %v189 = vsel %vm30, %v161, 0
  %v192 = vsel %vm30, %v162, 0
  %v195 = vsel %vm30, %v163, 0
  %197 = vmatprep.subr.mxu0 0.0
  %198 = vmatpush1.msra.mxu0 %v164
  %199 = vmatprep.subr.mxu0 0.0
  %200 = vmatpush1.msra.mxu0 %v165
  %201 = vmatprep.subr.mxu0 0.0
  %202 = vmatpush1.msra.mxu0 0.0
  %203 = vmatprep.subr.mxu0 0.0
  %204 = vmatpush1.msra.mxu0 0.0
  %205 = vmatprep.subr.mxu0 0.0
  %206 = vmatpush1.msra.mxu0 0.0
  %207 = vmatprep.subr.mxu0 0.0
  %208 = vmatpush1.msra.mxu0 0.0
  %209 = vmatprep.subr.mxu0 0.0
  %210 = vmatpush1.msra.mxu0 0.0
  %211 = vmatprep.subr.mxu0 0.0
  %212 = vmatpush1.msra.mxu0 0.0
  %213 = vmatprep.subr.mxu0 0.0
  %214 = vmatpush1.msra.mxu0 0.0
  %215 = vmatprep.subr.mxu0 0.0
  %216 = vmatpush1.msra.mxu0 0.0
  %217 = vmatprep.subr.mxu0 0.0
  %218 = vmatpush1.msra.mxu0 0.0
  %219 = vmatprep.subr.mxu0 0.0
  %220 = vmatpush1.msra.mxu0 0.0
  %221 = vmatprep.subr.mxu0 0.0
  %222 = vmatpush1.msra.mxu0 0.0
  %223 = vmatprep.subr.mxu0 0.0
  %224 = vmatpush1.msra.mxu0 0.0
  %225 = vmatprep.subr.mxu0 0.0
  %226 = vmatpush1.msra.mxu0 0.0
  %227 = vmatprep.subr.mxu0 0.0
  %228 = vmatpush1.msra.mxu0 0.0
  %229 = vmatprep.subr.mxu0 0.0
  %230 = vmatpush1.msra.mxu0 0.0
  %231 = vmatprep.subr.mxu0 0.0
  %232 = vmatpush1.msra.mxu0 0.0
  %233 = vmatprep.subr.mxu0 0.0
  %234 = vmatpush1.msra.mxu0 0.0
  %235 = vmatprep.subr.mxu0 0.0
  %236 = vmatpush1.msra.mxu0 0.0
  %237 = vmatprep.subr.mxu0 0.0
  %238 = vmatpush1.msra.mxu0 0.0
  %239 = vmatprep.subr.mxu0 0.0
  %240 = vmatpush1.msra.mxu0 0.0
  %241 = vmatprep.subr.mxu0 0.0
  %242 = vmatpush1.msra.mxu0 0.0
  %243 = vmatprep.subr.mxu0 0.0
  %244 = vmatpush1.msra.mxu0 0.0
  %245 = vmatprep.subr.mxu0 0.0
  %246 = vmatpush1.msra.mxu0 0.0
  %247 = vmatprep.subr.mxu0 0.0
  %248 = vmatpush1.msra.mxu0 0.0
  %249 = vmatprep.subr.mxu0 0.0
  %250 = vmatpush1.msra.mxu0 0.0
  %251 = vmatprep.subr.mxu0 0.0
  %252 = vmatpush1.msra.mxu0 0.0
  %253 = vmatprep.subr.mxu0 0.0
  %254 = vmatpush1.msra.mxu0 0.0
  %255 = vmatprep.subr.mxu0 0.0
  %256 = vmatpush1.msra.mxu0 0.0
  %257 = vmatprep.subr.mxu0 0.0
  %258 = vmatpush1.msra.mxu0 0.0
  %259 = vmatprep.subr.mxu0 0.0
  %260 = vmatpush1.msra.mxu0 0.0
  %261 = vmatprep.mubr.f32.mxu0 0.0
  %262 = vmatmul.mubr.f32.gmra.mrb[0].mxu0 %v174
  %v263 = vpop.f32.mrb[0].mxu0
  %v264 = vadd.f32 %v171, %v263
  %v265 = vpop.f32.mrb[0].mxu0
  %266 = vmatprep.mubr.f32.mxu0 0.0
  %267 = vmatmul.mubr.f32.gmra.mrb[0].mxu0 %v177
  %v268 = vpop.f32.mrb[0].mxu0
  %v269 = vadd.f32 %v171, %v268
  %v270 = vpop.f32.mrb[0].mxu0
  %271 = vmatprep.mubr.f32.mxu0 0.0
  %272 = vmatmul.mubr.f32.gmra.mrb[0].mxu0 %v180
  %v273 = vpop.f32.mrb[0].mxu0
  %v274 = vadd.f32 %v171, %v273
  %v275 = vpop.f32.mrb[0].mxu0
  %276 = vmatprep.mubr.f32.mxu0 0.0
  %277 = vmatmul.mubr.f32.gmra.mrb[0].mxu0 %v183
  %v278 = vpop.f32.mrb[0].mxu0
  %v279 = vadd.f32 %v171, %v278
  %v280 = vpop.f32.mrb[0].mxu0
  %281 = vmatprep.mubr.f32.mxu0 0.0
  %282 = vmatmul.mubr.f32.gmra.mrb[0].mxu0 %v186
  %v283 = vpop.f32.mrb[0].mxu0
  %v284 = vadd.f32 %v171, %v283
  %v285 = vpop.f32.mrb[0].mxu0
  %286 = vmatprep.mubr.f32.mxu0 0.0
  %287 = vmatmul.mubr.f32.gmra.mrb[0].mxu0 %v189
  %v288 = vpop.f32.mrb[0].mxu0
  %v289 = vadd.f32 %v171, %v288
  %v290 = vpop.f32.mrb[0].mxu0
  %291 = vmatprep.mubr.f32.mxu0 0.0
  %292 = vmatmul.mubr.f32.gmra.mrb[0].mxu0 %v192
  %v293 = vpop.f32.mrb[0].mxu0
  %v294 = vadd.f32 %v171, %v293
  %v295 = vpop.f32.mrb[0].mxu0
  %296 = vmatprep.mubr.f32.mxu0 0.0
  %297 = vmatmul.mubr.f32.gmra.mrb[0].mxu0 %v195
  %v298 = vpop.f32.mrb[0].mxu0
  %v299 = vadd.f32 %v171, %v298
  %v300 = vpop.f32.mrb[0].mxu0
  %301 = vdwg.mxu0
  %vm302 = vcmask 15360
  %303 = vst.msk [vmem:[%s5] sm:$0xff] %vm302, %v264
  %304 = vst.msk [vmem:[%s5 + $0x8] sm:$0xff] %vm302, %v269
  %305 = vst.msk [vmem:[%s5 + $0x10] sm:$0xff] %vm302, %v274
  %306 = vst.msk [vmem:[%s5 + $0x18] sm:$0xff] %vm302, %v279
  %307 = vst.msk [vmem:[%s5 + $0x20] sm:$0xff] %vm302, %v284
  %308 = vst.msk [vmem:[%s5 + $0x28] sm:$0xff] %vm302, %v289
  %309 = vst.msk [vmem:[%s5 + $0x30] sm:$0xff] %vm302, %v294
  %310 = vst.msk [vmem:[%s5 + $0x38] sm:$0xff] %vm302, %v299
  // Predicated region
  $region22: #{evoformer_stack_forward.50} parent=0 // pred_check
    _
  $region23: #{evoformer_stack_forward.50} parent=0 // pred_check_branch
    %312 = sbr.rel (0) target = $region25
  $region24: #{evoformer_stack_forward.50} parent=0 // pred_region
    _
  $region25: #{evoformer_stack_forward.50} parent=0 // pred_fallthru
    _
  // Predicated region
  $region26: #{evoformer_stack_forward.50} parent=0 // pred_check
    _
  $region27: #{evoformer_stack_forward.50} parent=0 // pred_check_branch
    %314 = sbr.rel (0) target = $region29
  $region28: #{evoformer_stack_forward.50} parent=0 // pred_region
    _
  $region29: #{evoformer_stack_forward.50} parent=0 // pred_fallthru
    _

// kernel: evoformer_stack_forward.73
$region0: #{evoformer_stack_forward.73}
  #allocation0 [shape = 'u32[]', space=smem, size = 0x4, offset = 0x4, fixed_abs, tag = 'smem constant byte address 0x4 - core index']
  #allocation1 [shape = 'u32[144,128]{1,0:T(1,128)}', space=vmem, size = 0x12000, scoped, tag = 'internal scratch']
  %s0 = inlined_call_operand.vmem [shape: f32[8,32], index: 0, kind: input, shape index: {}]
  %s1 = inlined_call_operand.vmem [shape: f32[32,32], index: 1, kind: input, shape index: {}]
  %s2 = inlined_call_operand.vmem [shape: f32[1,32], index: 2, kind: input, shape index: {}]
  %s3 = inlined_call_operand.hbm [shape: f32[8,32], index: 3, kind: output, shape index: {}]
  %s4 = sld [smem:[#allocation0]]
  $region22: #{evoformer_stack_forward.73} parent=0
    _
  %s6 = ssub.s32 1, %s4
  %s7 = scalar_select 0, %s6, %s4
  $region1: #{evoformer_stack_forward.73} parent=0
    #allocation2 [shape = 'u8[4096]{0}', space=vmem, size = 0x1000, scoped, tag = 'output window, operand 0, single buffered']
    #allocation3 [shape = 's32[1]{0}', space=sflag, size = 0x4, scoped, tag = 'scoped memory for evoformer_stack_forward.73']
    %8 = vsyncpa [#allocation3], 0
    // Predicated region
    $region2: #{evoformer_stack_forward.73} parent=1 // pred_check
      _
    $region3: #{evoformer_stack_forward.73} parent=1 // pred_check_branch
      %10 = sbr.rel (0) target = $region5
    $region4: #{evoformer_stack_forward.73} parent=1 // pred_region
      _
    $region5: #{evoformer_stack_forward.73} parent=1 // pred_fallthru
      _
    // Predicated region
    $region6: #{evoformer_stack_forward.73} parent=1 // pred_check
      _
    $region7: #{evoformer_stack_forward.73} parent=1 // pred_check_branch
      %12 = sbr.rel (0) target = $region9
    $region8: #{evoformer_stack_forward.73} parent=1 // pred_region
      _
    $region9: #{evoformer_stack_forward.73} parent=1 // pred_fallthru
      _
    // Predicated region
    $region10: #{evoformer_stack_forward.73} parent=1 // pred_check
      _
    $region11: #{evoformer_stack_forward.73} parent=1 // pred_check_branch
      %14 = sbr.rel (0) target = $region13
    $region12: #{evoformer_stack_forward.73} parent=1 // pred_region
      _
    $region13: #{evoformer_stack_forward.73} parent=1 // pred_fallthru
      _
    %v15 = vld [vmem:[%s0] sm:$0xff]
    %v16 = vld [vmem:[%s1] sm:$0xff]
    %v17 = vld [vmem:[%s1 + $0x8] sm:$0xff]
    %v18 = vld [vmem:[%s1 + $0x10] sm:$0xff]
    %v19 = vld [vmem:[%s1 + $0x18] sm:$0xff]
    %v20 = vld [vmem:[%s2] sm:$0x1]
    %v22 = vlaneseq
    %v23 = vshrl.u32 %v22, 7
    %v24 = vsub.s32 0, %v23
    %v25 = vrot.slane %v20, %v24
    %vm27 = vcmask 261120
    %v29 = vsel %vm27, %v15, 0
    %31 = vmatprep.subr.mxu0 0.0
    %32 = vmatpush1.msra.mxu0 %v16
    %33 = vmatprep.subr.mxu0 0.0
    %34 = vmatpush1.msra.mxu0 %v17
    %35 = vmatprep.subr.mxu0 0.0
    %36 = vmatpush1.msra.mxu0 %v18
    %37 = vmatprep.subr.mxu0 0.0
    %38 = vmatpush1.msra.mxu0 %v19
    %39 = vmatprep.subr.mxu0 0.0
    %40 = vmatpush1.msra.mxu0 0.0
    %41 = vmatprep.subr.mxu0 0.0
    %42 = vmatpush1.msra.mxu0 0.0
    %43 = vmatprep.subr.mxu0 0.0
    %44 = vmatpush1.msra.mxu0 0.0
    %45 = vmatprep.subr.mxu0 0.0
    %46 = vmatpush1.msra.mxu0 0.0
    %47 = vmatprep.subr.mxu0 0.0
    %48 = vmatpush1.msra.mxu0 0.0
    %49 = vmatprep.subr.mxu0 0.0
    %50 = vmatpush1.msra.mxu0 0.0
    %51 = vmatprep.subr.mxu0 0.0
    %52 = vmatpush1.msra.mxu0 0.0
    %53 = vmatprep.subr.mxu0 0.0
    %54 = vmatpush1.msra.mxu0 0.0
    %55 = vmatprep.subr.mxu0 0.0
    %56 = vmatpush1.msra.mxu0 0.0
    %57 = vmatprep.subr.mxu0 0.0
    %58 = vmatpush1.msra.mxu0 0.0
    %59 = vmatprep.subr.mxu0 0.0
    %60 = vmatpush1.msra.mxu0 0.0
    %61 = vmatprep.subr.mxu0 0.0
    %62 = vmatpush1.msra.mxu0 0.0
    %63 = vmatprep.subr.mxu0 0.0
    %64 = vmatpush1.msra.mxu0 0.0
    %65 = vmatprep.subr.mxu0 0.0
    %66 = vmatpush1.msra.mxu0 0.0
    %67 = vmatprep.subr.mxu0 0.0
    %68 = vmatpush1.msra.mxu0 0.0
    %69 = vmatprep.subr.mxu0 0.0
    %70 = vmatpush1.msra.mxu0 0.0
    %71 = vmatprep.subr.mxu0 0.0
    %72 = vmatpush1.msra.mxu0 0.0
    %73 = vmatprep.subr.mxu0 0.0
    %74 = vmatpush1.msra.mxu0 0.0
    %75 = vmatprep.subr.mxu0 0.0
    %76 = vmatpush1.msra.mxu0 0.0
    %77 = vmatprep.subr.mxu0 0.0
    %78 = vmatpush1.msra.mxu0 0.0
    %79 = vmatprep.subr.mxu0 0.0
    %80 = vmatpush1.msra.mxu0 0.0
    %81 = vmatprep.subr.mxu0 0.0
    %82 = vmatpush1.msra.mxu0 0.0
    %83 = vmatprep.subr.mxu0 0.0
    %84 = vmatpush1.msra.mxu0 0.0
    %85 = vmatprep.subr.mxu0 0.0
    %86 = vmatpush1.msra.mxu0 0.0
    %87 = vmatprep.subr.mxu0 0.0
    %88 = vmatpush1.msra.mxu0 0.0
    %89 = vmatprep.subr.mxu0 0.0
    %90 = vmatpush1.msra.mxu0 0.0
    %91 = vmatprep.subr.mxu0 0.0
    %92 = vmatpush1.msra.mxu0 0.0
    %93 = vmatprep.subr.mxu0 0.0
    %94 = vmatpush1.msra.mxu0 0.0
    %95 = vmatprep.mubr.f32.mxu0 0.0
    %96 = vmatmul.mubr.f32.gmra.mrb[0].mxu0 %v29
    %v97 = vpop.f32.mrb[0].mxu0
    %v98 = vadd.f32 %v25, %v97
    %v99 = vpop.f32.mrb[0].mxu0
    %100 = vdwg.mxu0
    %101 = vst.msk [vmem:[#allocation2] sm:$0xff] %vm27, %v98
    // Predicated region
    $region14: #{evoformer_stack_forward.73} parent=1 // pred_check
      _
    $region15: #{evoformer_stack_forward.73} parent=1 // pred_check_branch
      %103 = sbr.rel (0) target = $region17
    $region16: #{evoformer_stack_forward.73} parent=1 // pred_region
      %s105 = ssub.s32 128, 128
      %106 = vsyncadd [#allocation3], %s105
      %s108 = sshll.u32 [#allocation2], 4
      %s109 = int_to_ptr.vmem [resolvable:$true] %s108
      %111 = dma.vmem_to_hbm [thread:$0]  %s109, 128, %s3, [#allocation3]
    $region17: #{evoformer_stack_forward.73} parent=1 // pred_fallthru
      _
    // Predicated region
    $region18: #{evoformer_stack_forward.73} parent=1 // pred_check
      _
    $region19: #{evoformer_stack_forward.73} parent=1 // pred_check_branch
      %113 = sbr.rel (0) target = $region21
    $region20: #{evoformer_stack_forward.73} parent=1 // pred_region
      %114 = dma.done [#allocation3], 128
    $region21: #{evoformer_stack_forward.73} parent=1 // pred_fallthru
      _
    %115 = vsyncpa [#allocation3], 1

// kernel: evoformer_stack_forward.51
$region0: #{evoformer_stack_forward.51}
  #allocation0 [shape = 'u32[]', space=smem, size = 0x4, offset = 0x4, fixed_abs, tag = 'smem constant byte address 0x4 - core index']
  #allocation1 [shape = 'u32[144,128]{1,0:T(1,128)}', space=vmem, size = 0x12000, scoped, tag = 'internal scratch']
  %s0 = inlined_call_operand.vmem [shape: f32[1,8,8,16], index: 0, kind: input, shape index: {}]
  %s1 = inlined_call_operand.vmem [shape: bf16[1,2,8,8], index: 1, kind: input, shape index: {}]
  %s2 = inlined_call_operand.vmem [shape: f32[1,8,1,8], index: 2, kind: input, shape index: {}]
  %s3 = inlined_call_operand.vmem [shape: f32[1,16], index: 3, kind: input, shape index: {}]
  %s4 = inlined_call_operand.vmem [shape: f32[1,16], index: 4, kind: input, shape index: {}]
  %s5 = inlined_call_operand.vmem [shape: bf16[16,64], index: 5, kind: input, shape index: {}]
  %s6 = inlined_call_operand.vmem [shape: f32[1,64], index: 6, kind: input, shape index: {}]
  %s7 = inlined_call_operand.vmem [shape: bf16[16,16], index: 7, kind: input, shape index: {}]
  %s8 = inlined_call_operand.vmem [shape: f32[1,16], index: 8, kind: input, shape index: {}]
  %s9 = inlined_call_operand.vmem [shape: f32[1,8,8,16], index: 9, kind: output, shape index: {}]
  %s10 = sld [smem:[#allocation0]]
  $region69: #{evoformer_stack_forward.51} parent=0
    _
  %s12 = ssub.s32 1, %s10
  %s13 = scalar_select 0, %s12, %s10
  loop: start=0, step=1, limit=10
  $region2: #{evoformer_stack_forward.51} parent=0 // loop_pre_header
    _
  $region3: #{evoformer_stack_forward.51} parent=0 // loop_header
    %s15 = sphi 0, %s19
    %p16 = scmp.ge.s32.totalorder %s15, 10
    %s22 = sphi 0, %s34
    %s23 = sphi 0, %s30
    %s24 = sphi 0, %s22
    %s25 = sphi 0, %s23
    %s26 = sphi 0, %s24
    %s27 = sphi 0, %s25
    %s39 = sphi 0, %s41
    %s42 = sphi 0, %s39
    %s43 = sphi 0, %s42
    %s59 = sphi 0, %s43
    %s65 = sphi 0, %s67
    %s68 = sphi 0, %s65
    %s69 = sphi 0, %s68
    %s85 = sphi 0, %s69
    %s93 = sphi 0, %s95
    %s96 = sphi 0, %s93
    %s97 = sphi 0, %s96
    %s113 = sphi 0, %s97
    %s117 = sphi 0, %s117
    %s119 = sphi 0, %s117
    %s120 = sphi 0, %s119
    %s134 = sphi 0, %s120
    %s138 = sphi 0, %s138
    %s140 = sphi 0, %s138
    %s141 = sphi 0, %s140
    %s155 = sphi 0, %s141
    %s159 = sphi 0, %s159
    %s161 = sphi 0, %s159
    %s162 = sphi 0, %s161
    %s176 = sphi 0, %s162
    %s180 = sphi 0, %s180
    %s182 = sphi 0, %s180
    %s183 = sphi 0, %s182
    %s197 = sphi 0, %s183
    %s201 = sphi 0, %s201
    %s203 = sphi 0, %s201
    %s204 = sphi 0, %s203
    %s218 = sphi 0, %s204
    %s222 = sphi 0, %s222
    %s224 = sphi 0, %s222
    %s225 = sphi 0, %s224
    %s239 = sphi 0, %s225
    %s247 = sphi 0, %s249
    %s250 = sphi 0, %s247
    %s251 = sphi 0, %s250
    %s267 = sphi 0, %s251
  $region4: #{evoformer_stack_forward.51} parent=0 // loop_header_branch
    %18 = sbr.rel (%p16) target = $region8
  $region5: #{evoformer_stack_forward.51} parent=0 // loop_body
    %s20 = ssub.s32 %s15, 1
    %s21 = ssub.s32 %s15, 2
    %s28 = sadd.s32 1, %s23
    %p29 = scmp.ge.s32.totalorder %s28, 8
    %s30 = scalar_select %p29, 0, %s28
    %s31 = sadd.s32 1, %s22
    %s32 = scalar_select %p29, %s31, %s22
    %p33 = scmp.ge.s32.totalorder %s32, 1
    %s34 = scalar_select %p33, 0, %s32
    %s35 = ssub.s32 %s22, %s34
    %s36 = ssub.s32 %s23, %s30
    %s37 = sor.u32 %s35, %s36
    %p38 = scmp.eq.s32.totalorder %s37, 0
    %s40 = sadd.s32 %s39, 1
    %s41 = scalar_select %p38, %s39, %s40
    %p44 = pneg %p38
    %p45 = scmp.eq.s32.totalorder %s15, 7
    %p46 = por %p44, %p45
    %p47 = scmp.ne.s32.totalorder %s39, %s42
    %p48 = scmp.eq.s32.totalorder %s15, 0
    %p49 = por %p47, %p48
    %p50 = scmp.ne.s32.totalorder %s39, %s42
    %p51 = scmp.eq.s32.totalorder %s20, 7
    %p52 = por %p50, %p51
    %p53 = scmp.ne.s32.totalorder %s42, %s43
    %p54 = scmp.eq.s32.totalorder %s20, 0
    %p55 = por %p53, %p54
    %p56 = scmp.ne.s32.totalorder %s42, %s43
    %p57 = scmp.eq.s32.totalorder %s21, 7
    %p58 = por %p56, %p57
    %p60 = scmp.ne.s32.totalorder %s43, %s59
    %p61 = scmp.eq.s32.totalorder %s21, 0
    %p62 = por %p60, %p61
    %s63 = ssub.s32 %s22, %s34
    %p64 = scmp.eq.s32.totalorder %s63, 0
    %s66 = sadd.s32 %s65, 1
    %s67 = scalar_select %p64, %s65, %s66
    %p70 = pneg %p64
    %p71 = scmp.eq.s32.totalorder %s15, 7
    %p72 = por %p70, %p71
    %p73 = scmp.ne.s32.totalorder %s65, %s68
    %p74 = scmp.eq.s32.totalorder %s15, 0
    %p75 = por %p73, %p74
    %p76 = scmp.ne.s32.totalorder %s65, %s68
    %p77 = scmp.eq.s32.totalorder %s20, 7
    %p78 = por %p76, %p77
    %p79 = scmp.ne.s32.totalorder %s68, %s69
    %p80 = scmp.eq.s32.totalorder %s20, 0
    %p81 = por %p79, %p80
    %p82 = scmp.ne.s32.totalorder %s68, %s69
    %p83 = scmp.eq.s32.totalorder %s21, 7
    %p84 = por %p82, %p83
    %p86 = scmp.ne.s32.totalorder %s69, %s85
    %p87 = scmp.eq.s32.totalorder %s21, 0
    %p88 = por %p86, %p87
    %s89 = ssub.s32 %s22, %s34
    %s90 = ssub.s32 %s23, %s30
    %s91 = sor.u32 %s89, %s90
    %p92 = scmp.eq.s32.totalorder %s91, 0
    %s94 = sadd.s32 %s93, 1
    %s95 = scalar_select %p92, %s93, %s94
    %p98 = pneg %p92
    %p99 = scmp.eq.s32.totalorder %s15, 7
    %p100 = por %p98, %p99
    %p101 = scmp.ne.s32.totalorder %s93, %s96
    %p102 = scmp.eq.s32.totalorder %s15, 0
    %p103 = por %p101, %p102
    %p104 = scmp.ne.s32.totalorder %s93, %s96
    %p105 = scmp.eq.s32.totalorder %s20, 7
    %p106 = por %p104, %p105
    %p107 = scmp.ne.s32.totalorder %s96, %s97
    %p108 = scmp.eq.s32.totalorder %s20, 0
    %p109 = por %p107, %p108
    %p110 = scmp.ne.s32.totalorder %s96, %s97
    %p111 = scmp.eq.s32.totalorder %s21, 7
    %p112 = por %p110, %p111
    %p114 = scmp.ne.s32.totalorder %s97, %s113
    %p115 = scmp.eq.s32.totalorder %s21, 0
    %p116 = por %p114, %p115
    %s118 = sadd.s32 %s117, 1
    %p121 = scmp.eq.s32.totalorder %s15, 7
    %p122 = scmp.ne.s32.totalorder %s117, %s119
    %p123 = scmp.eq.s32.totalorder %s15, 0
    %p124 = por %p122, %p123
    %p125 = scmp.ne.s32.totalorder %s117, %s119
    %p126 = scmp.eq.s32.totalorder %s20, 7
    %p127 = por %p125, %p126
    %p128 = scmp.ne.s32.totalorder %s119, %s120
    %p129 = scmp.eq.s32.totalorder %s20, 0
    %p130 = por %p128, %p129
    %p131 = scmp.ne.s32.totalorder %s119, %s120
    %p132 = scmp.eq.s32.totalorder %s21, 7
    %p133 = por %p131, %p132
    %p135 = scmp.ne.s32.totalorder %s120, %s134
    %p136 = scmp.eq.s32.totalorder %s21, 0
    %p137 = por %p135, %p136
    %s139 = sadd.s32 %s138, 1
    %p142 = scmp.eq.s32.totalorder %s15, 7
    %p143 = scmp.ne.s32.totalorder %s138, %s140
    %p144 = scmp.eq.s32.totalorder %s15, 0
    %p145 = por %p143, %p144
    %p146 = scmp.ne.s32.totalorder %s138, %s140
    %p147 = scmp.eq.s32.totalorder %s20, 7
    %p148 = por %p146, %p147
    %p149 = scmp.ne.s32.totalorder %s140, %s141
    %p150 = scmp.eq.s32.totalorder %s20, 0
    %p151 = por %p149, %p150
    %p152 = scmp.ne.s32.totalorder %s140, %s141
    %p153 = scmp.eq.s32.totalorder %s21, 7
    %p154 = por %p152, %p153
    %p156 = scmp.ne.s32.totalorder %s141, %s155
    %p157 = scmp.eq.s32.totalorder %s21, 0
    %p158 = por %p156, %p157
    %s160 = sadd.s32 %s159, 1
    %p163 = scmp.eq.s32.totalorder %s15, 7
    %p164 = scmp.ne.s32.totalorder %s159, %s161
    %p165 = scmp.eq.s32.totalorder %s15, 0
    %p166 = por %p164, %p165
    %p167 = scmp.ne.s32.totalorder %s159, %s161
    %p168 = scmp.eq.s32.totalorder %s20, 7
    %p169 = por %p167, %p168
    %p170 = scmp.ne.s32.totalorder %s161, %s162
    %p171 = scmp.eq.s32.totalorder %s20, 0
    %p172 = por %p170, %p171
    %p173 = scmp.ne.s32.totalorder %s161, %s162
    %p174 = scmp.eq.s32.totalorder %s21, 7
    %p175 = por %p173, %p174
    %p177 = scmp.ne.s32.totalorder %s162, %s176
    %p178 = scmp.eq.s32.totalorder %s21, 0
    %p179 = por %p177, %p178
    %s181 = sadd.s32 %s180, 1
    %p184 = scmp.eq.s32.totalorder %s15, 7
    %p185 = scmp.ne.s32.totalorder %s180, %s182
    %p186 = scmp.eq.s32.totalorder %s15, 0
    %p187 = por %p185, %p186
    %p188 = scmp.ne.s32.totalorder %s180, %s182
    %p189 = scmp.eq.s32.totalorder %s20, 7
    %p190 = por %p188, %p189
    %p191 = scmp.ne.s32.totalorder %s182, %s183
    %p192 = scmp.eq.s32.totalorder %s20, 0
    %p193 = por %p191, %p192
    %p194 = scmp.ne.s32.totalorder %s182, %s183
    %p195 = scmp.eq.s32.totalorder %s21, 7
    %p196 = por %p194, %p195
    %p198 = scmp.ne.s32.totalorder %s183, %s197
    %p199 = scmp.eq.s32.totalorder %s21, 0
    %p200 = por %p198, %p199
    %s202 = sadd.s32 %s201, 1
    %p205 = scmp.eq.s32.totalorder %s15, 7
    %p206 = scmp.ne.s32.totalorder %s201, %s203
    %p207 = scmp.eq.s32.totalorder %s15, 0
    %p208 = por %p206, %p207
    %p209 = scmp.ne.s32.totalorder %s201, %s203
    %p210 = scmp.eq.s32.totalorder %s20, 7
    %p211 = por %p209, %p210
    %p212 = scmp.ne.s32.totalorder %s203, %s204
    %p213 = scmp.eq.s32.totalorder %s20, 0
    %p214 = por %p212, %p213
    %p215 = scmp.ne.s32.totalorder %s203, %s204
    %p216 = scmp.eq.s32.totalorder %s21, 7
    %p217 = por %p215, %p216
    %p219 = scmp.ne.s32.totalorder %s204, %s218
    %p220 = scmp.eq.s32.totalorder %s21, 0
    %p221 = por %p219, %p220
    %s223 = sadd.s32 %s222, 1
    %p226 = scmp.eq.s32.totalorder %s15, 7
    %p227 = scmp.ne.s32.totalorder %s222, %s224
    %p228 = scmp.eq.s32.totalorder %s15, 0
    %p229 = por %p227, %p228
    %p230 = scmp.ne.s32.totalorder %s222, %s224
    %p231 = scmp.eq.s32.totalorder %s20, 7
    %p232 = por %p230, %p231
    %p233 = scmp.ne.s32.totalorder %s224, %s225
    %p234 = scmp.eq.s32.totalorder %s20, 0
    %p235 = por %p233, %p234
    %p236 = scmp.ne.s32.totalorder %s224, %s225
    %p237 = scmp.eq.s32.totalorder %s21, 7
    %p238 = por %p236, %p237
    %p240 = scmp.ne.s32.totalorder %s225, %s239
    %p241 = scmp.eq.s32.totalorder %s21, 0
    %p242 = por %p240, %p241
    %s243 = ssub.s32 %s22, %s34
    %s244 = ssub.s32 %s23, %s30
    %s245 = sor.u32 %s243, %s244
    %p246 = scmp.eq.s32.totalorder %s245, 0
    %s248 = sadd.s32 %s247, 1
    %s249 = scalar_select %p246, %s247, %s248
    %p252 = pneg %p246
    %p253 = scmp.eq.s32.totalorder %s15, 7
    %p254 = por %p252, %p253
    %p255 = scmp.ne.s32.totalorder %s247, %s250
    %p256 = scmp.eq.s32.totalorder %s15, 0
    %p257 = por %p255, %p256
    %p258 = scmp.ne.s32.totalorder %s247, %s250
    %p259 = scmp.eq.s32.totalorder %s20, 7
    %p260 = por %p258, %p259
    %p261 = scmp.ne.s32.totalorder %s250, %s251
    %p262 = scmp.eq.s32.totalorder %s20, 0
    %p263 = por %p261, %p262
    %p264 = scmp.ne.s32.totalorder %s250, %s251
    %p265 = scmp.eq.s32.totalorder %s21, 7
    %p266 = por %p264, %p265
    %p268 = scmp.ne.s32.totalorder %s251, %s267
    %p269 = scmp.eq.s32.totalorder %s21, 0
    %p270 = por %p268, %p269
    %p271 = scmp.le.s32.totalorder 1, %s15
    %p272 = scmp.lt.s32.totalorder %s15, 9
    %p273 = pnand %p271, %p272
    %p274 = pneg %p273
    // Predicated region
    $region9: #{evoformer_stack_forward.51} parent=5 // pred_check
      _
    $region10: #{evoformer_stack_forward.51} parent=5 // pred_check_branch
      %276 = sbr.rel (%p273) target = $region12
    $region11: #{evoformer_stack_forward.51} parent=5 // pred_region
      %s277 = ssub.s32 %s15, 1
      // Predicated region
      $region13: #{evoformer_stack_forward.51} parent=11 // pred_check
        %p278 = pneg %p81
      $region14: #{evoformer_stack_forward.51} parent=11 // pred_check_branch
        %280 = sbr.rel (%p278) target = $region16
      $region15: #{evoformer_stack_forward.51} parent=11 // pred_region
        %p281 = scmp.lt.s32.totalorder %s24, 0
        %s282 = scalar_select %p281, %s24, 0
        %s283 = smul.addr %s282, 2
        %s284 = smul.addr %s283, 4
        %s285 = scalar_lea.vmem %s1, %s284
      $region16: #{evoformer_stack_forward.51} parent=11 // pred_fallthru
        _
      // Predicated region
      $region17: #{evoformer_stack_forward.51} parent=11 // pred_check
        %p286 = pneg %p130
      $region18: #{evoformer_stack_forward.51} parent=11 // pred_check_branch
        %288 = sbr.rel (%p286) target = $region20
      $region19: #{evoformer_stack_forward.51} parent=11 // pred_region
        _
      $region20: #{evoformer_stack_forward.51} parent=11 // pred_fallthru
        _
      // Predicated region
      $region21: #{evoformer_stack_forward.51} parent=11 // pred_check
        %p289 = pneg %p151
      $region22: #{evoformer_stack_forward.51} parent=11 // pred_check_branch
        %291 = sbr.rel (%p289) target = $region24
      $region23: #{evoformer_stack_forward.51} parent=11 // pred_region
        _
      $region24: #{evoformer_stack_forward.51} parent=11 // pred_fallthru
        _
      // Predicated region
      $region25: #{evoformer_stack_forward.51} parent=11 // pred_check
        %p292 = pneg %p172
      $region26: #{evoformer_stack_forward.51} parent=11 // pred_check_branch
        %294 = sbr.rel (%p292) target = $region28
      $region27: #{evoformer_stack_forward.51} parent=11 // pred_region
        _
      $region28: #{evoformer_stack_forward.51} parent=11 // pred_fallthru
        _
      // Predicated region
      $region29: #{evoformer_stack_forward.51} parent=11 // pred_check
        %p295 = pneg %p193
      $region30: #{evoformer_stack_forward.51} parent=11 // pred_check_branch
        %297 = sbr.rel (%p295) target = $region32
      $region31: #{evoformer_stack_forward.51} parent=11 // pred_region
        _
      $region32: #{evoformer_stack_forward.51} parent=11 // pred_fallthru
        _
      // Predicated region
      $region33: #{evoformer_stack_forward.51} parent=11 // pred_check
        %p298 = pneg %p214
      $region34: #{evoformer_stack_forward.51} parent=11 // pred_check_branch
        %300 = sbr.rel (%p298) target = $region36
      $region35: #{evoformer_stack_forward.51} parent=11 // pred_region
        _
      $region36: #{evoformer_stack_forward.51} parent=11 // pred_fallthru
        _
      // Predicated region
      $region37: #{evoformer_stack_forward.51} parent=11 // pred_check
        %p301 = pneg %p235
      $region38: #{evoformer_stack_forward.51} parent=11 // pred_check_branch
        %303 = sbr.rel (%p301) target = $region40
      $region39: #{evoformer_stack_forward.51} parent=11 // pred_region
        _
      $region40: #{evoformer_stack_forward.51} parent=11 // pred_fallthru
        _
    $region12: #{evoformer_stack_forward.51} parent=5 // pred_fallthru
      _
    %p304 = scmp.lt.s32.totalorder %s15, 8
    // Predicated region
    $region41: #{evoformer_stack_forward.51} parent=5 // pred_check
      %p305 = pneg %p304
    $region42: #{evoformer_stack_forward.51} parent=5 // pred_check_branch
      %307 = sbr.rel (%p305) target = $region44
    $region43: #{evoformer_stack_forward.51} parent=5 // pred_region
      // Predicated region
      $region45: #{evoformer_stack_forward.51} parent=43 // pred_check
        %p308 = pneg %p49
      $region46: #{evoformer_stack_forward.51} parent=43 // pred_check_branch
        %310 = sbr.rel (%p308) target = $region48
      $region47: #{evoformer_stack_forward.51} parent=43 // pred_region
        %p311 = scmp.lt.s32.totalorder %s22, 0
        %s312 = scalar_select %p311, %s22, 0
        %p313 = scmp.lt.s32.totalorder %s23, 7
        %s314 = scalar_select %p313, %s23, 7
        %s315 = smul.addr %s312, 8
        %s316 = sadd.s32 %s314, %s315
        %s317 = smul.addr %s316, 8
        %s318 = scalar_lea.vmem %s0, %s317
      $region48: #{evoformer_stack_forward.51} parent=43 // pred_fallthru
        _
      // Predicated region
      $region49: #{evoformer_stack_forward.51} parent=43 // pred_check
        %p319 = pneg %p103
      $region50: #{evoformer_stack_forward.51} parent=43 // pred_check_branch
        %321 = sbr.rel (%p319) target = $region52
      $region51: #{evoformer_stack_forward.51} parent=43 // pred_region
        %p322 = scmp.lt.s32.totalorder %s22, 0
        %s323 = scalar_select %p322, %s22, 0
        %p324 = scmp.lt.s32.totalorder %s23, 7
        %s325 = scalar_select %p324, %s23, 7
        %s326 = smul.addr %s323, 8
        %s327 = sadd.s32 %s325, %s326
        %s328 = scalar_lea.vmem %s2, %s327
      $region52: #{evoformer_stack_forward.51} parent=43 // pred_fallthru
        _
    $region44: #{evoformer_stack_forward.51} parent=5 // pred_fallthru
      _
    %p329 = scmp.le.s32.totalorder 1, %s15
    %p330 = scmp.lt.s32.totalorder %s15, 9
    %p331 = pnand %p329, %p330
    %p332 = pneg %p331
    // Predicated region
    $region53: #{evoformer_stack_forward.51} parent=5 // pred_check
      _
    $region54: #{evoformer_stack_forward.51} parent=5 // pred_check_branch
      %334 = sbr.rel (%p331) target = $region56
    $region55: #{evoformer_stack_forward.51} parent=5 // pred_region
      %s335 = ssub.s32 %s15, 1
      %p336 = scmp.lt.s32.totalorder %s24, 0
      %s337 = scalar_select %p336, %s24, 0
      %p338 = scmp.lt.s32.totalorder %s25, 7
      %s339 = scalar_select %p338, %s25, 7
      %s340 = smul.addr %s337, 8
      %s341 = sadd.s32 %s339, %s340
      %s342 = smul.addr %s341, 8
      %s343 = scalar_lea.vmem %s0, %s342
      %p344 = pneg %p55
      %p345 = pneg %p52
      %p346 = scmp.lt.s32.totalorder %s24, 0
      %s347 = scalar_select %p346, %s24, 0
      %s348 = smul.addr %s347, 2
      %s349 = smul.addr %s348, 4
      %s350 = scalar_lea.vmem %s1, %s349
      %p351 = pneg %p81
      %p352 = pneg %p78
      %p353 = scmp.lt.s32.totalorder %s24, 0
      %s354 = scalar_select %p353, %s24, 0
      %p355 = scmp.lt.s32.totalorder %s25, 7
      %s356 = scalar_select %p355, %s25, 7
      %s357 = smul.addr %s354, 8
      %s358 = sadd.s32 %s356, %s357
      %s359 = scalar_lea.vmem %s2, %s358
      %p360 = pneg %p109
      %p361 = pneg %p106
      %p362 = pneg %p130
      %p363 = pneg %p127
      %p364 = pneg %p151
      %p365 = pneg %p148
      %p366 = pneg %p172
      %p367 = pneg %p169
      %p368 = pneg %p193
      %p369 = pneg %p190
      %p370 = pneg %p214
      %p371 = pneg %p211
      %p372 = pneg %p235
      %p373 = pneg %p232
      %p374 = pneg %p263
      %p375 = pneg %p260
      %p376 = scmp.lt.s32.totalorder %s24, 0
      %s377 = scalar_select %p376, %s24, 0
      %p378 = scmp.lt.s32.totalorder %s25, 7
      %s379 = scalar_select %p378, %s25, 7
      %s380 = smul.addr %s377, 8
      %s381 = sadd.s32 %s379, %s380
      %s382 = smul.addr %s381, 8
      %s383 = scalar_lea.vmem %s9, %s382
      %p384 = scmp.lt.s32.totalorder %s24, 0
      %s385 = scalar_select %p384, %s24, 0
      %p386 = scmp.lt.s32.totalorder %s25, 7
      %s387 = scalar_select %p386, %s25, 7
      %s388 = smul.addr %s385, 8
      %s389 = sadd.s32 %s387, %s388
      %s390 = smul.addr %s389, 8
      %s391 = scalar_lea.vmem %s0, %s390
      %p392 = scmp.lt.s32.totalorder %s24, 0
      %s393 = scalar_select %p392, %s24, 0
      %s394 = smul.addr %s393, 2
      %s395 = smul.addr %s394, 4
      %s396 = scalar_lea.vmem %s1, %s395
      %p397 = scmp.lt.s32.totalorder %s24, 0
      %s398 = scalar_select %p397, %s24, 0
      %p399 = scmp.lt.s32.totalorder %s25, 7
      %s400 = scalar_select %p399, %s25, 7
      %s401 = smul.addr %s398, 8
      %s402 = sadd.s32 %s400, %s401
      %s403 = scalar_lea.vmem %s2, %s402
      %p404 = scmp.lt.s32.totalorder %s24, 0
      %s405 = scalar_select %p404, %s24, 0
      %p406 = scmp.lt.s32.totalorder %s25, 7
      %s407 = scalar_select %p406, %s25, 7
      %s408 = smul.addr %s405, 8
      %s409 = sadd.s32 %s407, %s408
      %s410 = smul.addr %s409, 8
      %s411 = scalar_lea.vmem %s9, %s410
      %v413 = vld [vmem:[%s391] sm:$0xff]
      %v414 = vld [vmem:[%s3] sm:$0x1]
      %v415 = vld [vmem:[%s4] sm:$0x1]
      %vm416 = vcmask 130048
      %v417 = vsel %vm416, %v413, 0.0
      %418 = vadd.xlane.f32.xlu0 %v417
      %v419 = vpop.xlane.xlu0 %418
      %v420 = vrcp.pop 16.0
      %v421 = vmul.f32 %v419, %v420
      %v422 = vsub.f32 %v413, %v421
      %v423 = vmul.f32 %v422, %v422
      %v424 = vsel %vm416, %v423, 0.0
      %425 = vadd.xlane.f32.xlu0 %v424
      %v426 = vpop.xlane.xlu0 %425
      %v427 = vmul.f32 %v426, %v420
      %v428 = vadd.f32 %v427, 1e-05
      %v429 = vrsqrt.pop %v428
      %v430 = vmul.f32 %v422, %v429
      %v432 = vlaneseq
      %v433 = vshrl.u32 %v432, 7
      %v434 = vsub.s32 0, %v433
      %v435 = vrot.slane %v414, %v434
      %v437 = vmul.f32 %v430, %v435
      %v439 = vlaneseq
      %v440 = vshrl.u32 %v439, 7
      %v441 = vsub.s32 0, %v440
      %v442 = vrot.slane %v415, %v441
      %v444 = vadd.f32 %v437, %v442
      %v445 = vpack.c.bf16 %v444, %v444
      %v446 = vld [vmem:[%s5] sm:$0xf]
      %v447 = vld [vmem:[%s5 + $0x4] sm:$0xf]
      %v448 = vld [vmem:[%s6] sm:$0x1]
      %v450 = vlaneseq
      %v451 = vshrl.u32 %v450, 7
      %v452 = vsub.s32 0, %v451
      %v453 = vrot.slane %v448, %v452
      %v457 = vunpack.c.l.b16 %v446
      %v458 = vunpack.c.l.b16 %v447
      %v459 = vpack.c.b16 %v458, %v457
      %v462 = vsel %vm416, %v445, 0
      %464 = vmatprep.subr.bf16.mxu0 0
      %465 = vmatpush1.bf16.msra.mxu0 %v459
      %466 = vmatprep.subr.bf16.mxu0 0
      %467 = vmatpush1.bf16.msra.mxu0 0
      %468 = vmatprep.subr.bf16.mxu0 0
      %469 = vmatpush1.bf16.msra.mxu0 0
      %470 = vmatprep.subr.bf16.mxu0 0
      %471 = vmatpush1.bf16.msra.mxu0 0
      %472 = vmatprep.subr.bf16.mxu0 0
      %473 = vmatpush1.bf16.msra.mxu0 0
      %474 = vmatprep.subr.bf16.mxu0 0
      %475 = vmatpush1.bf16.msra.mxu0 0
      %476 = vmatprep.subr.bf16.mxu0 0
      %477 = vmatpush1.bf16.msra.mxu0 0
      %478 = vmatprep.subr.bf16.mxu0 0
      %479 = vmatpush1.bf16.msra.mxu0 0
      %480 = vmatprep.subr.bf16.mxu0 0
      %481 = vmatpush1.bf16.msra.mxu0 0
      %482 = vmatprep.subr.bf16.mxu0 0
      %483 = vmatpush1.bf16.msra.mxu0 0
      %484 = vmatprep.subr.bf16.mxu0 0
      %485 = vmatpush1.bf16.msra.mxu0 0
      %486 = vmatprep.subr.bf16.mxu0 0
      %487 = vmatpush1.bf16.msra.mxu0 0
      %488 = vmatprep.subr.bf16.mxu0 0
      %489 = vmatpush1.bf16.msra.mxu0 0
      %490 = vmatprep.subr.bf16.mxu0 0
      %491 = vmatpush1.bf16.msra.mxu0 0
      %492 = vmatprep.subr.bf16.mxu0 0
      %493 = vmatpush1.bf16.msra.mxu0 0
      %494 = vmatprep.subr.bf16.mxu0 0
      %495 = vmatpush1.bf16.msra.mxu0 0
      %496 = vmatprep.mubr.bf16.mxu0 0
      %497 = vmatmul.mubr.bf16.gmra.mrb[0].mxu0 %v462
      %v498 = vpop.f32.mrb[0].mxu0
      %v499 = vadd.f32 %v453, %v498
      %v500 = vpop.f32.mrb[0].mxu0
      %v501 = vpop.f32.mrb[0].mxu0
      %v502 = vpop.f32.mrb[0].mxu0
      %503 = vdwg.mxu0
      %v504 = vld [vmem:[%s403] sm:$0x1]
      %v505 = vsub.f32 %v504, 1.0
      %v506 = vmul.f32 %v505, 1e+09
      %v507 = vmul.f32 %v499, 0.35355338
      %v508 = vpack.c.bf16 %v507, %v507
      %v509 = vpack.c.bf16 %v499, %v499
      %v510 = vld [vmem:[%s396] sm:$0xf]
      %v511 = vunpack.c.l.bf16 %v510
      %513 = vrot.lane.b32.xlu0 %v509, 112
      %v514 = vpop.permute.xlu0 %513
      %vm515 = vcmask 64512
      %v517 = vsel %vm515, %v508, 0
      %v520 = vsel %vm515, %v514, 0
      %522 = vmatprep.subr.bf16.mxu0 0
      %523 = vmatpush1.bf16.xpose.msra.mxu0 %v520
      %524 = vmatprep.subr.bf16.mxu0 0
      %525 = vmatpush1.bf16.xpose.msra.mxu0 0
      %526 = vmatprep.subr.bf16.mxu0 0
      %527 = vmatpush1.bf16.xpose.msra.mxu0 0
      %528 = vmatprep.subr.bf16.mxu0 0
      %529 = vmatpush1.bf16.xpose.msra.mxu0 0
      %530 = vmatprep.subr.bf16.mxu0 0
      %531 = vmatpush1.bf16.xpose.msra.mxu0 0
      %532 = vmatprep.subr.bf16.mxu0 0
      %533 = vmatpush1.bf16.xpose.msra.mxu0 0
      %534 = vmatprep.subr.bf16.mxu0 0
      %535 = vmatpush1.bf16.xpose.msra.mxu0 0
      %536 = vmatprep.subr.bf16.mxu0 0
      %537 = vmatpush1.bf16.xpose.msra.mxu0 0
      %538 = vmatprep.subr.bf16.mxu0 0
      %539 = vmatpush1.bf16.xpose.msra.mxu0 0
      %540 = vmatprep.subr.bf16.mxu0 0
      %541 = vmatpush1.bf16.xpose.msra.mxu0 0
      %542 = vmatprep.subr.bf16.mxu0 0
      %543 = vmatpush1.bf16.xpose.msra.mxu0 0
      %544 = vmatprep.subr.bf16.mxu0 0
      %545 = vmatpush1.bf16.xpose.msra.mxu0 0
      %546 = vmatprep.subr.bf16.mxu0 0
      %547 = vmatpush1.bf16.xpose.msra.mxu0 0
      %548 = vmatprep.subr.bf16.mxu0 0
      %549 = vmatpush1.bf16.xpose.msra.mxu0 0
      %550 = vmatprep.subr.bf16.mxu0 0
      %551 = vmatpush1.bf16.xpose.msra.mxu0 0
      %552 = vmatprep.subr.bf16.mxu0 0
      %553 = vmatpush1.bf16.xpose.msra.mxu0 0
      %554 = vmatprep.mubr.bf16.mxu0 0
      %555 = vmatmul.mubr.bf16.gmra.mrb[0].mxu0 %v517
      %v556 = vpop.f32.mrb[0].mxu0
      %v557 = vadd.f32 %v511, %v556
      %v558 = vpop.f32.mrb[0].mxu0
      %v559 = vpop.f32.mrb[0].mxu0
      %v560 = vpop.f32.mrb[0].mxu0
      %561 = vdwg.mxu0
      %v563 = vlaneseq
      %v564 = vshrl.u32 %v563, 7
      %v565 = vsub.s32 0, %v564
      %v566 = vrot.slane %v506, %v565
      %v568 = vadd.f32 %v557, %v566
      %v569 = vsel %vm515, %v568, -inf
      %570 = vmax.xlane.f32.xlu0 %v569
      %v571 = vpop.xlane.xlu0 %570
      %v572 = vsub.f32 %v568, %v571
      %v573 = vmul.f32 %v572, 1.442695
      %v574 = vpow.pop %v573
      %v575 = vsel %vm515, %v574, 0.0
      %576 = vadd.xlane.f32.xlu0 %v575
      %v577 = vpop.xlane.xlu0 %576
      %v578 = vrcp.pop %v577
      %v579 = vmul.f32 %v574, %v578
      %v580 = vpack.c.bf16 %v579, %v579
      %581 = vrot.lane.b32.xlu0 %v509, 96
      %v582 = vpop.permute.xlu0 %581
      %v584 = vsel %vm515, %v580, 0
      %vm586 = vcmask 1043456
      %v588 = vsel %vm586, %v582, 0
      %590 = vmatprep.subr.bf16.mxu0 0
      %591 = vmatpush1.bf16.msra.mxu0 %v588
      %592 = vmatprep.subr.bf16.mxu0 0
      %593 = vmatpush1.bf16.msra.mxu0 0
      %594 = vmatprep.subr.bf16.mxu0 0
      %595 = vmatpush1.bf16.msra.mxu0 0
      %596 = vmatprep.subr.bf16.mxu0 0
      %597 = vmatpush1.bf16.msra.mxu0 0
      %598 = vmatprep.subr.bf16.mxu0 0
      %599 = vmatpush1.bf16.msra.mxu0 0
      %600 = vmatprep.subr.bf16.mxu0 0
      %601 = vmatpush1.bf16.msra.mxu0 0
      %602 = vmatprep.subr.bf16.mxu0 0
      %603 = vmatpush1.bf16.msra.mxu0 0
      %604 = vmatprep.subr.bf16.mxu0 0
      %605 = vmatpush1.bf16.msra.mxu0 0
      %606 = vmatprep.subr.bf16.mxu0 0
      %607 = vmatpush1.bf16.msra.mxu0 0
      %608 = vmatprep.subr.bf16.mxu0 0
      %609 = vmatpush1.bf16.msra.mxu0 0
      %610 = vmatprep.subr.bf16.mxu0 0
      %611 = vmatpush1.bf16.msra.mxu0 0
      %612 = vmatprep.subr.bf16.mxu0 0
      %613 = vmatpush1.bf16.msra.mxu0 0
      %614 = vmatprep.subr.bf16.mxu0 0
      %615 = vmatpush1.bf16.msra.mxu0 0
      %616 = vmatprep.subr.bf16.mxu0 0
      %617 = vmatpush1.bf16.msra.mxu0 0
      %618 = vmatprep.subr.bf16.mxu0 0
      %619 = vmatpush1.bf16.msra.mxu0 0
      %620 = vmatprep.subr.bf16.mxu0 0
      %621 = vmatpush1.bf16.msra.mxu0 0
      %622 = vmatprep.mubr.bf16.mxu0 0
      %623 = vmatmul.mubr.bf16.gmra.mrb[0].mxu0 %v584
      %v624 = vpop.f32.mrb[0].mxu0
      %v625 = vadd.f32 0.0, %v624
      %v626 = vpop.f32.mrb[0].mxu0
      %v627 = vpop.f32.mrb[0].mxu0
      %v628 = vpop.f32.mrb[0].mxu0
      %629 = vdwg.mxu0
      %s630 = scalar_lea.vmem %s396, 4
      %v631 = vld [vmem:[%s630] sm:$0xf]
      %v632 = vunpack.c.l.bf16 %v631
      %634 = vrot.lane.b32.xlu0 %v508, 120
      %v635 = vpop.permute.xlu0 %634
      %636 = vrot.lane.b32.xlu0 %v509, 104
      %v637 = vpop.permute.xlu0 %636
      %v639 = vsel %vm515, %v635, 0
      %v642 = vsel %vm515, %v637, 0
      %644 = vmatprep.subr.bf16.mxu0 0
      %645 = vmatpush1.bf16.xpose.msra.mxu0 %v642
      %646 = vmatprep.subr.bf16.mxu0 0
      %647 = vmatpush1.bf16.xpose.msra.mxu0 0
      %648 = vmatprep.subr.bf16.mxu0 0
      %649 = vmatpush1.bf16.xpose.msra.mxu0 0
      %650 = vmatprep.subr.bf16.mxu0 0
      %651 = vmatpush1.bf16.xpose.msra.mxu0 0
      %652 = vmatprep.subr.bf16.mxu0 0
      %653 = vmatpush1.bf16.xpose.msra.mxu0 0
      %654 = vmatprep.subr.bf16.mxu0 0
      %655 = vmatpush1.bf16.xpose.msra.mxu0 0
      %656 = vmatprep.subr.bf16.mxu0 0
      %657 = vmatpush1.bf16.xpose.msra.mxu0 0
      %658 = vmatprep.subr.bf16.mxu0 0
      %659 = vmatpush1.bf16.xpose.msra.mxu0 0
      %660 = vmatprep.subr.bf16.mxu0 0
      %661 = vmatpush1.bf16.xpose.msra.mxu0 0
      %662 = vmatprep.subr.bf16.mxu0 0
      %663 = vmatpush1.bf16.xpose.msra.mxu0 0
      %664 = vmatprep.subr.bf16.mxu0 0
      %665 = vmatpush1.bf16.xpose.msra.mxu0 0
      %666 = vmatprep.subr.bf16.mxu0 0
      %667 = vmatpush1.bf16.xpose.msra.mxu0 0
      %668 = vmatprep.subr.bf16.mxu0 0
      %669 = vmatpush1.bf16.xpose.msra.mxu0 0
      %670 = vmatprep.subr.bf16.mxu0 0
      %671 = vmatpush1.bf16.xpose.msra.mxu0 0
      %672 = vmatprep.subr.bf16.mxu0 0
      %673 = vmatpush1.bf16.xpose.msra.mxu0 0
      %674 = vmatprep.subr.bf16.mxu0 0
      %675 = vmatpush1.bf16.xpose.msra.mxu0 0
      %676 = vmatprep.mubr.bf16.mxu0 0
      %677 = vmatmul.mubr.bf16.gmra.mrb[0].mxu0 %v639
      %v678 = vpop.f32.mrb[0].mxu0
      %v679 = vadd.f32 %v632, %v678
      %v680 = vpop.f32.mrb[0].mxu0
      %v681 = vpop.f32.mrb[0].mxu0
      %v682 = vpop.f32.mrb[0].mxu0
      %683 = vdwg.mxu0
      %v684 = vadd.f32 %v679, %v566
      %v685 = vsel %vm515, %v684, -inf
      %686 = vmax.xlane.f32.xlu0 %v685
      %v687 = vpop.xlane.xlu0 %686
      %v688 = vsub.f32 %v684, %v687
      %v689 = vmul.f32 %v688, 1.442695
      %v690 = vpow.pop %v689
      %v691 = vsel %vm515, %v690, 0.0
      %692 = vadd.xlane.f32.xlu0 %v691
      %v693 = vpop.xlane.xlu0 %692
      %v694 = vrcp.pop %v693
      %v695 = vmul.f32 %v690, %v694
      %v696 = vpack.c.bf16 %v695, %v695
      %697 = vrot.lane.b32.xlu0 %v509, 88
      %v698 = vpop.permute.xlu0 %697
      %v700 = vsel %vm515, %v696, 0
      %v703 = vsel %vm586, %v698, 0
      %705 = vmatprep.subr.bf16.mxu0 0
      %706 = vmatpush1.bf16.msra.mxu0 %v703
      %707 = vmatprep.subr.bf16.mxu0 0
      %708 = vmatpush1.bf16.msra.mxu0 0
      %709 = vmatprep.subr.bf16.mxu0 0
      %710 = vmatpush1.bf16.msra.mxu0 0
      %711 = vmatprep.subr.bf16.mxu0 0
      %712 = vmatpush1.bf16.msra.mxu0 0
      %713 = vmatprep.subr.bf16.mxu0 0
      %714 = vmatpush1.bf16.msra.mxu0 0
      %715 = vmatprep.subr.bf16.mxu0 0
      %716 = vmatpush1.bf16.msra.mxu0 0
      %717 = vmatprep.subr.bf16.mxu0 0
      %718 = vmatpush1.bf16.msra.mxu0 0
      %719 = vmatprep.subr.bf16.mxu0 0
      %720 = vmatpush1.bf16.msra.mxu0 0
      %721 = vmatprep.subr.bf16.mxu0 0
      %722 = vmatpush1.bf16.msra.mxu0 0
      %723 = vmatprep.subr.bf16.mxu0 0
      %724 = vmatpush1.bf16.msra.mxu0 0
      %725 = vmatprep.subr.bf16.mxu0 0
      %726 = vmatpush1.bf16.msra.mxu0 0
      %727 = vmatprep.subr.bf16.mxu0 0
      %728 = vmatpush1.bf16.msra.mxu0 0
      %729 = vmatprep.subr.bf16.mxu0 0
      %730 = vmatpush1.bf16.msra.mxu0 0
      %731 = vmatprep.subr.bf16.mxu0 0
      %732 = vmatpush1.bf16.msra.mxu0 0
      %733 = vmatprep.subr.bf16.mxu0 0
      %734 = vmatpush1.bf16.msra.mxu0 0
      %735 = vmatprep.subr.bf16.mxu0 0
      %736 = vmatpush1.bf16.msra.mxu0 0
      %737 = vmatprep.mubr.bf16.mxu0 0
      %738 = vmatmul.mubr.bf16.gmra.mrb[0].mxu0 %v700
      %v739 = vpop.f32.mrb[0].mxu0
      %v740 = vadd.f32 0.0, %v739
      %v741 = vpop.f32.mrb[0].mxu0
      %v742 = vpop.f32.mrb[0].mxu0
      %v743 = vpop.f32.mrb[0].mxu0
      %744 = vdwg.mxu0
      %v745 = vxor.u32 %v499, 2147483648
      %v746 = vmul.f32 %v745, 1.442695
      %v747 = vpow.pop %v746
      %v748 = vadd.f32 %v747, 1.0
      %v749 = vrcp.pop %v748
      %v750 = vmul.f32 1.0, %v749
      %752 = vrot.lane.b32.xlu0 %v740, 8
      %v753 = vpop.permute.xlu0 %752
      %v755 = vsel %vm515, %v625, %v753
      %757 = vrot.lane.b32.xlu0 %v750, 80
      %v758 = vpop.permute.xlu0 %757
      %v760 = vmul.f32 %v755, %v758
      %v761 = vpack.c.bf16 %v760, %v760
      %v762 = vld [vmem:[%s7] sm:$0xf]
      %v763 = vld [vmem:[%s7 + $0x4] sm:$0xf]
      %v764 = vld [vmem:[%s8] sm:$0x1]
      %v766 = vlaneseq
      %v767 = vshrl.u32 %v766, 7
      %v768 = vsub.s32 0, %v767
      %v769 = vrot.slane %v764, %v768
      %v773 = vunpack.c.l.b16 %v762
      %v774 = vunpack.c.l.b16 %v763
      %v775 = vpack.c.b16 %v774, %v773
      %v778 = vsel %vm416, %v761, 0
      %780 = vmatprep.subr.bf16.mxu0 0
      %781 = vmatpush1.bf16.msra.mxu0 %v775
      %782 = vmatprep.subr.bf16.mxu0 0
      %783 = vmatpush1.bf16.msra.mxu0 0
      %784 = vmatprep.subr.bf16.mxu0 0
      %785 = vmatpush1.bf16.msra.mxu0 0
      %786 = vmatprep.subr.bf16.mxu0 0
      %787 = vmatpush1.bf16.msra.mxu0 0
      %788 = vmatprep.subr.bf16.mxu0 0
      %789 = vmatpush1.bf16.msra.mxu0 0
      %790 = vmatprep.subr.bf16.mxu0 0
      %791 = vmatpush1.bf16.msra.mxu0 0
      %792 = vmatprep.subr.bf16.mxu0 0
      %793 = vmatpush1.bf16.msra.mxu0 0
      %794 = vmatprep.subr.bf16.mxu0 0
      %795 = vmatpush1.bf16.msra.mxu0 0
      %796 = vmatprep.subr.bf16.mxu0 0
      %797 = vmatpush1.bf16.msra.mxu0 0
      %798 = vmatprep.subr.bf16.mxu0 0
      %799 = vmatpush1.bf16.msra.mxu0 0
      %800 = vmatprep.subr.bf16.mxu0 0
      %801 = vmatpush1.bf16.msra.mxu0 0
      %802 = vmatprep.subr.bf16.mxu0 0
      %803 = vmatpush1.bf16.msra.mxu0 0
      %804 = vmatprep.subr.bf16.mxu0 0
      %805 = vmatpush1.bf16.msra.mxu0 0
      %806 = vmatprep.subr.bf16.mxu0 0
      %807 = vmatpush1.bf16.msra.mxu0 0
      %808 = vmatprep.subr.bf16.mxu0 0
      %809 = vmatpush1.bf16.msra.mxu0 0
      %810 = vmatprep.subr.bf16.mxu0 0
      %811 = vmatpush1.bf16.msra.mxu0 0
      %812 = vmatprep.mubr.bf16.mxu0 0
      %813 = vmatmul.mubr.bf16.gmra.mrb[0].mxu0 %v778
      %v814 = vpop.f32.mrb[0].mxu0
      %v815 = vadd.f32 %v769, %v814
      %v816 = vpop.f32.mrb[0].mxu0
      %v817 = vpop.f32.mrb[0].mxu0
      %v818 = vpop.f32.mrb[0].mxu0
      %819 = vdwg.mxu0
      %820 = vst.msk [vmem:[%s411] sm:$0xff] %vm416, %v815
      %p821 = scmp.lt.s32.totalorder %s24, 0
      %s822 = scalar_select %p821, %s24, 0
      %p823 = scmp.lt.s32.totalorder %s25, 7
      %s824 = scalar_select %p823, %s25, 7
      %s825 = smul.addr %s822, 8
      %s826 = sadd.s32 %s824, %s825
      %s827 = smul.addr %s826, 8
      %s828 = scalar_lea.vmem %s9, %s827
      // Predicated region
      $region57: #{evoformer_stack_forward.51} parent=55 // pred_check
        %p829 = pneg %p260
      $region58: #{evoformer_stack_forward.51} parent=55 // pred_check_branch
        %831 = sbr.rel (%p829) target = $region60
      $region59: #{evoformer_stack_forward.51} parent=55 // pred_region
        _
      $region60: #{evoformer_stack_forward.51} parent=55 // pred_fallthru
        _
    $region56: #{evoformer_stack_forward.51} parent=5 // pred_fallthru
      _
    %p832 = scmp.le.s32.totalorder 2, %s15
    // Predicated region
    $region61: #{evoformer_stack_forward.51} parent=5 // pred_check
      %p833 = pneg %p832
    $region62: #{evoformer_stack_forward.51} parent=5 // pred_check_branch
      %835 = sbr.rel (%p833) target = $region64
    $region63: #{evoformer_stack_forward.51} parent=5 // pred_region
      %s836 = ssub.s32 %s15, 2
      // Predicated region
      $region65: #{evoformer_stack_forward.51} parent=63 // pred_check
        %p837 = pneg %p266
      $region66: #{evoformer_stack_forward.51} parent=63 // pred_check_branch
        %839 = sbr.rel (%p837) target = $region68
      $region67: #{evoformer_stack_forward.51} parent=63 // pred_region
        %p840 = scmp.lt.s32.totalorder %s26, 0
        %s841 = scalar_select %p840, %s26, 0
        %p842 = scmp.lt.s32.totalorder %s27, 7
        %s843 = scalar_select %p842, %s27, 7
        %s844 = smul.addr %s841, 8
        %s845 = sadd.s32 %s843, %s844
        %s846 = smul.addr %s845, 8
        %s847 = scalar_lea.vmem %s9, %s846
      $region68: #{evoformer_stack_forward.51} parent=63 // pred_fallthru
        _
    $region64: #{evoformer_stack_forward.51} parent=5 // pred_fallthru
      _
  $region6: #{evoformer_stack_forward.51} parent=0 // loop_footer
    %s19 = sadd.s32 1, %s15
  $region7: #{evoformer_stack_forward.51} parent=0 // loop_footer_branch
    %14 = sbr.rel target = $region3
  $region8: #{evoformer_stack_forward.51} parent=0 // loop_exit
    _

// kernel: evoformer_stack_forward.54
$region0: #{evoformer_stack_forward.54}
  #allocation0 [shape = 'u32[]', space=smem, size = 0x4, offset = 0x4, fixed_abs, tag = 'smem constant byte address 0x4 - core index']
  #allocation1 [shape = 'u32[144,128]{1,0:T(1,128)}', space=vmem, size = 0x12000, scoped, tag = 'internal scratch']
  %s0 = inlined_call_operand.vmem [shape: f32[64,16], index: 0, kind: input, shape index: {}]
  %s1 = inlined_call_operand.vmem [shape: f32[64,1], index: 1, kind: input, shape index: {}]
  %s2 = inlined_call_operand.vmem [shape: f32[1,16], index: 2, kind: input, shape index: {}]
  %s3 = inlined_call_operand.vmem [shape: f32[1,16], index: 3, kind: input, shape index: {}]
  %s4 = inlined_call_operand.vmem [shape: f32[16,32], index: 4, kind: input, shape index: {}]
  %s5 = inlined_call_operand.vmem [shape: f32[1,32], index: 5, kind: input, shape index: {}]
  %s6 = inlined_call_operand.vmem [shape: f32[32,16], index: 6, kind: input, shape index: {}]
  %s7 = inlined_call_operand.vmem [shape: f32[1,16], index: 7, kind: input, shape index: {}]
  %s8 = inlined_call_operand.vmem [shape: f32[64,16], index: 8, kind: output, shape index: {}]
  %s9 = sld [smem:[#allocation0]]
  $region42: #{evoformer_stack_forward.54} parent=0
    _
  %s11 = ssub.s32 1, %s9
  %s12 = scalar_select 0, %s11, %s9
  // Predicated region
  $region2: #{evoformer_stack_forward.54} parent=0 // pred_check
    _
  $region3: #{evoformer_stack_forward.54} parent=0 // pred_check_branch
    %14 = sbr.rel (0) target = $region5
  $region4: #{evoformer_stack_forward.54} parent=0 // pred_region
    _
  $region5: #{evoformer_stack_forward.54} parent=0 // pred_fallthru
    _
  // Predicated region
  $region6: #{evoformer_stack_forward.54} parent=0 // pred_check
    _
  $region7: #{evoformer_stack_forward.54} parent=0 // pred_check_branch
    %16 = sbr.rel (0) target = $region9
  $region8: #{evoformer_stack_forward.54} parent=0 // pred_region
    _
  $region9: #{evoformer_stack_forward.54} parent=0 // pred_fallthru
    _
  // Predicated region
  $region10: #{evoformer_stack_forward.54} parent=0 // pred_check
    _
  $region11: #{evoformer_stack_forward.54} parent=0 // pred_check_branch
    %18 = sbr.rel (0) target = $region13
  $region12: #{evoformer_stack_forward.54} parent=0 // pred_region
    _
  $region13: #{evoformer_stack_forward.54} parent=0 // pred_fallthru
    _
  // Predicated region
  $region14: #{evoformer_stack_forward.54} parent=0 // pred_check
    _
  $region15: #{evoformer_stack_forward.54} parent=0 // pred_check_branch
    %20 = sbr.rel (0) target = $region17
  $region16: #{evoformer_stack_forward.54} parent=0 // pred_region
    _
  $region17: #{evoformer_stack_forward.54} parent=0 // pred_fallthru
    _
  // Predicated region
  $region18: #{evoformer_stack_forward.54} parent=0 // pred_check
    _
  $region19: #{evoformer_stack_forward.54} parent=0 // pred_check_branch
    %22 = sbr.rel (0) target = $region21
  $region20: #{evoformer_stack_forward.54} parent=0 // pred_region
    _
  $region21: #{evoformer_stack_forward.54} parent=0 // pred_fallthru
    _
  // Predicated region
  $region22: #{evoformer_stack_forward.54} parent=0 // pred_check
    _
  $region23: #{evoformer_stack_forward.54} parent=0 // pred_check_branch
    %24 = sbr.rel (0) target = $region25
  $region24: #{evoformer_stack_forward.54} parent=0 // pred_region
    _
  $region25: #{evoformer_stack_forward.54} parent=0 // pred_fallthru
    _
  // Predicated region
  $region26: #{evoformer_stack_forward.54} parent=0 // pred_check
    _
  $region27: #{evoformer_stack_forward.54} parent=0 // pred_check_branch
    %26 = sbr.rel (0) target = $region29
  $region28: #{evoformer_stack_forward.54} parent=0 // pred_region
    _
  $region29: #{evoformer_stack_forward.54} parent=0 // pred_fallthru
    _
  // Predicated region
  $region30: #{evoformer_stack_forward.54} parent=0 // pred_check
    _
  $region31: #{evoformer_stack_forward.54} parent=0 // pred_check_branch
    %28 = sbr.rel (0) target = $region33
  $region32: #{evoformer_stack_forward.54} parent=0 // pred_region
    _
  $region33: #{evoformer_stack_forward.54} parent=0 // pred_fallthru
    _
  %v29 = vld [vmem:[%s0] sm:$0xff]
  %v30 = vld [vmem:[%s0 + $0x8] sm:$0xff]
  %v31 = vld [vmem:[%s0 + $0x10] sm:$0xff]
  %v32 = vld [vmem:[%s0 + $0x18] sm:$0xff]
  %v33 = vld [vmem:[%s0 + $0x20] sm:$0xff]
  %v34 = vld [vmem:[%s0 + $0x28] sm:$0xff]
  %v35 = vld [vmem:[%s0 + $0x30] sm:$0xff]
  %v36 = vld [vmem:[%s0 + $0x38] sm:$0xff]
  %v37 = vld [vmem:[%s2] sm:$0x1]
  %v38 = vld [vmem:[%s3] sm:$0x1]
  %vm39 = vcmask 130048
  %v40 = vsel %vm39, %v29, 0.0
  %41 = vadd.xlane.f32.xlu0 %v40
  %v42 = vpop.xlane.xlu0 %41
  %v43 = vsel %vm39, %v30, 0.0
  %44 = vadd.xlane.f32.xlu0 %v43
  %v45 = vpop.xlane.xlu0 %44
  %v46 = vsel %vm39, %v31, 0.0
  %47 = vadd.xlane.f32.xlu0 %v46
  %v48 = vpop.xlane.xlu0 %47
  %v49 = vsel %vm39, %v32, 0.0
  %50 = vadd.xlane.f32.xlu0 %v49
  %v51 = vpop.xlane.xlu0 %50
  %v52 = vsel %vm39, %v33, 0.0
  %53 = vadd.xlane.f32.xlu0 %v52
  %v54 = vpop.xlane.xlu0 %53
  %v55 = vsel %vm39, %v34, 0.0
  %56 = vadd.xlane.f32.xlu0 %v55
  %v57 = vpop.xlane.xlu0 %56
  %v58 = vsel %vm39, %v35, 0.0
  %59 = vadd.xlane.f32.xlu0 %v58
  %v60 = vpop.xlane.xlu0 %59
  %v61 = vsel %vm39, %v36, 0.0
  %62 = vadd.xlane.f32.xlu0 %v61
  %v63 = vpop.xlane.xlu0 %62
  %v64 = vrcp.pop 16.0
  %v65 = vmul.f32 %v42, %v64
  %v66 = vmul.f32 %v45, %v64
  %v67 = vmul.f32 %v48, %v64
  %v68 = vmul.f32 %v51, %v64
  %v69 = vmul.f32 %v54, %v64
  %v70 = vmul.f32 %v57, %v64
  %v71 = vmul.f32 %v60, %v64
  %v72 = vmul.f32 %v63, %v64
  %v73 = vsub.f32 %v29, %v65
  %v74 = vsub.f32 %v30, %v66
  %v75 = vsub.f32 %v31, %v67
  %v76 = vsub.f32 %v32, %v68
  %v77 = vsub.f32 %v33, %v69
  %v78 = vsub.f32 %v34, %v70
  %v79 = vsub.f32 %v35, %v71
  %v80 = vsub.f32 %v36, %v72
  %v81 = vmul.f32 %v73, %v73
  %v82 = vmul.f32 %v74, %v74
  %v83 = vmul.f32 %v75, %v75
  %v84 = vmul.f32 %v76, %v76
  %v85 = vmul.f32 %v77, %v77
  %v86 = vmul.f32 %v78, %v78
  %v87 = vmul.f32 %v79, %v79
  %v88 = vmul.f32 %v80, %v80
  %v89 = vsel %vm39, %v81, 0.0
  %90 = vadd.xlane.f32.xlu0 %v89
  %v91 = vpop.xlane.xlu0 %90
  %v92 = vsel %vm39, %v82, 0.0
  %93 = vadd.xlane.f32.xlu0 %v92
  %v94 = vpop.xlane.xlu0 %93
  %v95 = vsel %vm39, %v83, 0.0
  %96 = vadd.xlane.f32.xlu0 %v95
  %v97 = vpop.xlane.xlu0 %96
  %v98 = vsel %vm39, %v84, 0.0
  %99 = vadd.xlane.f32.xlu0 %v98
  %v100 = vpop.xlane.xlu0 %99
  %v101 = vsel %vm39, %v85, 0.0
  %102 = vadd.xlane.f32.xlu0 %v101
  %v103 = vpop.xlane.xlu0 %102
  %v104 = vsel %vm39, %v86, 0.0
  %105 = vadd.xlane.f32.xlu0 %v104
  %v106 = vpop.xlane.xlu0 %105
  %v107 = vsel %vm39, %v87, 0.0
  %108 = vadd.xlane.f32.xlu0 %v107
  %v109 = vpop.xlane.xlu0 %108
  %v110 = vsel %vm39, %v88, 0.0
  %111 = vadd.xlane.f32.xlu0 %v110
  %v112 = vpop.xlane.xlu0 %111
  %v113 = vmul.f32 %v91, %v64
  %v114 = vmul.f32 %v94, %v64
  %v115 = vmul.f32 %v97, %v64
  %v116 = vmul.f32 %v100, %v64
  %v117 = vmul.f32 %v103, %v64
  %v118 = vmul.f32 %v106, %v64
  %v119 = vmul.f32 %v109, %v64
  %v120 = vmul.f32 %v112, %v64
  %v121 = vadd.f32 %v113, 1e-05
  %v122 = vadd.f32 %v114, 1e-05
  %v123 = vadd.f32 %v115, 1e-05
  %v124 = vadd.f32 %v116, 1e-05
  %v125 = vadd.f32 %v117, 1e-05
  %v126 = vadd.f32 %v118, 1e-05
  %v127 = vadd.f32 %v119, 1e-05
  %v128 = vadd.f32 %v120, 1e-05
  %v129 = vrsqrt.pop %v121
  %v130 = vrsqrt.pop %v122
  %v131 = vrsqrt.pop %v123
  %v132 = vrsqrt.pop %v124
  %v133 = vrsqrt.pop %v125
  %v134 = vrsqrt.pop %v126
  %v135 = vrsqrt.pop %v127
  %v136 = vrsqrt.pop %v128
  %v137 = vmul.f32 %v73, %v129
  %v138 = vmul.f32 %v74, %v130
  %v139 = vmul.f32 %v75, %v131
  %v140 = vmul.f32 %v76, %v132
  %v141 = vmul.f32 %v77, %v133
  %v142 = vmul.f32 %v78, %v134
  %v143 = vmul.f32 %v79, %v135
  %v144 = vmul.f32 %v80, %v136
  %v146 = vlaneseq
  %v147 = vshrl.u32 %v146, 7
  %v148 = vsub.s32 0, %v147
  %v149 = vrot.slane %v37, %v148
  %v151 = vmul.f32 %v137, %v149
  %v152 = vmul.f32 %v138, %v149
  %v153 = vmul.f32 %v139, %v149
  %v154 = vmul.f32 %v140, %v149
  %v155 = vmul.f32 %v141, %v149
  %v156 = vmul.f32 %v142, %v149
  %v157 = vmul.f32 %v143, %v149
  %v158 = vmul.f32 %v144, %v149
  %v160 = vlaneseq
  %v161 = vshrl.u32 %v160, 7
  %v162 = vsub.s32 0, %v161
  %v163 = vrot.slane %v38, %v162
  %v165 = vadd.f32 %v151, %v163
  %v166 = vadd.f32 %v152, %v163
  %v167 = vadd.f32 %v153, %v163
  %v168 = vadd.f32 %v154, %v163
  %v169 = vadd.f32 %v155, %v163
  %v170 = vadd.f32 %v156, %v163
  %v171 = vadd.f32 %v157, %v163
  %v172 = vadd.f32 %v158, %v163
  %v173 = vld [vmem:[%s4] sm:$0xff]
  %v174 = vld [vmem:[%s4 + $0x8] sm:$0xff]
  %v175 = vld [vmem:[%s5] sm:$0x1]
  %v177 = vlaneseq
  %v178 = vshrl.u32 %v177, 7
  %v179 = vsub.s32 0, %v178
  %v180 = vrot.slane %v175, %v179
  %v183 = vsel %vm39, %v165, 0
  %v186 = vsel %vm39, %v166, 0
  %v189 = vsel %vm39, %v167, 0
  %v192 = vsel %vm39, %v168, 0
  %v195 = vsel %vm39, %v169, 0
  %v198 = vsel %vm39, %v170, 0
  %v201 = vsel %vm39, %v171, 0
  %v204 = vsel %vm39, %v172, 0
  %206 = vmatprep.subr.mxu0 0.0
  %207 = vmatpush1.msra.mxu0 %v173
  %208 = vmatprep.subr.mxu0 0.0
  %209 = vmatpush1.msra.mxu0 %v174
  %210 = vmatprep.subr.mxu0 0.0
  %211 = vmatpush1.msra.mxu0 0.0
  %212 = vmatprep.subr.mxu0 0.0
  %213 = vmatpush1.msra.mxu0 0.0
  %214 = vmatprep.subr.mxu0 0.0
  %215 = vmatpush1.msra.mxu0 0.0
  %216 = vmatprep.subr.mxu0 0.0
  %217 = vmatpush1.msra.mxu0 0.0
  %218 = vmatprep.subr.mxu0 0.0
  %219 = vmatpush1.msra.mxu0 0.0
  %220 = vmatprep.subr.mxu0 0.0
  %221 = vmatpush1.msra.mxu0 0.0
  %222 = vmatprep.subr.mxu0 0.0
  %223 = vmatpush1.msra.mxu0 0.0
  %224 = vmatprep.subr.mxu0 0.0
  %225 = vmatpush1.msra.mxu0 0.0
  %226 = vmatprep.subr.mxu0 0.0
  %227 = vmatpush1.msra.mxu0 0.0
  %228 = vmatprep.subr.mxu0 0.0
  %229 = vmatpush1.msra.mxu0 0.0
  %230 = vmatprep.subr.mxu0 0.0
  %231 = vmatpush1.msra.mxu0 0.0
  %232 = vmatprep.subr.mxu0 0.0
  %233 = vmatpush1.msra.mxu0 0.0
  %234 = vmatprep.subr.mxu0 0.0
  %235 = vmatpush1.msra.mxu0 0.0
  %236 = vmatprep.subr.mxu0 0.0
  %237 = vmatpush1.msra.mxu0 0.0
  %238 = vmatprep.subr.mxu0 0.0
  %239 = vmatpush1.msra.mxu0 0.0
  %240 = vmatprep.subr.mxu0 0.0
  %241 = vmatpush1.msra.mxu0 0.0
  %242 = vmatprep.subr.mxu0 0.0
  %243 = vmatpush1.msra.mxu0 0.0
  %244 = vmatprep.subr.mxu0 0.0
  %245 = vmatpush1.msra.mxu0 0.0
  %246 = vmatprep.subr.mxu0 0.0
  %247 = vmatpush1.msra.mxu0 0.0
  %248 = vmatprep.subr.mxu0 0.0
  %249 = vmatpush1.msra.mxu0 0.0
  %250 = vmatprep.subr.mxu0 0.0
  %251 = vmatpush1.msra.mxu0 0.0
  %252 = vmatprep.subr.mxu0 0.0
  %253 = vmatpush1.msra.mxu0 0.0
  %254 = vmatprep.subr.mxu0 0.0
  %255 = vmatpush1.msra.mxu0 0.0
  %256 = vmatprep.subr.mxu0 0.0
  %257 = vmatpush1.msra.mxu0 0.0
  %258 = vmatprep.subr.mxu0 0.0
  %259 = vmatpush1.msra.mxu0 0.0
  %260 = vmatprep.subr.mxu0 0.0
  %261 = vmatpush1.msra.mxu0 0.0
  %262 = vmatprep.subr.mxu0 0.0
  %263 = vmatpush1.msra.mxu0 0.0
  %264 = vmatprep.subr.mxu0 0.0
  %265 = vmatpush1.msra.mxu0 0.0
  %266 = vmatprep.subr.mxu0 0.0
  %267 = vmatpush1.msra.mxu0 0.0
  %268 = vmatprep.subr.mxu0 0.0
  %269 = vmatpush1.msra.mxu0 0.0
  %270 = vmatprep.mubr.f32.mxu0 0.0
  %271 = vmatmul.mubr.f32.gmra.mrb[0].mxu0 %v183
  %v272 = vpop.f32.mrb[0].mxu0
  %v273 = vadd.f32 %v180, %v272
  %v274 = vpop.f32.mrb[0].mxu0
  %275 = vmatprep.mubr.f32.mxu0 0.0
  %276 = vmatmul.mubr.f32.gmra.mrb[0].mxu0 %v186
  %v277 = vpop.f32.mrb[0].mxu0
  %v278 = vadd.f32 %v180, %v277
  %v279 = vpop.f32.mrb[0].mxu0
  %280 = vmatprep.mubr.f32.mxu0 0.0
  %281 = vmatmul.mubr.f32.gmra.mrb[0].mxu0 %v189
  %v282 = vpop.f32.mrb[0].mxu0
  %v283 = vadd.f32 %v180, %v282
  %v284 = vpop.f32.mrb[0].mxu0
  %285 = vmatprep.mubr.f32.mxu0 0.0
  %286 = vmatmul.mubr.f32.gmra.mrb[0].mxu0 %v192
  %v287 = vpop.f32.mrb[0].mxu0
  %v288 = vadd.f32 %v180, %v287
  %v289 = vpop.f32.mrb[0].mxu0
  %290 = vmatprep.mubr.f32.mxu0 0.0
  %291 = vmatmul.mubr.f32.gmra.mrb[0].mxu0 %v195
  %v292 = vpop.f32.mrb[0].mxu0
  %v293 = vadd.f32 %v180, %v292
  %v294 = vpop.f32.mrb[0].mxu0
  %295 = vmatprep.mubr.f32.mxu0 0.0
  %296 = vmatmul.mubr.f32.gmra.mrb[0].mxu0 %v198
  %v297 = vpop.f32.mrb[0].mxu0
  %v298 = vadd.f32 %v180, %v297
  %v299 = vpop.f32.mrb[0].mxu0
  %300 = vmatprep.mubr.f32.mxu0 0.0
  %301 = vmatmul.mubr.f32.gmra.mrb[0].mxu0 %v201
  %v302 = vpop.f32.mrb[0].mxu0
  %v303 = vadd.f32 %v180, %v302
  %v304 = vpop.f32.mrb[0].mxu0
  %305 = vmatprep.mubr.f32.mxu0 0.0
  %306 = vmatmul.mubr.f32.gmra.mrb[0].mxu0 %v204
  %v307 = vpop.f32.mrb[0].mxu0
  %v308 = vadd.f32 %v180, %v307
  %v309 = vpop.f32.mrb[0].mxu0
  %310 = vdwg.mxu0
  %v311 = vmax.f32 %v273, 0.0
  %v312 = vmax.f32 %v278, 0.0
  %v313 = vmax.f32 %v283, 0.0
  %v314 = vmax.f32 %v288, 0.0
  %v315 = vmax.f32 %v293, 0.0
  %v316 = vmax.f32 %v298, 0.0
  %v317 = vmax.f32 %v303, 0.0
  %v318 = vmax.f32 %v308, 0.0
  %v319 = vld [vmem:[%s6] sm:$0xff]
  %v320 = vld [vmem:[%s6 + $0x8] sm:$0xff]
  %v321 = vld [vmem:[%s6 + $0x10] sm:$0xff]
  %v322 = vld [vmem:[%s6 + $0x18] sm:$0xff]
  %v323 = vld [vmem:[%s7] sm:$0x1]
  %v325 = vlaneseq
  %v326 = vshrl.u32 %v325, 7
  %v327 = vsub.s32 0, %v326
  %v328 = vrot.slane %v323, %v327
  %vm330 = vcmask 261120
  %v332 = vsel %vm330, %v311, 0
  %v335 = vsel %vm330, %v312, 0
  %v338 = vsel %vm330, %v313, 0
  %v341 = vsel %vm330, %v314, 0
  %v344 = vsel %vm330, %v315, 0
  %v347 = vsel %vm330, %v316, 0
  %v350 = vsel %vm330, %v317, 0
  %v353 = vsel %vm330, %v318, 0
  %355 = vmatprep.subr.mxu0 0.0
  %356 = vmatpush1.msra.mxu0 %v319
  %357 = vmatprep.subr.mxu0 0.0
  %358 = vmatpush1.msra.mxu0 %v320
  %359 = vmatprep.subr.mxu0 0.0
  %360 = vmatpush1.msra.mxu0 %v321
  %361 = vmatprep.subr.mxu0 0.0
  %362 = vmatpush1.msra.mxu0 %v322
  %363 = vmatprep.subr.mxu0 0.0
  %364 = vmatpush1.msra.mxu0 0.0
  %365 = vmatprep.subr.mxu0 0.0
  %366 = vmatpush1.msra.mxu0 0.0
  %367 = vmatprep.subr.mxu0 0.0
  %368 = vmatpush1.msra.mxu0 0.0
  %369 = vmatprep.subr.mxu0 0.0
  %370 = vmatpush1.msra.mxu0 0.0
  %371 = vmatprep.subr.mxu0 0.0
  %372 = vmatpush1.msra.mxu0 0.0
  %373 = vmatprep.subr.mxu0 0.0
  %374 = vmatpush1.msra.mxu0 0.0
  %375 = vmatprep.subr.mxu0 0.0
  %376 = vmatpush1.msra.mxu0 0.0
  %377 = vmatprep.subr.mxu0 0.0
  %378 = vmatpush1.msra.mxu0 0.0
  %379 = vmatprep.subr.mxu0 0.0
  %380 = vmatpush1.msra.mxu0 0.0
  %381 = vmatprep.subr.mxu0 0.0
  %382 = vmatpush1.msra.mxu0 0.0
  %383 = vmatprep.subr.mxu0 0.0
  %384 = vmatpush1.msra.mxu0 0.0
  %385 = vmatprep.subr.mxu0 0.0
  %386 = vmatpush1.msra.mxu0 0.0
  %387 = vmatprep.subr.mxu0 0.0
  %388 = vmatpush1.msra.mxu0 0.0
  %389 = vmatprep.subr.mxu0 0.0
  %390 = vmatpush1.msra.mxu0 0.0
  %391 = vmatprep.subr.mxu0 0.0
  %392 = vmatpush1.msra.mxu0 0.0
  %393 = vmatprep.subr.mxu0 0.0
  %394 = vmatpush1.msra.mxu0 0.0
  %395 = vmatprep.subr.mxu0 0.0
  %396 = vmatpush1.msra.mxu0 0.0
  %397 = vmatprep.subr.mxu0 0.0
  %398 = vmatpush1.msra.mxu0 0.0
  %399 = vmatprep.subr.mxu0 0.0
  %400 = vmatpush1.msra.mxu0 0.0
  %401 = vmatprep.subr.mxu0 0.0
  %402 = vmatpush1.msra.mxu0 0.0
  %403 = vmatprep.subr.mxu0 0.0
  %404 = vmatpush1.msra.mxu0 0.0
  %405 = vmatprep.subr.mxu0 0.0
  %406 = vmatpush1.msra.mxu0 0.0
  %407 = vmatprep.subr.mxu0 0.0
  %408 = vmatpush1.msra.mxu0 0.0
  %409 = vmatprep.subr.mxu0 0.0
  %410 = vmatpush1.msra.mxu0 0.0
  %411 = vmatprep.subr.mxu0 0.0
  %412 = vmatpush1.msra.mxu0 0.0
  %413 = vmatprep.subr.mxu0 0.0
  %414 = vmatpush1.msra.mxu0 0.0
  %415 = vmatprep.subr.mxu0 0.0
  %416 = vmatpush1.msra.mxu0 0.0
  %417 = vmatprep.subr.mxu0 0.0
  %418 = vmatpush1.msra.mxu0 0.0
  %419 = vmatprep.mubr.f32.mxu0 0.0
  %420 = vmatmul.mubr.f32.gmra.mrb[0].mxu0 %v332
  %v421 = vpop.f32.mrb[0].mxu0
  %v422 = vadd.f32 %v328, %v421
  %v423 = vpop.f32.mrb[0].mxu0
  %424 = vmatprep.mubr.f32.mxu0 0.0
  %425 = vmatmul.mubr.f32.gmra.mrb[0].mxu0 %v335
  %v426 = vpop.f32.mrb[0].mxu0
  %v427 = vadd.f32 %v328, %v426
  %v428 = vpop.f32.mrb[0].mxu0
  %429 = vmatprep.mubr.f32.mxu0 0.0
  %430 = vmatmul.mubr.f32.gmra.mrb[0].mxu0 %v338
  %v431 = vpop.f32.mrb[0].mxu0
  %v432 = vadd.f32 %v328, %v431
  %v433 = vpop.f32.mrb[0].mxu0
  %434 = vmatprep.mubr.f32.mxu0 0.0
  %435 = vmatmul.mubr.f32.gmra.mrb[0].mxu0 %v341
  %v436 = vpop.f32.mrb[0].mxu0
  %v437 = vadd.f32 %v328, %v436
  %v438 = vpop.f32.mrb[0].mxu0
  %439 = vmatprep.mubr.f32.mxu0 0.0
  %440 = vmatmul.mubr.f32.gmra.mrb[0].mxu0 %v344
  %v441 = vpop.f32.mrb[0].mxu0
  %v442 = vadd.f32 %v328, %v441
  %v443 = vpop.f32.mrb[0].mxu0
  %444 = vmatprep.mubr.f32.mxu0 0.0
  %445 = vmatmul.mubr.f32.gmra.mrb[0].mxu0 %v347
  %v446 = vpop.f32.mrb[0].mxu0
  %v447 = vadd.f32 %v328, %v446
  %v448 = vpop.f32.mrb[0].mxu0
  %449 = vmatprep.mubr.f32.mxu0 0.0
  %450 = vmatmul.mubr.f32.gmra.mrb[0].mxu0 %v350
  %v451 = vpop.f32.mrb[0].mxu0
  %v452 = vadd.f32 %v328, %v451
  %v453 = vpop.f32.mrb[0].mxu0
  %454 = vmatprep.mubr.f32.mxu0 0.0
  %455 = vmatmul.mubr.f32.gmra.mrb[0].mxu0 %v353
  %v456 = vpop.f32.mrb[0].mxu0
  %v457 = vadd.f32 %v328, %v456
  %v458 = vpop.f32.mrb[0].mxu0
  %459 = vdwg.mxu0
  %v460 = vld [vmem:[%s1] sm:$0xff]
  %v461 = vld [vmem:[%s1 + $0x8] sm:$0xff]
  %v462 = vld [vmem:[%s1 + $0x10] sm:$0xff]
  %v463 = vld [vmem:[%s1 + $0x18] sm:$0xff]
  %v464 = vld [vmem:[%s1 + $0x20] sm:$0xff]
  %v465 = vld [vmem:[%s1 + $0x28] sm:$0xff]
  %v466 = vld [vmem:[%s1 + $0x30] sm:$0xff]
  %v467 = vld [vmem:[%s1 + $0x38] sm:$0xff]
  %469 = vset.pattern.permute.xlu0 0
  %470 = vperm.xlu0 %469, %v460
  %v471 = vpop.permute.xlu0 %470
  %474 = vset.pattern.permute.xlu0 0
  %475 = vperm.xlu0 %474, %v461
  %v476 = vpop.permute.xlu0 %475
  %479 = vset.pattern.permute.xlu0 0
  %480 = vperm.xlu0 %479, %v462
  %v481 = vpop.permute.xlu0 %480
  %484 = vset.pattern.permute.xlu0 0
  %485 = vperm.xlu0 %484, %v463
  %v486 = vpop.permute.xlu0 %485
  %489 = vset.pattern.permute.xlu0 0
  %490 = vperm.xlu0 %489, %v464
  %v491 = vpop.permute.xlu0 %490
  %494 = vset.pattern.permute.xlu0 0
  %495 = vperm.xlu0 %494, %v465
  %v496 = vpop.permute.xlu0 %495
  %499 = vset.pattern.permute.xlu0 0
  %500 = vperm.xlu0 %499, %v466
  %v501 = vpop.permute.xlu0 %500
  %504 = vset.pattern.permute.xlu0 0
  %505 = vperm.xlu0 %504, %v467
  %v506 = vpop.permute.xlu0 %505
  %v508 = vmul.f32 %v422, %v471
  %v509 = vmul.f32 %v427, %v476
  %v510 = vmul.f32 %v432, %v481
  %v511 = vmul.f32 %v437, %v486
  %v512 = vmul.f32 %v442, %v491
  %v513 = vmul.f32 %v447, %v496
  %v514 = vmul.f32 %v452, %v501
  %v515 = vmul.f32 %v457, %v506
  %516 = vst.msk [vmem:[%s8] sm:$0xff] %vm39, %v508
  %517 = vst.msk [vmem:[%s8 + $0x8] sm:$0xff] %vm39, %v509
  %518 = vst.msk [vmem:[%s8 + $0x10] sm:$0xff] %vm39, %v510
  %519 = vst.msk [vmem:[%s8 + $0x18] sm:$0xff] %vm39, %v511
  %520 = vst.msk [vmem:[%s8 + $0x20] sm:$0xff] %vm39, %v512
  %521 = vst.msk [vmem:[%s8 + $0x28] sm:$0xff] %vm39, %v513
  %522 = vst.msk [vmem:[%s8 + $0x30] sm:$0xff] %vm39, %v514
  %523 = vst.msk [vmem:[%s8 + $0x38] sm:$0xff] %vm39, %v515
  // Predicated region
  $region34: #{evoformer_stack_forward.54} parent=0 // pred_check
    _
  $region35: #{evoformer_stack_forward.54} parent=0 // pred_check_branch
    %525 = sbr.rel (0) target = $region37
  $region36: #{evoformer_stack_forward.54} parent=0 // pred_region
    _
  $region37: #{evoformer_stack_forward.54} parent=0 // pred_fallthru
    _
  // Predicated region
  $region38: #{evoformer_stack_forward.54} parent=0 // pred_check
    _
  $region39: #{evoformer_stack_forward.54} parent=0 // pred_check_branch
    %527 = sbr.rel (0) target = $region41
  $region40: #{evoformer_stack_forward.54} parent=0 // pred_region
    _
  $region41: #{evoformer_stack_forward.54} parent=0 // pred_fallthru
    _

</llo_original>
